<compile_context>
chip_gen: v7x
topology: tpu7x:2x2x1
jax: 0.10.0
libtpu: 0.0.40
codegen_flags: <defaults>
</compile_context>

<pallas_src>
import functools
import numpy as np
import jax
import jax.numpy as jnp
from jax import lax
from jax.experimental import pallas as pl
from jax.experimental.pallas import tpu as pltpu


def _round_up(v, m):
    return (v + m - 1) // m * m


# ---------------------------------------------------------------------------
# Kernel 1: conv (per-row matmuls over the horizontal im2col) + bias
#           + per-tile BatchNorm statistics (sum / sum-of-squares).
# ---------------------------------------------------------------------------
def _conv_stats_kernel(xe_ref, xo_ref, w_ref, b_ref,
                       ze_ref, zo_ref, s1_ref, s2_ref,
                       *, th, Kp, khKp, kchunk):
    i = pl.program_id(1)                 # row-tile index
    Cout = b_ref.shape[0]
    Wp = ze_ref.shape[-1]

    def body(r, carry):
        s1, s2 = carry
        bias = b_ref[...]                                    # (Cout, 1) f32
        # global output row = i*th + r; its im2col slab starts at row h*Kp
        row0 = pl.multiple_of((i * th + r) * Kp, 16)
        acc_e = jnp.zeros((Cout, Wp), jnp.float32)
        acc_o = jnp.zeros((Cout, Wp), jnp.float32)
        # contraction over (di, ci, dj), split into aligned chunks to keep
        # vreg pressure bounded (chunk offsets are multiples of 128/16).
        for off in range(0, khKp, kchunk):
            size = min(kchunk, khKp - off)
            wc = w_ref[:, pl.ds(off, size)]                  # (Cout, size) bf16
            se = xe_ref[0, pl.ds(row0 + off, size), :]       # (size, Wp)  bf16
            so = xo_ref[0, pl.ds(row0 + off, size), :]
            acc_e = acc_e + jnp.dot(wc, se, preferred_element_type=jnp.float32)
            acc_o = acc_o + jnp.dot(wc, so, preferred_element_type=jnp.float32)
        ze = acc_e + bias                                    # (Cout, Wp) f32
        zo = acc_o + bias
        ze_ref[0, r] = ze
        zo_ref[0, r] = zo
        s1 = s1 + jnp.sum(ze, axis=1, keepdims=True) + jnp.sum(zo, axis=1, keepdims=True)
        s2 = s2 + jnp.sum(ze * ze, axis=1, keepdims=True) + jnp.sum(zo * zo, axis=1, keepdims=True)
        return s1, s2

    zeros = jnp.zeros((Cout, 1), jnp.float32)
    s1, s2 = lax.fori_loop(0, th, body, (zeros, zeros))
    s1_ref[...] = s1.reshape(1, 1, Cout, 1)
    s2_ref[...] = s2.reshape(1, 1, Cout, 1)


# ---------------------------------------------------------------------------
# Kernel 2: BatchNorm affine + 2x2 max-pool + ReLU (all elementwise / VPU).
#   z_e / z_o hold the even- / odd-column conv outputs, so the pool is the
#   elementwise max of four (Cout, Wp) slabs (two rows x two column parities).
# ---------------------------------------------------------------------------
def _bn_pool_relu_kernel(ze_ref, zo_ref, s_ref, t_ref, o_ref, *, hp):
    Cout = s_ref.shape[0]

    def body(r, carry):
        s = s_ref[...].reshape(1, Cout, 1)
        t = t_ref[...].reshape(1, Cout, 1)
        ze = ze_ref[0, pl.ds(2 * r, 2)]          # conv rows 2r, 2r+1 (even cols)
        zo = zo_ref[0, pl.ds(2 * r, 2)]          # conv rows 2r, 2r+1 (odd cols)
        ye = ze * s + t                          # BN affine (before max!)
        yo = zo * s + t
        m = jnp.maximum(ye, yo)                  # horizontal 2-max
        y = jnp.maximum(m[0], m[1])              # vertical 2-max  -> (Cout, Wp)
        o_ref[0, r] = jnp.maximum(y, 0.0)        # ReLU
        return carry

    lax.fori_loop(0, hp, body, 0)


# ---------------------------------------------------------------------------
# Kernel 3: fused fc1 (+ReLU) and fc2.
# ---------------------------------------------------------------------------
def _fc_kernel(x_ref, w1_ref, b1_ref, w2_ref, b2_ref, o_ref):
    h = jnp.dot(x_ref[...], w1_ref[...], preferred_element_type=jnp.float32)
    h = jnp.maximum(h + b1_ref[...], 0.0)                        # (B, 400) f32
    o_ref[...] = jnp.sum(h * w2_ref[...], axis=1, keepdims=True) + b2_ref[...]


# ---------------------------------------------------------------------------
# Wrapper: one Conv2d -> BatchNorm2d(train stats) -> MaxPool2d(2,2) -> ReLU
# Activations use layout (B, H, C, W)  (wide W in lanes).
# ---------------------------------------------------------------------------
def _conv_bn_pool_relu(x, w, b, gamma, beta, *, eps=1e-5):
    B, Hin, Cin, Win = x.shape
    Cout, _, kh, kw = w.shape
    Ho, Wo = Hin - kh + 1, Win - kw + 1
    assert Ho % 2 == 0 and Wo % 2 == 0
    Hp, Wp = Ho // 2, Wo // 2
    Kp = _round_up(Cin * kw, 16)            # padded per-tap contraction size
    khKp = kh * Kp
    NH = 2 if Ho >= 32 else 1               # >=2 parallel steps for big layers
    th = Ho // NH
    assert th * NH == Ho

    # ---- horizontal-only im2col, split into even / odd output columns ------
    cols = [x[:, :, :, dj:dj + Wo] for dj in range(kw)]            # (B,H,Cin,Wo)
    xh = jnp.stack(cols, axis=3).reshape(B, Hin, Cin * kw, Wo)     # k = ci*kw+dj
    xh = jnp.pad(xh, ((0, 0), (0, 0), (0, Kp - Cin * kw), (0, 0)))
    xe = xh[:, :, :, 0::2].reshape(B, Hin * Kp, Wp).astype(jnp.bfloat16)
    xo = xh[:, :, :, 1::2].reshape(B, Hin * Kp, Wp).astype(jnp.bfloat16)

    # weight laid out to match: wt[co, di*Kp + ci*kw + dj] = w[co, ci, di, dj]
    wt = jnp.transpose(w, (0, 2, 1, 3)).reshape(Cout, kh, Cin * kw)
    wt = jnp.pad(wt, ((0, 0), (0, 0), (0, Kp - Cin * kw)))
    wt = wt.reshape(Cout, khKp).astype(jnp.bfloat16)
    bias = b.reshape(Cout, 1).astype(jnp.float32)

    ze, zo, s1p, s2p = pl.pallas_call(
        functools.partial(_conv_stats_kernel, th=th, Kp=Kp, khKp=khKp, kchunk=512),
        out_shape=(jax.ShapeDtypeStruct((B, Ho, Cout, Wp), jnp.float32),
                   jax.ShapeDtypeStruct((B, Ho, Cout, Wp), jnp.float32),
                   jax.ShapeDtypeStruct((B, NH, Cout, 1), jnp.float32),
                   jax.ShapeDtypeStruct((B, NH, Cout, 1), jnp.float32)),
        grid_spec=pltpu.PrefetchScalarGridSpec(
            num_scalar_prefetch=0,
            grid=(B, NH),
            in_specs=[pl.BlockSpec((1, Hin * Kp, Wp), lambda bb, ii: (bb, 0, 0)),
                      pl.BlockSpec((1, Hin * Kp, Wp), lambda bb, ii: (bb, 0, 0)),
                      pl.BlockSpec((Cout, khKp), lambda bb, ii: (0, 0)),
                      pl.BlockSpec((Cout, 1), lambda bb, ii: (0, 0))],
            out_specs=(pl.BlockSpec((1, th, Cout, Wp), lambda bb, ii: (bb, ii, 0, 0)),
                       pl.BlockSpec((1, th, Cout, Wp), lambda bb, ii: (bb, ii, 0, 0)),
                       pl.BlockSpec((1, 1, Cout, 1), lambda bb, ii: (bb, ii, 0, 0)),
                       pl.BlockSpec((1, 1, Cout, 1), lambda bb, ii: (bb, ii, 0, 0)))),
        compiler_params=pltpu.CompilerParams(
            dimension_semantics=("parallel", "parallel")),
    )(xe, xo, wt, bias)

    # ---- training-mode BatchNorm statistics (tiny per-channel XLA math) ----
    n = B * Ho * Wo
    s1 = jnp.sum(s1p, axis=(0, 1))                     # (Cout, 1)
    s2 = jnp.sum(s2p, axis=(0, 1))
    mean = s1 / n
    var = jnp.maximum(s2 / n - mean * mean, 0.0)       # biased var (as torch BN)
    scale = gamma.reshape(Cout, 1) * lax.rsqrt(var + eps)
    shift = beta.reshape(Cout, 1) - mean * scale

    return pl.pallas_call(
        functools.partial(_bn_pool_relu_kernel, hp=Hp),
        out_shape=jax.ShapeDtypeStruct((B, Hp, Cout, Wp), jnp.float32),
        grid_spec=pltpu.PrefetchScalarGridSpec(
            num_scalar_prefetch=0,
            grid=(B,),
            in_specs=[pl.BlockSpec((1, Ho, Cout, Wp), lambda bb: (bb, 0, 0, 0)),
                      pl.BlockSpec((1, Ho, Cout, Wp), lambda bb: (bb, 0, 0, 0)),
                      pl.BlockSpec((Cout, 1), lambda bb: (0, 0)),
                      pl.BlockSpec((Cout, 1), lambda bb: (0, 0))],
            out_specs=pl.BlockSpec((1, Hp, Cout, Wp), lambda bb: (bb, 0, 0, 0))),
        compiler_params=pltpu.CompilerParams(
            dimension_semantics=("parallel",)),
    )(ze, zo, scale, shift)


def _fc_head(flat, w1, b1, w2, b2):
    B, D = flat.shape
    H = w1.shape[1]
    return pl.pallas_call(
        _fc_kernel,
        out_shape=jax.ShapeDtypeStruct((B, 1), jnp.float32),
        grid_spec=pltpu.PrefetchScalarGridSpec(
            num_scalar_prefetch=0,
            grid=(1,),
            in_specs=[pl.BlockSpec((B, D), lambda i: (0, 0)),
                      pl.BlockSpec((D, H), lambda i: (0, 0)),
                      pl.BlockSpec((1, H), lambda i: (0, 0)),
                      pl.BlockSpec((1, H), lambda i: (0, 0)),
                      pl.BlockSpec((1, 1), lambda i: (0, 0))],
            out_specs=pl.BlockSpec((B, 1), lambda i: (0, 0))),
    )(flat.astype(jnp.bfloat16), w1.astype(jnp.bfloat16),
      b1.reshape(1, H).astype(jnp.float32),
      w2.reshape(1, H).astype(jnp.float32),
      b2.reshape(1, 1).astype(jnp.float32))


# ---------------------------------------------------------------------------
# Parameters & forward pass
# ---------------------------------------------------------------------------
def init_params(key):
    params = {}
    conv_cfgs = [("conv1", 1, 10, 13), ("conv2", 10, 20, 7),
                 ("conv3", 20, 40, 7), ("conv4", 40, 80, 5)]
    for name, cin, cout, k in conv_cfgs:
        key, k1, k2, k3, k4 = jax.random.split(key, 5)
        fan_in = cin * k * k
        params[name] = dict(
            w=jax.random.normal(k1, (cout, cin, k, k), jnp.float32) / np.sqrt(fan_in),
            b=0.1 * jax.random.normal(k2, (cout,), jnp.float32),
            gamma=jax.random.uniform(k3, (cout,), jnp.float32, 0.5, 1.5),
            beta=0.1 * jax.random.normal(k4, (cout,), jnp.float32))
    for name, din, dout in [("fc1", 720, 400), ("fc2", 400, 1)]:
        key, k1, k2 = jax.random.split(key, 3)
        params[name] = dict(
            # stored pre-transposed: (din, dout) == torch_weight.T
            w=jax.random.normal(k1, (din, dout), jnp.float32) / np.sqrt(din),
            b=0.1 * jax.random.normal(k2, (dout,), jnp.float32))
    return params


def net1_forward(params, x_nchw):
    # x: (B, 1, 128, 128) float32, PyTorch NCHW convention.
    # BatchNorm uses training-mode batch statistics (running buffers are not
    # tracked, matching the module's forward in train mode).
    x = jnp.transpose(x_nchw, (0, 2, 1, 3))          # (B, H, C, W) layout
    for name in ("conv1", "conv2", "conv3", "conv4"):
        p = params[name]
        x = _conv_bn_pool_relu(x, p["w"], p["b"], p["gamma"], p["beta"])
    B = x.shape[0]
    # flatten in torch's (C, H, W) order to match f4.view(B, -1)
    flat = jnp.transpose(x, (0, 2, 1, 3)).reshape(B, -1)    # (B, 720)
    return _fc_head(flat, params["fc1"]["w"], params["fc1"]["b"],
                    params["fc2"]["w"], params["fc2"]["b"])


if __name__ == "__main__":
    key = jax.random.PRNGKey(0)
    pkey, xkey = jax.random.split(key)
    params = init_params(pkey)
    # 128x128 input => 80*3*3 = 720 flattened features, matching fc1
    x = jax.random.normal(xkey, (2, 1, 128, 128), jnp.float32)

    fwd = jax.jit(net1_forward)
    out = jax.block_until_ready(fwd(params, x))

    assert out.shape == (2, 1), out.shape
    assert bool(jnp.all(jnp.isfinite(out)))
    print("KERNEL_OK")
</pallas_src>

<mosaic_0001>
module attributes {stable_mosaic.version = 11 : i64} {
  func.func @_conv_stats_kernel(%arg0: i32, %arg1: i32, %arg2: memref<1x2048x58xbf16, #tpu.memory_space<vmem>>, %arg3: memref<1x2048x58xbf16, #tpu.memory_space<vmem>>, %arg4: memref<10x208xbf16, #tpu.memory_space<vmem>>, %arg5: memref<10x1xf32, #tpu.memory_space<vmem>>, %arg6: memref<1x58x10x58xf32, #tpu.memory_space<vmem>>, %arg7: memref<1x58x10x58xf32, #tpu.memory_space<vmem>>, %arg8: memref<1x1x10x1xf32, #tpu.memory_space<vmem>>, %arg9: memref<1x1x10x1xf32, #tpu.memory_space<vmem>>) attributes {dimension_semantics = [#tpu.dimension_semantics<parallel>, #tpu.dimension_semantics<parallel>], iteration_bounds = array<i64: 2, 2>, scalar_prefetch = 0 : i64, scratch_operands = 0 : i64, tpu.core_type = #tpu.core_type<tc>, window_params = [{transform_indices = @transform_0, window_bounds = array<i64: 1, 2048, 58>}, {transform_indices = @transform_1, window_bounds = array<i64: 1, 2048, 58>}, {pipeline_mode = #tpu.pipeline_mode<synchronous>, transform_indices = @transform_2, window_bounds = array<i64: 10, 208>}, {pipeline_mode = #tpu.pipeline_mode<synchronous>, transform_indices = @transform_3, window_bounds = array<i64: 10, 1>}, {transform_indices = @transform_4, window_bounds = array<i64: 1, 58, 10, 58>}, {transform_indices = @transform_5, window_bounds = array<i64: 1, 58, 10, 58>}, {transform_indices = @transform_6, window_bounds = array<i64: 1, 1, 10, 1>}, {transform_indices = @transform_7, window_bounds = array<i64: 1, 1, 10, 1>}]} {
    %cst = arith.constant 0.000000e+00 : f32
    %0 = vector.broadcast %cst : f32 to vector<10x1xf32>
    %c0_i32 = arith.constant 0 : i32
    %c58_i32 = arith.constant 58 : i32
    %1 = arith.addi %c0_i32, %c58_i32 : i32
    %c1_i32 = arith.constant 1 : i32
    %2:2 = scf.for %arg10 = %c0_i32 to %1 step %c1_i32 iter_args(%arg11 = %0, %arg12 = %0) -> (vector<10x1xf32>, vector<10x1xf32>)  : i32 {
      %c0_8 = arith.constant 0 : index
      %c0_9 = arith.constant 0 : index
      %7 = vector.load %arg5[%c0_8, %c0_9] : memref<10x1xf32, #tpu.memory_space<vmem>>, vector<10x1xf32>
      %c58_i32_10 = arith.constant 58 : i32
      %8 = arith.muli %arg1, %c58_i32_10 : i32
      %9 = arith.addi %8, %arg10 : i32
      %c16_i32 = arith.constant 16 : i32
      %10 = arith.muli %9, %c16_i32 : i32
      %11 = tpu.assume_multiple %10, 16 : i32
      %cst_11 = arith.constant 0.000000e+00 : f32
      %12 = vector.broadcast %cst_11 : f32 to vector<10x58xf32>
      %cst_12 = arith.constant 0.000000e+00 : f32
      %13 = vector.broadcast %cst_12 : f32 to vector<10x58xf32>
      %c0_13 = arith.constant 0 : index
      %c0_14 = arith.constant 0 : index
      %14 = vector.load %arg4[%c0_13, %c0_14] : memref<10x208xbf16, #tpu.memory_space<vmem>>, vector<10x208xbf16>
      %c0_i32_15 = arith.constant 0 : i32
      %15 = arith.addi %11, %c0_i32_15 : i32
      %c0_16 = arith.constant 0 : index
      %16 = arith.index_cast %15 : i32 to index
      %c0_17 = arith.constant 0 : index
      %17 = vector.load %arg2[%c0_16, %16, %c0_17] : memref<1x2048x58xbf16, #tpu.memory_space<vmem>>, vector<1x208x58xbf16>
      %18 = vector.shape_cast %17 : vector<1x208x58xbf16> to vector<208x58xbf16>
      %c0_i32_18 = arith.constant 0 : i32
      %19 = arith.addi %11, %c0_i32_18 : i32
      %c0_19 = arith.constant 0 : index
      %20 = arith.index_cast %19 : i32 to index
      %c0_20 = arith.constant 0 : index
      %21 = vector.load %arg3[%c0_19, %20, %c0_20] : memref<1x2048x58xbf16, #tpu.memory_space<vmem>>, vector<1x208x58xbf16>
      %22 = vector.shape_cast %21 : vector<1x208x58xbf16> to vector<208x58xbf16>
      %cst_21 = arith.constant dense<0.000000e+00> : vector<10x58xf32>
      %23 = tpu.matmul %14, %18, %cst_21 {dimension_numbers = #tpu.dot_dimension_numbers<[1], [0], [0], [1], [0, 0, 1, 1], [], []>} : vector<10x208xbf16>, vector<208x58xbf16>, vector<10x58xf32> -> vector<10x58xf32>
      %24 = arith.addf %12, %23 : vector<10x58xf32>
      %cst_22 = arith.constant dense<0.000000e+00> : vector<10x58xf32>
      %25 = tpu.matmul %14, %22, %cst_22 {dimension_numbers = #tpu.dot_dimension_numbers<[1], [0], [0], [1], [0, 0, 1, 1], [], []>} : vector<10x208xbf16>, vector<208x58xbf16>, vector<10x58xf32> -> vector<10x58xf32>
      %26 = arith.addf %13, %25 : vector<10x58xf32>
      %27 = vector.broadcast %7 : vector<10x1xf32> to vector<10x58xf32>
      %28 = arith.addf %24, %27 : vector<10x58xf32>
      %29 = vector.broadcast %7 : vector<10x1xf32> to vector<10x58xf32>
      %30 = arith.addf %26, %29 : vector<10x58xf32>
      %c0_23 = arith.constant 0 : index
      %31 = arith.index_cast %arg10 : i32 to index
      %c0_24 = arith.constant 0 : index
      %c0_25 = arith.constant 0 : index
      %32 = vector.load %arg6[%c0_23, %31, %c0_24, %c0_25] : memref<1x58x10x58xf32, #tpu.memory_space<vmem>>, vector<1x1x10x58xf32>
      %33 = vector.shape_cast %32 : vector<1x1x10x58xf32> to vector<10x58xf32>
      %34 = vector.shape_cast %28 : vector<10x58xf32> to vector<1x1x10x58xf32>
      tpu.vector_store %arg6[%c0_23, %31, %c0_24, %c0_25], %34 {strides = array<i32>} : memref<1x58x10x58xf32, #tpu.memory_space<vmem>>, vector<1x1x10x58xf32>,
      %c0_26 = arith.constant 0 : index
      %35 = arith.index_cast %arg10 : i32 to index
      %c0_27 = arith.constant 0 : index
      %c0_28 = arith.constant 0 : index
      %36 = vector.load %arg7[%c0_26, %35, %c0_27, %c0_28] : memref<1x58x10x58xf32, #tpu.memory_space<vmem>>, vector<1x1x10x58xf32>
      %37 = vector.shape_cast %36 : vector<1x1x10x58xf32> to vector<10x58xf32>
      %38 = vector.shape_cast %30 : vector<10x58xf32> to vector<1x1x10x58xf32>
      tpu.vector_store %arg7[%c0_26, %35, %c0_27, %c0_28], %38 {strides = array<i32>} : memref<1x58x10x58xf32, #tpu.memory_space<vmem>>, vector<1x1x10x58xf32>,
      %cst_29 = arith.constant dense<0.000000e+00> : vector<10xf32>
      %39 = vector.multi_reduction <add>, %28, %cst_29 [1] : vector<10x58xf32> to vector<10xf32>
      %40 = vector.shape_cast %39 : vector<10xf32> to vector<10x1xf32>
      %41 = arith.addf %arg11, %40 : vector<10x1xf32>
      %cst_30 = arith.constant dense<0.000000e+00> : vector<10xf32>
      %42 = vector.multi_reduction <add>, %30, %cst_30 [1] : vector<10x58xf32> to vector<10xf32>
      %43 = vector.shape_cast %42 : vector<10xf32> to vector<10x1xf32>
      %44 = arith.addf %41, %43 : vector<10x1xf32>
      %45 = arith.mulf %28, %28 : vector<10x58xf32>
      %cst_31 = arith.constant dense<0.000000e+00> : vector<10xf32>
      %46 = vector.multi_reduction <add>, %45, %cst_31 [1] : vector<10x58xf32> to vector<10xf32>
      %47 = vector.shape_cast %46 : vector<10xf32> to vector<10x1xf32>
      %48 = arith.addf %arg12, %47 : vector<10x1xf32>
      %49 = arith.mulf %30, %30 : vector<10x58xf32>
      %cst_32 = arith.constant dense<0.000000e+00> : vector<10xf32>
      %50 = vector.multi_reduction <add>, %49, %cst_32 [1] : vector<10x58xf32> to vector<10xf32>
      %51 = vector.shape_cast %50 : vector<10xf32> to vector<10x1xf32>
      %52 = arith.addf %48, %51 : vector<10x1xf32>
      scf.yield %44, %52 : vector<10x1xf32>, vector<10x1xf32>
    }
    %c58_i32_0 = arith.constant 58 : i32
    %3 = vector.shape_cast %2#0 : vector<10x1xf32> to vector<1x1x10x1xf32>
    %c0 = arith.constant 0 : index
    %c0_1 = arith.constant 0 : index
    %c0_2 = arith.constant 0 : index
    %c0_3 = arith.constant 0 : index
    %4 = vector.load %arg8[%c0, %c0_1, %c0_2, %c0_3] : memref<1x1x10x1xf32, #tpu.memory_space<vmem>>, vector<1x1x10x1xf32>
    tpu.vector_store %arg8[%c0, %c0_1, %c0_2, %c0_3], %3 {strides = array<i32>} : memref<1x1x10x1xf32, #tpu.memory_space<vmem>>, vector<1x1x10x1xf32>,
    %5 = vector.shape_cast %2#1 : vector<10x1xf32> to vector<1x1x10x1xf32>
    %c0_4 = arith.constant 0 : index
    %c0_5 = arith.constant 0 : index
    %c0_6 = arith.constant 0 : index
    %c0_7 = arith.constant 0 : index
    %6 = vector.load %arg9[%c0_4, %c0_5, %c0_6, %c0_7] : memref<1x1x10x1xf32, #tpu.memory_space<vmem>>, vector<1x1x10x1xf32>
    tpu.vector_store %arg9[%c0_4, %c0_5, %c0_6, %c0_7], %5 {strides = array<i32>} : memref<1x1x10x1xf32, #tpu.memory_space<vmem>>, vector<1x1x10x1xf32>,
    return
  }
  func.func @transform_0(%arg0: i32, %arg1: i32) -> (i32, i32, i32) {
    %c0_i32 = arith.constant 0 : i32
    %c0_i32_0 = arith.constant 0 : i32
    %c0_i32_1 = arith.constant 0 : i32
    return %arg0, %c0_i32, %c0_i32_0 : i32, i32, i32
  }
  func.func @transform_1(%arg0: i32, %arg1: i32) -> (i32, i32, i32) {
    %c0_i32 = arith.constant 0 : i32
    %c0_i32_0 = arith.constant 0 : i32
    %c0_i32_1 = arith.constant 0 : i32
    return %arg0, %c0_i32, %c0_i32_0 : i32, i32, i32
  }
  func.func @transform_2(%arg0: i32, %arg1: i32) -> (i32, i32) {
    %c0_i32 = arith.constant 0 : i32
    %c0_i32_0 = arith.constant 0 : i32
    %c0_i32_1 = arith.constant 0 : i32
    return %c0_i32, %c0_i32_0 : i32, i32
  }
  func.func @transform_3(%arg0: i32, %arg1: i32) -> (i32, i32) {
    %c0_i32 = arith.constant 0 : i32
    %c0_i32_0 = arith.constant 0 : i32
    %c0_i32_1 = arith.constant 0 : i32
    return %c0_i32, %c0_i32_0 : i32, i32
  }
  func.func @transform_4(%arg0: i32, %arg1: i32) -> (i32, i32, i32, i32) {
    %c0_i32 = arith.constant 0 : i32
    %c0_i32_0 = arith.constant 0 : i32
    %c0_i32_1 = arith.constant 0 : i32
    return %arg0, %arg1, %c0_i32, %c0_i32_0 : i32, i32, i32, i32
  }
  func.func @transform_5(%arg0: i32, %arg1: i32) -> (i32, i32, i32, i32) {
    %c0_i32 = arith.constant 0 : i32
    %c0_i32_0 = arith.constant 0 : i32
    %c0_i32_1 = arith.constant 0 : i32
    return %arg0, %arg1, %c0_i32, %c0_i32_0 : i32, i32, i32, i32
  }
  func.func @transform_6(%arg0: i32, %arg1: i32) -> (i32, i32, i32, i32) {
    %c0_i32 = arith.constant 0 : i32
    %c0_i32_0 = arith.constant 0 : i32
    %c0_i32_1 = arith.constant 0 : i32
    return %arg0, %arg1, %c0_i32, %c0_i32_0 : i32, i32, i32, i32
  }
  func.func @transform_7(%arg0: i32, %arg1: i32) -> (i32, i32, i32, i32) {
    %c0_i32 = arith.constant 0 : i32
    %c0_i32_0 = arith.constant 0 : i32
    %c0_i32_1 = arith.constant 0 : i32
    return %arg0, %arg1, %c0_i32, %c0_i32_0 : i32, i32, i32, i32
  }
}

module attributes {stable_mosaic.version = 11 : i64} {
  func.func @_bn_pool_relu_kernel(%arg0: i32, %arg1: memref<1x116x10x58xf32, #tpu.memory_space<vmem>>, %arg2: memref<1x116x10x58xf32, #tpu.memory_space<vmem>>, %arg3: memref<10x1xf32, #tpu.memory_space<vmem>>, %arg4: memref<10x1xf32, #tpu.memory_space<vmem>>, %arg5: memref<1x58x10x58xf32, #tpu.memory_space<vmem>>) attributes {dimension_semantics = [#tpu.dimension_semantics<parallel>], iteration_bounds = array<i64: 2>, scalar_prefetch = 0 : i64, scratch_operands = 0 : i64, tpu.core_type = #tpu.core_type<tc>, window_params = [{transform_indices = @transform_0, window_bounds = array<i64: 1, 116, 10, 58>}, {transform_indices = @transform_1, window_bounds = array<i64: 1, 116, 10, 58>}, {pipeline_mode = #tpu.pipeline_mode<synchronous>, transform_indices = @transform_2, window_bounds = array<i64: 10, 1>}, {pipeline_mode = #tpu.pipeline_mode<synchronous>, transform_indices = @transform_3, window_bounds = array<i64: 10, 1>}, {transform_indices = @transform_4, window_bounds = array<i64: 1, 58, 10, 58>}]} {
    %c0_i32 = arith.constant 0 : i32
    %c58_i32 = arith.constant 58 : i32
    %0 = arith.addi %c0_i32, %c58_i32 : i32
    %c1_i32 = arith.constant 1 : i32
    scf.for %arg6 = %c0_i32 to %0 step %c1_i32  : i32 {
      %c0 = arith.constant 0 : index
      %c0_1 = arith.constant 0 : index
      %1 = vector.load %arg3[%c0, %c0_1] : memref<10x1xf32, #tpu.memory_space<vmem>>, vector<10x1xf32>
      %2 = vector.shape_cast %1 : vector<10x1xf32> to vector<1x10x1xf32>
      %c0_2 = arith.constant 0 : index
      %c0_3 = arith.constant 0 : index
      %3 = vector.load %arg4[%c0_2, %c0_3] : memref<10x1xf32, #tpu.memory_space<vmem>>, vector<10x1xf32>
      %4 = vector.shape_cast %3 : vector<10x1xf32> to vector<1x10x1xf32>
      %c2_i32 = arith.constant 2 : i32
      %5 = arith.muli %c2_i32, %arg6 : i32
      %c0_4 = arith.constant 0 : index
      %6 = arith.index_cast %5 : i32 to index
      %c0_5 = arith.constant 0 : index
      %c0_6 = arith.constant 0 : index
      %7 = vector.load %arg1[%c0_4, %6, %c0_5, %c0_6] : memref<1x116x10x58xf32, #tpu.memory_space<vmem>>, vector<1x2x10x58xf32>
      %8 = vector.shape_cast %7 : vector<1x2x10x58xf32> to vector<2x10x58xf32>
      %c2_i32_7 = arith.constant 2 : i32
      %9 = arith.muli %c2_i32_7, %arg6 : i32
      %c0_8 = arith.constant 0 : index
      %10 = arith.index_cast %9 : i32 to index
      %c0_9 = arith.constant 0 : index
      %c0_10 = arith.constant 0 : index
      %11 = vector.load %arg2[%c0_8, %10, %c0_9, %c0_10] : memref<1x116x10x58xf32, #tpu.memory_space<vmem>>, vector<1x2x10x58xf32>
      %12 = vector.shape_cast %11 : vector<1x2x10x58xf32> to vector<2x10x58xf32>
      %13 = vector.broadcast %2 : vector<1x10x1xf32> to vector<2x10x58xf32>
      %14 = arith.mulf %8, %13 : vector<2x10x58xf32>
      %15 = vector.broadcast %4 : vector<1x10x1xf32> to vector<2x10x58xf32>
      %16 = arith.addf %14, %15 : vector<2x10x58xf32>
      %17 = vector.broadcast %2 : vector<1x10x1xf32> to vector<2x10x58xf32>
      %18 = arith.mulf %12, %17 : vector<2x10x58xf32>
      %19 = vector.broadcast %4 : vector<1x10x1xf32> to vector<2x10x58xf32>
      %20 = arith.addf %18, %19 : vector<2x10x58xf32>
      %21 = arith.maximumf %16, %20 : vector<2x10x58xf32>
      %22 = vector.extract_strided_slice %21 {offsets = [0, 0, 0], sizes = [1, 10, 58], strides = [1, 1, 1]} : vector<2x10x58xf32> to vector<1x10x58xf32>
      %23 = vector.shape_cast %22 : vector<1x10x58xf32> to vector<10x58xf32>
      %24 = vector.extract_strided_slice %21 {offsets = [1, 0, 0], sizes = [1, 10, 58], strides = [1, 1, 1]} : vector<2x10x58xf32> to vector<1x10x58xf32>
      %25 = vector.shape_cast %24 : vector<1x10x58xf32> to vector<10x58xf32>
      %26 = arith.maximumf %23, %25 : vector<10x58xf32>
      %cst = arith.constant 0.000000e+00 : f32
      %27 = vector.broadcast %cst : f32 to vector<10x58xf32>
      %28 = arith.maximumf %26, %27 : vector<10x58xf32>
      %c0_11 = arith.constant 0 : index
      %29 = arith.index_cast %arg6 : i32 to index
      %c0_12 = arith.constant 0 : index
      %c0_13 = arith.constant 0 : index
      %30 = vector.load %arg5[%c0_11, %29, %c0_12, %c0_13] : memref<1x58x10x58xf32, #tpu.memory_space<vmem>>, vector<1x1x10x58xf32>
      %31 = vector.shape_cast %30 : vector<1x1x10x58xf32> to vector<10x58xf32>
      %32 = vector.shape_cast %28 : vector<10x58xf32> to vector<1x1x10x58xf32>
      tpu.vector_store %arg5[%c0_11, %29, %c0_12, %c0_13], %32 {strides = array<i32>} : memref<1x58x10x58xf32, #tpu.memory_space<vmem>>, vector<1x1x10x58xf32>,
    }
    %c58_i32_0 = arith.constant 58 : i32
    return
  }
  func.func @transform_0(%arg0: i32) -> (i32, i32, i32, i32) {
    %c0_i32 = arith.constant 0 : i32
    %c0_i32_0 = arith.constant 0 : i32
    %c0_i32_1 = arith.constant 0 : i32
    %c0_i32_2 = arith.constant 0 : i32
    return %arg0, %c0_i32, %c0_i32_0, %c0_i32_1 : i32, i32, i32, i32
  }
  func.func @transform_1(%arg0: i32) -> (i32, i32, i32, i32) {
    %c0_i32 = arith.constant 0 : i32
    %c0_i32_0 = arith.constant 0 : i32
    %c0_i32_1 = arith.constant 0 : i32
    %c0_i32_2 = arith.constant 0 : i32
    return %arg0, %c0_i32, %c0_i32_0, %c0_i32_1 : i32, i32, i32, i32
  }
  func.func @transform_2(%arg0: i32) -> (i32, i32) {
    %c0_i32 = arith.constant 0 : i32
    %c0_i32_0 = arith.constant 0 : i32
    %c0_i32_1 = arith.constant 0 : i32
    return %c0_i32, %c0_i32_0 : i32, i32
  }
  func.func @transform_3(%arg0: i32) -> (i32, i32) {
    %c0_i32 = arith.constant 0 : i32
    %c0_i32_0 = arith.constant 0 : i32
    %c0_i32_1 = arith.constant 0 : i32
    return %c0_i32, %c0_i32_0 : i32, i32
  }
  func.func @transform_4(%arg0: i32) -> (i32, i32, i32, i32) {
    %c0_i32 = arith.constant 0 : i32
    %c0_i32_0 = arith.constant 0 : i32
    %c0_i32_1 = arith.constant 0 : i32
    %c0_i32_2 = arith.constant 0 : i32
    return %arg0, %c0_i32, %c0_i32_0, %c0_i32_1 : i32, i32, i32, i32
  }
}

module attributes {stable_mosaic.version = 11 : i64} {
  func.func @_conv_stats_kernel(%arg0: i32, %arg1: i32, %arg2: memref<1x4640x26xbf16, #tpu.memory_space<vmem>>, %arg3: memref<1x4640x26xbf16, #tpu.memory_space<vmem>>, %arg4: memref<20x560xbf16, #tpu.memory_space<vmem>>, %arg5: memref<20x1xf32, #tpu.memory_space<vmem>>, %arg6: memref<1x26x20x26xf32, #tpu.memory_space<vmem>>, %arg7: memref<1x26x20x26xf32, #tpu.memory_space<vmem>>, %arg8: memref<1x1x20x1xf32, #tpu.memory_space<vmem>>, %arg9: memref<1x1x20x1xf32, #tpu.memory_space<vmem>>) attributes {dimension_semantics = [#tpu.dimension_semantics<parallel>, #tpu.dimension_semantics<parallel>], iteration_bounds = array<i64: 2, 2>, scalar_prefetch = 0 : i64, scratch_operands = 0 : i64, tpu.core_type = #tpu.core_type<tc>, window_params = [{transform_indices = @transform_0, window_bounds = array<i64: 1, 4640, 26>}, {transform_indices = @transform_1, window_bounds = array<i64: 1, 4640, 26>}, {pipeline_mode = #tpu.pipeline_mode<synchronous>, transform_indices = @transform_2, window_bounds = array<i64: 20, 560>}, {pipeline_mode = #tpu.pipeline_mode<synchronous>, transform_indices = @transform_3, window_bounds = array<i64: 20, 1>}, {transform_indices = @transform_4, window_bounds = array<i64: 1, 26, 20, 26>}, {transform_indices = @transform_5, window_bounds = array<i64: 1, 26, 20, 26>}, {transform_indices = @transform_6, window_bounds = array<i64: 1, 1, 20, 1>}, {transform_indices = @transform_7, window_bounds = array<i64: 1, 1, 20, 1>}]} {
    %cst = arith.constant 0.000000e+00 : f32
    %0 = vector.broadcast %cst : f32 to vector<20x1xf32>
    %c0_i32 = arith.constant 0 : i32
    %c26_i32 = arith.constant 26 : i32
    %1 = arith.addi %c0_i32, %c26_i32 : i32
    %c1_i32 = arith.constant 1 : i32
    %2:2 = scf.for %arg10 = %c0_i32 to %1 step %c1_i32 iter_args(%arg11 = %0, %arg12 = %0) -> (vector<20x1xf32>, vector<20x1xf32>)  : i32 {
      %c0_8 = arith.constant 0 : index
      %c0_9 = arith.constant 0 : index
      %7 = vector.load %arg5[%c0_8, %c0_9] : memref<20x1xf32, #tpu.memory_space<vmem>>, vector<20x1xf32>
      %c26_i32_10 = arith.constant 26 : i32
      %8 = arith.muli %arg1, %c26_i32_10 : i32
      %9 = arith.addi %8, %arg10 : i32
      %c80_i32 = arith.constant 80 : i32
      %10 = arith.muli %9, %c80_i32 : i32
      %11 = tpu.assume_multiple %10, 16 : i32
      %cst_11 = arith.constant 0.000000e+00 : f32
      %12 = vector.broadcast %cst_11 : f32 to vector<20x26xf32>
      %cst_12 = arith.constant 0.000000e+00 : f32
      %13 = vector.broadcast %cst_12 : f32 to vector<20x26xf32>
      %c0_13 = arith.constant 0 : index
      %c0_14 = arith.constant 0 : index
      %14 = vector.load %arg4[%c0_13, %c0_14] : memref<20x560xbf16, #tpu.memory_space<vmem>>, vector<20x512xbf16>
      %c0_i32_15 = arith.constant 0 : i32
      %15 = arith.addi %11, %c0_i32_15 : i32
      %c0_16 = arith.constant 0 : index
      %16 = arith.index_cast %15 : i32 to index
      %c0_17 = arith.constant 0 : index
      %17 = vector.load %arg2[%c0_16, %16, %c0_17] : memref<1x4640x26xbf16, #tpu.memory_space<vmem>>, vector<1x512x26xbf16>
      %18 = vector.shape_cast %17 : vector<1x512x26xbf16> to vector<512x26xbf16>
      %c0_i32_18 = arith.constant 0 : i32
      %19 = arith.addi %11, %c0_i32_18 : i32
      %c0_19 = arith.constant 0 : index
      %20 = arith.index_cast %19 : i32 to index
      %c0_20 = arith.constant 0 : index
      %21 = vector.load %arg3[%c0_19, %20, %c0_20] : memref<1x4640x26xbf16, #tpu.memory_space<vmem>>, vector<1x512x26xbf16>
      %22 = vector.shape_cast %21 : vector<1x512x26xbf16> to vector<512x26xbf16>
      %cst_21 = arith.constant dense<0.000000e+00> : vector<20x26xf32>
      %23 = tpu.matmul %14, %18, %cst_21 {dimension_numbers = #tpu.dot_dimension_numbers<[1], [0], [0], [1], [0, 0, 1, 1], [], []>} : vector<20x512xbf16>, vector<512x26xbf16>, vector<20x26xf32> -> vector<20x26xf32>
      %24 = arith.addf %12, %23 : vector<20x26xf32>
      %cst_22 = arith.constant dense<0.000000e+00> : vector<20x26xf32>
      %25 = tpu.matmul %14, %22, %cst_22 {dimension_numbers = #tpu.dot_dimension_numbers<[1], [0], [0], [1], [0, 0, 1, 1], [], []>} : vector<20x512xbf16>, vector<512x26xbf16>, vector<20x26xf32> -> vector<20x26xf32>
      %26 = arith.addf %13, %25 : vector<20x26xf32>
      %c0_23 = arith.constant 0 : index
      %c512 = arith.constant 512 : index
      %27 = vector.load %arg4[%c0_23, %c512] : memref<20x560xbf16, #tpu.memory_space<vmem>>, vector<20x48xbf16>
      %c512_i32 = arith.constant 512 : i32
      %28 = arith.addi %11, %c512_i32 : i32
      %c0_24 = arith.constant 0 : index
      %29 = arith.index_cast %28 : i32 to index
      %c0_25 = arith.constant 0 : index
      %30 = vector.load %arg2[%c0_24, %29, %c0_25] : memref<1x4640x26xbf16, #tpu.memory_space<vmem>>, vector<1x48x26xbf16>
      %31 = vector.shape_cast %30 : vector<1x48x26xbf16> to vector<48x26xbf16>
      %c512_i32_26 = arith.constant 512 : i32
      %32 = arith.addi %11, %c512_i32_26 : i32
      %c0_27 = arith.constant 0 : index
      %33 = arith.index_cast %32 : i32 to index
      %c0_28 = arith.constant 0 : index
      %34 = vector.load %arg3[%c0_27, %33, %c0_28] : memref<1x4640x26xbf16, #tpu.memory_space<vmem>>, vector<1x48x26xbf16>
      %35 = vector.shape_cast %34 : vector<1x48x26xbf16> to vector<48x26xbf16>
      %cst_29 = arith.constant dense<0.000000e+00> : vector<20x26xf32>
      %36 = tpu.matmul %27, %31, %cst_29 {dimension_numbers = #tpu.dot_dimension_numbers<[1], [0], [0], [1], [0, 0, 1, 1], [], []>} : vector<20x48xbf16>, vector<48x26xbf16>, vector<20x26xf32> -> vector<20x26xf32>
      %37 = arith.addf %24, %36 : vector<20x26xf32>
      %cst_30 = arith.constant dense<0.000000e+00> : vector<20x26xf32>
      %38 = tpu.matmul %27, %35, %cst_30 {dimension_numbers = #tpu.dot_dimension_numbers<[1], [0], [0], [1], [0, 0, 1, 1], [], []>} : vector<20x48xbf16>, vector<48x26xbf16>, vector<20x26xf32> -> vector<20x26xf32>
      %39 = arith.addf %26, %38 : vector<20x26xf32>
      %40 = vector.broadcast %7 : vector<20x1xf32> to vector<20x26xf32>
      %41 = arith.addf %37, %40 : vector<20x26xf32>
      %42 = vector.broadcast %7 : vector<20x1xf32> to vector<20x26xf32>
      %43 = arith.addf %39, %42 : vector<20x26xf32>
      %c0_31 = arith.constant 0 : index
      %44 = arith.index_cast %arg10 : i32 to index
      %c0_32 = arith.constant 0 : index
      %c0_33 = arith.constant 0 : index
      %45 = vector.load %arg6[%c0_31, %44, %c0_32, %c0_33] : memref<1x26x20x26xf32, #tpu.memory_space<vmem>>, vector<1x1x20x26xf32>
      %46 = vector.shape_cast %45 : vector<1x1x20x26xf32> to vector<20x26xf32>
      %47 = vector.shape_cast %41 : vector<20x26xf32> to vector<1x1x20x26xf32>
      tpu.vector_store %arg6[%c0_31, %44, %c0_32, %c0_33], %47 {strides = array<i32>} : memref<1x26x20x26xf32, #tpu.memory_space<vmem>>, vector<1x1x20x26xf32>,
      %c0_34 = arith.constant 0 : index
      %48 = arith.index_cast %arg10 : i32 to index
      %c0_35 = arith.constant 0 : index
      %c0_36 = arith.constant 0 : index
      %49 = vector.load %arg7[%c0_34, %48, %c0_35, %c0_36] : memref<1x26x20x26xf32, #tpu.memory_space<vmem>>, vector<1x1x20x26xf32>
      %50 = vector.shape_cast %49 : vector<1x1x20x26xf32> to vector<20x26xf32>
      %51 = vector.shape_cast %43 : vector<20x26xf32> to vector<1x1x20x26xf32>
      tpu.vector_store %arg7[%c0_34, %48, %c0_35, %c0_36], %51 {strides = array<i32>} : memref<1x26x20x26xf32, #tpu.memory_space<vmem>>, vector<1x1x20x26xf32>,
      %cst_37 = arith.constant dense<0.000000e+00> : vector<20xf32>
      %52 = vector.multi_reduction <add>, %41, %cst_37 [1] : vector<20x26xf32> to vector<20xf32>
      %53 = vector.shape_cast %52 : vector<20xf32> to vector<20x1xf32>
      %54 = arith.addf %arg11, %53 : vector<20x1xf32>
      %cst_38 = arith.constant dense<0.000000e+00> : vector<20xf32>
      %55 = vector.multi_reduction <add>, %43, %cst_38 [1] : vector<20x26xf32> to vector<20xf32>
      %56 = vector.shape_cast %55 : vector<20xf32> to vector<20x1xf32>
      %57 = arith.addf %54, %56 : vector<20x1xf32>
      %58 = arith.mulf %41, %41 : vector<20x26xf32>
      %cst_39 = arith.constant dense<0.000000e+00> : vector<20xf32>
      %59 = vector.multi_reduction <add>, %58, %cst_39 [1] : vector<20x26xf32> to vector<20xf32>
      %60 = vector.shape_cast %59 : vector<20xf32> to vector<20x1xf32>
      %61 = arith.addf %arg12, %60 : vector<20x1xf32>
      %62 = arith.mulf %43, %43 : vector<20x26xf32>
      %cst_40 = arith.constant dense<0.000000e+00> : vector<20xf32>
      %63 = vector.multi_reduction <add>, %62, %cst_40 [1] : vector<20x26xf32> to vector<20xf32>
      %64 = vector.shape_cast %63 : vector<20xf32> to vector<20x1xf32>
      %65 = arith.addf %61, %64 : vector<20x1xf32>
      scf.yield %57, %65 : vector<20x1xf32>, vector<20x1xf32>
    }
    %c26_i32_0 = arith.constant 26 : i32
    %3 = vector.shape_cast %2#0 : vector<20x1xf32> to vector<1x1x20x1xf32>
    %c0 = arith.constant 0 : index
    %c0_1 = arith.constant 0 : index
    %c0_2 = arith.constant 0 : index
    %c0_3 = arith.constant 0 : index
    %4 = vector.load %arg8[%c0, %c0_1, %c0_2, %c0_3] : memref<1x1x20x1xf32, #tpu.memory_space<vmem>>, vector<1x1x20x1xf32>
    tpu.vector_store %arg8[%c0, %c0_1, %c0_2, %c0_3], %3 {strides = array<i32>} : memref<1x1x20x1xf32, #tpu.memory_space<vmem>>, vector<1x1x20x1xf32>,
    %5 = vector.shape_cast %2#1 : vector<20x1xf32> to vector<1x1x20x1xf32>
    %c0_4 = arith.constant 0 : index
    %c0_5 = arith.constant 0 : index
    %c0_6 = arith.constant 0 : index
    %c0_7 = arith.constant 0 : index
    %6 = vector.load %arg9[%c0_4, %c0_5, %c0_6, %c0_7] : memref<1x1x20x1xf32, #tpu.memory_space<vmem>>, vector<1x1x20x1xf32>
    tpu.vector_store %arg9[%c0_4, %c0_5, %c0_6, %c0_7], %5 {strides = array<i32>} : memref<1x1x20x1xf32, #tpu.memory_space<vmem>>, vector<1x1x20x1xf32>,
    return
  }
  func.func @transform_0(%arg0: i32, %arg1: i32) -> (i32, i32, i32) {
    %c0_i32 = arith.constant 0 : i32
    %c0_i32_0 = arith.constant 0 : i32
    %c0_i32_1 = arith.constant 0 : i32
    return %arg0, %c0_i32, %c0_i32_0 : i32, i32, i32
  }
  func.func @transform_1(%arg0: i32, %arg1: i32) -> (i32, i32, i32) {
    %c0_i32 = arith.constant 0 : i32
    %c0_i32_0 = arith.constant 0 : i32
    %c0_i32_1 = arith.constant 0 : i32
    return %arg0, %c0_i32, %c0_i32_0 : i32, i32, i32
  }
  func.func @transform_2(%arg0: i32, %arg1: i32) -> (i32, i32) {
    %c0_i32 = arith.constant 0 : i32
    %c0_i32_0 = arith.constant 0 : i32
    %c0_i32_1 = arith.constant 0 : i32
    return %c0_i32, %c0_i32_0 : i32, i32
  }
  func.func @transform_3(%arg0: i32, %arg1: i32) -> (i32, i32) {
    %c0_i32 = arith.constant 0 : i32
    %c0_i32_0 = arith.constant 0 : i32
    %c0_i32_1 = arith.constant 0 : i32
    return %c0_i32, %c0_i32_0 : i32, i32
  }
  func.func @transform_4(%arg0: i32, %arg1: i32) -> (i32, i32, i32, i32) {
    %c0_i32 = arith.constant 0 : i32
    %c0_i32_0 = arith.constant 0 : i32
    %c0_i32_1 = arith.constant 0 : i32
    return %arg0, %arg1, %c0_i32, %c0_i32_0 : i32, i32, i32, i32
  }
  func.func @transform_5(%arg0: i32, %arg1: i32) -> (i32, i32, i32, i32) {
    %c0_i32 = arith.constant 0 : i32
    %c0_i32_0 = arith.constant 0 : i32
    %c0_i32_1 = arith.constant 0 : i32
    return %arg0, %arg1, %c0_i32, %c0_i32_0 : i32, i32, i32, i32
  }
  func.func @transform_6(%arg0: i32, %arg1: i32) -> (i32, i32, i32, i32) {
    %c0_i32 = arith.constant 0 : i32
    %c0_i32_0 = arith.constant 0 : i32
    %c0_i32_1 = arith.constant 0 : i32
    return %arg0, %arg1, %c0_i32, %c0_i32_0 : i32, i32, i32, i32
  }
  func.func @transform_7(%arg0: i32, %arg1: i32) -> (i32, i32, i32, i32) {
    %c0_i32 = arith.constant 0 : i32
    %c0_i32_0 = arith.constant 0 : i32
    %c0_i32_1 = arith.constant 0 : i32
    return %arg0, %arg1, %c0_i32, %c0_i32_0 : i32, i32, i32, i32
  }
}

module attributes {stable_mosaic.version = 11 : i64} {
  func.func @_bn_pool_relu_kernel(%arg0: i32, %arg1: memref<1x52x20x26xf32, #tpu.memory_space<vmem>>, %arg2: memref<1x52x20x26xf32, #tpu.memory_space<vmem>>, %arg3: memref<20x1xf32, #tpu.memory_space<vmem>>, %arg4: memref<20x1xf32, #tpu.memory_space<vmem>>, %arg5: memref<1x26x20x26xf32, #tpu.memory_space<vmem>>) attributes {dimension_semantics = [#tpu.dimension_semantics<parallel>], iteration_bounds = array<i64: 2>, scalar_prefetch = 0 : i64, scratch_operands = 0 : i64, tpu.core_type = #tpu.core_type<tc>, window_params = [{transform_indices = @transform_0, window_bounds = array<i64: 1, 52, 20, 26>}, {transform_indices = @transform_1, window_bounds = array<i64: 1, 52, 20, 26>}, {pipeline_mode = #tpu.pipeline_mode<synchronous>, transform_indices = @transform_2, window_bounds = array<i64: 20, 1>}, {pipeline_mode = #tpu.pipeline_mode<synchronous>, transform_indices = @transform_3, window_bounds = array<i64: 20, 1>}, {transform_indices = @transform_4, window_bounds = array<i64: 1, 26, 20, 26>}]} {
    %c0_i32 = arith.constant 0 : i32
    %c26_i32 = arith.constant 26 : i32
    %0 = arith.addi %c0_i32, %c26_i32 : i32
    %c1_i32 = arith.constant 1 : i32
    scf.for %arg6 = %c0_i32 to %0 step %c1_i32  : i32 {
      %c0 = arith.constant 0 : index
      %c0_1 = arith.constant 0 : index
      %1 = vector.load %arg3[%c0, %c0_1] : memref<20x1xf32, #tpu.memory_space<vmem>>, vector<20x1xf32>
      %2 = vector.shape_cast %1 : vector<20x1xf32> to vector<1x20x1xf32>
      %c0_2 = arith.constant 0 : index
      %c0_3 = arith.constant 0 : index
      %3 = vector.load %arg4[%c0_2, %c0_3] : memref<20x1xf32, #tpu.memory_space<vmem>>, vector<20x1xf32>
      %4 = vector.shape_cast %3 : vector<20x1xf32> to vector<1x20x1xf32>
      %c2_i32 = arith.constant 2 : i32
      %5 = arith.muli %c2_i32, %arg6 : i32
      %c0_4 = arith.constant 0 : index
      %6 = arith.index_cast %5 : i32 to index
      %c0_5 = arith.constant 0 : index
      %c0_6 = arith.constant 0 : index
      %7 = vector.load %arg1[%c0_4, %6, %c0_5, %c0_6] : memref<1x52x20x26xf32, #tpu.memory_space<vmem>>, vector<1x2x20x26xf32>
      %8 = vector.shape_cast %7 : vector<1x2x20x26xf32> to vector<2x20x26xf32>
      %c2_i32_7 = arith.constant 2 : i32
      %9 = arith.muli %c2_i32_7, %arg6 : i32
      %c0_8 = arith.constant 0 : index
      %10 = arith.index_cast %9 : i32 to index
      %c0_9 = arith.constant 0 : index
      %c0_10 = arith.constant 0 : index
      %11 = vector.load %arg2[%c0_8, %10, %c0_9, %c0_10] : memref<1x52x20x26xf32, #tpu.memory_space<vmem>>, vector<1x2x20x26xf32>
      %12 = vector.shape_cast %11 : vector<1x2x20x26xf32> to vector<2x20x26xf32>
      %13 = vector.broadcast %2 : vector<1x20x1xf32> to vector<2x20x26xf32>
      %14 = arith.mulf %8, %13 : vector<2x20x26xf32>
      %15 = vector.broadcast %4 : vector<1x20x1xf32> to vector<2x20x26xf32>
      %16 = arith.addf %14, %15 : vector<2x20x26xf32>
      %17 = vector.broadcast %2 : vector<1x20x1xf32> to vector<2x20x26xf32>
      %18 = arith.mulf %12, %17 : vector<2x20x26xf32>
      %19 = vector.broadcast %4 : vector<1x20x1xf32> to vector<2x20x26xf32>
      %20 = arith.addf %18, %19 : vector<2x20x26xf32>
      %21 = arith.maximumf %16, %20 : vector<2x20x26xf32>
      %22 = vector.extract_strided_slice %21 {offsets = [0, 0, 0], sizes = [1, 20, 26], strides = [1, 1, 1]} : vector<2x20x26xf32> to vector<1x20x26xf32>
      %23 = vector.shape_cast %22 : vector<1x20x26xf32> to vector<20x26xf32>
      %24 = vector.extract_strided_slice %21 {offsets = [1, 0, 0], sizes = [1, 20, 26], strides = [1, 1, 1]} : vector<2x20x26xf32> to vector<1x20x26xf32>
      %25 = vector.shape_cast %24 : vector<1x20x26xf32> to vector<20x26xf32>
      %26 = arith.maximumf %23, %25 : vector<20x26xf32>
      %cst = arith.constant 0.000000e+00 : f32
      %27 = vector.broadcast %cst : f32 to vector<20x26xf32>
      %28 = arith.maximumf %26, %27 : vector<20x26xf32>
      %c0_11 = arith.constant 0 : index
      %29 = arith.index_cast %arg6 : i32 to index
      %c0_12 = arith.constant 0 : index
      %c0_13 = arith.constant 0 : index
      %30 = vector.load %arg5[%c0_11, %29, %c0_12, %c0_13] : memref<1x26x20x26xf32, #tpu.memory_space<vmem>>, vector<1x1x20x26xf32>
      %31 = vector.shape_cast %30 : vector<1x1x20x26xf32> to vector<20x26xf32>
      %32 = vector.shape_cast %28 : vector<20x26xf32> to vector<1x1x20x26xf32>
      tpu.vector_store %arg5[%c0_11, %29, %c0_12, %c0_13], %32 {strides = array<i32>} : memref<1x26x20x26xf32, #tpu.memory_space<vmem>>, vector<1x1x20x26xf32>,
    }
    %c26_i32_0 = arith.constant 26 : i32
    return
  }
  func.func @transform_0(%arg0: i32) -> (i32, i32, i32, i32) {
    %c0_i32 = arith.constant 0 : i32
    %c0_i32_0 = arith.constant 0 : i32
    %c0_i32_1 = arith.constant 0 : i32
    %c0_i32_2 = arith.constant 0 : i32
    return %arg0, %c0_i32, %c0_i32_0, %c0_i32_1 : i32, i32, i32, i32
  }
  func.func @transform_1(%arg0: i32) -> (i32, i32, i32, i32) {
    %c0_i32 = arith.constant 0 : i32
    %c0_i32_0 = arith.constant 0 : i32
    %c0_i32_1 = arith.constant 0 : i32
    %c0_i32_2 = arith.constant 0 : i32
    return %arg0, %c0_i32, %c0_i32_0, %c0_i32_1 : i32, i32, i32, i32
  }
  func.func @transform_2(%arg0: i32) -> (i32, i32) {
    %c0_i32 = arith.constant 0 : i32
    %c0_i32_0 = arith.constant 0 : i32
    %c0_i32_1 = arith.constant 0 : i32
    return %c0_i32, %c0_i32_0 : i32, i32
  }
  func.func @transform_3(%arg0: i32) -> (i32, i32) {
    %c0_i32 = arith.constant 0 : i32
    %c0_i32_0 = arith.constant 0 : i32
    %c0_i32_1 = arith.constant 0 : i32
    return %c0_i32, %c0_i32_0 : i32, i32
  }
  func.func @transform_4(%arg0: i32) -> (i32, i32, i32, i32) {
    %c0_i32 = arith.constant 0 : i32
    %c0_i32_0 = arith.constant 0 : i32
    %c0_i32_1 = arith.constant 0 : i32
    %c0_i32_2 = arith.constant 0 : i32
    return %arg0, %c0_i32, %c0_i32_0, %c0_i32_1 : i32, i32, i32, i32
  }
}

module attributes {stable_mosaic.version = 11 : i64} {
  func.func @_conv_stats_kernel(%arg0: i32, %arg1: i32, %arg2: memref<1x3744x10xbf16, #tpu.memory_space<vmem>>, %arg3: memref<1x3744x10xbf16, #tpu.memory_space<vmem>>, %arg4: memref<40x1008xbf16, #tpu.memory_space<vmem>>, %arg5: memref<40x1xf32, #tpu.memory_space<vmem>>, %arg6: memref<1x20x40x10xf32, #tpu.memory_space<vmem>>, %arg7: memref<1x20x40x10xf32, #tpu.memory_space<vmem>>, %arg8: memref<1x1x40x1xf32, #tpu.memory_space<vmem>>, %arg9: memref<1x1x40x1xf32, #tpu.memory_space<vmem>>) attributes {dimension_semantics = [#tpu.dimension_semantics<parallel>, #tpu.dimension_semantics<parallel>], iteration_bounds = array<i64: 2, 1>, scalar_prefetch = 0 : i64, scratch_operands = 0 : i64, tpu.core_type = #tpu.core_type<tc>, window_params = [{transform_indices = @transform_0, window_bounds = array<i64: 1, 3744, 10>}, {transform_indices = @transform_1, window_bounds = array<i64: 1, 3744, 10>}, {pipeline_mode = #tpu.pipeline_mode<synchronous>, transform_indices = @transform_2, window_bounds = array<i64: 40, 1008>}, {pipeline_mode = #tpu.pipeline_mode<synchronous>, transform_indices = @transform_3, window_bounds = array<i64: 40, 1>}, {transform_indices = @transform_4, window_bounds = array<i64: 1, 20, 40, 10>}, {transform_indices = @transform_5, window_bounds = array<i64: 1, 20, 40, 10>}, {transform_indices = @transform_6, window_bounds = array<i64: 1, 1, 40, 1>}, {transform_indices = @transform_7, window_bounds = array<i64: 1, 1, 40, 1>}]} {
    %cst = arith.constant 0.000000e+00 : f32
    %0 = vector.broadcast %cst : f32 to vector<40x1xf32>
    %c0_i32 = arith.constant 0 : i32
    %c20_i32 = arith.constant 20 : i32
    %1 = arith.addi %c0_i32, %c20_i32 : i32
    %c1_i32 = arith.constant 1 : i32
    %2:2 = scf.for %arg10 = %c0_i32 to %1 step %c1_i32 iter_args(%arg11 = %0, %arg12 = %0) -> (vector<40x1xf32>, vector<40x1xf32>)  : i32 {
      %c0_8 = arith.constant 0 : index
      %c0_9 = arith.constant 0 : index
      %7 = vector.load %arg5[%c0_8, %c0_9] : memref<40x1xf32, #tpu.memory_space<vmem>>, vector<40x1xf32>
      %c20_i32_10 = arith.constant 20 : i32
      %8 = arith.muli %arg1, %c20_i32_10 : i32
      %9 = arith.addi %8, %arg10 : i32
      %c144_i32 = arith.constant 144 : i32
      %10 = arith.muli %9, %c144_i32 : i32
      %11 = tpu.assume_multiple %10, 16 : i32
      %cst_11 = arith.constant 0.000000e+00 : f32
      %12 = vector.broadcast %cst_11 : f32 to vector<40x10xf32>
      %cst_12 = arith.constant 0.000000e+00 : f32
      %13 = vector.broadcast %cst_12 : f32 to vector<40x10xf32>
      %c0_13 = arith.constant 0 : index
      %c0_14 = arith.constant 0 : index
      %14 = vector.load %arg4[%c0_13, %c0_14] : memref<40x1008xbf16, #tpu.memory_space<vmem>>, vector<40x512xbf16>
      %c0_i32_15 = arith.constant 0 : i32
      %15 = arith.addi %11, %c0_i32_15 : i32
      %c0_16 = arith.constant 0 : index
      %16 = arith.index_cast %15 : i32 to index
      %c0_17 = arith.constant 0 : index
      %17 = vector.load %arg2[%c0_16, %16, %c0_17] : memref<1x3744x10xbf16, #tpu.memory_space<vmem>>, vector<1x512x10xbf16>
      %18 = vector.shape_cast %17 : vector<1x512x10xbf16> to vector<512x10xbf16>
      %c0_i32_18 = arith.constant 0 : i32
      %19 = arith.addi %11, %c0_i32_18 : i32
      %c0_19 = arith.constant 0 : index
      %20 = arith.index_cast %19 : i32 to index
      %c0_20 = arith.constant 0 : index
      %21 = vector.load %arg3[%c0_19, %20, %c0_20] : memref<1x3744x10xbf16, #tpu.memory_space<vmem>>, vector<1x512x10xbf16>
      %22 = vector.shape_cast %21 : vector<1x512x10xbf16> to vector<512x10xbf16>
      %cst_21 = arith.constant dense<0.000000e+00> : vector<40x10xf32>
      %23 = tpu.matmul %14, %18, %cst_21 {dimension_numbers = #tpu.dot_dimension_numbers<[1], [0], [0], [1], [0, 0, 1, 1], [], []>} : vector<40x512xbf16>, vector<512x10xbf16>, vector<40x10xf32> -> vector<40x10xf32>
      %24 = arith.addf %12, %23 : vector<40x10xf32>
      %cst_22 = arith.constant dense<0.000000e+00> : vector<40x10xf32>
      %25 = tpu.matmul %14, %22, %cst_22 {dimension_numbers = #tpu.dot_dimension_numbers<[1], [0], [0], [1], [0, 0, 1, 1], [], []>} : vector<40x512xbf16>, vector<512x10xbf16>, vector<40x10xf32> -> vector<40x10xf32>
      %26 = arith.addf %13, %25 : vector<40x10xf32>
      %c0_23 = arith.constant 0 : index
      %c512 = arith.constant 512 : index
      %27 = vector.load %arg4[%c0_23, %c512] : memref<40x1008xbf16, #tpu.memory_space<vmem>>, vector<40x496xbf16>
      %c512_i32 = arith.constant 512 : i32
      %28 = arith.addi %11, %c512_i32 : i32
      %c0_24 = arith.constant 0 : index
      %29 = arith.index_cast %28 : i32 to index
      %c0_25 = arith.constant 0 : index
      %30 = vector.load %arg2[%c0_24, %29, %c0_25] : memref<1x3744x10xbf16, #tpu.memory_space<vmem>>, vector<1x496x10xbf16>
      %31 = vector.shape_cast %30 : vector<1x496x10xbf16> to vector<496x10xbf16>
      %c512_i32_26 = arith.constant 512 : i32
      %32 = arith.addi %11, %c512_i32_26 : i32
      %c0_27 = arith.constant 0 : index
      %33 = arith.index_cast %32 : i32 to index
      %c0_28 = arith.constant 0 : index
      %34 = vector.load %arg3[%c0_27, %33, %c0_28] : memref<1x3744x10xbf16, #tpu.memory_space<vmem>>, vector<1x496x10xbf16>
      %35 = vector.shape_cast %34 : vector<1x496x10xbf16> to vector<496x10xbf16>
      %cst_29 = arith.constant dense<0.000000e+00> : vector<40x10xf32>
      %36 = tpu.matmul %27, %31, %cst_29 {dimension_numbers = #tpu.dot_dimension_numbers<[1], [0], [0], [1], [0, 0, 1, 1], [], []>} : vector<40x496xbf16>, vector<496x10xbf16>, vector<40x10xf32> -> vector<40x10xf32>
      %37 = arith.addf %24, %36 : vector<40x10xf32>
      %cst_30 = arith.constant dense<0.000000e+00> : vector<40x10xf32>
      %38 = tpu.matmul %27, %35, %cst_30 {dimension_numbers = #tpu.dot_dimension_numbers<[1], [0], [0], [1], [0, 0, 1, 1], [], []>} : vector<40x496xbf16>, vector<496x10xbf16>, vector<40x10xf32> -> vector<40x10xf32>
      %39 = arith.addf %26, %38 : vector<40x10xf32>
      %40 = vector.broadcast %7 : vector<40x1xf32> to vector<40x10xf32>
      %41 = arith.addf %37, %40 : vector<40x10xf32>
      %42 = vector.broadcast %7 : vector<40x1xf32> to vector<40x10xf32>
      %43 = arith.addf %39, %42 : vector<40x10xf32>
      %c0_31 = arith.constant 0 : index
      %44 = arith.index_cast %arg10 : i32 to index
      %c0_32 = arith.constant 0 : index
      %c0_33 = arith.constant 0 : index
      %45 = vector.load %arg6[%c0_31, %44, %c0_32, %c0_33] : memref<1x20x40x10xf32, #tpu.memory_space<vmem>>, vector<1x1x40x10xf32>
      %46 = vector.shape_cast %45 : vector<1x1x40x10xf32> to vector<40x10xf32>
      %47 = vector.shape_cast %41 : vector<40x10xf32> to vector<1x1x40x10xf32>
      tpu.vector_store %arg6[%c0_31, %44, %c0_32, %c0_33], %47 {strides = array<i32>} : memref<1x20x40x10xf32, #tpu.memory_space<vmem>>, vector<1x1x40x10xf32>,
      %c0_34 = arith.constant 0 : index
      %48 = arith.index_cast %arg10 : i32 to index
      %c0_35 = arith.constant 0 : index
      %c0_36 = arith.constant 0 : index
      %49 = vector.load %arg7[%c0_34, %48, %c0_35, %c0_36] : memref<1x20x40x10xf32, #tpu.memory_space<vmem>>, vector<1x1x40x10xf32>
      %50 = vector.shape_cast %49 : vector<1x1x40x10xf32> to vector<40x10xf32>
      %51 = vector.shape_cast %43 : vector<40x10xf32> to vector<1x1x40x10xf32>
      tpu.vector_store %arg7[%c0_34, %48, %c0_35, %c0_36], %51 {strides = array<i32>} : memref<1x20x40x10xf32, #tpu.memory_space<vmem>>, vector<1x1x40x10xf32>,
      %cst_37 = arith.constant dense<0.000000e+00> : vector<40xf32>
      %52 = vector.multi_reduction <add>, %41, %cst_37 [1] : vector<40x10xf32> to vector<40xf32>
      %53 = vector.shape_cast %52 : vector<40xf32> to vector<40x1xf32>
      %54 = arith.addf %arg11, %53 : vector<40x1xf32>
      %cst_38 = arith.constant dense<0.000000e+00> : vector<40xf32>
      %55 = vector.multi_reduction <add>, %43, %cst_38 [1] : vector<40x10xf32> to vector<40xf32>
      %56 = vector.shape_cast %55 : vector<40xf32> to vector<40x1xf32>
      %57 = arith.addf %54, %56 : vector<40x1xf32>
      %58 = arith.mulf %41, %41 : vector<40x10xf32>
      %cst_39 = arith.constant dense<0.000000e+00> : vector<40xf32>
      %59 = vector.multi_reduction <add>, %58, %cst_39 [1] : vector<40x10xf32> to vector<40xf32>
      %60 = vector.shape_cast %59 : vector<40xf32> to vector<40x1xf32>
      %61 = arith.addf %arg12, %60 : vector<40x1xf32>
      %62 = arith.mulf %43, %43 : vector<40x10xf32>
      %cst_40 = arith.constant dense<0.000000e+00> : vector<40xf32>
      %63 = vector.multi_reduction <add>, %62, %cst_40 [1] : vector<40x10xf32> to vector<40xf32>
      %64 = vector.shape_cast %63 : vector<40xf32> to vector<40x1xf32>
      %65 = arith.addf %61, %64 : vector<40x1xf32>
      scf.yield %57, %65 : vector<40x1xf32>, vector<40x1xf32>
    }
    %c20_i32_0 = arith.constant 20 : i32
    %3 = vector.shape_cast %2#0 : vector<40x1xf32> to vector<1x1x40x1xf32>
    %c0 = arith.constant 0 : index
    %c0_1 = arith.constant 0 : index
    %c0_2 = arith.constant 0 : index
    %c0_3 = arith.constant 0 : index
    %4 = vector.load %arg8[%c0, %c0_1, %c0_2, %c0_3] : memref<1x1x40x1xf32, #tpu.memory_space<vmem>>, vector<1x1x40x1xf32>
    tpu.vector_store %arg8[%c0, %c0_1, %c0_2, %c0_3], %3 {strides = array<i32>} : memref<1x1x40x1xf32, #tpu.memory_space<vmem>>, vector<1x1x40x1xf32>,
    %5 = vector.shape_cast %2#1 : vector<40x1xf32> to vector<1x1x40x1xf32>
    %c0_4 = arith.constant 0 : index
    %c0_5 = arith.constant 0 : index
    %c0_6 = arith.constant 0 : index
    %c0_7 = arith.constant 0 : index
    %6 = vector.load %arg9[%c0_4, %c0_5, %c0_6, %c0_7] : memref<1x1x40x1xf32, #tpu.memory_space<vmem>>, vector<1x1x40x1xf32>
    tpu.vector_store %arg9[%c0_4, %c0_5, %c0_6, %c0_7], %5 {strides = array<i32>} : memref<1x1x40x1xf32, #tpu.memory_space<vmem>>, vector<1x1x40x1xf32>,
    return
  }
  func.func @transform_0(%arg0: i32, %arg1: i32) -> (i32, i32, i32) {
    %c0_i32 = arith.constant 0 : i32
    %c0_i32_0 = arith.constant 0 : i32
    %c0_i32_1 = arith.constant 0 : i32
    return %arg0, %c0_i32, %c0_i32_0 : i32, i32, i32
  }
  func.func @transform_1(%arg0: i32, %arg1: i32) -> (i32, i32, i32) {
    %c0_i32 = arith.constant 0 : i32
    %c0_i32_0 = arith.constant 0 : i32
    %c0_i32_1 = arith.constant 0 : i32
    return %arg0, %c0_i32, %c0_i32_0 : i32, i32, i32
  }
  func.func @transform_2(%arg0: i32, %arg1: i32) -> (i32, i32) {
    %c0_i32 = arith.constant 0 : i32
    %c0_i32_0 = arith.constant 0 : i32
    %c0_i32_1 = arith.constant 0 : i32
    return %c0_i32, %c0_i32_0 : i32, i32
  }
  func.func @transform_3(%arg0: i32, %arg1: i32) -> (i32, i32) {
    %c0_i32 = arith.constant 0 : i32
    %c0_i32_0 = arith.constant 0 : i32
    %c0_i32_1 = arith.constant 0 : i32
    return %c0_i32, %c0_i32_0 : i32, i32
  }
  func.func @transform_4(%arg0: i32, %arg1: i32) -> (i32, i32, i32, i32) {
    %c0_i32 = arith.constant 0 : i32
    %c0_i32_0 = arith.constant 0 : i32
    %c0_i32_1 = arith.constant 0 : i32
    return %arg0, %arg1, %c0_i32, %c0_i32_0 : i32, i32, i32, i32
  }
  func.func @transform_5(%arg0: i32, %arg1: i32) -> (i32, i32, i32, i32) {
    %c0_i32 = arith.constant 0 : i32
    %c0_i32_0 = arith.constant 0 : i32
    %c0_i32_1 = arith.constant 0 : i32
    return %arg0, %arg1, %c0_i32, %c0_i32_0 : i32, i32, i32, i32
  }
  func.func @transform_6(%arg0: i32, %arg1: i32) -> (i32, i32, i32, i32) {
    %c0_i32 = arith.constant 0 : i32
    %c0_i32_0 = arith.constant 0 : i32
    %c0_i32_1 = arith.constant 0 : i32
    return %arg0, %arg1, %c0_i32, %c0_i32_0 : i32, i32, i32, i32
  }
  func.func @transform_7(%arg0: i32, %arg1: i32) -> (i32, i32, i32, i32) {
    %c0_i32 = arith.constant 0 : i32
    %c0_i32_0 = arith.constant 0 : i32
    %c0_i32_1 = arith.constant 0 : i32
    return %arg0, %arg1, %c0_i32, %c0_i32_0 : i32, i32, i32, i32
  }
}

module attributes {stable_mosaic.version = 11 : i64} {
  func.func @_bn_pool_relu_kernel(%arg0: i32, %arg1: memref<1x20x40x10xf32, #tpu.memory_space<vmem>>, %arg2: memref<1x20x40x10xf32, #tpu.memory_space<vmem>>, %arg3: memref<40x1xf32, #tpu.memory_space<vmem>>, %arg4: memref<40x1xf32, #tpu.memory_space<vmem>>, %arg5: memref<1x10x40x10xf32, #tpu.memory_space<vmem>>) attributes {dimension_semantics = [#tpu.dimension_semantics<parallel>], iteration_bounds = array<i64: 2>, scalar_prefetch = 0 : i64, scratch_operands = 0 : i64, tpu.core_type = #tpu.core_type<tc>, window_params = [{transform_indices = @transform_0, window_bounds = array<i64: 1, 20, 40, 10>}, {transform_indices = @transform_1, window_bounds = array<i64: 1, 20, 40, 10>}, {pipeline_mode = #tpu.pipeline_mode<synchronous>, transform_indices = @transform_2, window_bounds = array<i64: 40, 1>}, {pipeline_mode = #tpu.pipeline_mode<synchronous>, transform_indices = @transform_3, window_bounds = array<i64: 40, 1>}, {transform_indices = @transform_4, window_bounds = array<i64: 1, 10, 40, 10>}]} {
    %c0_i32 = arith.constant 0 : i32
    %c10_i32 = arith.constant 10 : i32
    %0 = arith.addi %c0_i32, %c10_i32 : i32
    %c1_i32 = arith.constant 1 : i32
    scf.for %arg6 = %c0_i32 to %0 step %c1_i32  : i32 {
      %c0 = arith.constant 0 : index
      %c0_1 = arith.constant 0 : index
      %1 = vector.load %arg3[%c0, %c0_1] : memref<40x1xf32, #tpu.memory_space<vmem>>, vector<40x1xf32>
      %2 = vector.shape_cast %1 : vector<40x1xf32> to vector<1x40x1xf32>
      %c0_2 = arith.constant 0 : index
      %c0_3 = arith.constant 0 : index
      %3 = vector.load %arg4[%c0_2, %c0_3] : memref<40x1xf32, #tpu.memory_space<vmem>>, vector<40x1xf32>
      %4 = vector.shape_cast %3 : vector<40x1xf32> to vector<1x40x1xf32>
      %c2_i32 = arith.constant 2 : i32
      %5 = arith.muli %c2_i32, %arg6 : i32
      %c0_4 = arith.constant 0 : index
      %6 = arith.index_cast %5 : i32 to index
      %c0_5 = arith.constant 0 : index
      %c0_6 = arith.constant 0 : index
      %7 = vector.load %arg1[%c0_4, %6, %c0_5, %c0_6] : memref<1x20x40x10xf32, #tpu.memory_space<vmem>>, vector<1x2x40x10xf32>
      %8 = vector.shape_cast %7 : vector<1x2x40x10xf32> to vector<2x40x10xf32>
      %c2_i32_7 = arith.constant 2 : i32
      %9 = arith.muli %c2_i32_7, %arg6 : i32
      %c0_8 = arith.constant 0 : index
      %10 = arith.index_cast %9 : i32 to index
      %c0_9 = arith.constant 0 : index
      %c0_10 = arith.constant 0 : index
      %11 = vector.load %arg2[%c0_8, %10, %c0_9, %c0_10] : memref<1x20x40x10xf32, #tpu.memory_space<vmem>>, vector<1x2x40x10xf32>
      %12 = vector.shape_cast %11 : vector<1x2x40x10xf32> to vector<2x40x10xf32>
      %13 = vector.broadcast %2 : vector<1x40x1xf32> to vector<2x40x10xf32>
      %14 = arith.mulf %8, %13 : vector<2x40x10xf32>
      %15 = vector.broadcast %4 : vector<1x40x1xf32> to vector<2x40x10xf32>
      %16 = arith.addf %14, %15 : vector<2x40x10xf32>
      %17 = vector.broadcast %2 : vector<1x40x1xf32> to vector<2x40x10xf32>
      %18 = arith.mulf %12, %17 : vector<2x40x10xf32>
      %19 = vector.broadcast %4 : vector<1x40x1xf32> to vector<2x40x10xf32>
      %20 = arith.addf %18, %19 : vector<2x40x10xf32>
      %21 = arith.maximumf %16, %20 : vector<2x40x10xf32>
      %22 = vector.extract_strided_slice %21 {offsets = [0, 0, 0], sizes = [1, 40, 10], strides = [1, 1, 1]} : vector<2x40x10xf32> to vector<1x40x10xf32>
      %23 = vector.shape_cast %22 : vector<1x40x10xf32> to vector<40x10xf32>
      %24 = vector.extract_strided_slice %21 {offsets = [1, 0, 0], sizes = [1, 40, 10], strides = [1, 1, 1]} : vector<2x40x10xf32> to vector<1x40x10xf32>
      %25 = vector.shape_cast %24 : vector<1x40x10xf32> to vector<40x10xf32>
      %26 = arith.maximumf %23, %25 : vector<40x10xf32>
      %cst = arith.constant 0.000000e+00 : f32
      %27 = vector.broadcast %cst : f32 to vector<40x10xf32>
      %28 = arith.maximumf %26, %27 : vector<40x10xf32>
      %c0_11 = arith.constant 0 : index
      %29 = arith.index_cast %arg6 : i32 to index
      %c0_12 = arith.constant 0 : index
      %c0_13 = arith.constant 0 : index
      %30 = vector.load %arg5[%c0_11, %29, %c0_12, %c0_13] : memref<1x10x40x10xf32, #tpu.memory_space<vmem>>, vector<1x1x40x10xf32>
      %31 = vector.shape_cast %30 : vector<1x1x40x10xf32> to vector<40x10xf32>
      %32 = vector.shape_cast %28 : vector<40x10xf32> to vector<1x1x40x10xf32>
      tpu.vector_store %arg5[%c0_11, %29, %c0_12, %c0_13], %32 {strides = array<i32>} : memref<1x10x40x10xf32, #tpu.memory_space<vmem>>, vector<1x1x40x10xf32>,
    }
    %c10_i32_0 = arith.constant 10 : i32
    return
  }
  func.func @transform_0(%arg0: i32) -> (i32, i32, i32, i32) {
    %c0_i32 = arith.constant 0 : i32
    %c0_i32_0 = arith.constant 0 : i32
    %c0_i32_1 = arith.constant 0 : i32
    %c0_i32_2 = arith.constant 0 : i32
    return %arg0, %c0_i32, %c0_i32_0, %c0_i32_1 : i32, i32, i32, i32
  }
  func.func @transform_1(%arg0: i32) -> (i32, i32, i32, i32) {
    %c0_i32 = arith.constant 0 : i32
    %c0_i32_0 = arith.constant 0 : i32
    %c0_i32_1 = arith.constant 0 : i32
    %c0_i32_2 = arith.constant 0 : i32
    return %arg0, %c0_i32, %c0_i32_0, %c0_i32_1 : i32, i32, i32, i32
  }
  func.func @transform_2(%arg0: i32) -> (i32, i32) {
    %c0_i32 = arith.constant 0 : i32
    %c0_i32_0 = arith.constant 0 : i32
    %c0_i32_1 = arith.constant 0 : i32
    return %c0_i32, %c0_i32_0 : i32, i32
  }
  func.func @transform_3(%arg0: i32) -> (i32, i32) {
    %c0_i32 = arith.constant 0 : i32
    %c0_i32_0 = arith.constant 0 : i32
    %c0_i32_1 = arith.constant 0 : i32
    return %c0_i32, %c0_i32_0 : i32, i32
  }
  func.func @transform_4(%arg0: i32) -> (i32, i32, i32, i32) {
    %c0_i32 = arith.constant 0 : i32
    %c0_i32_0 = arith.constant 0 : i32
    %c0_i32_1 = arith.constant 0 : i32
    %c0_i32_2 = arith.constant 0 : i32
    return %arg0, %c0_i32, %c0_i32_0, %c0_i32_1 : i32, i32, i32, i32
  }
}

module attributes {stable_mosaic.version = 11 : i64} {
  func.func @_conv_stats_kernel(%arg0: i32, %arg1: i32, %arg2: memref<1x2080x3xbf16, #tpu.memory_space<vmem>>, %arg3: memref<1x2080x3xbf16, #tpu.memory_space<vmem>>, %arg4: memref<80x1040xbf16, #tpu.memory_space<vmem>>, %arg5: memref<80x1xf32, #tpu.memory_space<vmem>>, %arg6: memref<1x6x80x3xf32, #tpu.memory_space<vmem>>, %arg7: memref<1x6x80x3xf32, #tpu.memory_space<vmem>>, %arg8: memref<1x1x80x1xf32, #tpu.memory_space<vmem>>, %arg9: memref<1x1x80x1xf32, #tpu.memory_space<vmem>>) attributes {dimension_semantics = [#tpu.dimension_semantics<parallel>, #tpu.dimension_semantics<parallel>], iteration_bounds = array<i64: 2, 1>, scalar_prefetch = 0 : i64, scratch_operands = 0 : i64, tpu.core_type = #tpu.core_type<tc>, window_params = [{transform_indices = @transform_0, window_bounds = array<i64: 1, 2080, 3>}, {transform_indices = @transform_1, window_bounds = array<i64: 1, 2080, 3>}, {pipeline_mode = #tpu.pipeline_mode<synchronous>, transform_indices = @transform_2, window_bounds = array<i64: 80, 1040>}, {pipeline_mode = #tpu.pipeline_mode<synchronous>, transform_indices = @transform_3, window_bounds = array<i64: 80, 1>}, {transform_indices = @transform_4, window_bounds = array<i64: 1, 6, 80, 3>}, {transform_indices = @transform_5, window_bounds = array<i64: 1, 6, 80, 3>}, {transform_indices = @transform_6, window_bounds = array<i64: 1, 1, 80, 1>}, {transform_indices = @transform_7, window_bounds = array<i64: 1, 1, 80, 1>}]} {
    %cst = arith.constant 0.000000e+00 : f32
    %0 = vector.broadcast %cst : f32 to vector<80x1xf32>
    %c0_i32 = arith.constant 0 : i32
    %c6_i32 = arith.constant 6 : i32
    %1 = arith.addi %c0_i32, %c6_i32 : i32
    %c1_i32 = arith.constant 1 : i32
    %2:2 = scf.for %arg10 = %c0_i32 to %1 step %c1_i32 iter_args(%arg11 = %0, %arg12 = %0) -> (vector<80x1xf32>, vector<80x1xf32>)  : i32 {
      %c0_8 = arith.constant 0 : index
      %c0_9 = arith.constant 0 : index
      %7 = vector.load %arg5[%c0_8, %c0_9] : memref<80x1xf32, #tpu.memory_space<vmem>>, vector<80x1xf32>
      %c6_i32_10 = arith.constant 6 : i32
      %8 = arith.muli %arg1, %c6_i32_10 : i32
      %9 = arith.addi %8, %arg10 : i32
      %c208_i32 = arith.constant 208 : i32
      %10 = arith.muli %9, %c208_i32 : i32
      %11 = tpu.assume_multiple %10, 16 : i32
      %cst_11 = arith.constant 0.000000e+00 : f32
      %12 = vector.broadcast %cst_11 : f32 to vector<80x3xf32>
      %cst_12 = arith.constant 0.000000e+00 : f32
      %13 = vector.broadcast %cst_12 : f32 to vector<80x3xf32>
      %c0_13 = arith.constant 0 : index
      %c0_14 = arith.constant 0 : index
      %14 = vector.load %arg4[%c0_13, %c0_14] : memref<80x1040xbf16, #tpu.memory_space<vmem>>, vector<80x512xbf16>
      %c0_i32_15 = arith.constant 0 : i32
      %15 = arith.addi %11, %c0_i32_15 : i32
      %c0_16 = arith.constant 0 : index
      %16 = arith.index_cast %15 : i32 to index
      %c0_17 = arith.constant 0 : index
      %17 = vector.load %arg2[%c0_16, %16, %c0_17] : memref<1x2080x3xbf16, #tpu.memory_space<vmem>>, vector<1x512x3xbf16>
      %18 = vector.shape_cast %17 : vector<1x512x3xbf16> to vector<512x3xbf16>
      %c0_i32_18 = arith.constant 0 : i32
      %19 = arith.addi %11, %c0_i32_18 : i32
      %c0_19 = arith.constant 0 : index
      %20 = arith.index_cast %19 : i32 to index
      %c0_20 = arith.constant 0 : index
      %21 = vector.load %arg3[%c0_19, %20, %c0_20] : memref<1x2080x3xbf16, #tpu.memory_space<vmem>>, vector<1x512x3xbf16>
      %22 = vector.shape_cast %21 : vector<1x512x3xbf16> to vector<512x3xbf16>
      %cst_21 = arith.constant dense<0.000000e+00> : vector<80x3xf32>
      %23 = tpu.matmul %14, %18, %cst_21 {dimension_numbers = #tpu.dot_dimension_numbers<[1], [0], [0], [1], [0, 0, 1, 1], [], []>} : vector<80x512xbf16>, vector<512x3xbf16>, vector<80x3xf32> -> vector<80x3xf32>
      %24 = arith.addf %12, %23 : vector<80x3xf32>
      %cst_22 = arith.constant dense<0.000000e+00> : vector<80x3xf32>
      %25 = tpu.matmul %14, %22, %cst_22 {dimension_numbers = #tpu.dot_dimension_numbers<[1], [0], [0], [1], [0, 0, 1, 1], [], []>} : vector<80x512xbf16>, vector<512x3xbf16>, vector<80x3xf32> -> vector<80x3xf32>
      %26 = arith.addf %13, %25 : vector<80x3xf32>
      %c0_23 = arith.constant 0 : index
      %c512 = arith.constant 512 : index
      %27 = vector.load %arg4[%c0_23, %c512] : memref<80x1040xbf16, #tpu.memory_space<vmem>>, vector<80x512xbf16>
      %c512_i32 = arith.constant 512 : i32
      %28 = arith.addi %11, %c512_i32 : i32
      %c0_24 = arith.constant 0 : index
      %29 = arith.index_cast %28 : i32 to index
      %c0_25 = arith.constant 0 : index
      %30 = vector.load %arg2[%c0_24, %29, %c0_25] : memref<1x2080x3xbf16, #tpu.memory_space<vmem>>, vector<1x512x3xbf16>
      %31 = vector.shape_cast %30 : vector<1x512x3xbf16> to vector<512x3xbf16>
      %c512_i32_26 = arith.constant 512 : i32
      %32 = arith.addi %11, %c512_i32_26 : i32
      %c0_27 = arith.constant 0 : index
      %33 = arith.index_cast %32 : i32 to index
      %c0_28 = arith.constant 0 : index
      %34 = vector.load %arg3[%c0_27, %33, %c0_28] : memref<1x2080x3xbf16, #tpu.memory_space<vmem>>, vector<1x512x3xbf16>
      %35 = vector.shape_cast %34 : vector<1x512x3xbf16> to vector<512x3xbf16>
      %cst_29 = arith.constant dense<0.000000e+00> : vector<80x3xf32>
      %36 = tpu.matmul %27, %31, %cst_29 {dimension_numbers = #tpu.dot_dimension_numbers<[1], [0], [0], [1], [0, 0, 1, 1], [], []>} : vector<80x512xbf16>, vector<512x3xbf16>, vector<80x3xf32> -> vector<80x3xf32>
      %37 = arith.addf %24, %36 : vector<80x3xf32>
      %cst_30 = arith.constant dense<0.000000e+00> : vector<80x3xf32>
      %38 = tpu.matmul %27, %35, %cst_30 {dimension_numbers = #tpu.dot_dimension_numbers<[1], [0], [0], [1], [0, 0, 1, 1], [], []>} : vector<80x512xbf16>, vector<512x3xbf16>, vector<80x3xf32> -> vector<80x3xf32>
      %39 = arith.addf %26, %38 : vector<80x3xf32>
      %c0_31 = arith.constant 0 : index
      %c1024 = arith.constant 1024 : index
      %40 = vector.load %arg4[%c0_31, %c1024] : memref<80x1040xbf16, #tpu.memory_space<vmem>>, vector<80x16xbf16>
      %c1024_i32 = arith.constant 1024 : i32
      %41 = arith.addi %11, %c1024_i32 : i32
      %c0_32 = arith.constant 0 : index
      %42 = arith.index_cast %41 : i32 to index
      %c0_33 = arith.constant 0 : index
      %43 = vector.load %arg2[%c0_32, %42, %c0_33] : memref<1x2080x3xbf16, #tpu.memory_space<vmem>>, vector<1x16x3xbf16>
      %44 = vector.shape_cast %43 : vector<1x16x3xbf16> to vector<16x3xbf16>
      %c1024_i32_34 = arith.constant 1024 : i32
      %45 = arith.addi %11, %c1024_i32_34 : i32
      %c0_35 = arith.constant 0 : index
      %46 = arith.index_cast %45 : i32 to index
      %c0_36 = arith.constant 0 : index
      %47 = vector.load %arg3[%c0_35, %46, %c0_36] : memref<1x2080x3xbf16, #tpu.memory_space<vmem>>, vector<1x16x3xbf16>
      %48 = vector.shape_cast %47 : vector<1x16x3xbf16> to vector<16x3xbf16>
      %cst_37 = arith.constant dense<0.000000e+00> : vector<80x3xf32>
      %49 = tpu.matmul %40, %44, %cst_37 {dimension_numbers = #tpu.dot_dimension_numbers<[1], [0], [0], [1], [0, 0, 1, 1], [], []>} : vector<80x16xbf16>, vector<16x3xbf16>, vector<80x3xf32> -> vector<80x3xf32>
      %50 = arith.addf %37, %49 : vector<80x3xf32>
      %cst_38 = arith.constant dense<0.000000e+00> : vector<80x3xf32>
      %51 = tpu.matmul %40, %48, %cst_38 {dimension_numbers = #tpu.dot_dimension_numbers<[1], [0], [0], [1], [0, 0, 1, 1], [], []>} : vector<80x16xbf16>, vector<16x3xbf16>, vector<80x3xf32> -> vector<80x3xf32>
      %52 = arith.addf %39, %51 : vector<80x3xf32>
      %53 = vector.broadcast %7 : vector<80x1xf32> to vector<80x3xf32>
      %54 = arith.addf %50, %53 : vector<80x3xf32>
      %55 = vector.broadcast %7 : vector<80x1xf32> to vector<80x3xf32>
      %56 = arith.addf %52, %55 : vector<80x3xf32>
      %c0_39 = arith.constant 0 : index
      %57 = arith.index_cast %arg10 : i32 to index
      %c0_40 = arith.constant 0 : index
      %c0_41 = arith.constant 0 : index
      %58 = vector.load %arg6[%c0_39, %57, %c0_40, %c0_41] : memref<1x6x80x3xf32, #tpu.memory_space<vmem>>, vector<1x1x80x3xf32>
      %59 = vector.shape_cast %58 : vector<1x1x80x3xf32> to vector<80x3xf32>
      %60 = vector.shape_cast %54 : vector<80x3xf32> to vector<1x1x80x3xf32>
      tpu.vector_store %arg6[%c0_39, %57, %c0_40, %c0_41], %60 {strides = array<i32>} : memref<1x6x80x3xf32, #tpu.memory_space<vmem>>, vector<1x1x80x3xf32>,
      %c0_42 = arith.constant 0 : index
      %61 = arith.index_cast %arg10 : i32 to index
      %c0_43 = arith.constant 0 : index
      %c0_44 = arith.constant 0 : index
      %62 = vector.load %arg7[%c0_42, %61, %c0_43, %c0_44] : memref<1x6x80x3xf32, #tpu.memory_space<vmem>>, vector<1x1x80x3xf32>
      %63 = vector.shape_cast %62 : vector<1x1x80x3xf32> to vector<80x3xf32>
      %64 = vector.shape_cast %56 : vector<80x3xf32> to vector<1x1x80x3xf32>
      tpu.vector_store %arg7[%c0_42, %61, %c0_43, %c0_44], %64 {strides = array<i32>} : memref<1x6x80x3xf32, #tpu.memory_space<vmem>>, vector<1x1x80x3xf32>,
      %cst_45 = arith.constant dense<0.000000e+00> : vector<80xf32>
      %65 = vector.multi_reduction <add>, %54, %cst_45 [1] : vector<80x3xf32> to vector<80xf32>
      %66 = vector.shape_cast %65 : vector<80xf32> to vector<80x1xf32>
      %67 = arith.addf %arg11, %66 : vector<80x1xf32>
      %cst_46 = arith.constant dense<0.000000e+00> : vector<80xf32>
      %68 = vector.multi_reduction <add>, %56, %cst_46 [1] : vector<80x3xf32> to vector<80xf32>
      %69 = vector.shape_cast %68 : vector<80xf32> to vector<80x1xf32>
      %70 = arith.addf %67, %69 : vector<80x1xf32>
      %71 = arith.mulf %54, %54 : vector<80x3xf32>
      %cst_47 = arith.constant dense<0.000000e+00> : vector<80xf32>
      %72 = vector.multi_reduction <add>, %71, %cst_47 [1] : vector<80x3xf32> to vector<80xf32>
      %73 = vector.shape_cast %72 : vector<80xf32> to vector<80x1xf32>
      %74 = arith.addf %arg12, %73 : vector<80x1xf32>
      %75 = arith.mulf %56, %56 : vector<80x3xf32>
      %cst_48 = arith.constant dense<0.000000e+00> : vector<80xf32>
      %76 = vector.multi_reduction <add>, %75, %cst_48 [1] : vector<80x3xf32> to vector<80xf32>
      %77 = vector.shape_cast %76 : vector<80xf32> to vector<80x1xf32>
      %78 = arith.addf %74, %77 : vector<80x1xf32>
      scf.yield %70, %78 : vector<80x1xf32>, vector<80x1xf32>
    }
    %c6_i32_0 = arith.constant 6 : i32
    %3 = vector.shape_cast %2#0 : vector<80x1xf32> to vector<1x1x80x1xf32>
    %c0 = arith.constant 0 : index
    %c0_1 = arith.constant 0 : index
    %c0_2 = arith.constant 0 : index
    %c0_3 = arith.constant 0 : index
    %4 = vector.load %arg8[%c0, %c0_1, %c0_2, %c0_3] : memref<1x1x80x1xf32, #tpu.memory_space<vmem>>, vector<1x1x80x1xf32>
    tpu.vector_store %arg8[%c0, %c0_1, %c0_2, %c0_3], %3 {strides = array<i32>} : memref<1x1x80x1xf32, #tpu.memory_space<vmem>>, vector<1x1x80x1xf32>,
    %5 = vector.shape_cast %2#1 : vector<80x1xf32> to vector<1x1x80x1xf32>
    %c0_4 = arith.constant 0 : index
    %c0_5 = arith.constant 0 : index
    %c0_6 = arith.constant 0 : index
    %c0_7 = arith.constant 0 : index
    %6 = vector.load %arg9[%c0_4, %c0_5, %c0_6, %c0_7] : memref<1x1x80x1xf32, #tpu.memory_space<vmem>>, vector<1x1x80x1xf32>
    tpu.vector_store %arg9[%c0_4, %c0_5, %c0_6, %c0_7], %5 {strides = array<i32>} : memref<1x1x80x1xf32, #tpu.memory_space<vmem>>, vector<1x1x80x1xf32>,
    return
  }
  func.func @transform_0(%arg0: i32, %arg1: i32) -> (i32, i32, i32) {
    %c0_i32 = arith.constant 0 : i32
    %c0_i32_0 = arith.constant 0 : i32
    %c0_i32_1 = arith.constant 0 : i32
    return %arg0, %c0_i32, %c0_i32_0 : i32, i32, i32
  }
  func.func @transform_1(%arg0: i32, %arg1: i32) -> (i32, i32, i32) {
    %c0_i32 = arith.constant 0 : i32
    %c0_i32_0 = arith.constant 0 : i32
    %c0_i32_1 = arith.constant 0 : i32
    return %arg0, %c0_i32, %c0_i32_0 : i32, i32, i32
  }
  func.func @transform_2(%arg0: i32, %arg1: i32) -> (i32, i32) {
    %c0_i32 = arith.constant 0 : i32
    %c0_i32_0 = arith.constant 0 : i32
    %c0_i32_1 = arith.constant 0 : i32
    return %c0_i32, %c0_i32_0 : i32, i32
  }
  func.func @transform_3(%arg0: i32, %arg1: i32) -> (i32, i32) {
    %c0_i32 = arith.constant 0 : i32
    %c0_i32_0 = arith.constant 0 : i32
    %c0_i32_1 = arith.constant 0 : i32
    return %c0_i32, %c0_i32_0 : i32, i32
  }
  func.func @transform_4(%arg0: i32, %arg1: i32) -> (i32, i32, i32, i32) {
    %c0_i32 = arith.constant 0 : i32
    %c0_i32_0 = arith.constant 0 : i32
    %c0_i32_1 = arith.constant 0 : i32
    return %arg0, %arg1, %c0_i32, %c0_i32_0 : i32, i32, i32, i32
  }
  func.func @transform_5(%arg0: i32, %arg1: i32) -> (i32, i32, i32, i32) {
    %c0_i32 = arith.constant 0 : i32
    %c0_i32_0 = arith.constant 0 : i32
    %c0_i32_1 = arith.constant 0 : i32
    return %arg0, %arg1, %c0_i32, %c0_i32_0 : i32, i32, i32, i32
  }
  func.func @transform_6(%arg0: i32, %arg1: i32) -> (i32, i32, i32, i32) {
    %c0_i32 = arith.constant 0 : i32
    %c0_i32_0 = arith.constant 0 : i32
    %c0_i32_1 = arith.constant 0 : i32
    return %arg0, %arg1, %c0_i32, %c0_i32_0 : i32, i32, i32, i32
  }
  func.func @transform_7(%arg0: i32, %arg1: i32) -> (i32, i32, i32, i32) {
    %c0_i32 = arith.constant 0 : i32
    %c0_i32_0 = arith.constant 0 : i32
    %c0_i32_1 = arith.constant 0 : i32
    return %arg0, %arg1, %c0_i32, %c0_i32_0 : i32, i32, i32, i32
  }
}

module attributes {stable_mosaic.version = 11 : i64} {
  func.func @_bn_pool_relu_kernel(%arg0: i32, %arg1: memref<1x6x80x3xf32, #tpu.memory_space<vmem>>, %arg2: memref<1x6x80x3xf32, #tpu.memory_space<vmem>>, %arg3: memref<80x1xf32, #tpu.memory_space<vmem>>, %arg4: memref<80x1xf32, #tpu.memory_space<vmem>>, %arg5: memref<1x3x80x3xf32, #tpu.memory_space<vmem>>) attributes {dimension_semantics = [#tpu.dimension_semantics<parallel>], iteration_bounds = array<i64: 2>, scalar_prefetch = 0 : i64, scratch_operands = 0 : i64, tpu.core_type = #tpu.core_type<tc>, window_params = [{transform_indices = @transform_0, window_bounds = array<i64: 1, 6, 80, 3>}, {transform_indices = @transform_1, window_bounds = array<i64: 1, 6, 80, 3>}, {pipeline_mode = #tpu.pipeline_mode<synchronous>, transform_indices = @transform_2, window_bounds = array<i64: 80, 1>}, {pipeline_mode = #tpu.pipeline_mode<synchronous>, transform_indices = @transform_3, window_bounds = array<i64: 80, 1>}, {transform_indices = @transform_4, window_bounds = array<i64: 1, 3, 80, 3>}]} {
    %c0_i32 = arith.constant 0 : i32
    %c3_i32 = arith.constant 3 : i32
    %0 = arith.addi %c0_i32, %c3_i32 : i32
    %c1_i32 = arith.constant 1 : i32
    scf.for %arg6 = %c0_i32 to %0 step %c1_i32  : i32 {
      %c0 = arith.constant 0 : index
      %c0_1 = arith.constant 0 : index
      %1 = vector.load %arg3[%c0, %c0_1] : memref<80x1xf32, #tpu.memory_space<vmem>>, vector<80x1xf32>
      %2 = vector.shape_cast %1 : vector<80x1xf32> to vector<1x80x1xf32>
      %c0_2 = arith.constant 0 : index
      %c0_3 = arith.constant 0 : index
      %3 = vector.load %arg4[%c0_2, %c0_3] : memref<80x1xf32, #tpu.memory_space<vmem>>, vector<80x1xf32>
      %4 = vector.shape_cast %3 : vector<80x1xf32> to vector<1x80x1xf32>
      %c2_i32 = arith.constant 2 : i32
      %5 = arith.muli %c2_i32, %arg6 : i32
      %c0_4 = arith.constant 0 : index
      %6 = arith.index_cast %5 : i32 to index
      %c0_5 = arith.constant 0 : index
      %c0_6 = arith.constant 0 : index
      %7 = vector.load %arg1[%c0_4, %6, %c0_5, %c0_6] : memref<1x6x80x3xf32, #tpu.memory_space<vmem>>, vector<1x2x80x3xf32>
      %8 = vector.shape_cast %7 : vector<1x2x80x3xf32> to vector<2x80x3xf32>
      %c2_i32_7 = arith.constant 2 : i32
      %9 = arith.muli %c2_i32_7, %arg6 : i32
      %c0_8 = arith.constant 0 : index
      %10 = arith.index_cast %9 : i32 to index
      %c0_9 = arith.constant 0 : index
      %c0_10 = arith.constant 0 : index
      %11 = vector.load %arg2[%c0_8, %10, %c0_9, %c0_10] : memref<1x6x80x3xf32, #tpu.memory_space<vmem>>, vector<1x2x80x3xf32>
      %12 = vector.shape_cast %11 : vector<1x2x80x3xf32> to vector<2x80x3xf32>
      %13 = vector.broadcast %2 : vector<1x80x1xf32> to vector<2x80x3xf32>
      %14 = arith.mulf %8, %13 : vector<2x80x3xf32>
      %15 = vector.broadcast %4 : vector<1x80x1xf32> to vector<2x80x3xf32>
      %16 = arith.addf %14, %15 : vector<2x80x3xf32>
      %17 = vector.broadcast %2 : vector<1x80x1xf32> to vector<2x80x3xf32>
      %18 = arith.mulf %12, %17 : vector<2x80x3xf32>
      %19 = vector.broadcast %4 : vector<1x80x1xf32> to vector<2x80x3xf32>
      %20 = arith.addf %18, %19 : vector<2x80x3xf32>
      %21 = arith.maximumf %16, %20 : vector<2x80x3xf32>
      %22 = vector.extract_strided_slice %21 {offsets = [0, 0, 0], sizes = [1, 80, 3], strides = [1, 1, 1]} : vector<2x80x3xf32> to vector<1x80x3xf32>
      %23 = vector.shape_cast %22 : vector<1x80x3xf32> to vector<80x3xf32>
      %24 = vector.extract_strided_slice %21 {offsets = [1, 0, 0], sizes = [1, 80, 3], strides = [1, 1, 1]} : vector<2x80x3xf32> to vector<1x80x3xf32>
      %25 = vector.shape_cast %24 : vector<1x80x3xf32> to vector<80x3xf32>
      %26 = arith.maximumf %23, %25 : vector<80x3xf32>
      %cst = arith.constant 0.000000e+00 : f32
      %27 = vector.broadcast %cst : f32 to vector<80x3xf32>
      %28 = arith.maximumf %26, %27 : vector<80x3xf32>
      %c0_11 = arith.constant 0 : index
      %29 = arith.index_cast %arg6 : i32 to index
      %c0_12 = arith.constant 0 : index
      %c0_13 = arith.constant 0 : index
      %30 = vector.load %arg5[%c0_11, %29, %c0_12, %c0_13] : memref<1x3x80x3xf32, #tpu.memory_space<vmem>>, vector<1x1x80x3xf32>
      %31 = vector.shape_cast %30 : vector<1x1x80x3xf32> to vector<80x3xf32>
      %32 = vector.shape_cast %28 : vector<80x3xf32> to vector<1x1x80x3xf32>
      tpu.vector_store %arg5[%c0_11, %29, %c0_12, %c0_13], %32 {strides = array<i32>} : memref<1x3x80x3xf32, #tpu.memory_space<vmem>>, vector<1x1x80x3xf32>,
    }
    %c3_i32_0 = arith.constant 3 : i32
    return
  }
  func.func @transform_0(%arg0: i32) -> (i32, i32, i32, i32) {
    %c0_i32 = arith.constant 0 : i32
    %c0_i32_0 = arith.constant 0 : i32
    %c0_i32_1 = arith.constant 0 : i32
    %c0_i32_2 = arith.constant 0 : i32
    return %arg0, %c0_i32, %c0_i32_0, %c0_i32_1 : i32, i32, i32, i32
  }
  func.func @transform_1(%arg0: i32) -> (i32, i32, i32, i32) {
    %c0_i32 = arith.constant 0 : i32
    %c0_i32_0 = arith.constant 0 : i32
    %c0_i32_1 = arith.constant 0 : i32
    %c0_i32_2 = arith.constant 0 : i32
    return %arg0, %c0_i32, %c0_i32_0, %c0_i32_1 : i32, i32, i32, i32
  }
  func.func @transform_2(%arg0: i32) -> (i32, i32) {
    %c0_i32 = arith.constant 0 : i32
    %c0_i32_0 = arith.constant 0 : i32
    %c0_i32_1 = arith.constant 0 : i32
    return %c0_i32, %c0_i32_0 : i32, i32
  }
  func.func @transform_3(%arg0: i32) -> (i32, i32) {
    %c0_i32 = arith.constant 0 : i32
    %c0_i32_0 = arith.constant 0 : i32
    %c0_i32_1 = arith.constant 0 : i32
    return %c0_i32, %c0_i32_0 : i32, i32
  }
  func.func @transform_4(%arg0: i32) -> (i32, i32, i32, i32) {
    %c0_i32 = arith.constant 0 : i32
    %c0_i32_0 = arith.constant 0 : i32
    %c0_i32_1 = arith.constant 0 : i32
    %c0_i32_2 = arith.constant 0 : i32
    return %arg0, %c0_i32, %c0_i32_0, %c0_i32_1 : i32, i32, i32, i32
  }
}

module attributes {stable_mosaic.version = 11 : i64} {
  func.func @_fc_kernel(%arg0: i32, %arg1: memref<2x720xbf16, #tpu.memory_space<vmem>>, %arg2: memref<720x400xbf16, #tpu.memory_space<vmem>>, %arg3: memref<1x400xf32, #tpu.memory_space<vmem>>, %arg4: memref<1x400xf32, #tpu.memory_space<vmem>>, %arg5: memref<1x1xf32, #tpu.memory_space<vmem>>, %arg6: memref<2x1xf32, #tpu.memory_space<vmem>>) attributes {dimension_semantics = [#tpu.dimension_semantics<arbitrary>], iteration_bounds = array<i64: 1>, scalar_prefetch = 0 : i64, scratch_operands = 0 : i64, tpu.core_type = #tpu.core_type<tc>, window_params = [{pipeline_mode = #tpu.pipeline_mode<synchronous>, transform_indices = @transform_0, window_bounds = array<i64: 2, 720>}, {pipeline_mode = #tpu.pipeline_mode<synchronous>, transform_indices = @transform_1, window_bounds = array<i64: 720, 400>}, {pipeline_mode = #tpu.pipeline_mode<synchronous>, transform_indices = @transform_2, window_bounds = array<i64: 1, 400>}, {pipeline_mode = #tpu.pipeline_mode<synchronous>, transform_indices = @transform_3, window_bounds = array<i64: 1, 400>}, {pipeline_mode = #tpu.pipeline_mode<synchronous>, transform_indices = @transform_4, window_bounds = array<i64: 1, 1>}, {pipeline_mode = #tpu.pipeline_mode<synchronous>, transform_indices = @transform_5, window_bounds = array<i64: 2, 1>}]} {
    %c0 = arith.constant 0 : index
    %c0_0 = arith.constant 0 : index
    %0 = vector.load %arg1[%c0, %c0_0] : memref<2x720xbf16, #tpu.memory_space<vmem>>, vector<2x720xbf16>
    %c0_1 = arith.constant 0 : index
    %c0_2 = arith.constant 0 : index
    %1 = vector.load %arg2[%c0_1, %c0_2] : memref<720x400xbf16, #tpu.memory_space<vmem>>, vector<720x400xbf16>
    %cst = arith.constant dense<0.000000e+00> : vector<2x400xf32>
    %2 = tpu.matmul %0, %1, %cst {dimension_numbers = #tpu.dot_dimension_numbers<[1], [0], [0], [1], [0, 0, 1, 1], [], []>} : vector<2x720xbf16>, vector<720x400xbf16>, vector<2x400xf32> -> vector<2x400xf32>
    %c0_3 = arith.constant 0 : index
    %c0_4 = arith.constant 0 : index
    %3 = vector.load %arg3[%c0_3, %c0_4] : memref<1x400xf32, #tpu.memory_space<vmem>>, vector<1x400xf32>
    %4 = vector.broadcast %3 : vector<1x400xf32> to vector<2x400xf32>
    %5 = arith.addf %2, %4 : vector<2x400xf32>
    %cst_5 = arith.constant 0.000000e+00 : f32
    %6 = vector.broadcast %cst_5 : f32 to vector<2x400xf32>
    %7 = arith.maximumf %5, %6 : vector<2x400xf32>
    %c0_6 = arith.constant 0 : index
    %c0_7 = arith.constant 0 : index
    %8 = vector.load %arg4[%c0_6, %c0_7] : memref<1x400xf32, #tpu.memory_space<vmem>>, vector<1x400xf32>
    %9 = vector.broadcast %8 : vector<1x400xf32> to vector<2x400xf32>
    %10 = arith.mulf %7, %9 : vector<2x400xf32>
    %cst_8 = arith.constant dense<0.000000e+00> : vector<2xf32>
    %11 = vector.multi_reduction <add>, %10, %cst_8 [1] : vector<2x400xf32> to vector<2xf32>
    %12 = vector.shape_cast %11 : vector<2xf32> to vector<2x1xf32>
    %c0_9 = arith.constant 0 : index
    %c0_10 = arith.constant 0 : index
    %13 = vector.load %arg5[%c0_9, %c0_10] : memref<1x1xf32, #tpu.memory_space<vmem>>, vector<1x1xf32>
    %14 = vector.broadcast %13 : vector<1x1xf32> to vector<2x1xf32>
    %15 = arith.addf %12, %14 : vector<2x1xf32>
    %c0_11 = arith.constant 0 : index
    %c0_12 = arith.constant 0 : index
    %16 = vector.load %arg6[%c0_11, %c0_12] : memref<2x1xf32, #tpu.memory_space<vmem>>, vector<2x1xf32>
    tpu.vector_store %arg6[%c0_11, %c0_12], %15 {strides = array<i32>} : memref<2x1xf32, #tpu.memory_space<vmem>>, vector<2x1xf32>,
    return
  }
  func.func @transform_0(%arg0: i32) -> (i32, i32) {
    %c0_i32 = arith.constant 0 : i32
    %c0_i32_0 = arith.constant 0 : i32
    %c0_i32_1 = arith.constant 0 : i32
    return %c0_i32, %c0_i32_0 : i32, i32
  }
  func.func @transform_1(%arg0: i32) -> (i32, i32) {
    %c0_i32 = arith.constant 0 : i32
    %c0_i32_0 = arith.constant 0 : i32
    %c0_i32_1 = arith.constant 0 : i32
    return %c0_i32, %c0_i32_0 : i32, i32
  }
  func.func @transform_2(%arg0: i32) -> (i32, i32) {
    %c0_i32 = arith.constant 0 : i32
    %c0_i32_0 = arith.constant 0 : i32
    %c0_i32_1 = arith.constant 0 : i32
    return %c0_i32, %c0_i32_0 : i32, i32
  }
  func.func @transform_3(%arg0: i32) -> (i32, i32) {
    %c0_i32 = arith.constant 0 : i32
    %c0_i32_0 = arith.constant 0 : i32
    %c0_i32_1 = arith.constant 0 : i32
    return %c0_i32, %c0_i32_0 : i32, i32
  }
  func.func @transform_4(%arg0: i32) -> (i32, i32) {
    %c0_i32 = arith.constant 0 : i32
    %c0_i32_0 = arith.constant 0 : i32
    %c0_i32_1 = arith.constant 0 : i32
    return %c0_i32, %c0_i32_0 : i32, i32
  }
  func.func @transform_5(%arg0: i32) -> (i32, i32) {
    %c0_i32 = arith.constant 0 : i32
    %c0_i32_0 = arith.constant 0 : i32
    %c0_i32_1 = arith.constant 0 : i32
    return %c0_i32, %c0_i32_0 : i32, i32
  }
}

</mosaic_0001>

<llo_original>
// kernel: net1_forward.9
$region0: #{net1_forward.9}
  #allocation0 [shape = 'u32[]', space=smem, size = 0x4, offset = 0x4, fixed_abs, tag = 'smem constant byte address 0x4 - core index']
  #allocation1 [shape = 'u32[144,128]{1,0:T(1,128)}', space=vmem, size = 0x12000, scoped, tag = 'internal scratch']
  %s0 = inlined_call_operand.vmem [shape: bf16[2,2048,58], index: 0, kind: input, shape index: {}]
  %s1 = inlined_call_operand.vmem [shape: bf16[2,2048,58], index: 1, kind: input, shape index: {}]
  %s2 = inlined_call_operand.vmem [shape: bf16[10,208], index: 2, kind: input, shape index: {}]
  %s3 = inlined_call_operand.vmem [shape: f32[10,1], index: 3, kind: input, shape index: {}]
  %s4 = inlined_call_operand.vmem [shape: f32[2,116,10,58], index: 4, kind: output, shape index: {0}]
  %s5 = inlined_call_operand.vmem [shape: f32[2,116,10,58], index: 5, kind: output, shape index: {1}]
  %s6 = inlined_call_operand.vmem [shape: f32[2,2,10,1], index: 6, kind: output, shape index: {2}]
  %s7 = inlined_call_operand.vmem [shape: f32[2,2,10,1], index: 7, kind: output, shape index: {3}]
  %8 = xla_tuple %s4, %s5, %s6, %s7
  %s9 = sld [smem:[#allocation0]]
  $region80: #{net1_forward.9} parent=0
    _
  %s11 = ssub.s32 1, %s9
  %s12 = scalar_select 0, %s11, %s9
  loop: start=0, step=1, limit=6
  $region2: #{net1_forward.9} parent=0 // loop_pre_header
    _
  $region3: #{net1_forward.9} parent=0 // loop_header
    %s14 = sphi 0, %s18
    %p15 = scmp.ge.s32.totalorder %s14, 6
    %s21 = sphi 0, %s33
    %s22 = sphi 0, %s29
    %s23 = sphi 0, %s21
    %s24 = sphi 0, %s22
    %s25 = sphi 0, %s23
    %s26 = sphi 0, %s24
    %s36 = sphi 0, %s38
    %s39 = sphi 0, %s36
    %s40 = sphi 0, %s39
    %s56 = sphi 0, %s40
    %s62 = sphi 0, %s64
    %s65 = sphi 0, %s62
    %s66 = sphi 0, %s65
    %s82 = sphi 0, %s66
    %s86 = sphi 0, %s86
    %s88 = sphi 0, %s86
    %s89 = sphi 0, %s88
    %s103 = sphi 0, %s89
    %s107 = sphi 0, %s107
    %s109 = sphi 0, %s107
    %s110 = sphi 0, %s109
    %s124 = sphi 0, %s110
    %s132 = sphi 0, %s134
    %s135 = sphi 0, %s132
    %s136 = sphi 0, %s135
    %s152 = sphi 0, %s136
    %s160 = sphi 0, %s162
    %s163 = sphi 0, %s160
    %s164 = sphi 0, %s163
    %s180 = sphi 0, %s164
    %s188 = sphi 0, %s190
    %s191 = sphi 0, %s188
    %s192 = sphi 0, %s191
    %s208 = sphi 0, %s192
    %s216 = sphi 0, %s218
    %s219 = sphi 0, %s216
    %s220 = sphi 0, %s219
    %s236 = sphi 0, %s220
  $region4: #{net1_forward.9} parent=0 // loop_header_branch
    %17 = sbr.rel (%p15) target = $region8
  $region5: #{net1_forward.9} parent=0 // loop_body
    %s19 = ssub.s32 %s14, 1
    %s20 = ssub.s32 %s14, 2
    %s27 = sadd.s32 1, %s22
    %p28 = scmp.ge.s32.totalorder %s27, 2
    %s29 = scalar_select %p28, 0, %s27
    %s30 = sadd.s32 1, %s21
    %s31 = scalar_select %p28, %s30, %s21
    %p32 = scmp.ge.s32.totalorder %s31, 2
    %s33 = scalar_select %p32, 0, %s31
    %s34 = ssub.s32 %s21, %s33
    %p35 = scmp.eq.s32.totalorder %s34, 0
    %s37 = sadd.s32 %s36, 1
    %s38 = scalar_select %p35, %s36, %s37
    %p41 = pneg %p35
    %p42 = scmp.eq.s32.totalorder %s14, 3
    %p43 = por %p41, %p42
    %p44 = scmp.ne.s32.totalorder %s36, %s39
    %p45 = scmp.eq.s32.totalorder %s14, 0
    %p46 = por %p44, %p45
    %p47 = scmp.ne.s32.totalorder %s36, %s39
    %p48 = scmp.eq.s32.totalorder %s19, 3
    %p49 = por %p47, %p48
    %p50 = scmp.ne.s32.totalorder %s39, %s40
    %p51 = scmp.eq.s32.totalorder %s19, 0
    %p52 = por %p50, %p51
    %p53 = scmp.ne.s32.totalorder %s39, %s40
    %p54 = scmp.eq.s32.totalorder %s20, 3
    %p55 = por %p53, %p54
    %p57 = scmp.ne.s32.totalorder %s40, %s56
    %p58 = scmp.eq.s32.totalorder %s20, 0
    %p59 = por %p57, %p58
    %s60 = ssub.s32 %s21, %s33
    %p61 = scmp.eq.s32.totalorder %s60, 0
    %s63 = sadd.s32 %s62, 1
    %s64 = scalar_select %p61, %s62, %s63
    %p67 = pneg %p61
    %p68 = scmp.eq.s32.totalorder %s14, 3
    %p69 = por %p67, %p68
    %p70 = scmp.ne.s32.totalorder %s62, %s65
    %p71 = scmp.eq.s32.totalorder %s14, 0
    %p72 = por %p70, %p71
    %p73 = scmp.ne.s32.totalorder %s62, %s65
    %p74 = scmp.eq.s32.totalorder %s19, 3
    %p75 = por %p73, %p74
    %p76 = scmp.ne.s32.totalorder %s65, %s66
    %p77 = scmp.eq.s32.totalorder %s19, 0
    %p78 = por %p76, %p77
    %p79 = scmp.ne.s32.totalorder %s65, %s66
    %p80 = scmp.eq.s32.totalorder %s20, 3
    %p81 = por %p79, %p80
    %p83 = scmp.ne.s32.totalorder %s66, %s82
    %p84 = scmp.eq.s32.totalorder %s20, 0
    %p85 = por %p83, %p84
    %s87 = sadd.s32 %s86, 1
    %p90 = scmp.eq.s32.totalorder %s14, 3
    %p91 = scmp.ne.s32.totalorder %s86, %s88
    %p92 = scmp.eq.s32.totalorder %s14, 0
    %p93 = por %p91, %p92
    %p94 = scmp.ne.s32.totalorder %s86, %s88
    %p95 = scmp.eq.s32.totalorder %s19, 3
    %p96 = por %p94, %p95
    %p97 = scmp.ne.s32.totalorder %s88, %s89
    %p98 = scmp.eq.s32.totalorder %s19, 0
    %p99 = por %p97, %p98
    %p100 = scmp.ne.s32.totalorder %s88, %s89
    %p101 = scmp.eq.s32.totalorder %s20, 3
    %p102 = por %p100, %p101
    %p104 = scmp.ne.s32.totalorder %s89, %s103
    %p105 = scmp.eq.s32.totalorder %s20, 0
    %p106 = por %p104, %p105
    %s108 = sadd.s32 %s107, 1
    %p111 = scmp.eq.s32.totalorder %s14, 3
    %p112 = scmp.ne.s32.totalorder %s107, %s109
    %p113 = scmp.eq.s32.totalorder %s14, 0
    %p114 = por %p112, %p113
    %p115 = scmp.ne.s32.totalorder %s107, %s109
    %p116 = scmp.eq.s32.totalorder %s19, 3
    %p117 = por %p115, %p116
    %p118 = scmp.ne.s32.totalorder %s109, %s110
    %p119 = scmp.eq.s32.totalorder %s19, 0
    %p120 = por %p118, %p119
    %p121 = scmp.ne.s32.totalorder %s109, %s110
    %p122 = scmp.eq.s32.totalorder %s20, 3
    %p123 = por %p121, %p122
    %p125 = scmp.ne.s32.totalorder %s110, %s124
    %p126 = scmp.eq.s32.totalorder %s20, 0
    %p127 = por %p125, %p126
    %s128 = ssub.s32 %s21, %s33
    %s129 = ssub.s32 %s22, %s29
    %s130 = sor.u32 %s128, %s129
    %p131 = scmp.eq.s32.totalorder %s130, 0
    %s133 = sadd.s32 %s132, 1
    %s134 = scalar_select %p131, %s132, %s133
    %p137 = pneg %p131
    %p138 = scmp.eq.s32.totalorder %s14, 3
    %p139 = por %p137, %p138
    %p140 = scmp.ne.s32.totalorder %s132, %s135
    %p141 = scmp.eq.s32.totalorder %s14, 0
    %p142 = por %p140, %p141
    %p143 = scmp.ne.s32.totalorder %s132, %s135
    %p144 = scmp.eq.s32.totalorder %s19, 3
    %p145 = por %p143, %p144
    %p146 = scmp.ne.s32.totalorder %s135, %s136
    %p147 = scmp.eq.s32.totalorder %s19, 0
    %p148 = por %p146, %p147
    %p149 = scmp.ne.s32.totalorder %s135, %s136
    %p150 = scmp.eq.s32.totalorder %s20, 3
    %p151 = por %p149, %p150
    %p153 = scmp.ne.s32.totalorder %s136, %s152
    %p154 = scmp.eq.s32.totalorder %s20, 0
    %p155 = por %p153, %p154
    %s156 = ssub.s32 %s21, %s33
    %s157 = ssub.s32 %s22, %s29
    %s158 = sor.u32 %s156, %s157
    %p159 = scmp.eq.s32.totalorder %s158, 0
    %s161 = sadd.s32 %s160, 1
    %s162 = scalar_select %p159, %s160, %s161
    %p165 = pneg %p159
    %p166 = scmp.eq.s32.totalorder %s14, 3
    %p167 = por %p165, %p166
    %p168 = scmp.ne.s32.totalorder %s160, %s163
    %p169 = scmp.eq.s32.totalorder %s14, 0
    %p170 = por %p168, %p169
    %p171 = scmp.ne.s32.totalorder %s160, %s163
    %p172 = scmp.eq.s32.totalorder %s19, 3
    %p173 = por %p171, %p172
    %p174 = scmp.ne.s32.totalorder %s163, %s164
    %p175 = scmp.eq.s32.totalorder %s19, 0
    %p176 = por %p174, %p175
    %p177 = scmp.ne.s32.totalorder %s163, %s164
    %p178 = scmp.eq.s32.totalorder %s20, 3
    %p179 = por %p177, %p178
    %p181 = scmp.ne.s32.totalorder %s164, %s180
    %p182 = scmp.eq.s32.totalorder %s20, 0
    %p183 = por %p181, %p182
    %s184 = ssub.s32 %s21, %s33
    %s185 = ssub.s32 %s22, %s29
    %s186 = sor.u32 %s184, %s185
    %p187 = scmp.eq.s32.totalorder %s186, 0
    %s189 = sadd.s32 %s188, 1
    %s190 = scalar_select %p187, %s188, %s189
    %p193 = pneg %p187
    %p194 = scmp.eq.s32.totalorder %s14, 3
    %p195 = por %p193, %p194
    %p196 = scmp.ne.s32.totalorder %s188, %s191
    %p197 = scmp.eq.s32.totalorder %s14, 0
    %p198 = por %p196, %p197
    %p199 = scmp.ne.s32.totalorder %s188, %s191
    %p200 = scmp.eq.s32.totalorder %s19, 3
    %p201 = por %p199, %p200
    %p202 = scmp.ne.s32.totalorder %s191, %s192
    %p203 = scmp.eq.s32.totalorder %s19, 0
    %p204 = por %p202, %p203
    %p205 = scmp.ne.s32.totalorder %s191, %s192
    %p206 = scmp.eq.s32.totalorder %s20, 3
    %p207 = por %p205, %p206
    %p209 = scmp.ne.s32.totalorder %s192, %s208
    %p210 = scmp.eq.s32.totalorder %s20, 0
    %p211 = por %p209, %p210
    %s212 = ssub.s32 %s21, %s33
    %s213 = ssub.s32 %s22, %s29
    %s214 = sor.u32 %s212, %s213
    %p215 = scmp.eq.s32.totalorder %s214, 0
    %s217 = sadd.s32 %s216, 1
    %s218 = scalar_select %p215, %s216, %s217
    %p221 = pneg %p215
    %p222 = scmp.eq.s32.totalorder %s14, 3
    %p223 = por %p221, %p222
    %p224 = scmp.ne.s32.totalorder %s216, %s219
    %p225 = scmp.eq.s32.totalorder %s14, 0
    %p226 = por %p224, %p225
    %p227 = scmp.ne.s32.totalorder %s216, %s219
    %p228 = scmp.eq.s32.totalorder %s19, 3
    %p229 = por %p227, %p228
    %p230 = scmp.ne.s32.totalorder %s219, %s220
    %p231 = scmp.eq.s32.totalorder %s19, 0
    %p232 = por %p230, %p231
    %p233 = scmp.ne.s32.totalorder %s219, %s220
    %p234 = scmp.eq.s32.totalorder %s20, 3
    %p235 = por %p233, %p234
    %p237 = scmp.ne.s32.totalorder %s220, %s236
    %p238 = scmp.eq.s32.totalorder %s20, 0
    %p239 = por %p237, %p238
    %p240 = scmp.le.s32.totalorder 1, %s14
    %p241 = scmp.lt.s32.totalorder %s14, 5
    %p242 = pnand %p240, %p241
    %p243 = pneg %p242
    // Predicated region
    $region9: #{net1_forward.9} parent=5 // pred_check
      _
    $region10: #{net1_forward.9} parent=5 // pred_check_branch
      %245 = sbr.rel (%p242) target = $region12
    $region11: #{net1_forward.9} parent=5 // pred_region
      %s246 = ssub.s32 %s14, 1
      // Predicated region
      $region13: #{net1_forward.9} parent=11 // pred_check
        %p247 = pneg %p99
      $region14: #{net1_forward.9} parent=11 // pred_check_branch
        %249 = sbr.rel (%p247) target = $region16
      $region15: #{net1_forward.9} parent=11 // pred_region
        _
      $region16: #{net1_forward.9} parent=11 // pred_fallthru
        _
      // Predicated region
      $region17: #{net1_forward.9} parent=11 // pred_check
        %p250 = pneg %p120
      $region18: #{net1_forward.9} parent=11 // pred_check_branch
        %252 = sbr.rel (%p250) target = $region20
      $region19: #{net1_forward.9} parent=11 // pred_region
        _
      $region20: #{net1_forward.9} parent=11 // pred_fallthru
        _
    $region12: #{net1_forward.9} parent=5 // pred_fallthru
      _
    %p253 = scmp.lt.s32.totalorder %s14, 4
    // Predicated region
    $region21: #{net1_forward.9} parent=5 // pred_check
      %p254 = pneg %p253
    $region22: #{net1_forward.9} parent=5 // pred_check_branch
      %256 = sbr.rel (%p254) target = $region24
    $region23: #{net1_forward.9} parent=5 // pred_region
      // Predicated region
      $region25: #{net1_forward.9} parent=23 // pred_check
        %p257 = pneg %p46
      $region26: #{net1_forward.9} parent=23 // pred_check_branch
        %259 = sbr.rel (%p257) target = $region28
      $region27: #{net1_forward.9} parent=23 // pred_region
        %p260 = scmp.lt.s32.totalorder %s21, 1
        %s261 = scalar_select %p260, %s21, 1
        %s262 = smul.addr %s261, 256
        %s263 = smul.addr %s262, 4
        %s264 = scalar_lea.vmem %s0, %s263
      $region28: #{net1_forward.9} parent=23 // pred_fallthru
        _
      // Predicated region
      $region29: #{net1_forward.9} parent=23 // pred_check
        %p265 = pneg %p72
      $region30: #{net1_forward.9} parent=23 // pred_check_branch
        %267 = sbr.rel (%p265) target = $region32
      $region31: #{net1_forward.9} parent=23 // pred_region
        %p268 = scmp.lt.s32.totalorder %s21, 1
        %s269 = scalar_select %p268, %s21, 1
        %s270 = smul.addr %s269, 256
        %s271 = smul.addr %s270, 4
        %s272 = scalar_lea.vmem %s1, %s271
      $region32: #{net1_forward.9} parent=23 // pred_fallthru
        _
    $region24: #{net1_forward.9} parent=5 // pred_fallthru
      _
    %p273 = scmp.le.s32.totalorder 1, %s14
    %p274 = scmp.lt.s32.totalorder %s14, 5
    %p275 = pnand %p273, %p274
    %p276 = pneg %p275
    // Predicated region
    $region33: #{net1_forward.9} parent=5 // pred_check
      _
    $region34: #{net1_forward.9} parent=5 // pred_check_branch
      %278 = sbr.rel (%p275) target = $region36
    $region35: #{net1_forward.9} parent=5 // pred_region
      %s279 = ssub.s32 %s14, 1
      %p280 = scmp.lt.s32.totalorder %s23, 1
      %s281 = scalar_select %p280, %s23, 1
      %s282 = smul.addr %s281, 256
      %s283 = smul.addr %s282, 4
      %s284 = scalar_lea.vmem %s0, %s283
      %p285 = pneg %p52
      %p286 = pneg %p49
      %p287 = scmp.lt.s32.totalorder %s23, 1
      %s288 = scalar_select %p287, %s23, 1
      %s289 = smul.addr %s288, 256
      %s290 = smul.addr %s289, 4
      %s291 = scalar_lea.vmem %s1, %s290
      %p292 = pneg %p78
      %p293 = pneg %p75
      %p294 = pneg %p99
      %p295 = pneg %p96
      %p296 = pneg %p120
      %p297 = pneg %p117
      %p298 = pneg %p148
      %p299 = pneg %p145
      %s300 = smul.u32 58, %s24
      %p301 = scmp.lt.s32.totalorder %s23, 1
      %s302 = scalar_select %p301, %s23, 1
      %p303 = scmp.lt.s32.totalorder %s300, 115
      %s304 = scalar_select %p303, %s300, 115
      %s305 = smul.addr %s304, 2
      %s306 = smul.addr %s302, 232
      %s307 = sadd.s32 %s305, %s306
      %s308 = smul.addr %s307, 8
      %s309 = scalar_lea.vmem %s4, %s308
      %p310 = pneg %p176
      %p311 = pneg %p173
      %s312 = smul.u32 58, %s24
      %p313 = scmp.lt.s32.totalorder %s23, 1
      %s314 = scalar_select %p313, %s23, 1
      %p315 = scmp.lt.s32.totalorder %s312, 115
      %s316 = scalar_select %p315, %s312, 115
      %s317 = smul.addr %s316, 2
      %s318 = smul.addr %s314, 232
      %s319 = sadd.s32 %s317, %s318
      %s320 = smul.addr %s319, 8
      %s321 = scalar_lea.vmem %s5, %s320
      %p322 = pneg %p204
      %p323 = pneg %p201
      %p324 = scmp.lt.s32.totalorder %s23, 1
      %s325 = scalar_select %p324, %s23, 1
      %p326 = scmp.lt.s32.totalorder %s24, 1
      %s327 = scalar_select %p326, %s24, 1
      %s328 = smul.addr %s327, 2
      %s329 = smul.addr %s325, 4
      %s330 = sadd.s32 %s328, %s329
      %s331 = smul.addr %s330, 8
      %s332 = scalar_lea.vmem %s6, %s331
      %p333 = pneg %p232
      %p334 = pneg %p229
      %p335 = scmp.lt.s32.totalorder %s23, 1
      %s336 = scalar_select %p335, %s23, 1
      %p337 = scmp.lt.s32.totalorder %s24, 1
      %s338 = scalar_select %p337, %s24, 1
      %s339 = smul.addr %s338, 2
      %s340 = smul.addr %s336, 4
      %s341 = sadd.s32 %s339, %s340
      %s342 = smul.addr %s341, 8
      %s343 = scalar_lea.vmem %s7, %s342
      %p344 = scmp.lt.s32.totalorder %s23, 1
      %s345 = scalar_select %p344, %s23, 1
      %s346 = smul.addr %s345, 256
      %s347 = smul.addr %s346, 4
      %s348 = scalar_lea.vmem %s0, %s347
      %p349 = scmp.lt.s32.totalorder %s23, 1
      %s350 = scalar_select %p349, %s23, 1
      %s351 = smul.addr %s350, 256
      %s352 = smul.addr %s351, 4
      %s353 = scalar_lea.vmem %s1, %s352
      %s354 = smul.u32 58, %s24
      %p355 = scmp.lt.s32.totalorder %s23, 1
      %s356 = scalar_select %p355, %s23, 1
      %p357 = scmp.lt.s32.totalorder %s354, 115
      %s358 = scalar_select %p357, %s354, 115
      %s359 = smul.addr %s358, 2
      %s360 = smul.addr %s356, 232
      %s361 = sadd.s32 %s359, %s360
      %s362 = smul.addr %s361, 8
      %s363 = scalar_lea.vmem %s4, %s362
      %s364 = smul.u32 58, %s24
      %s365 = smul.u32 58, %s24
      %p366 = scmp.lt.s32.totalorder %s23, 1
      %s367 = scalar_select %p366, %s23, 1
      %p368 = scmp.lt.s32.totalorder %s365, 115
      %s369 = scalar_select %p368, %s365, 115
      %s370 = smul.addr %s369, 2
      %s371 = smul.addr %s367, 232
      %s372 = sadd.s32 %s370, %s371
      %s373 = smul.addr %s372, 8
      %s374 = scalar_lea.vmem %s5, %s373
      %s375 = smul.u32 58, %s24
      %p376 = scmp.lt.s32.totalorder %s23, 1
      %s377 = scalar_select %p376, %s23, 1
      %p378 = scmp.lt.s32.totalorder %s24, 1
      %s379 = scalar_select %p378, %s24, 1
      %s380 = smul.addr %s379, 2
      %s381 = smul.addr %s377, 4
      %s382 = sadd.s32 %s380, %s381
      %s383 = smul.addr %s382, 8
      %s384 = scalar_lea.vmem %s6, %s383
      %p385 = scmp.lt.s32.totalorder %s23, 1
      %s386 = scalar_select %p385, %s23, 1
      %p387 = scmp.lt.s32.totalorder %s24, 1
      %s388 = scalar_select %p387, %s24, 1
      %s389 = smul.addr %s388, 2
      %s390 = smul.addr %s386, 4
      %s391 = sadd.s32 %s389, %s390
      %s392 = smul.addr %s391, 8
      %s393 = scalar_lea.vmem %s7, %s392
      loop: start=0, step=1, limit=58
      $region37: #{net1_forward.9} parent=35 // loop_pre_header
        _
      $region38: #{net1_forward.9} parent=35 // loop_header
        %s396 = sphi 0, %s400
        %p397 = scmp.ge.s32.totalorder %s396, 58
        %v401 = vphi 0.0, %v754
        %v402 = vphi 0.0, %v755
        %v403 = vphi 0.0, %v774
        %v404 = vphi 0.0, %v775
      $region39: #{net1_forward.9} parent=35 // loop_header_branch
        %399 = sbr.rel (%p397) target = $region43
      $region40: #{net1_forward.9} parent=35 // loop_body
        %v405 = vld [vmem:[%s3] sm:$0xff]
        %v406 = vld [vmem:[%s3 + $0x8] sm:$0x3]
        %s407 = smul.u32 %s24, 58
        %s408 = sadd.s32 %s407, %s396
        %s409 = smul.u32 %s408, 16
        %v410 = vld [vmem:[%s2] sm:$0xff]
        %v411 = vld [vmem:[%s2 + $0x8] sm:$0x11]
        %s412 = sshra.s32 %s409, 3
        %s413 = sand.u32 %s409, 7
        %s414 = smul.addr %s412, 4
        %s415 = scalar_lea.vmem %s348, %s414
        %v416 = vld [vmem:[%s415] sm:$0xf]
        %v417 = vld [vmem:[%s415 + $0x4] sm:$0xf]
        %v418 = vld [vmem:[%s415 + $0x8] sm:$0xf]
        %v419 = vld [vmem:[%s415 + $0xc] sm:$0xf]
        %v420 = vld [vmem:[%s415 + $0x10] sm:$0xf]
        %v421 = vld [vmem:[%s415 + $0x14] sm:$0xf]
        %v422 = vld [vmem:[%s415 + $0x18] sm:$0xf]
        %v423 = vld [vmem:[%s415 + $0x1c] sm:$0xf]
        %v424 = vld [vmem:[%s415 + $0x20] sm:$0xf]
        %v425 = vld [vmem:[%s415 + $0x24] sm:$0xf]
        %v426 = vld [vmem:[%s415 + $0x28] sm:$0xf]
        %v427 = vld [vmem:[%s415 + $0x2c] sm:$0xf]
        %v428 = vld [vmem:[%s415 + $0x30] sm:$0xf]
        %v429 = vld [vmem:[%s415 + $0x34] sm:$0xf]
        %v430 = vld [vmem:[%s415 + $0x38] sm:$0xf]
        %v431 = vld [vmem:[%s415 + $0x3c] sm:$0xf]
        %v432 = vld [vmem:[%s415 + $0x40] sm:$0xf]
        %v433 = vld [vmem:[%s415 + $0x44] sm:$0xf]
        %v434 = vld [vmem:[%s415 + $0x48] sm:$0xf]
        %v435 = vld [vmem:[%s415 + $0x4c] sm:$0xf]
        %v436 = vld [vmem:[%s415 + $0x50] sm:$0xf]
        %v437 = vld [vmem:[%s415 + $0x54] sm:$0xf]
        %v438 = vld [vmem:[%s415 + $0x58] sm:$0xf]
        %v439 = vld [vmem:[%s415 + $0x5c] sm:$0xf]
        %v440 = vld [vmem:[%s415 + $0x60] sm:$0xf]
        %v441 = vld [vmem:[%s415 + $0x64] sm:$0xf]
        %s442 = smul.addr %s412, 4
        %s443 = scalar_lea.vmem %s353, %s442
        %v444 = vld [vmem:[%s443] sm:$0xf]
        %v445 = vld [vmem:[%s443 + $0x4] sm:$0xf]
        %v446 = vld [vmem:[%s443 + $0x8] sm:$0xf]
        %v447 = vld [vmem:[%s443 + $0xc] sm:$0xf]
        %v448 = vld [vmem:[%s443 + $0x10] sm:$0xf]
        %v449 = vld [vmem:[%s443 + $0x14] sm:$0xf]
        %v450 = vld [vmem:[%s443 + $0x18] sm:$0xf]
        %v451 = vld [vmem:[%s443 + $0x1c] sm:$0xf]
        %v452 = vld [vmem:[%s443 + $0x20] sm:$0xf]
        %v453 = vld [vmem:[%s443 + $0x24] sm:$0xf]
        %v454 = vld [vmem:[%s443 + $0x28] sm:$0xf]
        %v455 = vld [vmem:[%s443 + $0x2c] sm:$0xf]
        %v456 = vld [vmem:[%s443 + $0x30] sm:$0xf]
        %v457 = vld [vmem:[%s443 + $0x34] sm:$0xf]
        %v458 = vld [vmem:[%s443 + $0x38] sm:$0xf]
        %v459 = vld [vmem:[%s443 + $0x3c] sm:$0xf]
        %v460 = vld [vmem:[%s443 + $0x40] sm:$0xf]
        %v461 = vld [vmem:[%s443 + $0x44] sm:$0xf]
        %v462 = vld [vmem:[%s443 + $0x48] sm:$0xf]
        %v463 = vld [vmem:[%s443 + $0x4c] sm:$0xf]
        %v464 = vld [vmem:[%s443 + $0x50] sm:$0xf]
        %v465 = vld [vmem:[%s443 + $0x54] sm:$0xf]
        %v466 = vld [vmem:[%s443 + $0x58] sm:$0xf]
        %v467 = vld [vmem:[%s443 + $0x5c] sm:$0xf]
        %v468 = vld [vmem:[%s443 + $0x60] sm:$0xf]
        %v469 = vld [vmem:[%s443 + $0x64] sm:$0xf]
        %471 = vset.pattern.permute.xlu0 0
        %472 = vperm.xlu0 %471, %v405
        %v473 = vpop.permute.xlu0 %472
        %476 = vset.pattern.permute.xlu0 0
        %477 = vperm.xlu0 %476, %v406
        %v478 = vpop.permute.xlu0 %477
        %v482 = vunpack.c.l.b16 %v410
        %v483 = vunpack.c.h.b16 %v410
        %v484 = vunpack.c.l.b16 %v411
        %v485 = vunpack.c.h.b16 %v411
        %v486 = vpack.c.b16 %v484, %v482
        %v487 = vpack.c.b16 %v485, %v483
        %v515 = vunpack.c.l.b16 %v416
        %v516 = vunpack.c.l.b16 %v417
        %v517 = vunpack.c.l.b16 %v418
        %v518 = vunpack.c.l.b16 %v419
        %v519 = vunpack.c.l.b16 %v420
        %v520 = vunpack.c.l.b16 %v421
        %v521 = vunpack.c.l.b16 %v422
        %v522 = vunpack.c.l.b16 %v423
        %v523 = vunpack.c.l.b16 %v424
        %v524 = vunpack.c.l.b16 %v425
        %v525 = vunpack.c.l.b16 %v426
        %v526 = vunpack.c.l.b16 %v427
        %v527 = vunpack.c.l.b16 %v428
        %v528 = vunpack.c.l.b16 %v429
        %v529 = vunpack.c.l.b16 %v430
        %v530 = vunpack.c.l.b16 %v431
        %v531 = vunpack.c.l.b16 %v432
        %v532 = vunpack.c.l.b16 %v433
        %v533 = vunpack.c.l.b16 %v434
        %v534 = vunpack.c.l.b16 %v435
        %v535 = vunpack.c.l.b16 %v436
        %v536 = vunpack.c.l.b16 %v437
        %v537 = vunpack.c.l.b16 %v438
        %v538 = vunpack.c.l.b16 %v439
        %v539 = vunpack.c.l.b16 %v440
        %v540 = vunpack.c.l.b16 %v441
        %v541 = vpack.c.b16 %v516, %v515
        %v542 = vpack.c.b16 %v518, %v517
        %v543 = vpack.c.b16 %v520, %v519
        %v544 = vpack.c.b16 %v522, %v521
        %v545 = vpack.c.b16 %v524, %v523
        %v546 = vpack.c.b16 %v526, %v525
        %v547 = vpack.c.b16 %v528, %v527
        %v548 = vpack.c.b16 %v530, %v529
        %v549 = vpack.c.b16 %v532, %v531
        %v550 = vpack.c.b16 %v534, %v533
        %v551 = vpack.c.b16 %v536, %v535
        %v552 = vpack.c.b16 %v538, %v537
        %v553 = vpack.c.b16 %v540, %v539
        %vm567 = vcmask 654336
        %v569 = vsel %vm567, %v487, 0
        %571 = vmatprep.subr.bf16.mxu0 0
        %572 = vmatpush1.bf16.msra.mxu0 %v541
        %573 = vmatprep.subr.bf16.mxu0 0
        %574 = vmatpush1.bf16.msra.mxu0 %v542
        %575 = vmatprep.subr.bf16.mxu0 0
        %576 = vmatpush1.bf16.msra.mxu0 %v543
        %577 = vmatprep.subr.bf16.mxu0 0
        %578 = vmatpush1.bf16.msra.mxu0 %v544
        %579 = vmatprep.subr.bf16.mxu0 0
        %580 = vmatpush1.bf16.msra.mxu0 %v545
        %581 = vmatprep.subr.bf16.mxu0 0
        %582 = vmatpush1.bf16.msra.mxu0 %v546
        %583 = vmatprep.subr.bf16.mxu0 0
        %584 = vmatpush1.bf16.msra.mxu0 %v547
        %585 = vmatprep.subr.bf16.mxu0 0
        %586 = vmatpush1.bf16.msra.mxu0 %v548
        %587 = vmatprep.subr.bf16.mxu0 0
        %588 = vmatpush1.bf16.msra.mxu0 %v549
        %589 = vmatprep.subr.bf16.mxu0 0
        %590 = vmatpush1.bf16.msra.mxu0 %v550
        %591 = vmatprep.subr.bf16.mxu0 0
        %592 = vmatpush1.bf16.msra.mxu0 %v551
        %593 = vmatprep.subr.bf16.mxu0 0
        %594 = vmatpush1.bf16.msra.mxu0 %v552
        %595 = vmatprep.subr.bf16.mxu0 0
        %596 = vmatpush1.bf16.msra.mxu0 %v553
        %597 = vmatprep.subr.bf16.mxu0 0
        %598 = vmatpush1.bf16.msra.mxu0 0
        %599 = vmatprep.subr.bf16.mxu0 0
        %600 = vmatpush1.bf16.msra.mxu0 0
        %601 = vmatprep.subr.bf16.mxu0 0
        %602 = vmatpush1.bf16.msra.mxu0 0
        %603 = vmatprep.mubr.bf16.mxu0 %v569
        %604 = vmatmul.mubr.bf16.gmra.mrb[0].mxu0 %v486
        %v605 = vpop.f32.mrb[0].mxu0
        %v606 = vadd.f32 %v473, %v605
        %v607 = vpop.f32.mrb[0].mxu0
        %v608 = vpop.f32.mrb[0].mxu0
        %v609 = vadd.f32 %v478, %v608
        %v610 = vpop.f32.mrb[0].mxu0
        %611 = vdwg.mxu0
        %v638 = vunpack.c.l.b16 %v444
        %v639 = vunpack.c.l.b16 %v445
        %v640 = vunpack.c.l.b16 %v446
        %v641 = vunpack.c.l.b16 %v447
        %v642 = vunpack.c.l.b16 %v448
        %v643 = vunpack.c.l.b16 %v449
        %v644 = vunpack.c.l.b16 %v450
        %v645 = vunpack.c.l.b16 %v451
        %v646 = vunpack.c.l.b16 %v452
        %v647 = vunpack.c.l.b16 %v453
        %v648 = vunpack.c.l.b16 %v454
        %v649 = vunpack.c.l.b16 %v455
        %v650 = vunpack.c.l.b16 %v456
        %v651 = vunpack.c.l.b16 %v457
        %v652 = vunpack.c.l.b16 %v458
        %v653 = vunpack.c.l.b16 %v459
        %v654 = vunpack.c.l.b16 %v460
        %v655 = vunpack.c.l.b16 %v461
        %v656 = vunpack.c.l.b16 %v462
        %v657 = vunpack.c.l.b16 %v463
        %v658 = vunpack.c.l.b16 %v464
        %v659 = vunpack.c.l.b16 %v465
        %v660 = vunpack.c.l.b16 %v466
        %v661 = vunpack.c.l.b16 %v467
        %v662 = vunpack.c.l.b16 %v468
        %v663 = vunpack.c.l.b16 %v469
        %v664 = vpack.c.b16 %v639, %v638
        %v665 = vpack.c.b16 %v641, %v640
        %v666 = vpack.c.b16 %v643, %v642
        %v667 = vpack.c.b16 %v645, %v644
        %v668 = vpack.c.b16 %v647, %v646
        %v669 = vpack.c.b16 %v649, %v648
        %v670 = vpack.c.b16 %v651, %v650
        %v671 = vpack.c.b16 %v653, %v652
        %v672 = vpack.c.b16 %v655, %v654
        %v673 = vpack.c.b16 %v657, %v656
        %v674 = vpack.c.b16 %v659, %v658
        %v675 = vpack.c.b16 %v661, %v660
        %v676 = vpack.c.b16 %v663, %v662
        %690 = vmatprep.subr.bf16.mxu0 0
        %691 = vmatpush1.bf16.msra.mxu0 %v664
        %692 = vmatprep.subr.bf16.mxu0 0
        %693 = vmatpush1.bf16.msra.mxu0 %v665
        %694 = vmatprep.subr.bf16.mxu0 0
        %695 = vmatpush1.bf16.msra.mxu0 %v666
        %696 = vmatprep.subr.bf16.mxu0 0
        %697 = vmatpush1.bf16.msra.mxu0 %v667
        %698 = vmatprep.subr.bf16.mxu0 0
        %699 = vmatpush1.bf16.msra.mxu0 %v668
        %700 = vmatprep.subr.bf16.mxu0 0
        %701 = vmatpush1.bf16.msra.mxu0 %v669
        %702 = vmatprep.subr.bf16.mxu0 0
        %703 = vmatpush1.bf16.msra.mxu0 %v670
        %704 = vmatprep.subr.bf16.mxu0 0
        %705 = vmatpush1.bf16.msra.mxu0 %v671
        %706 = vmatprep.subr.bf16.mxu0 0
        %707 = vmatpush1.bf16.msra.mxu0 %v672
        %708 = vmatprep.subr.bf16.mxu0 0
        %709 = vmatpush1.bf16.msra.mxu0 %v673
        %710 = vmatprep.subr.bf16.mxu0 0
        %711 = vmatpush1.bf16.msra.mxu0 %v674
        %712 = vmatprep.subr.bf16.mxu0 0
        %713 = vmatpush1.bf16.msra.mxu0 %v675
        %714 = vmatprep.subr.bf16.mxu0 0
        %715 = vmatpush1.bf16.msra.mxu0 %v676
        %716 = vmatprep.subr.bf16.mxu0 0
        %717 = vmatpush1.bf16.msra.mxu0 0
        %718 = vmatprep.subr.bf16.mxu0 0
        %719 = vmatpush1.bf16.msra.mxu0 0
        %720 = vmatprep.subr.bf16.mxu0 0
        %721 = vmatpush1.bf16.msra.mxu0 0
        %722 = vmatprep.mubr.bf16.mxu0 %v569
        %723 = vmatmul.mubr.bf16.gmra.mrb[0].mxu0 %v486
        %v724 = vpop.f32.mrb[0].mxu0
        %v725 = vadd.f32 %v473, %v724
        %v726 = vpop.f32.mrb[0].mxu0
        %v727 = vpop.f32.mrb[0].mxu0
        %v728 = vadd.f32 %v478, %v727
        %v729 = vpop.f32.mrb[0].mxu0
        %730 = vdwg.mxu0
        %s731 = smul.u32 %s396, 16
        %s732 = scalar_lea.vmem %s363, %s731
        %vm733 = vcmask 474112
        %734 = vst.msk [vmem:[%s732] sm:$0xff] %vm733, %v606
        %vm735 = vcmask 467968
        %736 = vst.msk [vmem:[%s732 + $0x8] sm:$0x3] %vm735, %v609
        %s737 = scalar_lea.vmem %s374, %s731
        %738 = vst.msk [vmem:[%s737] sm:$0xff] %vm733, %v725
        %739 = vst.msk [vmem:[%s737 + $0x8] sm:$0x3] %vm735, %v728
        %v740 = vsel %vm733, %v606, 0.0
        %741 = vadd.xlane.f32.xlu0 %v740
        %v742 = vpop.xlane.xlu0 %741
        %v743 = vsel %vm735, %v609, 0.0
        %744 = vadd.xlane.f32.xlu0 %v743
        %v745 = vpop.xlane.xlu0 %744
        %v746 = vadd.f32 %v401, %v742
        %v747 = vadd.f32 %v402, %v745
        %v748 = vsel %vm733, %v725, 0.0
        %749 = vadd.xlane.f32.xlu0 %v748
        %v750 = vpop.xlane.xlu0 %749
        %v751 = vsel %vm735, %v728, 0.0
        %752 = vadd.xlane.f32.xlu0 %v751
        %v753 = vpop.xlane.xlu0 %752
        %v754 = vadd.f32 %v746, %v750
        %v755 = vadd.f32 %v747, %v753
        %v756 = vmul.f32 %v606, %v606
        %v757 = vmul.f32 %v609, %v609
        %v758 = vsel %vm733, %v756, 0.0
        %759 = vadd.xlane.f32.xlu0 %v758
        %v760 = vpop.xlane.xlu0 %759
        %v761 = vsel %vm735, %v757, 0.0
        %762 = vadd.xlane.f32.xlu0 %v761
        %v763 = vpop.xlane.xlu0 %762
        %v764 = vadd.f32 %v403, %v760
        %v765 = vadd.f32 %v404, %v763
        %v766 = vmul.f32 %v725, %v725
        %v767 = vmul.f32 %v728, %v728
        %v768 = vsel %vm733, %v766, 0.0
        %769 = vadd.xlane.f32.xlu0 %v768
        %v770 = vpop.xlane.xlu0 %769
        %v771 = vsel %vm735, %v767, 0.0
        %772 = vadd.xlane.f32.xlu0 %v771
        %v773 = vpop.xlane.xlu0 %772
        %v774 = vadd.f32 %v764, %v770
        %v775 = vadd.f32 %v765, %v773
      $region41: #{net1_forward.9} parent=35 // loop_footer
        %s400 = sadd.s32 1, %s396
      $region42: #{net1_forward.9} parent=35 // loop_footer_branch
        %395 = sbr.rel target = $region38
      $region43: #{net1_forward.9} parent=35 // loop_exit
        _
      %vm776 = vcmask 7168
      %777 = vst.msk [vmem:[%s384] sm:$0xff] %vm776, %v401
      %vm778 = vcmask 1024
      %779 = vst.msk [vmem:[%s384 + $0x8] sm:$0x3] %vm778, %v402
      %780 = vst.msk [vmem:[%s393] sm:$0xff] %vm776, %v403
      %781 = vst.msk [vmem:[%s393 + $0x8] sm:$0x3] %vm778, %v404
      %s782 = smul.u32 58, %s24
      %p783 = scmp.lt.s32.totalorder %s23, 1
      %s784 = scalar_select %p783, %s23, 1
      %p785 = scmp.lt.s32.totalorder %s782, 115
      %s786 = scalar_select %p785, %s782, 115
      %s787 = smul.addr %s786, 2
      %s788 = smul.addr %s784, 232
      %s789 = sadd.s32 %s787, %s788
      %s790 = smul.addr %s789, 8
      %s791 = scalar_lea.vmem %s4, %s790
      %s792 = smul.u32 58, %s24
      %p793 = scmp.lt.s32.totalorder %s23, 1
      %s794 = scalar_select %p793, %s23, 1
      %p795 = scmp.lt.s32.totalorder %s792, 115
      %s796 = scalar_select %p795, %s792, 115
      %s797 = smul.addr %s796, 2
      %s798 = smul.addr %s794, 232
      %s799 = sadd.s32 %s797, %s798
      %s800 = smul.addr %s799, 8
      %s801 = scalar_lea.vmem %s5, %s800
      %p802 = scmp.lt.s32.totalorder %s23, 1
      %s803 = scalar_select %p802, %s23, 1
      %p804 = scmp.lt.s32.totalorder %s24, 1
      %s805 = scalar_select %p804, %s24, 1
      %s806 = smul.addr %s805, 2
      %s807 = smul.addr %s803, 4
      %s808 = sadd.s32 %s806, %s807
      %s809 = smul.addr %s808, 8
      %s810 = scalar_lea.vmem %s6, %s809
      %p811 = scmp.lt.s32.totalorder %s23, 1
      %s812 = scalar_select %p811, %s23, 1
      %p813 = scmp.lt.s32.totalorder %s24, 1
      %s814 = scalar_select %p813, %s24, 1
      %s815 = smul.addr %s814, 2
      %s816 = smul.addr %s812, 4
      %s817 = sadd.s32 %s815, %s816
      %s818 = smul.addr %s817, 8
      %s819 = scalar_lea.vmem %s7, %s818
      // Predicated region
      $region44: #{net1_forward.9} parent=35 // pred_check
        %p820 = pneg %p145
      $region45: #{net1_forward.9} parent=35 // pred_check_branch
        %822 = sbr.rel (%p820) target = $region47
      $region46: #{net1_forward.9} parent=35 // pred_region
        %s823 = smul.u32 58, %s24
      $region47: #{net1_forward.9} parent=35 // pred_fallthru
        _
      // Predicated region
      $region48: #{net1_forward.9} parent=35 // pred_check
        %p824 = pneg %p173
      $region49: #{net1_forward.9} parent=35 // pred_check_branch
        %826 = sbr.rel (%p824) target = $region51
      $region50: #{net1_forward.9} parent=35 // pred_region
        %s827 = smul.u32 58, %s24
      $region51: #{net1_forward.9} parent=35 // pred_fallthru
        _
      // Predicated region
      $region52: #{net1_forward.9} parent=35 // pred_check
        %p828 = pneg %p201
      $region53: #{net1_forward.9} parent=35 // pred_check_branch
        %830 = sbr.rel (%p828) target = $region55
      $region54: #{net1_forward.9} parent=35 // pred_region
        _
      $region55: #{net1_forward.9} parent=35 // pred_fallthru
        _
      // Predicated region
      $region56: #{net1_forward.9} parent=35 // pred_check
        %p831 = pneg %p229
      $region57: #{net1_forward.9} parent=35 // pred_check_branch
        %833 = sbr.rel (%p831) target = $region59
      $region58: #{net1_forward.9} parent=35 // pred_region
        _
      $region59: #{net1_forward.9} parent=35 // pred_fallthru
        _
    $region36: #{net1_forward.9} parent=5 // pred_fallthru
      _
    %p834 = scmp.le.s32.totalorder 2, %s14
    // Predicated region
    $region60: #{net1_forward.9} parent=5 // pred_check
      %p835 = pneg %p834
    $region61: #{net1_forward.9} parent=5 // pred_check_branch
      %837 = sbr.rel (%p835) target = $region63
    $region62: #{net1_forward.9} parent=5 // pred_region
      %s838 = ssub.s32 %s14, 2
      // Predicated region
      $region64: #{net1_forward.9} parent=62 // pred_check
        %p839 = pneg %p151
      $region65: #{net1_forward.9} parent=62 // pred_check_branch
        %841 = sbr.rel (%p839) target = $region67
      $region66: #{net1_forward.9} parent=62 // pred_region
        %s842 = smul.u32 58, %s26
        %p843 = scmp.lt.s32.totalorder %s25, 1
        %s844 = scalar_select %p843, %s25, 1
        %p845 = scmp.lt.s32.totalorder %s842, 115
        %s846 = scalar_select %p845, %s842, 115
        %s847 = smul.addr %s846, 2
        %s848 = smul.addr %s844, 232
        %s849 = sadd.s32 %s847, %s848
        %s850 = smul.addr %s849, 8
        %s851 = scalar_lea.vmem %s4, %s850
      $region67: #{net1_forward.9} parent=62 // pred_fallthru
        _
      // Predicated region
      $region68: #{net1_forward.9} parent=62 // pred_check
        %p852 = pneg %p179
      $region69: #{net1_forward.9} parent=62 // pred_check_branch
        %854 = sbr.rel (%p852) target = $region71
      $region70: #{net1_forward.9} parent=62 // pred_region
        %s855 = smul.u32 58, %s26
        %p856 = scmp.lt.s32.totalorder %s25, 1
        %s857 = scalar_select %p856, %s25, 1
        %p858 = scmp.lt.s32.totalorder %s855, 115
        %s859 = scalar_select %p858, %s855, 115
        %s860 = smul.addr %s859, 2
        %s861 = smul.addr %s857, 232
        %s862 = sadd.s32 %s860, %s861
        %s863 = smul.addr %s862, 8
        %s864 = scalar_lea.vmem %s5, %s863
      $region71: #{net1_forward.9} parent=62 // pred_fallthru
        _
      // Predicated region
      $region72: #{net1_forward.9} parent=62 // pred_check
        %p865 = pneg %p207
      $region73: #{net1_forward.9} parent=62 // pred_check_branch
        %867 = sbr.rel (%p865) target = $region75
      $region74: #{net1_forward.9} parent=62 // pred_region
        %p868 = scmp.lt.s32.totalorder %s25, 1
        %s869 = scalar_select %p868, %s25, 1
        %p870 = scmp.lt.s32.totalorder %s26, 1
        %s871 = scalar_select %p870, %s26, 1
        %s872 = smul.addr %s871, 2
        %s873 = smul.addr %s869, 4
        %s874 = sadd.s32 %s872, %s873
        %s875 = smul.addr %s874, 8
        %s876 = scalar_lea.vmem %s6, %s875
      $region75: #{net1_forward.9} parent=62 // pred_fallthru
        _
      // Predicated region
      $region76: #{net1_forward.9} parent=62 // pred_check
        %p877 = pneg %p235
      $region77: #{net1_forward.9} parent=62 // pred_check_branch
        %879 = sbr.rel (%p877) target = $region79
      $region78: #{net1_forward.9} parent=62 // pred_region
        %p880 = scmp.lt.s32.totalorder %s25, 1
        %s881 = scalar_select %p880, %s25, 1
        %p882 = scmp.lt.s32.totalorder %s26, 1
        %s883 = scalar_select %p882, %s26, 1
        %s884 = smul.addr %s883, 2
        %s885 = smul.addr %s881, 4
        %s886 = sadd.s32 %s884, %s885
        %s887 = smul.addr %s886, 8
        %s888 = scalar_lea.vmem %s7, %s887
      $region79: #{net1_forward.9} parent=62 // pred_fallthru
        _
    $region63: #{net1_forward.9} parent=5 // pred_fallthru
      _
  $region6: #{net1_forward.9} parent=0 // loop_footer
    %s18 = sadd.s32 1, %s14
  $region7: #{net1_forward.9} parent=0 // loop_footer_branch
    %13 = sbr.rel target = $region3
  $region8: #{net1_forward.9} parent=0 // loop_exit
    _

// kernel: net1_forward.10
$region0: #{net1_forward.10}
  #allocation0 [shape = 'u32[]', space=smem, size = 0x4, offset = 0x4, fixed_abs, tag = 'smem constant byte address 0x4 - core index']
  #allocation1 [shape = 'u32[144,128]{1,0:T(1,128)}', space=vmem, size = 0x12000, scoped, tag = 'internal scratch']
  %s0 = inlined_call_operand.vmem [shape: f32[2,116,10,58], index: 0, kind: input, shape index: {}]
  %s1 = inlined_call_operand.vmem [shape: f32[2,116,10,58], index: 1, kind: input, shape index: {}]
  %s2 = inlined_call_operand.vmem [shape: f32[10,1], index: 2, kind: input, shape index: {}]
  %s3 = inlined_call_operand.vmem [shape: f32[10,1], index: 3, kind: input, shape index: {}]
  %s4 = inlined_call_operand.vmem [shape: f32[2,58,10,58], index: 4, kind: output, shape index: {}]
  %s5 = sld [smem:[#allocation0]]
  $region56: #{net1_forward.10} parent=0
    _
  %s7 = ssub.s32 1, %s5
  %s8 = scalar_select 0, %s7, %s5
  loop: start=0, step=1, limit=4
  $region2: #{net1_forward.10} parent=0 // loop_pre_header
    _
  $region3: #{net1_forward.10} parent=0 // loop_header
    %s10 = sphi 0, %s14
    %p11 = scmp.ge.s32.totalorder %s10, 4
    %s20 = sphi 0, %s22
    %s23 = sphi 0, %s20
    %s24 = sphi 0, %s23
    %s40 = sphi 0, %s24
    %s46 = sphi 0, %s48
    %s49 = sphi 0, %s46
    %s50 = sphi 0, %s49
    %s66 = sphi 0, %s50
    %s70 = sphi 0, %s70
    %s72 = sphi 0, %s70
    %s73 = sphi 0, %s72
    %s87 = sphi 0, %s73
    %s91 = sphi 0, %s91
    %s93 = sphi 0, %s91
    %s94 = sphi 0, %s93
    %s108 = sphi 0, %s94
    %s114 = sphi 0, %s116
    %s117 = sphi 0, %s114
    %s118 = sphi 0, %s117
    %s134 = sphi 0, %s118
  $region4: #{net1_forward.10} parent=0 // loop_header_branch
    %13 = sbr.rel (%p11) target = $region8
  $region5: #{net1_forward.10} parent=0 // loop_body
    %s15 = ssub.s32 %s10, 1
    %s16 = ssub.s32 %s10, 2
    %s17 = sadd.s32 %s10, 1
    %s18 = ssub.s32 %s10, %s17
    %p19 = scmp.eq.s32.totalorder %s18, 0
    %s21 = sadd.s32 %s20, 1
    %s22 = scalar_select %p19, %s20, %s21
    %p25 = pneg %p19
    %p26 = scmp.eq.s32.totalorder %s10, 1
    %p27 = por %p25, %p26
    %p28 = scmp.ne.s32.totalorder %s20, %s23
    %p29 = scmp.eq.s32.totalorder %s10, 0
    %p30 = por %p28, %p29
    %p31 = scmp.ne.s32.totalorder %s20, %s23
    %p32 = scmp.eq.s32.totalorder %s15, 1
    %p33 = por %p31, %p32
    %p34 = scmp.ne.s32.totalorder %s23, %s24
    %p35 = scmp.eq.s32.totalorder %s15, 0
    %p36 = por %p34, %p35
    %p37 = scmp.ne.s32.totalorder %s23, %s24
    %p38 = scmp.eq.s32.totalorder %s16, 1
    %p39 = por %p37, %p38
    %p41 = scmp.ne.s32.totalorder %s24, %s40
    %p42 = scmp.eq.s32.totalorder %s16, 0
    %p43 = por %p41, %p42
    %s44 = ssub.s32 %s10, %s17
    %p45 = scmp.eq.s32.totalorder %s44, 0
    %s47 = sadd.s32 %s46, 1
    %s48 = scalar_select %p45, %s46, %s47
    %p51 = pneg %p45
    %p52 = scmp.eq.s32.totalorder %s10, 1
    %p53 = por %p51, %p52
    %p54 = scmp.ne.s32.totalorder %s46, %s49
    %p55 = scmp.eq.s32.totalorder %s10, 0
    %p56 = por %p54, %p55
    %p57 = scmp.ne.s32.totalorder %s46, %s49
    %p58 = scmp.eq.s32.totalorder %s15, 1
    %p59 = por %p57, %p58
    %p60 = scmp.ne.s32.totalorder %s49, %s50
    %p61 = scmp.eq.s32.totalorder %s15, 0
    %p62 = por %p60, %p61
    %p63 = scmp.ne.s32.totalorder %s49, %s50
    %p64 = scmp.eq.s32.totalorder %s16, 1
    %p65 = por %p63, %p64
    %p67 = scmp.ne.s32.totalorder %s50, %s66
    %p68 = scmp.eq.s32.totalorder %s16, 0
    %p69 = por %p67, %p68
    %s71 = sadd.s32 %s70, 1
    %p74 = scmp.eq.s32.totalorder %s10, 1
    %p75 = scmp.ne.s32.totalorder %s70, %s72
    %p76 = scmp.eq.s32.totalorder %s10, 0
    %p77 = por %p75, %p76
    %p78 = scmp.ne.s32.totalorder %s70, %s72
    %p79 = scmp.eq.s32.totalorder %s15, 1
    %p80 = por %p78, %p79
    %p81 = scmp.ne.s32.totalorder %s72, %s73
    %p82 = scmp.eq.s32.totalorder %s15, 0
    %p83 = por %p81, %p82
    %p84 = scmp.ne.s32.totalorder %s72, %s73
    %p85 = scmp.eq.s32.totalorder %s16, 1
    %p86 = por %p84, %p85
    %p88 = scmp.ne.s32.totalorder %s73, %s87
    %p89 = scmp.eq.s32.totalorder %s16, 0
    %p90 = por %p88, %p89
    %s92 = sadd.s32 %s91, 1
    %p95 = scmp.eq.s32.totalorder %s10, 1
    %p96 = scmp.ne.s32.totalorder %s91, %s93
    %p97 = scmp.eq.s32.totalorder %s10, 0
    %p98 = por %p96, %p97
    %p99 = scmp.ne.s32.totalorder %s91, %s93
    %p100 = scmp.eq.s32.totalorder %s15, 1
    %p101 = por %p99, %p100
    %p102 = scmp.ne.s32.totalorder %s93, %s94
    %p103 = scmp.eq.s32.totalorder %s15, 0
    %p104 = por %p102, %p103
    %p105 = scmp.ne.s32.totalorder %s93, %s94
    %p106 = scmp.eq.s32.totalorder %s16, 1
    %p107 = por %p105, %p106
    %p109 = scmp.ne.s32.totalorder %s94, %s108
    %p110 = scmp.eq.s32.totalorder %s16, 0
    %p111 = por %p109, %p110
    %s112 = ssub.s32 %s10, %s17
    %p113 = scmp.eq.s32.totalorder %s112, 0
    %s115 = sadd.s32 %s114, 1
    %s116 = scalar_select %p113, %s114, %s115
    %p119 = pneg %p113
    %p120 = scmp.eq.s32.totalorder %s10, 1
    %p121 = por %p119, %p120
    %p122 = scmp.ne.s32.totalorder %s114, %s117
    %p123 = scmp.eq.s32.totalorder %s10, 0
    %p124 = por %p122, %p123
    %p125 = scmp.ne.s32.totalorder %s114, %s117
    %p126 = scmp.eq.s32.totalorder %s15, 1
    %p127 = por %p125, %p126
    %p128 = scmp.ne.s32.totalorder %s117, %s118
    %p129 = scmp.eq.s32.totalorder %s15, 0
    %p130 = por %p128, %p129
    %p131 = scmp.ne.s32.totalorder %s117, %s118
    %p132 = scmp.eq.s32.totalorder %s16, 1
    %p133 = por %p131, %p132
    %p135 = scmp.ne.s32.totalorder %s118, %s134
    %p136 = scmp.eq.s32.totalorder %s16, 0
    %p137 = por %p135, %p136
    %p138 = scmp.le.s32.totalorder 1, %s10
    %p139 = scmp.lt.s32.totalorder %s10, 3
    %p140 = pnand %p138, %p139
    %p141 = pneg %p140
    // Predicated region
    $region9: #{net1_forward.10} parent=5 // pred_check
      _
    $region10: #{net1_forward.10} parent=5 // pred_check_branch
      %143 = sbr.rel (%p140) target = $region12
    $region11: #{net1_forward.10} parent=5 // pred_region
      %s144 = ssub.s32 %s10, 1
      // Predicated region
      $region13: #{net1_forward.10} parent=11 // pred_check
        %p145 = pneg %p83
      $region14: #{net1_forward.10} parent=11 // pred_check_branch
        %147 = sbr.rel (%p145) target = $region16
      $region15: #{net1_forward.10} parent=11 // pred_region
        _
      $region16: #{net1_forward.10} parent=11 // pred_fallthru
        _
      // Predicated region
      $region17: #{net1_forward.10} parent=11 // pred_check
        %p148 = pneg %p104
      $region18: #{net1_forward.10} parent=11 // pred_check_branch
        %150 = sbr.rel (%p148) target = $region20
      $region19: #{net1_forward.10} parent=11 // pred_region
        _
      $region20: #{net1_forward.10} parent=11 // pred_fallthru
        _
    $region12: #{net1_forward.10} parent=5 // pred_fallthru
      _
    %p151 = scmp.lt.s32.totalorder %s10, 2
    // Predicated region
    $region21: #{net1_forward.10} parent=5 // pred_check
      %p152 = pneg %p151
    $region22: #{net1_forward.10} parent=5 // pred_check_branch
      %154 = sbr.rel (%p152) target = $region24
    $region23: #{net1_forward.10} parent=5 // pred_region
      // Predicated region
      $region25: #{net1_forward.10} parent=23 // pred_check
        %p155 = pneg %p30
      $region26: #{net1_forward.10} parent=23 // pred_check_branch
        %157 = sbr.rel (%p155) target = $region28
      $region27: #{net1_forward.10} parent=23 // pred_region
        %p158 = scmp.lt.s32.totalorder %s10, 1
        %s159 = scalar_select %p158, %s10, 1
        %s160 = smul.addr %s159, 232
        %s161 = smul.addr %s160, 8
        %s162 = scalar_lea.vmem %s0, %s161
      $region28: #{net1_forward.10} parent=23 // pred_fallthru
        _
      // Predicated region
      $region29: #{net1_forward.10} parent=23 // pred_check
        %p163 = pneg %p56
      $region30: #{net1_forward.10} parent=23 // pred_check_branch
        %165 = sbr.rel (%p163) target = $region32
      $region31: #{net1_forward.10} parent=23 // pred_region
        %p166 = scmp.lt.s32.totalorder %s10, 1
        %s167 = scalar_select %p166, %s10, 1
        %s168 = smul.addr %s167, 232
        %s169 = smul.addr %s168, 8
        %s170 = scalar_lea.vmem %s1, %s169
      $region32: #{net1_forward.10} parent=23 // pred_fallthru
        _
    $region24: #{net1_forward.10} parent=5 // pred_fallthru
      _
    %p171 = scmp.le.s32.totalorder 1, %s10
    %p172 = scmp.lt.s32.totalorder %s10, 3
    %p173 = pnand %p171, %p172
    %p174 = pneg %p173
    // Predicated region
    $region33: #{net1_forward.10} parent=5 // pred_check
      _
    $region34: #{net1_forward.10} parent=5 // pred_check_branch
      %176 = sbr.rel (%p173) target = $region36
    $region35: #{net1_forward.10} parent=5 // pred_region
      %s177 = ssub.s32 %s10, 1
      %p178 = scmp.lt.s32.totalorder %s15, 1
      %s179 = scalar_select %p178, %s15, 1
      %s180 = smul.addr %s179, 232
      %s181 = smul.addr %s180, 8
      %s182 = scalar_lea.vmem %s0, %s181
      %p183 = pneg %p36
      %p184 = pneg %p33
      %p185 = scmp.lt.s32.totalorder %s15, 1
      %s186 = scalar_select %p185, %s15, 1
      %s187 = smul.addr %s186, 232
      %s188 = smul.addr %s187, 8
      %s189 = scalar_lea.vmem %s1, %s188
      %p190 = pneg %p62
      %p191 = pneg %p59
      %p192 = pneg %p83
      %p193 = pneg %p80
      %p194 = pneg %p104
      %p195 = pneg %p101
      %p196 = pneg %p130
      %p197 = pneg %p127
      %p198 = scmp.lt.s32.totalorder %s15, 1
      %s199 = scalar_select %p198, %s15, 1
      %s200 = smul.addr %s199, 116
      %s201 = smul.addr %s200, 8
      %s202 = scalar_lea.vmem %s4, %s201
      %p203 = scmp.lt.s32.totalorder %s15, 1
      %s204 = scalar_select %p203, %s15, 1
      %s205 = smul.addr %s204, 232
      %s206 = smul.addr %s205, 8
      %s207 = scalar_lea.vmem %s0, %s206
      %p208 = scmp.lt.s32.totalorder %s15, 1
      %s209 = scalar_select %p208, %s15, 1
      %s210 = smul.addr %s209, 232
      %s211 = smul.addr %s210, 8
      %s212 = scalar_lea.vmem %s1, %s211
      %p213 = scmp.lt.s32.totalorder %s15, 1
      %s214 = scalar_select %p213, %s15, 1
      %s215 = smul.addr %s214, 116
      %s216 = smul.addr %s215, 8
      %s217 = scalar_lea.vmem %s4, %s216
      loop: start=0, step=1, limit=58
      $region37: #{net1_forward.10} parent=35 // loop_pre_header
        _
      $region38: #{net1_forward.10} parent=35 // loop_header
        %s219 = sphi 0, %s223
        %p220 = scmp.ge.s32.totalorder %s219, 58
      $region39: #{net1_forward.10} parent=35 // loop_header_branch
        %222 = sbr.rel (%p220) target = $region43
      $region40: #{net1_forward.10} parent=35 // loop_body
        %v224 = vld [vmem:[%s2] sm:$0xff]
        %v225 = vld [vmem:[%s2 + $0x8] sm:$0x3]
        %v226 = vld [vmem:[%s3] sm:$0xff]
        %v227 = vld [vmem:[%s3 + $0x8] sm:$0x3]
        %s228 = smul.u32 %s219, 2
        %s229 = smul.u32 %s228, 16
        %s230 = scalar_lea.vmem %s207, %s229
        %v231 = vld [vmem:[%s230] sm:$0xff]
        %v232 = vld [vmem:[%s230 + $0x8] sm:$0x3]
        %v233 = vld [vmem:[%s230 + $0x10] sm:$0xff]
        %v234 = vld [vmem:[%s230 + $0x18] sm:$0x3]
        %s235 = scalar_lea.vmem %s212, %s229
        %v236 = vld [vmem:[%s235] sm:$0xff]
        %v237 = vld [vmem:[%s235 + $0x8] sm:$0x3]
        %v238 = vld [vmem:[%s235 + $0x10] sm:$0xff]
        %v239 = vld [vmem:[%s235 + $0x18] sm:$0x3]
        %241 = vset.pattern.permute.xlu0 0
        %242 = vperm.xlu0 %241, %v224
        %v243 = vpop.permute.xlu0 %242
        %246 = vset.pattern.permute.xlu0 0
        %247 = vperm.xlu0 %246, %v225
        %v248 = vpop.permute.xlu0 %247
        %v250 = vmul.f32 %v231, %v243
        %v251 = vmul.f32 %v232, %v248
        %v252 = vmul.f32 %v233, %v243
        %v253 = vmul.f32 %v234, %v248
        %255 = vset.pattern.permute.xlu0 0
        %256 = vperm.xlu0 %255, %v226
        %v257 = vpop.permute.xlu0 %256
        %260 = vset.pattern.permute.xlu0 0
        %261 = vperm.xlu0 %260, %v227
        %v262 = vpop.permute.xlu0 %261
        %v264 = vadd.f32 %v250, %v257
        %v265 = vadd.f32 %v251, %v262
        %v266 = vadd.f32 %v252, %v257
        %v267 = vadd.f32 %v253, %v262
        %v268 = vmul.f32 %v236, %v243
        %v269 = vmul.f32 %v237, %v248
        %v270 = vmul.f32 %v238, %v243
        %v271 = vmul.f32 %v239, %v248
        %v272 = vadd.f32 %v268, %v257
        %v273 = vadd.f32 %v269, %v262
        %v274 = vadd.f32 %v270, %v257
        %v275 = vadd.f32 %v271, %v262
        %v276 = vmax.f32 %v264, %v272
        %v277 = vmax.f32 %v265, %v273
        %v278 = vmax.f32 %v266, %v274
        %v279 = vmax.f32 %v267, %v275
        %v280 = vmax.f32 %v276, %v278
        %v281 = vmax.f32 %v277, %v279
        %v282 = vmax.f32 %v280, 0.0
        %v283 = vmax.f32 %v281, 0.0
        %s284 = smul.u32 %s219, 16
        %s285 = scalar_lea.vmem %s217, %s284
        %vm286 = vcmask 474112
        %287 = vst.msk [vmem:[%s285] sm:$0xff] %vm286, %v282
        %vm288 = vcmask 467968
        %289 = vst.msk [vmem:[%s285 + $0x8] sm:$0x3] %vm288, %v283
      $region41: #{net1_forward.10} parent=35 // loop_footer
        %s223 = sadd.s32 1, %s219
      $region42: #{net1_forward.10} parent=35 // loop_footer_branch
        %218 = sbr.rel target = $region38
      $region43: #{net1_forward.10} parent=35 // loop_exit
        _
      %p290 = scmp.lt.s32.totalorder %s15, 1
      %s291 = scalar_select %p290, %s15, 1
      %s292 = smul.addr %s291, 116
      %s293 = smul.addr %s292, 8
      %s294 = scalar_lea.vmem %s4, %s293
      // Predicated region
      $region44: #{net1_forward.10} parent=35 // pred_check
        %p295 = pneg %p127
      $region45: #{net1_forward.10} parent=35 // pred_check_branch
        %297 = sbr.rel (%p295) target = $region47
      $region46: #{net1_forward.10} parent=35 // pred_region
        _
      $region47: #{net1_forward.10} parent=35 // pred_fallthru
        _
    $region36: #{net1_forward.10} parent=5 // pred_fallthru
      _
    %p298 = scmp.le.s32.totalorder 2, %s10
    // Predicated region
    $region48: #{net1_forward.10} parent=5 // pred_check
      %p299 = pneg %p298
    $region49: #{net1_forward.10} parent=5 // pred_check_branch
      %301 = sbr.rel (%p299) target = $region51
    $region50: #{net1_forward.10} parent=5 // pred_region
      %s302 = ssub.s32 %s10, 2
      // Predicated region
      $region52: #{net1_forward.10} parent=50 // pred_check
        %p303 = pneg %p133
      $region53: #{net1_forward.10} parent=50 // pred_check_branch
        %305 = sbr.rel (%p303) target = $region55
      $region54: #{net1_forward.10} parent=50 // pred_region
        %p306 = scmp.lt.s32.totalorder %s16, 1
        %s307 = scalar_select %p306, %s16, 1
        %s308 = smul.addr %s307, 116
        %s309 = smul.addr %s308, 8
        %s310 = scalar_lea.vmem %s4, %s309
      $region55: #{net1_forward.10} parent=50 // pred_fallthru
        _
    $region51: #{net1_forward.10} parent=5 // pred_fallthru
      _
  $region6: #{net1_forward.10} parent=0 // loop_footer
    %s14 = sadd.s32 1, %s10
  $region7: #{net1_forward.10} parent=0 // loop_footer_branch
    %9 = sbr.rel target = $region3
  $region8: #{net1_forward.10} parent=0 // loop_exit
    _

// kernel: net1_forward.11
$region0: #{net1_forward.11}
  #allocation0 [shape = 'u32[]', space=smem, size = 0x4, offset = 0x4, fixed_abs, tag = 'smem constant byte address 0x4 - core index']
  #allocation1 [shape = 'u32[144,128]{1,0:T(1,128)}', space=vmem, size = 0x12000, scoped, tag = 'internal scratch']
  %s0 = inlined_call_operand.vmem [shape: bf16[2,4640,26], index: 0, kind: input, shape index: {}]
  %s1 = inlined_call_operand.vmem [shape: bf16[2,4640,26], index: 1, kind: input, shape index: {}]
  %s2 = inlined_call_operand.vmem [shape: bf16[20,560], index: 2, kind: input, shape index: {}]
  %s3 = inlined_call_operand.vmem [shape: f32[20,1], index: 3, kind: input, shape index: {}]
  %s4 = inlined_call_operand.vmem [shape: f32[2,52,20,26], index: 4, kind: output, shape index: {0}]
  %s5 = inlined_call_operand.vmem [shape: f32[2,52,20,26], index: 5, kind: output, shape index: {1}]
  %s6 = inlined_call_operand.vmem [shape: f32[2,2,20,1], index: 6, kind: output, shape index: {2}]
  %s7 = inlined_call_operand.vmem [shape: f32[2,2,20,1], index: 7, kind: output, shape index: {3}]
  %8 = xla_tuple %s4, %s5, %s6, %s7
  %s9 = sld [smem:[#allocation0]]
  $region80: #{net1_forward.11} parent=0
    _
  %s11 = ssub.s32 1, %s9
  %s12 = scalar_select 0, %s11, %s9
  loop: start=0, step=1, limit=6
  $region2: #{net1_forward.11} parent=0 // loop_pre_header
    _
  $region3: #{net1_forward.11} parent=0 // loop_header
    %s14 = sphi 0, %s18
    %p15 = scmp.ge.s32.totalorder %s14, 6
    %s21 = sphi 0, %s33
    %s22 = sphi 0, %s29
    %s23 = sphi 0, %s21
    %s24 = sphi 0, %s22
    %s25 = sphi 0, %s23
    %s26 = sphi 0, %s24
    %s36 = sphi 0, %s38
    %s39 = sphi 0, %s36
    %s40 = sphi 0, %s39
    %s56 = sphi 0, %s40
    %s62 = sphi 0, %s64
    %s65 = sphi 0, %s62
    %s66 = sphi 0, %s65
    %s82 = sphi 0, %s66
    %s86 = sphi 0, %s86
    %s88 = sphi 0, %s86
    %s89 = sphi 0, %s88
    %s103 = sphi 0, %s89
    %s107 = sphi 0, %s107
    %s109 = sphi 0, %s107
    %s110 = sphi 0, %s109
    %s124 = sphi 0, %s110
    %s132 = sphi 0, %s134
    %s135 = sphi 0, %s132
    %s136 = sphi 0, %s135
    %s152 = sphi 0, %s136
    %s160 = sphi 0, %s162
    %s163 = sphi 0, %s160
    %s164 = sphi 0, %s163
    %s180 = sphi 0, %s164
    %s188 = sphi 0, %s190
    %s191 = sphi 0, %s188
    %s192 = sphi 0, %s191
    %s208 = sphi 0, %s192
    %s216 = sphi 0, %s218
    %s219 = sphi 0, %s216
    %s220 = sphi 0, %s219
    %s236 = sphi 0, %s220
  $region4: #{net1_forward.11} parent=0 // loop_header_branch
    %17 = sbr.rel (%p15) target = $region8
  $region5: #{net1_forward.11} parent=0 // loop_body
    %s19 = ssub.s32 %s14, 1
    %s20 = ssub.s32 %s14, 2
    %s27 = sadd.s32 1, %s22
    %p28 = scmp.ge.s32.totalorder %s27, 2
    %s29 = scalar_select %p28, 0, %s27
    %s30 = sadd.s32 1, %s21
    %s31 = scalar_select %p28, %s30, %s21
    %p32 = scmp.ge.s32.totalorder %s31, 2
    %s33 = scalar_select %p32, 0, %s31
    %s34 = ssub.s32 %s21, %s33
    %p35 = scmp.eq.s32.totalorder %s34, 0
    %s37 = sadd.s32 %s36, 1
    %s38 = scalar_select %p35, %s36, %s37
    %p41 = pneg %p35
    %p42 = scmp.eq.s32.totalorder %s14, 3
    %p43 = por %p41, %p42
    %p44 = scmp.ne.s32.totalorder %s36, %s39
    %p45 = scmp.eq.s32.totalorder %s14, 0
    %p46 = por %p44, %p45
    %p47 = scmp.ne.s32.totalorder %s36, %s39
    %p48 = scmp.eq.s32.totalorder %s19, 3
    %p49 = por %p47, %p48
    %p50 = scmp.ne.s32.totalorder %s39, %s40
    %p51 = scmp.eq.s32.totalorder %s19, 0
    %p52 = por %p50, %p51
    %p53 = scmp.ne.s32.totalorder %s39, %s40
    %p54 = scmp.eq.s32.totalorder %s20, 3
    %p55 = por %p53, %p54
    %p57 = scmp.ne.s32.totalorder %s40, %s56
    %p58 = scmp.eq.s32.totalorder %s20, 0
    %p59 = por %p57, %p58
    %s60 = ssub.s32 %s21, %s33
    %p61 = scmp.eq.s32.totalorder %s60, 0
    %s63 = sadd.s32 %s62, 1
    %s64 = scalar_select %p61, %s62, %s63
    %p67 = pneg %p61
    %p68 = scmp.eq.s32.totalorder %s14, 3
    %p69 = por %p67, %p68
    %p70 = scmp.ne.s32.totalorder %s62, %s65
    %p71 = scmp.eq.s32.totalorder %s14, 0
    %p72 = por %p70, %p71
    %p73 = scmp.ne.s32.totalorder %s62, %s65
    %p74 = scmp.eq.s32.totalorder %s19, 3
    %p75 = por %p73, %p74
    %p76 = scmp.ne.s32.totalorder %s65, %s66
    %p77 = scmp.eq.s32.totalorder %s19, 0
    %p78 = por %p76, %p77
    %p79 = scmp.ne.s32.totalorder %s65, %s66
    %p80 = scmp.eq.s32.totalorder %s20, 3
    %p81 = por %p79, %p80
    %p83 = scmp.ne.s32.totalorder %s66, %s82
    %p84 = scmp.eq.s32.totalorder %s20, 0
    %p85 = por %p83, %p84
    %s87 = sadd.s32 %s86, 1
    %p90 = scmp.eq.s32.totalorder %s14, 3
    %p91 = scmp.ne.s32.totalorder %s86, %s88
    %p92 = scmp.eq.s32.totalorder %s14, 0
    %p93 = por %p91, %p92
    %p94 = scmp.ne.s32.totalorder %s86, %s88
    %p95 = scmp.eq.s32.totalorder %s19, 3
    %p96 = por %p94, %p95
    %p97 = scmp.ne.s32.totalorder %s88, %s89
    %p98 = scmp.eq.s32.totalorder %s19, 0
    %p99 = por %p97, %p98
    %p100 = scmp.ne.s32.totalorder %s88, %s89
    %p101 = scmp.eq.s32.totalorder %s20, 3
    %p102 = por %p100, %p101
    %p104 = scmp.ne.s32.totalorder %s89, %s103
    %p105 = scmp.eq.s32.totalorder %s20, 0
    %p106 = por %p104, %p105
    %s108 = sadd.s32 %s107, 1
    %p111 = scmp.eq.s32.totalorder %s14, 3
    %p112 = scmp.ne.s32.totalorder %s107, %s109
    %p113 = scmp.eq.s32.totalorder %s14, 0
    %p114 = por %p112, %p113
    %p115 = scmp.ne.s32.totalorder %s107, %s109
    %p116 = scmp.eq.s32.totalorder %s19, 3
    %p117 = por %p115, %p116
    %p118 = scmp.ne.s32.totalorder %s109, %s110
    %p119 = scmp.eq.s32.totalorder %s19, 0
    %p120 = por %p118, %p119
    %p121 = scmp.ne.s32.totalorder %s109, %s110
    %p122 = scmp.eq.s32.totalorder %s20, 3
    %p123 = por %p121, %p122
    %p125 = scmp.ne.s32.totalorder %s110, %s124
    %p126 = scmp.eq.s32.totalorder %s20, 0
    %p127 = por %p125, %p126
    %s128 = ssub.s32 %s21, %s33
    %s129 = ssub.s32 %s22, %s29
    %s130 = sor.u32 %s128, %s129
    %p131 = scmp.eq.s32.totalorder %s130, 0
    %s133 = sadd.s32 %s132, 1
    %s134 = scalar_select %p131, %s132, %s133
    %p137 = pneg %p131
    %p138 = scmp.eq.s32.totalorder %s14, 3
    %p139 = por %p137, %p138
    %p140 = scmp.ne.s32.totalorder %s132, %s135
    %p141 = scmp.eq.s32.totalorder %s14, 0
    %p142 = por %p140, %p141
    %p143 = scmp.ne.s32.totalorder %s132, %s135
    %p144 = scmp.eq.s32.totalorder %s19, 3
    %p145 = por %p143, %p144
    %p146 = scmp.ne.s32.totalorder %s135, %s136
    %p147 = scmp.eq.s32.totalorder %s19, 0
    %p148 = por %p146, %p147
    %p149 = scmp.ne.s32.totalorder %s135, %s136
    %p150 = scmp.eq.s32.totalorder %s20, 3
    %p151 = por %p149, %p150
    %p153 = scmp.ne.s32.totalorder %s136, %s152
    %p154 = scmp.eq.s32.totalorder %s20, 0
    %p155 = por %p153, %p154
    %s156 = ssub.s32 %s21, %s33
    %s157 = ssub.s32 %s22, %s29
    %s158 = sor.u32 %s156, %s157
    %p159 = scmp.eq.s32.totalorder %s158, 0
    %s161 = sadd.s32 %s160, 1
    %s162 = scalar_select %p159, %s160, %s161
    %p165 = pneg %p159
    %p166 = scmp.eq.s32.totalorder %s14, 3
    %p167 = por %p165, %p166
    %p168 = scmp.ne.s32.totalorder %s160, %s163
    %p169 = scmp.eq.s32.totalorder %s14, 0
    %p170 = por %p168, %p169
    %p171 = scmp.ne.s32.totalorder %s160, %s163
    %p172 = scmp.eq.s32.totalorder %s19, 3
    %p173 = por %p171, %p172
    %p174 = scmp.ne.s32.totalorder %s163, %s164
    %p175 = scmp.eq.s32.totalorder %s19, 0
    %p176 = por %p174, %p175
    %p177 = scmp.ne.s32.totalorder %s163, %s164
    %p178 = scmp.eq.s32.totalorder %s20, 3
    %p179 = por %p177, %p178
    %p181 = scmp.ne.s32.totalorder %s164, %s180
    %p182 = scmp.eq.s32.totalorder %s20, 0
    %p183 = por %p181, %p182
    %s184 = ssub.s32 %s21, %s33
    %s185 = ssub.s32 %s22, %s29
    %s186 = sor.u32 %s184, %s185
    %p187 = scmp.eq.s32.totalorder %s186, 0
    %s189 = sadd.s32 %s188, 1
    %s190 = scalar_select %p187, %s188, %s189
    %p193 = pneg %p187
    %p194 = scmp.eq.s32.totalorder %s14, 3
    %p195 = por %p193, %p194
    %p196 = scmp.ne.s32.totalorder %s188, %s191
    %p197 = scmp.eq.s32.totalorder %s14, 0
    %p198 = por %p196, %p197
    %p199 = scmp.ne.s32.totalorder %s188, %s191
    %p200 = scmp.eq.s32.totalorder %s19, 3
    %p201 = por %p199, %p200
    %p202 = scmp.ne.s32.totalorder %s191, %s192
    %p203 = scmp.eq.s32.totalorder %s19, 0
    %p204 = por %p202, %p203
    %p205 = scmp.ne.s32.totalorder %s191, %s192
    %p206 = scmp.eq.s32.totalorder %s20, 3
    %p207 = por %p205, %p206
    %p209 = scmp.ne.s32.totalorder %s192, %s208
    %p210 = scmp.eq.s32.totalorder %s20, 0
    %p211 = por %p209, %p210
    %s212 = ssub.s32 %s21, %s33
    %s213 = ssub.s32 %s22, %s29
    %s214 = sor.u32 %s212, %s213
    %p215 = scmp.eq.s32.totalorder %s214, 0
    %s217 = sadd.s32 %s216, 1
    %s218 = scalar_select %p215, %s216, %s217
    %p221 = pneg %p215
    %p222 = scmp.eq.s32.totalorder %s14, 3
    %p223 = por %p221, %p222
    %p224 = scmp.ne.s32.totalorder %s216, %s219
    %p225 = scmp.eq.s32.totalorder %s14, 0
    %p226 = por %p224, %p225
    %p227 = scmp.ne.s32.totalorder %s216, %s219
    %p228 = scmp.eq.s32.totalorder %s19, 3
    %p229 = por %p227, %p228
    %p230 = scmp.ne.s32.totalorder %s219, %s220
    %p231 = scmp.eq.s32.totalorder %s19, 0
    %p232 = por %p230, %p231
    %p233 = scmp.ne.s32.totalorder %s219, %s220
    %p234 = scmp.eq.s32.totalorder %s20, 3
    %p235 = por %p233, %p234
    %p237 = scmp.ne.s32.totalorder %s220, %s236
    %p238 = scmp.eq.s32.totalorder %s20, 0
    %p239 = por %p237, %p238
    %p240 = scmp.le.s32.totalorder 1, %s14
    %p241 = scmp.lt.s32.totalorder %s14, 5
    %p242 = pnand %p240, %p241
    %p243 = pneg %p242
    // Predicated region
    $region9: #{net1_forward.11} parent=5 // pred_check
      _
    $region10: #{net1_forward.11} parent=5 // pred_check_branch
      %245 = sbr.rel (%p242) target = $region12
    $region11: #{net1_forward.11} parent=5 // pred_region
      %s246 = ssub.s32 %s14, 1
      // Predicated region
      $region13: #{net1_forward.11} parent=11 // pred_check
        %p247 = pneg %p99
      $region14: #{net1_forward.11} parent=11 // pred_check_branch
        %249 = sbr.rel (%p247) target = $region16
      $region15: #{net1_forward.11} parent=11 // pred_region
        _
      $region16: #{net1_forward.11} parent=11 // pred_fallthru
        _
      // Predicated region
      $region17: #{net1_forward.11} parent=11 // pred_check
        %p250 = pneg %p120
      $region18: #{net1_forward.11} parent=11 // pred_check_branch
        %252 = sbr.rel (%p250) target = $region20
      $region19: #{net1_forward.11} parent=11 // pred_region
        _
      $region20: #{net1_forward.11} parent=11 // pred_fallthru
        _
    $region12: #{net1_forward.11} parent=5 // pred_fallthru
      _
    %p253 = scmp.lt.s32.totalorder %s14, 4
    // Predicated region
    $region21: #{net1_forward.11} parent=5 // pred_check
      %p254 = pneg %p253
    $region22: #{net1_forward.11} parent=5 // pred_check_branch
      %256 = sbr.rel (%p254) target = $region24
    $region23: #{net1_forward.11} parent=5 // pred_region
      // Predicated region
      $region25: #{net1_forward.11} parent=23 // pred_check
        %p257 = pneg %p46
      $region26: #{net1_forward.11} parent=23 // pred_check_branch
        %259 = sbr.rel (%p257) target = $region28
      $region27: #{net1_forward.11} parent=23 // pred_region
        %p260 = scmp.lt.s32.totalorder %s21, 1
        %s261 = scalar_select %p260, %s21, 1
        %s262 = smul.addr %s261, 580
        %s263 = smul.addr %s262, 4
        %s264 = scalar_lea.vmem %s0, %s263
      $region28: #{net1_forward.11} parent=23 // pred_fallthru
        _
      // Predicated region
      $region29: #{net1_forward.11} parent=23 // pred_check
        %p265 = pneg %p72
      $region30: #{net1_forward.11} parent=23 // pred_check_branch
        %267 = sbr.rel (%p265) target = $region32
      $region31: #{net1_forward.11} parent=23 // pred_region
        %p268 = scmp.lt.s32.totalorder %s21, 1
        %s269 = scalar_select %p268, %s21, 1
        %s270 = smul.addr %s269, 580
        %s271 = smul.addr %s270, 4
        %s272 = scalar_lea.vmem %s1, %s271
      $region32: #{net1_forward.11} parent=23 // pred_fallthru
        _
    $region24: #{net1_forward.11} parent=5 // pred_fallthru
      _
    %p273 = scmp.le.s32.totalorder 1, %s14
    %p274 = scmp.lt.s32.totalorder %s14, 5
    %p275 = pnand %p273, %p274
    %p276 = pneg %p275
    // Predicated region
    $region33: #{net1_forward.11} parent=5 // pred_check
      _
    $region34: #{net1_forward.11} parent=5 // pred_check_branch
      %278 = sbr.rel (%p275) target = $region36
    $region35: #{net1_forward.11} parent=5 // pred_region
      %s279 = ssub.s32 %s14, 1
      %p280 = scmp.lt.s32.totalorder %s23, 1
      %s281 = scalar_select %p280, %s23, 1
      %s282 = smul.addr %s281, 580
      %s283 = smul.addr %s282, 4
      %s284 = scalar_lea.vmem %s0, %s283
      %p285 = pneg %p52
      %p286 = pneg %p49
      %p287 = scmp.lt.s32.totalorder %s23, 1
      %s288 = scalar_select %p287, %s23, 1
      %s289 = smul.addr %s288, 580
      %s290 = smul.addr %s289, 4
      %s291 = scalar_lea.vmem %s1, %s290
      %p292 = pneg %p78
      %p293 = pneg %p75
      %p294 = pneg %p99
      %p295 = pneg %p96
      %p296 = pneg %p120
      %p297 = pneg %p117
      %p298 = pneg %p148
      %p299 = pneg %p145
      %s300 = smul.u32 26, %s24
      %p301 = scmp.lt.s32.totalorder %s23, 1
      %s302 = scalar_select %p301, %s23, 1
      %p303 = scmp.lt.s32.totalorder %s300, 51
      %s304 = scalar_select %p303, %s300, 51
      %s305 = smul.addr %s304, 3
      %s306 = smul.addr %s302, 156
      %s307 = sadd.s32 %s305, %s306
      %s308 = smul.addr %s307, 8
      %s309 = scalar_lea.vmem %s4, %s308
      %p310 = pneg %p176
      %p311 = pneg %p173
      %s312 = smul.u32 26, %s24
      %p313 = scmp.lt.s32.totalorder %s23, 1
      %s314 = scalar_select %p313, %s23, 1
      %p315 = scmp.lt.s32.totalorder %s312, 51
      %s316 = scalar_select %p315, %s312, 51
      %s317 = smul.addr %s316, 3
      %s318 = smul.addr %s314, 156
      %s319 = sadd.s32 %s317, %s318
      %s320 = smul.addr %s319, 8
      %s321 = scalar_lea.vmem %s5, %s320
      %p322 = pneg %p204
      %p323 = pneg %p201
      %p324 = scmp.lt.s32.totalorder %s23, 1
      %s325 = scalar_select %p324, %s23, 1
      %p326 = scmp.lt.s32.totalorder %s24, 1
      %s327 = scalar_select %p326, %s24, 1
      %s328 = smul.addr %s327, 3
      %s329 = smul.addr %s325, 6
      %s330 = sadd.s32 %s328, %s329
      %s331 = smul.addr %s330, 8
      %s332 = scalar_lea.vmem %s6, %s331
      %p333 = pneg %p232
      %p334 = pneg %p229
      %p335 = scmp.lt.s32.totalorder %s23, 1
      %s336 = scalar_select %p335, %s23, 1
      %p337 = scmp.lt.s32.totalorder %s24, 1
      %s338 = scalar_select %p337, %s24, 1
      %s339 = smul.addr %s338, 3
      %s340 = smul.addr %s336, 6
      %s341 = sadd.s32 %s339, %s340
      %s342 = smul.addr %s341, 8
      %s343 = scalar_lea.vmem %s7, %s342
      %p344 = scmp.lt.s32.totalorder %s23, 1
      %s345 = scalar_select %p344, %s23, 1
      %s346 = smul.addr %s345, 580
      %s347 = smul.addr %s346, 4
      %s348 = scalar_lea.vmem %s0, %s347
      %p349 = scmp.lt.s32.totalorder %s23, 1
      %s350 = scalar_select %p349, %s23, 1
      %s351 = smul.addr %s350, 580
      %s352 = smul.addr %s351, 4
      %s353 = scalar_lea.vmem %s1, %s352
      %s354 = smul.u32 26, %s24
      %p355 = scmp.lt.s32.totalorder %s23, 1
      %s356 = scalar_select %p355, %s23, 1
      %p357 = scmp.lt.s32.totalorder %s354, 51
      %s358 = scalar_select %p357, %s354, 51
      %s359 = smul.addr %s358, 3
      %s360 = smul.addr %s356, 156
      %s361 = sadd.s32 %s359, %s360
      %s362 = smul.addr %s361, 8
      %s363 = scalar_lea.vmem %s4, %s362
      %s364 = smul.u32 26, %s24
      %s365 = smul.u32 26, %s24
      %p366 = scmp.lt.s32.totalorder %s23, 1
      %s367 = scalar_select %p366, %s23, 1
      %p368 = scmp.lt.s32.totalorder %s365, 51
      %s369 = scalar_select %p368, %s365, 51
      %s370 = smul.addr %s369, 3
      %s371 = smul.addr %s367, 156
      %s372 = sadd.s32 %s370, %s371
      %s373 = smul.addr %s372, 8
      %s374 = scalar_lea.vmem %s5, %s373
      %s375 = smul.u32 26, %s24
      %p376 = scmp.lt.s32.totalorder %s23, 1
      %s377 = scalar_select %p376, %s23, 1
      %p378 = scmp.lt.s32.totalorder %s24, 1
      %s379 = scalar_select %p378, %s24, 1
      %s380 = smul.addr %s379, 3
      %s381 = smul.addr %s377, 6
      %s382 = sadd.s32 %s380, %s381
      %s383 = smul.addr %s382, 8
      %s384 = scalar_lea.vmem %s6, %s383
      %p385 = scmp.lt.s32.totalorder %s23, 1
      %s386 = scalar_select %p385, %s23, 1
      %p387 = scmp.lt.s32.totalorder %s24, 1
      %s388 = scalar_select %p387, %s24, 1
      %s389 = smul.addr %s388, 3
      %s390 = smul.addr %s386, 6
      %s391 = sadd.s32 %s389, %s390
      %s392 = smul.addr %s391, 8
      %s393 = scalar_lea.vmem %s7, %s392
      loop: start=0, step=1, limit=26
      $region37: #{net1_forward.11} parent=35 // loop_pre_header
        _
      $region38: #{net1_forward.11} parent=35 // loop_header
        %s396 = sphi 0, %s400
        %p397 = scmp.ge.s32.totalorder %s396, 26
        %v401 = vphi 0.0, %v1385
        %v402 = vphi 0.0, %v1386
        %v403 = vphi 0.0, %v1387
        %v404 = vphi 0.0, %v1415
        %v405 = vphi 0.0, %v1416
        %v406 = vphi 0.0, %v1417
      $region39: #{net1_forward.11} parent=35 // loop_header_branch
        %399 = sbr.rel (%p397) target = $region43
      $region40: #{net1_forward.11} parent=35 // loop_body
        %v407 = vld [vmem:[%s3] sm:$0xff]
        %v408 = vld [vmem:[%s3 + $0x8] sm:$0xff]
        %v409 = vld [vmem:[%s3 + $0x10] sm:$0xf]
        %s410 = smul.u32 %s24, 26
        %s411 = sadd.s32 %s410, %s396
        %s412 = smul.u32 %s411, 80
        %v413 = vld [vmem:[%s2] sm:$0xff]
        %v414 = vld [vmem:[%s2 + $0x8] sm:$0xff]
        %v415 = vld [vmem:[%s2 + $0x14] sm:$0xff]
        %v416 = vld [vmem:[%s2 + $0x1c] sm:$0xff]
        %v417 = vld [vmem:[%s2 + $0x28] sm:$0x33]
        %v418 = vld [vmem:[%s2 + $0x30] sm:$0x33]
        %s419 = sshra.s32 %s412, 3
        %s420 = sand.u32 %s412, 7
        %s421 = smul.addr %s419, 4
        %s422 = scalar_lea.vmem %s348, %s421
        %v423 = vld [vmem:[%s422] sm:$0xf]
        %v424 = vld [vmem:[%s422 + $0x4] sm:$0xf]
        %v425 = vld [vmem:[%s422 + $0x8] sm:$0xf]
        %v426 = vld [vmem:[%s422 + $0xc] sm:$0xf]
        %v427 = vld [vmem:[%s422 + $0x10] sm:$0xf]
        %v428 = vld [vmem:[%s422 + $0x14] sm:$0xf]
        %v429 = vld [vmem:[%s422 + $0x18] sm:$0xf]
        %v430 = vld [vmem:[%s422 + $0x1c] sm:$0xf]
        %v431 = vld [vmem:[%s422 + $0x20] sm:$0xf]
        %v432 = vld [vmem:[%s422 + $0x24] sm:$0xf]
        %v433 = vld [vmem:[%s422 + $0x28] sm:$0xf]
        %v434 = vld [vmem:[%s422 + $0x2c] sm:$0xf]
        %v435 = vld [vmem:[%s422 + $0x30] sm:$0xf]
        %v436 = vld [vmem:[%s422 + $0x34] sm:$0xf]
        %v437 = vld [vmem:[%s422 + $0x38] sm:$0xf]
        %v438 = vld [vmem:[%s422 + $0x3c] sm:$0xf]
        %v439 = vld [vmem:[%s422 + $0x40] sm:$0xf]
        %v440 = vld [vmem:[%s422 + $0x44] sm:$0xf]
        %v441 = vld [vmem:[%s422 + $0x48] sm:$0xf]
        %v442 = vld [vmem:[%s422 + $0x4c] sm:$0xf]
        %v443 = vld [vmem:[%s422 + $0x50] sm:$0xf]
        %v444 = vld [vmem:[%s422 + $0x54] sm:$0xf]
        %v445 = vld [vmem:[%s422 + $0x58] sm:$0xf]
        %v446 = vld [vmem:[%s422 + $0x5c] sm:$0xf]
        %v447 = vld [vmem:[%s422 + $0x60] sm:$0xf]
        %v448 = vld [vmem:[%s422 + $0x64] sm:$0xf]
        %v449 = vld [vmem:[%s422 + $0x68] sm:$0xf]
        %v450 = vld [vmem:[%s422 + $0x6c] sm:$0xf]
        %v451 = vld [vmem:[%s422 + $0x70] sm:$0xf]
        %v452 = vld [vmem:[%s422 + $0x74] sm:$0xf]
        %v453 = vld [vmem:[%s422 + $0x78] sm:$0xf]
        %v454 = vld [vmem:[%s422 + $0x7c] sm:$0xf]
        %v455 = vld [vmem:[%s422 + $0x80] sm:$0xf]
        %v456 = vld [vmem:[%s422 + $0x84] sm:$0xf]
        %v457 = vld [vmem:[%s422 + $0x88] sm:$0xf]
        %v458 = vld [vmem:[%s422 + $0x8c] sm:$0xf]
        %v459 = vld [vmem:[%s422 + $0x90] sm:$0xf]
        %v460 = vld [vmem:[%s422 + $0x94] sm:$0xf]
        %v461 = vld [vmem:[%s422 + $0x98] sm:$0xf]
        %v462 = vld [vmem:[%s422 + $0x9c] sm:$0xf]
        %v463 = vld [vmem:[%s422 + $0xa0] sm:$0xf]
        %v464 = vld [vmem:[%s422 + $0xa4] sm:$0xf]
        %v465 = vld [vmem:[%s422 + $0xa8] sm:$0xf]
        %v466 = vld [vmem:[%s422 + $0xac] sm:$0xf]
        %v467 = vld [vmem:[%s422 + $0xb0] sm:$0xf]
        %v468 = vld [vmem:[%s422 + $0xb4] sm:$0xf]
        %v469 = vld [vmem:[%s422 + $0xb8] sm:$0xf]
        %v470 = vld [vmem:[%s422 + $0xbc] sm:$0xf]
        %v471 = vld [vmem:[%s422 + $0xc0] sm:$0xf]
        %v472 = vld [vmem:[%s422 + $0xc4] sm:$0xf]
        %v473 = vld [vmem:[%s422 + $0xc8] sm:$0xf]
        %v474 = vld [vmem:[%s422 + $0xcc] sm:$0xf]
        %v475 = vld [vmem:[%s422 + $0xd0] sm:$0xf]
        %v476 = vld [vmem:[%s422 + $0xd4] sm:$0xf]
        %v477 = vld [vmem:[%s422 + $0xd8] sm:$0xf]
        %v478 = vld [vmem:[%s422 + $0xdc] sm:$0xf]
        %v479 = vld [vmem:[%s422 + $0xe0] sm:$0xf]
        %v480 = vld [vmem:[%s422 + $0xe4] sm:$0xf]
        %v481 = vld [vmem:[%s422 + $0xe8] sm:$0xf]
        %v482 = vld [vmem:[%s422 + $0xec] sm:$0xf]
        %v483 = vld [vmem:[%s422 + $0xf0] sm:$0xf]
        %v484 = vld [vmem:[%s422 + $0xf4] sm:$0xf]
        %v485 = vld [vmem:[%s422 + $0xf8] sm:$0xf]
        %v486 = vld [vmem:[%s422 + $0xfc] sm:$0xf]
        %s487 = smul.addr %s419, 4
        %s488 = scalar_lea.vmem %s353, %s487
        %v489 = vld [vmem:[%s488] sm:$0xf]
        %v490 = vld [vmem:[%s488 + $0x4] sm:$0xf]
        %v491 = vld [vmem:[%s488 + $0x8] sm:$0xf]
        %v492 = vld [vmem:[%s488 + $0xc] sm:$0xf]
        %v493 = vld [vmem:[%s488 + $0x10] sm:$0xf]
        %v494 = vld [vmem:[%s488 + $0x14] sm:$0xf]
        %v495 = vld [vmem:[%s488 + $0x18] sm:$0xf]
        %v496 = vld [vmem:[%s488 + $0x1c] sm:$0xf]
        %v497 = vld [vmem:[%s488 + $0x20] sm:$0xf]
        %v498 = vld [vmem:[%s488 + $0x24] sm:$0xf]
        %v499 = vld [vmem:[%s488 + $0x28] sm:$0xf]
        %v500 = vld [vmem:[%s488 + $0x2c] sm:$0xf]
        %v501 = vld [vmem:[%s488 + $0x30] sm:$0xf]
        %v502 = vld [vmem:[%s488 + $0x34] sm:$0xf]
        %v503 = vld [vmem:[%s488 + $0x38] sm:$0xf]
        %v504 = vld [vmem:[%s488 + $0x3c] sm:$0xf]
        %v505 = vld [vmem:[%s488 + $0x40] sm:$0xf]
        %v506 = vld [vmem:[%s488 + $0x44] sm:$0xf]
        %v507 = vld [vmem:[%s488 + $0x48] sm:$0xf]
        %v508 = vld [vmem:[%s488 + $0x4c] sm:$0xf]
        %v509 = vld [vmem:[%s488 + $0x50] sm:$0xf]
        %v510 = vld [vmem:[%s488 + $0x54] sm:$0xf]
        %v511 = vld [vmem:[%s488 + $0x58] sm:$0xf]
        %v512 = vld [vmem:[%s488 + $0x5c] sm:$0xf]
        %v513 = vld [vmem:[%s488 + $0x60] sm:$0xf]
        %v514 = vld [vmem:[%s488 + $0x64] sm:$0xf]
        %v515 = vld [vmem:[%s488 + $0x68] sm:$0xf]
        %v516 = vld [vmem:[%s488 + $0x6c] sm:$0xf]
        %v517 = vld [vmem:[%s488 + $0x70] sm:$0xf]
        %v518 = vld [vmem:[%s488 + $0x74] sm:$0xf]
        %v519 = vld [vmem:[%s488 + $0x78] sm:$0xf]
        %v520 = vld [vmem:[%s488 + $0x7c] sm:$0xf]
        %v521 = vld [vmem:[%s488 + $0x80] sm:$0xf]
        %v522 = vld [vmem:[%s488 + $0x84] sm:$0xf]
        %v523 = vld [vmem:[%s488 + $0x88] sm:$0xf]
        %v524 = vld [vmem:[%s488 + $0x8c] sm:$0xf]
        %v525 = vld [vmem:[%s488 + $0x90] sm:$0xf]
        %v526 = vld [vmem:[%s488 + $0x94] sm:$0xf]
        %v527 = vld [vmem:[%s488 + $0x98] sm:$0xf]
        %v528 = vld [vmem:[%s488 + $0x9c] sm:$0xf]
        %v529 = vld [vmem:[%s488 + $0xa0] sm:$0xf]
        %v530 = vld [vmem:[%s488 + $0xa4] sm:$0xf]
        %v531 = vld [vmem:[%s488 + $0xa8] sm:$0xf]
        %v532 = vld [vmem:[%s488 + $0xac] sm:$0xf]
        %v533 = vld [vmem:[%s488 + $0xb0] sm:$0xf]
        %v534 = vld [vmem:[%s488 + $0xb4] sm:$0xf]
        %v535 = vld [vmem:[%s488 + $0xb8] sm:$0xf]
        %v536 = vld [vmem:[%s488 + $0xbc] sm:$0xf]
        %v537 = vld [vmem:[%s488 + $0xc0] sm:$0xf]
        %v538 = vld [vmem:[%s488 + $0xc4] sm:$0xf]
        %v539 = vld [vmem:[%s488 + $0xc8] sm:$0xf]
        %v540 = vld [vmem:[%s488 + $0xcc] sm:$0xf]
        %v541 = vld [vmem:[%s488 + $0xd0] sm:$0xf]
        %v542 = vld [vmem:[%s488 + $0xd4] sm:$0xf]
        %v543 = vld [vmem:[%s488 + $0xd8] sm:$0xf]
        %v544 = vld [vmem:[%s488 + $0xdc] sm:$0xf]
        %v545 = vld [vmem:[%s488 + $0xe0] sm:$0xf]
        %v546 = vld [vmem:[%s488 + $0xe4] sm:$0xf]
        %v547 = vld [vmem:[%s488 + $0xe8] sm:$0xf]
        %v548 = vld [vmem:[%s488 + $0xec] sm:$0xf]
        %v549 = vld [vmem:[%s488 + $0xf0] sm:$0xf]
        %v550 = vld [vmem:[%s488 + $0xf4] sm:$0xf]
        %v551 = vld [vmem:[%s488 + $0xf8] sm:$0xf]
        %v552 = vld [vmem:[%s488 + $0xfc] sm:$0xf]
        %v553 = vld [vmem:[%s2 + $0x10] sm:$0xf]
        %v554 = vld [vmem:[%s2 + $0x24] sm:$0xf]
        %v555 = vld [vmem:[%s2 + $0x38] sm:$0x3]
        %s556 = sadd.s32 %s412, 512
        %s557 = sshra.s32 %s556, 3
        %s558 = sand.u32 %s556, 7
        %s559 = smul.addr %s557, 4
        %s560 = scalar_lea.vmem %s348, %s559
        %v561 = vld [vmem:[%s560] sm:$0xf]
        %v562 = vld [vmem:[%s560 + $0x4] sm:$0xf]
        %v563 = vld [vmem:[%s560 + $0x8] sm:$0xf]
        %v564 = vld [vmem:[%s560 + $0xc] sm:$0xf]
        %v565 = vld [vmem:[%s560 + $0x10] sm:$0xf]
        %v566 = vld [vmem:[%s560 + $0x14] sm:$0xf]
        %s567 = smul.addr %s557, 4
        %s568 = scalar_lea.vmem %s353, %s567
        %v569 = vld [vmem:[%s568] sm:$0xf]
        %v570 = vld [vmem:[%s568 + $0x4] sm:$0xf]
        %v571 = vld [vmem:[%s568 + $0x8] sm:$0xf]
        %v572 = vld [vmem:[%s568 + $0xc] sm:$0xf]
        %v573 = vld [vmem:[%s568 + $0x10] sm:$0xf]
        %v574 = vld [vmem:[%s568 + $0x14] sm:$0xf]
        %v578 = vunpack.c.l.b16 %v553
        %v579 = vunpack.c.l.b16 %v554
        %v580 = vunpack.c.l.b16 %v555
        %v581 = vpack.c.b16 %v579, %v578
        %v582 = vpack.c.b16 %v580, %v580
        %v589 = vunpack.c.l.b16 %v561
        %v590 = vunpack.c.l.b16 %v562
        %v591 = vunpack.c.l.b16 %v563
        %v592 = vunpack.c.l.b16 %v564
        %v593 = vunpack.c.l.b16 %v565
        %v594 = vunpack.c.l.b16 %v566
        %v595 = vpack.c.b16 %v590, %v589
        %v596 = vpack.c.b16 %v592, %v591
        %v597 = vpack.c.b16 %v594, %v593
        %vm601 = vcmask 392192
        %v603 = vsel %vm601, %v581, 0
        %v606 = vsel %vm601, %v582, 0
        %608 = vmatprep.subr.bf16.mxu0 0
        %609 = vmatpush1.bf16.msra.mxu0 %v595
        %610 = vmatprep.subr.bf16.mxu0 0
        %611 = vmatpush1.bf16.msra.mxu0 %v596
        %612 = vmatprep.subr.bf16.mxu0 0
        %613 = vmatpush1.bf16.msra.mxu0 %v597
        %614 = vmatprep.subr.bf16.mxu0 0
        %615 = vmatpush1.bf16.msra.mxu0 0
        %616 = vmatprep.subr.bf16.mxu0 0
        %617 = vmatpush1.bf16.msra.mxu0 0
        %618 = vmatprep.subr.bf16.mxu0 0
        %619 = vmatpush1.bf16.msra.mxu0 0
        %620 = vmatprep.subr.bf16.mxu0 0
        %621 = vmatpush1.bf16.msra.mxu0 0
        %622 = vmatprep.subr.bf16.mxu0 0
        %623 = vmatpush1.bf16.msra.mxu0 0
        %624 = vmatprep.subr.bf16.mxu0 0
        %625 = vmatpush1.bf16.msra.mxu0 0
        %626 = vmatprep.subr.bf16.mxu0 0
        %627 = vmatpush1.bf16.msra.mxu0 0
        %628 = vmatprep.subr.bf16.mxu0 0
        %629 = vmatpush1.bf16.msra.mxu0 0
        %630 = vmatprep.subr.bf16.mxu0 0
        %631 = vmatpush1.bf16.msra.mxu0 0
        %632 = vmatprep.subr.bf16.mxu0 0
        %633 = vmatpush1.bf16.msra.mxu0 0
        %634 = vmatprep.subr.bf16.mxu0 0
        %635 = vmatpush1.bf16.msra.mxu0 0
        %636 = vmatprep.subr.bf16.mxu0 0
        %637 = vmatpush1.bf16.msra.mxu0 0
        %638 = vmatprep.subr.bf16.mxu0 0
        %639 = vmatpush1.bf16.msra.mxu0 0
        %640 = vmatprep.mubr.bf16.mxu0 0
        %641 = vmatmul.mubr.bf16.gmra.mrb[0].mxu0 %v603
        %v642 = vpop.f32.mrb[0].mxu0
        %v643 = vadd.f32 0.0, %v642
        %v644 = vpop.f32.mrb[0].mxu0
        %v645 = vpop.f32.mrb[0].mxu0
        %v646 = vadd.f32 0.0, %v645
        %v647 = vpop.f32.mrb[0].mxu0
        %648 = vmatprep.mubr.bf16.mxu0 0
        %649 = vmatmul.mubr.bf16.gmra.mrb[0].mxu0 %v606
        %v650 = vpop.f32.mrb[0].mxu0
        %v651 = vadd.f32 0.0, %v650
        %v652 = vpop.f32.mrb[0].mxu0
        %v653 = vpop.f32.mrb[0].mxu0
        %v654 = vpop.f32.mrb[0].mxu0
        %655 = vdwg.mxu0
        %v662 = vunpack.c.l.b16 %v413
        %v663 = vunpack.c.h.b16 %v413
        %v664 = vunpack.c.l.b16 %v414
        %v665 = vunpack.c.h.b16 %v414
        %v666 = vunpack.c.l.b16 %v415
        %v667 = vunpack.c.h.b16 %v415
        %v668 = vunpack.c.l.b16 %v416
        %v669 = vunpack.c.h.b16 %v416
        %v670 = vunpack.c.l.b16 %v417
        %v671 = vunpack.c.h.b16 %v417
        %v672 = vunpack.c.l.b16 %v418
        %v673 = vunpack.c.h.b16 %v418
        %v674 = vpack.c.b16 %v666, %v662
        %v675 = vpack.c.b16 %v667, %v663
        %v676 = vpack.c.b16 %v668, %v664
        %v677 = vpack.c.b16 %v669, %v665
        %v678 = vpack.c.b16 %v670, %v670
        %v679 = vpack.c.b16 %v671, %v671
        %v680 = vpack.c.b16 %v672, %v672
        %v681 = vpack.c.b16 %v673, %v673
        %v754 = vunpack.c.l.b16 %v423
        %v755 = vunpack.c.l.b16 %v424
        %v756 = vunpack.c.l.b16 %v425
        %v757 = vunpack.c.l.b16 %v426
        %v758 = vunpack.c.l.b16 %v427
        %v759 = vunpack.c.l.b16 %v428
        %v760 = vunpack.c.l.b16 %v429
        %v761 = vunpack.c.l.b16 %v430
        %v762 = vunpack.c.l.b16 %v431
        %v763 = vunpack.c.l.b16 %v432
        %v764 = vunpack.c.l.b16 %v433
        %v765 = vunpack.c.l.b16 %v434
        %v766 = vunpack.c.l.b16 %v435
        %v767 = vunpack.c.l.b16 %v436
        %v768 = vunpack.c.l.b16 %v437
        %v769 = vunpack.c.l.b16 %v438
        %v770 = vunpack.c.l.b16 %v439
        %v771 = vunpack.c.l.b16 %v440
        %v772 = vunpack.c.l.b16 %v441
        %v773 = vunpack.c.l.b16 %v442
        %v774 = vunpack.c.l.b16 %v443
        %v775 = vunpack.c.l.b16 %v444
        %v776 = vunpack.c.l.b16 %v445
        %v777 = vunpack.c.l.b16 %v446
        %v778 = vunpack.c.l.b16 %v447
        %v779 = vunpack.c.l.b16 %v448
        %v780 = vunpack.c.l.b16 %v449
        %v781 = vunpack.c.l.b16 %v450
        %v782 = vunpack.c.l.b16 %v451
        %v783 = vunpack.c.l.b16 %v452
        %v784 = vunpack.c.l.b16 %v453
        %v785 = vunpack.c.l.b16 %v454
        %v786 = vunpack.c.l.b16 %v455
        %v787 = vunpack.c.l.b16 %v456
        %v788 = vunpack.c.l.b16 %v457
        %v789 = vunpack.c.l.b16 %v458
        %v790 = vunpack.c.l.b16 %v459
        %v791 = vunpack.c.l.b16 %v460
        %v792 = vunpack.c.l.b16 %v461
        %v793 = vunpack.c.l.b16 %v462
        %v794 = vunpack.c.l.b16 %v463
        %v795 = vunpack.c.l.b16 %v464
        %v796 = vunpack.c.l.b16 %v465
        %v797 = vunpack.c.l.b16 %v466
        %v798 = vunpack.c.l.b16 %v467
        %v799 = vunpack.c.l.b16 %v468
        %v800 = vunpack.c.l.b16 %v469
        %v801 = vunpack.c.l.b16 %v470
        %v802 = vunpack.c.l.b16 %v471
        %v803 = vunpack.c.l.b16 %v472
        %v804 = vunpack.c.l.b16 %v473
        %v805 = vunpack.c.l.b16 %v474
        %v806 = vunpack.c.l.b16 %v475
        %v807 = vunpack.c.l.b16 %v476
        %v808 = vunpack.c.l.b16 %v477
        %v809 = vunpack.c.l.b16 %v478
        %v810 = vunpack.c.l.b16 %v479
        %v811 = vunpack.c.l.b16 %v480
        %v812 = vunpack.c.l.b16 %v481
        %v813 = vunpack.c.l.b16 %v482
        %v814 = vunpack.c.l.b16 %v483
        %v815 = vunpack.c.l.b16 %v484
        %v816 = vunpack.c.l.b16 %v485
        %v817 = vunpack.c.l.b16 %v486
        %v818 = vpack.c.b16 %v755, %v754
        %v819 = vpack.c.b16 %v757, %v756
        %v820 = vpack.c.b16 %v759, %v758
        %v821 = vpack.c.b16 %v761, %v760
        %v822 = vpack.c.b16 %v763, %v762
        %v823 = vpack.c.b16 %v765, %v764
        %v824 = vpack.c.b16 %v767, %v766
        %v825 = vpack.c.b16 %v769, %v768
        %v826 = vpack.c.b16 %v771, %v770
        %v827 = vpack.c.b16 %v773, %v772
        %v828 = vpack.c.b16 %v775, %v774
        %v829 = vpack.c.b16 %v777, %v776
        %v830 = vpack.c.b16 %v779, %v778
        %v831 = vpack.c.b16 %v781, %v780
        %v832 = vpack.c.b16 %v783, %v782
        %v833 = vpack.c.b16 %v785, %v784
        %v834 = vpack.c.b16 %v787, %v786
        %v835 = vpack.c.b16 %v789, %v788
        %v836 = vpack.c.b16 %v791, %v790
        %v837 = vpack.c.b16 %v793, %v792
        %v838 = vpack.c.b16 %v795, %v794
        %v839 = vpack.c.b16 %v797, %v796
        %v840 = vpack.c.b16 %v799, %v798
        %v841 = vpack.c.b16 %v801, %v800
        %v842 = vpack.c.b16 %v803, %v802
        %v843 = vpack.c.b16 %v805, %v804
        %v844 = vpack.c.b16 %v807, %v806
        %v845 = vpack.c.b16 %v809, %v808
        %v846 = vpack.c.b16 %v811, %v810
        %v847 = vpack.c.b16 %v813, %v812
        %v848 = vpack.c.b16 %v815, %v814
        %v849 = vpack.c.b16 %v817, %v816
        %882 = vmatprep.subr.bf16.mxu0 0
        %883 = vmatpush1.bf16.msra.mxu0 %v818
        %884 = vmatprep.subr.bf16.mxu0 0
        %885 = vmatpush1.bf16.msra.mxu0 %v819
        %886 = vmatprep.subr.bf16.mxu0 0
        %887 = vmatpush1.bf16.msra.mxu0 %v820
        %888 = vmatprep.subr.bf16.mxu0 0
        %889 = vmatpush1.bf16.msra.mxu0 %v821
        %890 = vmatprep.subr.bf16.mxu0 0
        %891 = vmatpush1.bf16.msra.mxu0 %v822
        %892 = vmatprep.subr.bf16.mxu0 0
        %893 = vmatpush1.bf16.msra.mxu0 %v823
        %894 = vmatprep.subr.bf16.mxu0 0
        %895 = vmatpush1.bf16.msra.mxu0 %v824
        %896 = vmatprep.subr.bf16.mxu0 0
        %897 = vmatpush1.bf16.msra.mxu0 %v825
        %898 = vmatprep.subr.bf16.mxu0 0
        %899 = vmatpush1.bf16.msra.mxu0 %v826
        %900 = vmatprep.subr.bf16.mxu0 0
        %901 = vmatpush1.bf16.msra.mxu0 %v827
        %902 = vmatprep.subr.bf16.mxu0 0
        %903 = vmatpush1.bf16.msra.mxu0 %v828
        %904 = vmatprep.subr.bf16.mxu0 0
        %905 = vmatpush1.bf16.msra.mxu0 %v829
        %906 = vmatprep.subr.bf16.mxu0 0
        %907 = vmatpush1.bf16.msra.mxu0 %v830
        %908 = vmatprep.subr.bf16.mxu0 0
        %909 = vmatpush1.bf16.msra.mxu0 %v831
        %910 = vmatprep.subr.bf16.mxu0 0
        %911 = vmatpush1.bf16.msra.mxu0 %v832
        %912 = vmatprep.subr.bf16.mxu0 0
        %913 = vmatpush1.bf16.msra.mxu0 %v833
        %914 = vmatprep.mubr.bf16.mxu0 %v675
        %915 = vmatmul.mubr.bf16.gmra.mrb[0].mxu0 %v674
        %v916 = vpop.f32.mrb[0].mxu0
        %v917 = vadd.f32 %v643, %v916
        %v918 = vpop.f32.mrb[0].mxu0
        %v919 = vpop.f32.mrb[0].mxu0
        %v920 = vadd.f32 %v646, %v919
        %v921 = vpop.f32.mrb[0].mxu0
        %922 = vmatprep.mubr.bf16.mxu0 %v679
        %923 = vmatmul.mubr.bf16.gmra.mrb[0].mxu0 %v678
        %v924 = vpop.f32.mrb[0].mxu0
        %v925 = vadd.f32 %v651, %v924
        %v926 = vpop.f32.mrb[0].mxu0
        %v927 = vpop.f32.mrb[0].mxu0
        %v928 = vpop.f32.mrb[0].mxu0
        %929 = vdwg.mxu0
        %930 = vmatprep.subr.bf16.mxu0 0
        %931 = vmatpush1.bf16.msra.mxu0 %v834
        %932 = vmatprep.subr.bf16.mxu0 0
        %933 = vmatpush1.bf16.msra.mxu0 %v835
        %934 = vmatprep.subr.bf16.mxu0 0
        %935 = vmatpush1.bf16.msra.mxu0 %v836
        %936 = vmatprep.subr.bf16.mxu0 0
        %937 = vmatpush1.bf16.msra.mxu0 %v837
        %938 = vmatprep.subr.bf16.mxu0 0
        %939 = vmatpush1.bf16.msra.mxu0 %v838
        %940 = vmatprep.subr.bf16.mxu0 0
        %941 = vmatpush1.bf16.msra.mxu0 %v839
        %942 = vmatprep.subr.bf16.mxu0 0
        %943 = vmatpush1.bf16.msra.mxu0 %v840
        %944 = vmatprep.subr.bf16.mxu0 0
        %945 = vmatpush1.bf16.msra.mxu0 %v841
        %946 = vmatprep.subr.bf16.mxu0 0
        %947 = vmatpush1.bf16.msra.mxu0 %v842
        %948 = vmatprep.subr.bf16.mxu0 0
        %949 = vmatpush1.bf16.msra.mxu0 %v843
        %950 = vmatprep.subr.bf16.mxu0 0
        %951 = vmatpush1.bf16.msra.mxu0 %v844
        %952 = vmatprep.subr.bf16.mxu0 0
        %953 = vmatpush1.bf16.msra.mxu0 %v845
        %954 = vmatprep.subr.bf16.mxu0 0
        %955 = vmatpush1.bf16.msra.mxu0 %v846
        %956 = vmatprep.subr.bf16.mxu0 0
        %957 = vmatpush1.bf16.msra.mxu0 %v847
        %958 = vmatprep.subr.bf16.mxu0 0
        %959 = vmatpush1.bf16.msra.mxu0 %v848
        %960 = vmatprep.subr.bf16.mxu0 0
        %961 = vmatpush1.bf16.msra.mxu0 %v849
        %962 = vmatprep.mubr.bf16.mxu0 %v677
        %963 = vmatmul.mubr.bf16.gmra.mrb[0].mxu0 %v676
        %v964 = vpop.f32.mrb[0].mxu0
        %v965 = vadd.f32 %v917, %v964
        %v966 = vpop.f32.mrb[0].mxu0
        %v967 = vpop.f32.mrb[0].mxu0
        %v968 = vadd.f32 %v920, %v967
        %v969 = vpop.f32.mrb[0].mxu0
        %970 = vmatprep.mubr.bf16.mxu0 %v681
        %971 = vmatmul.mubr.bf16.gmra.mrb[0].mxu0 %v680
        %v972 = vpop.f32.mrb[0].mxu0
        %v973 = vadd.f32 %v925, %v972
        %v974 = vpop.f32.mrb[0].mxu0
        %v975 = vpop.f32.mrb[0].mxu0
        %v976 = vpop.f32.mrb[0].mxu0
        %977 = vdwg.mxu0
        %v984 = vunpack.c.l.b16 %v569
        %v985 = vunpack.c.l.b16 %v570
        %v986 = vunpack.c.l.b16 %v571
        %v987 = vunpack.c.l.b16 %v572
        %v988 = vunpack.c.l.b16 %v573
        %v989 = vunpack.c.l.b16 %v574
        %v990 = vpack.c.b16 %v985, %v984
        %v991 = vpack.c.b16 %v987, %v986
        %v992 = vpack.c.b16 %v989, %v988
        %996 = vmatprep.subr.bf16.mxu0 0
        %997 = vmatpush1.bf16.msra.mxu0 %v990
        %998 = vmatprep.subr.bf16.mxu0 0
        %999 = vmatpush1.bf16.msra.mxu0 %v991
        %1000 = vmatprep.subr.bf16.mxu0 0
        %1001 = vmatpush1.bf16.msra.mxu0 %v992
        %1002 = vmatprep.subr.bf16.mxu0 0
        %1003 = vmatpush1.bf16.msra.mxu0 0
        %1004 = vmatprep.subr.bf16.mxu0 0
        %1005 = vmatpush1.bf16.msra.mxu0 0
        %1006 = vmatprep.subr.bf16.mxu0 0
        %1007 = vmatpush1.bf16.msra.mxu0 0
        %1008 = vmatprep.subr.bf16.mxu0 0
        %1009 = vmatpush1.bf16.msra.mxu0 0
        %1010 = vmatprep.subr.bf16.mxu0 0
        %1011 = vmatpush1.bf16.msra.mxu0 0
        %1012 = vmatprep.subr.bf16.mxu0 0
        %1013 = vmatpush1.bf16.msra.mxu0 0
        %1014 = vmatprep.subr.bf16.mxu0 0
        %1015 = vmatpush1.bf16.msra.mxu0 0
        %1016 = vmatprep.subr.bf16.mxu0 0
        %1017 = vmatpush1.bf16.msra.mxu0 0
        %1018 = vmatprep.subr.bf16.mxu0 0
        %1019 = vmatpush1.bf16.msra.mxu0 0
        %1020 = vmatprep.subr.bf16.mxu0 0
        %1021 = vmatpush1.bf16.msra.mxu0 0
        %1022 = vmatprep.subr.bf16.mxu0 0
        %1023 = vmatpush1.bf16.msra.mxu0 0
        %1024 = vmatprep.subr.bf16.mxu0 0
        %1025 = vmatpush1.bf16.msra.mxu0 0
        %1026 = vmatprep.subr.bf16.mxu0 0
        %1027 = vmatpush1.bf16.msra.mxu0 0
        %1028 = vmatprep.mubr.bf16.mxu0 0
        %1029 = vmatmul.mubr.bf16.gmra.mrb[0].mxu0 %v603
        %v1030 = vpop.f32.mrb[0].mxu0
        %v1031 = vadd.f32 0.0, %v1030
        %v1032 = vpop.f32.mrb[0].mxu0
        %v1033 = vpop.f32.mrb[0].mxu0
        %v1034 = vadd.f32 0.0, %v1033
        %v1035 = vpop.f32.mrb[0].mxu0
        %1036 = vmatprep.mubr.bf16.mxu0 0
        %1037 = vmatmul.mubr.bf16.gmra.mrb[0].mxu0 %v606
        %v1038 = vpop.f32.mrb[0].mxu0
        %v1039 = vadd.f32 0.0, %v1038
        %v1040 = vpop.f32.mrb[0].mxu0
        %v1041 = vpop.f32.mrb[0].mxu0
        %v1042 = vpop.f32.mrb[0].mxu0
        %1043 = vdwg.mxu0
        %v1108 = vunpack.c.l.b16 %v489
        %v1109 = vunpack.c.l.b16 %v490
        %v1110 = vunpack.c.l.b16 %v491
        %v1111 = vunpack.c.l.b16 %v492
        %v1112 = vunpack.c.l.b16 %v493
        %v1113 = vunpack.c.l.b16 %v494
        %v1114 = vunpack.c.l.b16 %v495
        %v1115 = vunpack.c.l.b16 %v496
        %v1116 = vunpack.c.l.b16 %v497
        %v1117 = vunpack.c.l.b16 %v498
        %v1118 = vunpack.c.l.b16 %v499
        %v1119 = vunpack.c.l.b16 %v500
        %v1120 = vunpack.c.l.b16 %v501
        %v1121 = vunpack.c.l.b16 %v502
        %v1122 = vunpack.c.l.b16 %v503
        %v1123 = vunpack.c.l.b16 %v504
        %v1124 = vunpack.c.l.b16 %v505
        %v1125 = vunpack.c.l.b16 %v506
        %v1126 = vunpack.c.l.b16 %v507
        %v1127 = vunpack.c.l.b16 %v508
        %v1128 = vunpack.c.l.b16 %v509
        %v1129 = vunpack.c.l.b16 %v510
        %v1130 = vunpack.c.l.b16 %v511
        %v1131 = vunpack.c.l.b16 %v512
        %v1132 = vunpack.c.l.b16 %v513
        %v1133 = vunpack.c.l.b16 %v514
        %v1134 = vunpack.c.l.b16 %v515
        %v1135 = vunpack.c.l.b16 %v516
        %v1136 = vunpack.c.l.b16 %v517
        %v1137 = vunpack.c.l.b16 %v518
        %v1138 = vunpack.c.l.b16 %v519
        %v1139 = vunpack.c.l.b16 %v520
        %v1140 = vunpack.c.l.b16 %v521
        %v1141 = vunpack.c.l.b16 %v522
        %v1142 = vunpack.c.l.b16 %v523
        %v1143 = vunpack.c.l.b16 %v524
        %v1144 = vunpack.c.l.b16 %v525
        %v1145 = vunpack.c.l.b16 %v526
        %v1146 = vunpack.c.l.b16 %v527
        %v1147 = vunpack.c.l.b16 %v528
        %v1148 = vunpack.c.l.b16 %v529
        %v1149 = vunpack.c.l.b16 %v530
        %v1150 = vunpack.c.l.b16 %v531
        %v1151 = vunpack.c.l.b16 %v532
        %v1152 = vunpack.c.l.b16 %v533
        %v1153 = vunpack.c.l.b16 %v534
        %v1154 = vunpack.c.l.b16 %v535
        %v1155 = vunpack.c.l.b16 %v536
        %v1156 = vunpack.c.l.b16 %v537
        %v1157 = vunpack.c.l.b16 %v538
        %v1158 = vunpack.c.l.b16 %v539
        %v1159 = vunpack.c.l.b16 %v540
        %v1160 = vunpack.c.l.b16 %v541
        %v1161 = vunpack.c.l.b16 %v542
        %v1162 = vunpack.c.l.b16 %v543
        %v1163 = vunpack.c.l.b16 %v544
        %v1164 = vunpack.c.l.b16 %v545
        %v1165 = vunpack.c.l.b16 %v546
        %v1166 = vunpack.c.l.b16 %v547
        %v1167 = vunpack.c.l.b16 %v548
        %v1168 = vunpack.c.l.b16 %v549
        %v1169 = vunpack.c.l.b16 %v550
        %v1170 = vunpack.c.l.b16 %v551
        %v1171 = vunpack.c.l.b16 %v552
        %v1172 = vpack.c.b16 %v1109, %v1108
        %v1173 = vpack.c.b16 %v1111, %v1110
        %v1174 = vpack.c.b16 %v1113, %v1112
        %v1175 = vpack.c.b16 %v1115, %v1114
        %v1176 = vpack.c.b16 %v1117, %v1116
        %v1177 = vpack.c.b16 %v1119, %v1118
        %v1178 = vpack.c.b16 %v1121, %v1120
        %v1179 = vpack.c.b16 %v1123, %v1122
        %v1180 = vpack.c.b16 %v1125, %v1124
        %v1181 = vpack.c.b16 %v1127, %v1126
        %v1182 = vpack.c.b16 %v1129, %v1128
        %v1183 = vpack.c.b16 %v1131, %v1130
        %v1184 = vpack.c.b16 %v1133, %v1132
        %v1185 = vpack.c.b16 %v1135, %v1134
        %v1186 = vpack.c.b16 %v1137, %v1136
        %v1187 = vpack.c.b16 %v1139, %v1138
        %v1188 = vpack.c.b16 %v1141, %v1140
        %v1189 = vpack.c.b16 %v1143, %v1142
        %v1190 = vpack.c.b16 %v1145, %v1144
        %v1191 = vpack.c.b16 %v1147, %v1146
        %v1192 = vpack.c.b16 %v1149, %v1148
        %v1193 = vpack.c.b16 %v1151, %v1150
        %v1194 = vpack.c.b16 %v1153, %v1152
        %v1195 = vpack.c.b16 %v1155, %v1154
        %v1196 = vpack.c.b16 %v1157, %v1156
        %v1197 = vpack.c.b16 %v1159, %v1158
        %v1198 = vpack.c.b16 %v1161, %v1160
        %v1199 = vpack.c.b16 %v1163, %v1162
        %v1200 = vpack.c.b16 %v1165, %v1164
        %v1201 = vpack.c.b16 %v1167, %v1166
        %v1202 = vpack.c.b16 %v1169, %v1168
        %v1203 = vpack.c.b16 %v1171, %v1170
        %1236 = vmatprep.subr.bf16.mxu0 0
        %1237 = vmatpush1.bf16.msra.mxu0 %v1172
        %1238 = vmatprep.subr.bf16.mxu0 0
        %1239 = vmatpush1.bf16.msra.mxu0 %v1173
        %1240 = vmatprep.subr.bf16.mxu0 0
        %1241 = vmatpush1.bf16.msra.mxu0 %v1174
        %1242 = vmatprep.subr.bf16.mxu0 0
        %1243 = vmatpush1.bf16.msra.mxu0 %v1175
        %1244 = vmatprep.subr.bf16.mxu0 0
        %1245 = vmatpush1.bf16.msra.mxu0 %v1176
        %1246 = vmatprep.subr.bf16.mxu0 0
        %1247 = vmatpush1.bf16.msra.mxu0 %v1177
        %1248 = vmatprep.subr.bf16.mxu0 0
        %1249 = vmatpush1.bf16.msra.mxu0 %v1178
        %1250 = vmatprep.subr.bf16.mxu0 0
        %1251 = vmatpush1.bf16.msra.mxu0 %v1179
        %1252 = vmatprep.subr.bf16.mxu0 0
        %1253 = vmatpush1.bf16.msra.mxu0 %v1180
        %1254 = vmatprep.subr.bf16.mxu0 0
        %1255 = vmatpush1.bf16.msra.mxu0 %v1181
        %1256 = vmatprep.subr.bf16.mxu0 0
        %1257 = vmatpush1.bf16.msra.mxu0 %v1182
        %1258 = vmatprep.subr.bf16.mxu0 0
        %1259 = vmatpush1.bf16.msra.mxu0 %v1183
        %1260 = vmatprep.subr.bf16.mxu0 0
        %1261 = vmatpush1.bf16.msra.mxu0 %v1184
        %1262 = vmatprep.subr.bf16.mxu0 0
        %1263 = vmatpush1.bf16.msra.mxu0 %v1185
        %1264 = vmatprep.subr.bf16.mxu0 0
        %1265 = vmatpush1.bf16.msra.mxu0 %v1186
        %1266 = vmatprep.subr.bf16.mxu0 0
        %1267 = vmatpush1.bf16.msra.mxu0 %v1187
        %1268 = vmatprep.mubr.bf16.mxu0 %v675
        %1269 = vmatmul.mubr.bf16.gmra.mrb[0].mxu0 %v674
        %v1270 = vpop.f32.mrb[0].mxu0
        %v1271 = vadd.f32 %v1031, %v1270
        %v1272 = vpop.f32.mrb[0].mxu0
        %v1273 = vpop.f32.mrb[0].mxu0
        %v1274 = vadd.f32 %v1034, %v1273
        %v1275 = vpop.f32.mrb[0].mxu0
        %1276 = vmatprep.mubr.bf16.mxu0 %v679
        %1277 = vmatmul.mubr.bf16.gmra.mrb[0].mxu0 %v678
        %v1278 = vpop.f32.mrb[0].mxu0
        %v1279 = vadd.f32 %v1039, %v1278
        %v1280 = vpop.f32.mrb[0].mxu0
        %v1281 = vpop.f32.mrb[0].mxu0
        %v1282 = vpop.f32.mrb[0].mxu0
        %1283 = vdwg.mxu0
        %1284 = vmatprep.subr.bf16.mxu0 0
        %1285 = vmatpush1.bf16.msra.mxu0 %v1188
        %1286 = vmatprep.subr.bf16.mxu0 0
        %1287 = vmatpush1.bf16.msra.mxu0 %v1189
        %1288 = vmatprep.subr.bf16.mxu0 0
        %1289 = vmatpush1.bf16.msra.mxu0 %v1190
        %1290 = vmatprep.subr.bf16.mxu0 0
        %1291 = vmatpush1.bf16.msra.mxu0 %v1191
        %1292 = vmatprep.subr.bf16.mxu0 0
        %1293 = vmatpush1.bf16.msra.mxu0 %v1192
        %1294 = vmatprep.subr.bf16.mxu0 0
        %1295 = vmatpush1.bf16.msra.mxu0 %v1193
        %1296 = vmatprep.subr.bf16.mxu0 0
        %1297 = vmatpush1.bf16.msra.mxu0 %v1194
        %1298 = vmatprep.subr.bf16.mxu0 0
        %1299 = vmatpush1.bf16.msra.mxu0 %v1195
        %1300 = vmatprep.subr.bf16.mxu0 0
        %1301 = vmatpush1.bf16.msra.mxu0 %v1196
        %1302 = vmatprep.subr.bf16.mxu0 0
        %1303 = vmatpush1.bf16.msra.mxu0 %v1197
        %1304 = vmatprep.subr.bf16.mxu0 0
        %1305 = vmatpush1.bf16.msra.mxu0 %v1198
        %1306 = vmatprep.subr.bf16.mxu0 0
        %1307 = vmatpush1.bf16.msra.mxu0 %v1199
        %1308 = vmatprep.subr.bf16.mxu0 0
        %1309 = vmatpush1.bf16.msra.mxu0 %v1200
        %1310 = vmatprep.subr.bf16.mxu0 0
        %1311 = vmatpush1.bf16.msra.mxu0 %v1201
        %1312 = vmatprep.subr.bf16.mxu0 0
        %1313 = vmatpush1.bf16.msra.mxu0 %v1202
        %1314 = vmatprep.subr.bf16.mxu0 0
        %1315 = vmatpush1.bf16.msra.mxu0 %v1203
        %1316 = vmatprep.mubr.bf16.mxu0 %v677
        %1317 = vmatmul.mubr.bf16.gmra.mrb[0].mxu0 %v676
        %v1318 = vpop.f32.mrb[0].mxu0
        %v1319 = vadd.f32 %v1271, %v1318
        %v1320 = vpop.f32.mrb[0].mxu0
        %v1321 = vpop.f32.mrb[0].mxu0
        %v1322 = vadd.f32 %v1274, %v1321
        %v1323 = vpop.f32.mrb[0].mxu0
        %1324 = vmatprep.mubr.bf16.mxu0 %v681
        %1325 = vmatmul.mubr.bf16.gmra.mrb[0].mxu0 %v680
        %v1326 = vpop.f32.mrb[0].mxu0
        %v1327 = vadd.f32 %v1279, %v1326
        %v1328 = vpop.f32.mrb[0].mxu0
        %v1329 = vpop.f32.mrb[0].mxu0
        %v1330 = vpop.f32.mrb[0].mxu0
        %1331 = vdwg.mxu0
        %1333 = vset.pattern.permute.xlu0 0
        %1334 = vperm.xlu0 %1333, %v407
        %v1335 = vpop.permute.xlu0 %1334
        %1338 = vset.pattern.permute.xlu0 0
        %1339 = vperm.xlu0 %1338, %v408
        %v1340 = vpop.permute.xlu0 %1339
        %1343 = vset.pattern.permute.xlu0 0
        %1344 = vperm.xlu0 %1343, %v409
        %v1345 = vpop.permute.xlu0 %1344
        %v1347 = vadd.f32 %v965, %v1335
        %v1348 = vadd.f32 %v968, %v1340
        %v1349 = vadd.f32 %v973, %v1345
        %v1350 = vadd.f32 %v1319, %v1335
        %v1351 = vadd.f32 %v1322, %v1340
        %v1352 = vadd.f32 %v1327, %v1345
        %s1353 = smul.u32 %s396, 24
        %s1354 = scalar_lea.vmem %s363, %s1353
        %vm1355 = vcmask 211968
        %1356 = vst.msk [vmem:[%s1354] sm:$0xff] %vm1355, %v1347
        %1357 = vst.msk [vmem:[%s1354 + $0x8] sm:$0xff] %vm1355, %v1348
        %vm1358 = vcmask 207872
        %1359 = vst.msk [vmem:[%s1354 + $0x10] sm:$0xf] %vm1358, %v1349
        %s1360 = scalar_lea.vmem %s374, %s1353
        %1361 = vst.msk [vmem:[%s1360] sm:$0xff] %vm1355, %v1350
        %1362 = vst.msk [vmem:[%s1360 + $0x8] sm:$0xff] %vm1355, %v1351
        %1363 = vst.msk [vmem:[%s1360 + $0x10] sm:$0xf] %vm1358, %v1352
        %v1364 = vsel %vm1355, %v1347, 0.0
        %1365 = vadd.xlane.f32.xlu0 %v1364
        %v1366 = vpop.xlane.xlu0 %1365
        %v1367 = vsel %vm1355, %v1348, 0.0
        %1368 = vadd.xlane.f32.xlu0 %v1367
        %v1369 = vpop.xlane.xlu0 %1368
        %v1370 = vsel %vm1358, %v1349, 0.0
        %1371 = vadd.xlane.f32.xlu0 %v1370
        %v1372 = vpop.xlane.xlu0 %1371
        %v1373 = vadd.f32 %v401, %v1366
        %v1374 = vadd.f32 %v402, %v1369
        %v1375 = vadd.f32 %v403, %v1372
        %v1376 = vsel %vm1355, %v1350, 0.0
        %1377 = vadd.xlane.f32.xlu0 %v1376
        %v1378 = vpop.xlane.xlu0 %1377
        %v1379 = vsel %vm1355, %v1351, 0.0
        %1380 = vadd.xlane.f32.xlu0 %v1379
        %v1381 = vpop.xlane.xlu0 %1380
        %v1382 = vsel %vm1358, %v1352, 0.0
        %1383 = vadd.xlane.f32.xlu0 %v1382
        %v1384 = vpop.xlane.xlu0 %1383
        %v1385 = vadd.f32 %v1373, %v1378
        %v1386 = vadd.f32 %v1374, %v1381
        %v1387 = vadd.f32 %v1375, %v1384
        %v1388 = vmul.f32 %v1347, %v1347
        %v1389 = vmul.f32 %v1348, %v1348
        %v1390 = vmul.f32 %v1349, %v1349
        %v1391 = vsel %vm1355, %v1388, 0.0
        %1392 = vadd.xlane.f32.xlu0 %v1391
        %v1393 = vpop.xlane.xlu0 %1392
        %v1394 = vsel %vm1355, %v1389, 0.0
        %1395 = vadd.xlane.f32.xlu0 %v1394
        %v1396 = vpop.xlane.xlu0 %1395
        %v1397 = vsel %vm1358, %v1390, 0.0
        %1398 = vadd.xlane.f32.xlu0 %v1397
        %v1399 = vpop.xlane.xlu0 %1398
        %v1400 = vadd.f32 %v404, %v1393
        %v1401 = vadd.f32 %v405, %v1396
        %v1402 = vadd.f32 %v406, %v1399
        %v1403 = vmul.f32 %v1350, %v1350
        %v1404 = vmul.f32 %v1351, %v1351
        %v1405 = vmul.f32 %v1352, %v1352
        %v1406 = vsel %vm1355, %v1403, 0.0
        %1407 = vadd.xlane.f32.xlu0 %v1406
        %v1408 = vpop.xlane.xlu0 %1407
        %v1409 = vsel %vm1355, %v1404, 0.0
        %1410 = vadd.xlane.f32.xlu0 %v1409
        %v1411 = vpop.xlane.xlu0 %1410
        %v1412 = vsel %vm1358, %v1405, 0.0
        %1413 = vadd.xlane.f32.xlu0 %v1412
        %v1414 = vpop.xlane.xlu0 %1413
        %v1415 = vadd.f32 %v1400, %v1408
        %v1416 = vadd.f32 %v1401, %v1411
        %v1417 = vadd.f32 %v1402, %v1414
      $region41: #{net1_forward.11} parent=35 // loop_footer
        %s400 = sadd.s32 1, %s396
      $region42: #{net1_forward.11} parent=35 // loop_footer_branch
        %395 = sbr.rel target = $region38
      $region43: #{net1_forward.11} parent=35 // loop_exit
        _
      %vm1418 = vcmask 7168
      %1419 = vst.msk [vmem:[%s384] sm:$0xff] %vm1418, %v401
      %1420 = vst.msk [vmem:[%s384 + $0x8] sm:$0xff] %vm1418, %v402
      %vm1421 = vcmask 3072
      %1422 = vst.msk [vmem:[%s384 + $0x10] sm:$0xf] %vm1421, %v403
      %1423 = vst.msk [vmem:[%s393] sm:$0xff] %vm1418, %v404
      %1424 = vst.msk [vmem:[%s393 + $0x8] sm:$0xff] %vm1418, %v405
      %1425 = vst.msk [vmem:[%s393 + $0x10] sm:$0xf] %vm1421, %v406
      %s1426 = smul.u32 26, %s24
      %p1427 = scmp.lt.s32.totalorder %s23, 1
      %s1428 = scalar_select %p1427, %s23, 1
      %p1429 = scmp.lt.s32.totalorder %s1426, 51
      %s1430 = scalar_select %p1429, %s1426, 51
      %s1431 = smul.addr %s1430, 3
      %s1432 = smul.addr %s1428, 156
      %s1433 = sadd.s32 %s1431, %s1432
      %s1434 = smul.addr %s1433, 8
      %s1435 = scalar_lea.vmem %s4, %s1434
      %s1436 = smul.u32 26, %s24
      %p1437 = scmp.lt.s32.totalorder %s23, 1
      %s1438 = scalar_select %p1437, %s23, 1
      %p1439 = scmp.lt.s32.totalorder %s1436, 51
      %s1440 = scalar_select %p1439, %s1436, 51
      %s1441 = smul.addr %s1440, 3
      %s1442 = smul.addr %s1438, 156
      %s1443 = sadd.s32 %s1441, %s1442
      %s1444 = smul.addr %s1443, 8
      %s1445 = scalar_lea.vmem %s5, %s1444
      %p1446 = scmp.lt.s32.totalorder %s23, 1
      %s1447 = scalar_select %p1446, %s23, 1
      %p1448 = scmp.lt.s32.totalorder %s24, 1
      %s1449 = scalar_select %p1448, %s24, 1
      %s1450 = smul.addr %s1449, 3
      %s1451 = smul.addr %s1447, 6
      %s1452 = sadd.s32 %s1450, %s1451
      %s1453 = smul.addr %s1452, 8
      %s1454 = scalar_lea.vmem %s6, %s1453
      %p1455 = scmp.lt.s32.totalorder %s23, 1
      %s1456 = scalar_select %p1455, %s23, 1
      %p1457 = scmp.lt.s32.totalorder %s24, 1
      %s1458 = scalar_select %p1457, %s24, 1
      %s1459 = smul.addr %s1458, 3
      %s1460 = smul.addr %s1456, 6
      %s1461 = sadd.s32 %s1459, %s1460
      %s1462 = smul.addr %s1461, 8
      %s1463 = scalar_lea.vmem %s7, %s1462
      // Predicated region
      $region44: #{net1_forward.11} parent=35 // pred_check
        %p1464 = pneg %p145
      $region45: #{net1_forward.11} parent=35 // pred_check_branch
        %1466 = sbr.rel (%p1464) target = $region47
      $region46: #{net1_forward.11} parent=35 // pred_region
        %s1467 = smul.u32 26, %s24
      $region47: #{net1_forward.11} parent=35 // pred_fallthru
        _
      // Predicated region
      $region48: #{net1_forward.11} parent=35 // pred_check
        %p1468 = pneg %p173
      $region49: #{net1_forward.11} parent=35 // pred_check_branch
        %1470 = sbr.rel (%p1468) target = $region51
      $region50: #{net1_forward.11} parent=35 // pred_region
        %s1471 = smul.u32 26, %s24
      $region51: #{net1_forward.11} parent=35 // pred_fallthru
        _
      // Predicated region
      $region52: #{net1_forward.11} parent=35 // pred_check
        %p1472 = pneg %p201
      $region53: #{net1_forward.11} parent=35 // pred_check_branch
        %1474 = sbr.rel (%p1472) target = $region55
      $region54: #{net1_forward.11} parent=35 // pred_region
        _
      $region55: #{net1_forward.11} parent=35 // pred_fallthru
        _
      // Predicated region
      $region56: #{net1_forward.11} parent=35 // pred_check
        %p1475 = pneg %p229
      $region57: #{net1_forward.11} parent=35 // pred_check_branch
        %1477 = sbr.rel (%p1475) target = $region59
      $region58: #{net1_forward.11} parent=35 // pred_region
        _
      $region59: #{net1_forward.11} parent=35 // pred_fallthru
        _
    $region36: #{net1_forward.11} parent=5 // pred_fallthru
      _
    %p1478 = scmp.le.s32.totalorder 2, %s14
    // Predicated region
    $region60: #{net1_forward.11} parent=5 // pred_check
      %p1479 = pneg %p1478
    $region61: #{net1_forward.11} parent=5 // pred_check_branch
      %1481 = sbr.rel (%p1479) target = $region63
    $region62: #{net1_forward.11} parent=5 // pred_region
      %s1482 = ssub.s32 %s14, 2
      // Predicated region
      $region64: #{net1_forward.11} parent=62 // pred_check
        %p1483 = pneg %p151
      $region65: #{net1_forward.11} parent=62 // pred_check_branch
        %1485 = sbr.rel (%p1483) target = $region67
      $region66: #{net1_forward.11} parent=62 // pred_region
        %s1486 = smul.u32 26, %s26
        %p1487 = scmp.lt.s32.totalorder %s25, 1
        %s1488 = scalar_select %p1487, %s25, 1
        %p1489 = scmp.lt.s32.totalorder %s1486, 51
        %s1490 = scalar_select %p1489, %s1486, 51
        %s1491 = smul.addr %s1490, 3
        %s1492 = smul.addr %s1488, 156
        %s1493 = sadd.s32 %s1491, %s1492
        %s1494 = smul.addr %s1493, 8
        %s1495 = scalar_lea.vmem %s4, %s1494
      $region67: #{net1_forward.11} parent=62 // pred_fallthru
        _
      // Predicated region
      $region68: #{net1_forward.11} parent=62 // pred_check
        %p1496 = pneg %p179
      $region69: #{net1_forward.11} parent=62 // pred_check_branch
        %1498 = sbr.rel (%p1496) target = $region71
      $region70: #{net1_forward.11} parent=62 // pred_region
        %s1499 = smul.u32 26, %s26
        %p1500 = scmp.lt.s32.totalorder %s25, 1
        %s1501 = scalar_select %p1500, %s25, 1
        %p1502 = scmp.lt.s32.totalorder %s1499, 51
        %s1503 = scalar_select %p1502, %s1499, 51
        %s1504 = smul.addr %s1503, 3
        %s1505 = smul.addr %s1501, 156
        %s1506 = sadd.s32 %s1504, %s1505
        %s1507 = smul.addr %s1506, 8
        %s1508 = scalar_lea.vmem %s5, %s1507
      $region71: #{net1_forward.11} parent=62 // pred_fallthru
        _
      // Predicated region
      $region72: #{net1_forward.11} parent=62 // pred_check
        %p1509 = pneg %p207
      $region73: #{net1_forward.11} parent=62 // pred_check_branch
        %1511 = sbr.rel (%p1509) target = $region75
      $region74: #{net1_forward.11} parent=62 // pred_region
        %p1512 = scmp.lt.s32.totalorder %s25, 1
        %s1513 = scalar_select %p1512, %s25, 1
        %p1514 = scmp.lt.s32.totalorder %s26, 1
        %s1515 = scalar_select %p1514, %s26, 1
        %s1516 = smul.addr %s1515, 3
        %s1517 = smul.addr %s1513, 6
        %s1518 = sadd.s32 %s1516, %s1517
        %s1519 = smul.addr %s1518, 8
        %s1520 = scalar_lea.vmem %s6, %s1519
      $region75: #{net1_forward.11} parent=62 // pred_fallthru
        _
      // Predicated region
      $region76: #{net1_forward.11} parent=62 // pred_check
        %p1521 = pneg %p235
      $region77: #{net1_forward.11} parent=62 // pred_check_branch
        %1523 = sbr.rel (%p1521) target = $region79
      $region78: #{net1_forward.11} parent=62 // pred_region
        %p1524 = scmp.lt.s32.totalorder %s25, 1
        %s1525 = scalar_select %p1524, %s25, 1
        %p1526 = scmp.lt.s32.totalorder %s26, 1
        %s1527 = scalar_select %p1526, %s26, 1
        %s1528 = smul.addr %s1527, 3
        %s1529 = smul.addr %s1525, 6
        %s1530 = sadd.s32 %s1528, %s1529
        %s1531 = smul.addr %s1530, 8
        %s1532 = scalar_lea.vmem %s7, %s1531
      $region79: #{net1_forward.11} parent=62 // pred_fallthru
        _
    $region63: #{net1_forward.11} parent=5 // pred_fallthru
      _
  $region6: #{net1_forward.11} parent=0 // loop_footer
    %s18 = sadd.s32 1, %s14
  $region7: #{net1_forward.11} parent=0 // loop_footer_branch
    %13 = sbr.rel target = $region3
  $region8: #{net1_forward.11} parent=0 // loop_exit
    _

// kernel: net1_forward.12
$region0: #{net1_forward.12}
  #allocation0 [shape = 'u32[]', space=smem, size = 0x4, offset = 0x4, fixed_abs, tag = 'smem constant byte address 0x4 - core index']
  #allocation1 [shape = 'u32[144,128]{1,0:T(1,128)}', space=vmem, size = 0x12000, scoped, tag = 'internal scratch']
  %s0 = inlined_call_operand.vmem [shape: f32[2,52,20,26], index: 0, kind: input, shape index: {}]
  %s1 = inlined_call_operand.vmem [shape: f32[2,52,20,26], index: 1, kind: input, shape index: {}]
  %s2 = inlined_call_operand.vmem [shape: f32[20,1], index: 2, kind: input, shape index: {}]
  %s3 = inlined_call_operand.vmem [shape: f32[20,1], index: 3, kind: input, shape index: {}]
  %s4 = inlined_call_operand.vmem [shape: f32[2,26,20,26], index: 4, kind: output, shape index: {}]
  %s5 = sld [smem:[#allocation0]]
  $region56: #{net1_forward.12} parent=0
    _
  %s7 = ssub.s32 1, %s5
  %s8 = scalar_select 0, %s7, %s5
  loop: start=0, step=1, limit=4
  $region2: #{net1_forward.12} parent=0 // loop_pre_header
    _
  $region3: #{net1_forward.12} parent=0 // loop_header
    %s10 = sphi 0, %s14
    %p11 = scmp.ge.s32.totalorder %s10, 4
    %s20 = sphi 0, %s22
    %s23 = sphi 0, %s20
    %s24 = sphi 0, %s23
    %s40 = sphi 0, %s24
    %s46 = sphi 0, %s48
    %s49 = sphi 0, %s46
    %s50 = sphi 0, %s49
    %s66 = sphi 0, %s50
    %s70 = sphi 0, %s70
    %s72 = sphi 0, %s70
    %s73 = sphi 0, %s72
    %s87 = sphi 0, %s73
    %s91 = sphi 0, %s91
    %s93 = sphi 0, %s91
    %s94 = sphi 0, %s93
    %s108 = sphi 0, %s94
    %s114 = sphi 0, %s116
    %s117 = sphi 0, %s114
    %s118 = sphi 0, %s117
    %s134 = sphi 0, %s118
  $region4: #{net1_forward.12} parent=0 // loop_header_branch
    %13 = sbr.rel (%p11) target = $region8
  $region5: #{net1_forward.12} parent=0 // loop_body
    %s15 = ssub.s32 %s10, 1
    %s16 = ssub.s32 %s10, 2
    %s17 = sadd.s32 %s10, 1
    %s18 = ssub.s32 %s10, %s17
    %p19 = scmp.eq.s32.totalorder %s18, 0
    %s21 = sadd.s32 %s20, 1
    %s22 = scalar_select %p19, %s20, %s21
    %p25 = pneg %p19
    %p26 = scmp.eq.s32.totalorder %s10, 1
    %p27 = por %p25, %p26
    %p28 = scmp.ne.s32.totalorder %s20, %s23
    %p29 = scmp.eq.s32.totalorder %s10, 0
    %p30 = por %p28, %p29
    %p31 = scmp.ne.s32.totalorder %s20, %s23
    %p32 = scmp.eq.s32.totalorder %s15, 1
    %p33 = por %p31, %p32
    %p34 = scmp.ne.s32.totalorder %s23, %s24
    %p35 = scmp.eq.s32.totalorder %s15, 0
    %p36 = por %p34, %p35
    %p37 = scmp.ne.s32.totalorder %s23, %s24
    %p38 = scmp.eq.s32.totalorder %s16, 1
    %p39 = por %p37, %p38
    %p41 = scmp.ne.s32.totalorder %s24, %s40
    %p42 = scmp.eq.s32.totalorder %s16, 0
    %p43 = por %p41, %p42
    %s44 = ssub.s32 %s10, %s17
    %p45 = scmp.eq.s32.totalorder %s44, 0
    %s47 = sadd.s32 %s46, 1
    %s48 = scalar_select %p45, %s46, %s47
    %p51 = pneg %p45
    %p52 = scmp.eq.s32.totalorder %s10, 1
    %p53 = por %p51, %p52
    %p54 = scmp.ne.s32.totalorder %s46, %s49
    %p55 = scmp.eq.s32.totalorder %s10, 0
    %p56 = por %p54, %p55
    %p57 = scmp.ne.s32.totalorder %s46, %s49
    %p58 = scmp.eq.s32.totalorder %s15, 1
    %p59 = por %p57, %p58
    %p60 = scmp.ne.s32.totalorder %s49, %s50
    %p61 = scmp.eq.s32.totalorder %s15, 0
    %p62 = por %p60, %p61
    %p63 = scmp.ne.s32.totalorder %s49, %s50
    %p64 = scmp.eq.s32.totalorder %s16, 1
    %p65 = por %p63, %p64
    %p67 = scmp.ne.s32.totalorder %s50, %s66
    %p68 = scmp.eq.s32.totalorder %s16, 0
    %p69 = por %p67, %p68
    %s71 = sadd.s32 %s70, 1
    %p74 = scmp.eq.s32.totalorder %s10, 1
    %p75 = scmp.ne.s32.totalorder %s70, %s72
    %p76 = scmp.eq.s32.totalorder %s10, 0
    %p77 = por %p75, %p76
    %p78 = scmp.ne.s32.totalorder %s70, %s72
    %p79 = scmp.eq.s32.totalorder %s15, 1
    %p80 = por %p78, %p79
    %p81 = scmp.ne.s32.totalorder %s72, %s73
    %p82 = scmp.eq.s32.totalorder %s15, 0
    %p83 = por %p81, %p82
    %p84 = scmp.ne.s32.totalorder %s72, %s73
    %p85 = scmp.eq.s32.totalorder %s16, 1
    %p86 = por %p84, %p85
    %p88 = scmp.ne.s32.totalorder %s73, %s87
    %p89 = scmp.eq.s32.totalorder %s16, 0
    %p90 = por %p88, %p89
    %s92 = sadd.s32 %s91, 1
    %p95 = scmp.eq.s32.totalorder %s10, 1
    %p96 = scmp.ne.s32.totalorder %s91, %s93
    %p97 = scmp.eq.s32.totalorder %s10, 0
    %p98 = por %p96, %p97
    %p99 = scmp.ne.s32.totalorder %s91, %s93
    %p100 = scmp.eq.s32.totalorder %s15, 1
    %p101 = por %p99, %p100
    %p102 = scmp.ne.s32.totalorder %s93, %s94
    %p103 = scmp.eq.s32.totalorder %s15, 0
    %p104 = por %p102, %p103
    %p105 = scmp.ne.s32.totalorder %s93, %s94
    %p106 = scmp.eq.s32.totalorder %s16, 1
    %p107 = por %p105, %p106
    %p109 = scmp.ne.s32.totalorder %s94, %s108
    %p110 = scmp.eq.s32.totalorder %s16, 0
    %p111 = por %p109, %p110
    %s112 = ssub.s32 %s10, %s17
    %p113 = scmp.eq.s32.totalorder %s112, 0
    %s115 = sadd.s32 %s114, 1
    %s116 = scalar_select %p113, %s114, %s115
    %p119 = pneg %p113
    %p120 = scmp.eq.s32.totalorder %s10, 1
    %p121 = por %p119, %p120
    %p122 = scmp.ne.s32.totalorder %s114, %s117
    %p123 = scmp.eq.s32.totalorder %s10, 0
    %p124 = por %p122, %p123
    %p125 = scmp.ne.s32.totalorder %s114, %s117
    %p126 = scmp.eq.s32.totalorder %s15, 1
    %p127 = por %p125, %p126
    %p128 = scmp.ne.s32.totalorder %s117, %s118
    %p129 = scmp.eq.s32.totalorder %s15, 0
    %p130 = por %p128, %p129
    %p131 = scmp.ne.s32.totalorder %s117, %s118
    %p132 = scmp.eq.s32.totalorder %s16, 1
    %p133 = por %p131, %p132
    %p135 = scmp.ne.s32.totalorder %s118, %s134
    %p136 = scmp.eq.s32.totalorder %s16, 0
    %p137 = por %p135, %p136
    %p138 = scmp.le.s32.totalorder 1, %s10
    %p139 = scmp.lt.s32.totalorder %s10, 3
    %p140 = pnand %p138, %p139
    %p141 = pneg %p140
    // Predicated region
    $region9: #{net1_forward.12} parent=5 // pred_check
      _
    $region10: #{net1_forward.12} parent=5 // pred_check_branch
      %143 = sbr.rel (%p140) target = $region12
    $region11: #{net1_forward.12} parent=5 // pred_region
      %s144 = ssub.s32 %s10, 1
      // Predicated region
      $region13: #{net1_forward.12} parent=11 // pred_check
        %p145 = pneg %p83
      $region14: #{net1_forward.12} parent=11 // pred_check_branch
        %147 = sbr.rel (%p145) target = $region16
      $region15: #{net1_forward.12} parent=11 // pred_region
        _
      $region16: #{net1_forward.12} parent=11 // pred_fallthru
        _
      // Predicated region
      $region17: #{net1_forward.12} parent=11 // pred_check
        %p148 = pneg %p104
      $region18: #{net1_forward.12} parent=11 // pred_check_branch
        %150 = sbr.rel (%p148) target = $region20
      $region19: #{net1_forward.12} parent=11 // pred_region
        _
      $region20: #{net1_forward.12} parent=11 // pred_fallthru
        _
    $region12: #{net1_forward.12} parent=5 // pred_fallthru
      _
    %p151 = scmp.lt.s32.totalorder %s10, 2
    // Predicated region
    $region21: #{net1_forward.12} parent=5 // pred_check
      %p152 = pneg %p151
    $region22: #{net1_forward.12} parent=5 // pred_check_branch
      %154 = sbr.rel (%p152) target = $region24
    $region23: #{net1_forward.12} parent=5 // pred_region
      // Predicated region
      $region25: #{net1_forward.12} parent=23 // pred_check
        %p155 = pneg %p30
      $region26: #{net1_forward.12} parent=23 // pred_check_branch
        %157 = sbr.rel (%p155) target = $region28
      $region27: #{net1_forward.12} parent=23 // pred_region
        %p158 = scmp.lt.s32.totalorder %s10, 1
        %s159 = scalar_select %p158, %s10, 1
        %s160 = smul.addr %s159, 156
        %s161 = smul.addr %s160, 8
        %s162 = scalar_lea.vmem %s0, %s161
      $region28: #{net1_forward.12} parent=23 // pred_fallthru
        _
      // Predicated region
      $region29: #{net1_forward.12} parent=23 // pred_check
        %p163 = pneg %p56
      $region30: #{net1_forward.12} parent=23 // pred_check_branch
        %165 = sbr.rel (%p163) target = $region32
      $region31: #{net1_forward.12} parent=23 // pred_region
        %p166 = scmp.lt.s32.totalorder %s10, 1
        %s167 = scalar_select %p166, %s10, 1
        %s168 = smul.addr %s167, 156
        %s169 = smul.addr %s168, 8
        %s170 = scalar_lea.vmem %s1, %s169
      $region32: #{net1_forward.12} parent=23 // pred_fallthru
        _
    $region24: #{net1_forward.12} parent=5 // pred_fallthru
      _
    %p171 = scmp.le.s32.totalorder 1, %s10
    %p172 = scmp.lt.s32.totalorder %s10, 3
    %p173 = pnand %p171, %p172
    %p174 = pneg %p173
    // Predicated region
    $region33: #{net1_forward.12} parent=5 // pred_check
      _
    $region34: #{net1_forward.12} parent=5 // pred_check_branch
      %176 = sbr.rel (%p173) target = $region36
    $region35: #{net1_forward.12} parent=5 // pred_region
      %s177 = ssub.s32 %s10, 1
      %p178 = scmp.lt.s32.totalorder %s15, 1
      %s179 = scalar_select %p178, %s15, 1
      %s180 = smul.addr %s179, 156
      %s181 = smul.addr %s180, 8
      %s182 = scalar_lea.vmem %s0, %s181
      %p183 = pneg %p36
      %p184 = pneg %p33
      %p185 = scmp.lt.s32.totalorder %s15, 1
      %s186 = scalar_select %p185, %s15, 1
      %s187 = smul.addr %s186, 156
      %s188 = smul.addr %s187, 8
      %s189 = scalar_lea.vmem %s1, %s188
      %p190 = pneg %p62
      %p191 = pneg %p59
      %p192 = pneg %p83
      %p193 = pneg %p80
      %p194 = pneg %p104
      %p195 = pneg %p101
      %p196 = pneg %p130
      %p197 = pneg %p127
      %p198 = scmp.lt.s32.totalorder %s15, 1
      %s199 = scalar_select %p198, %s15, 1
      %s200 = smul.addr %s199, 78
      %s201 = smul.addr %s200, 8
      %s202 = scalar_lea.vmem %s4, %s201
      %p203 = scmp.lt.s32.totalorder %s15, 1
      %s204 = scalar_select %p203, %s15, 1
      %s205 = smul.addr %s204, 156
      %s206 = smul.addr %s205, 8
      %s207 = scalar_lea.vmem %s0, %s206
      %p208 = scmp.lt.s32.totalorder %s15, 1
      %s209 = scalar_select %p208, %s15, 1
      %s210 = smul.addr %s209, 156
      %s211 = smul.addr %s210, 8
      %s212 = scalar_lea.vmem %s1, %s211
      %p213 = scmp.lt.s32.totalorder %s15, 1
      %s214 = scalar_select %p213, %s15, 1
      %s215 = smul.addr %s214, 78
      %s216 = smul.addr %s215, 8
      %s217 = scalar_lea.vmem %s4, %s216
      loop: start=0, step=1, limit=26
      $region37: #{net1_forward.12} parent=35 // loop_pre_header
        _
      $region38: #{net1_forward.12} parent=35 // loop_header
        %s219 = sphi 0, %s223
        %p220 = scmp.ge.s32.totalorder %s219, 26
      $region39: #{net1_forward.12} parent=35 // loop_header_branch
        %222 = sbr.rel (%p220) target = $region43
      $region40: #{net1_forward.12} parent=35 // loop_body
        %v224 = vld [vmem:[%s2] sm:$0xff]
        %v225 = vld [vmem:[%s2 + $0x8] sm:$0xff]
        %v226 = vld [vmem:[%s2 + $0x10] sm:$0xf]
        %v227 = vld [vmem:[%s3] sm:$0xff]
        %v228 = vld [vmem:[%s3 + $0x8] sm:$0xff]
        %v229 = vld [vmem:[%s3 + $0x10] sm:$0xf]
        %s230 = smul.u32 %s219, 2
        %s231 = smul.u32 %s230, 24
        %s232 = scalar_lea.vmem %s207, %s231
        %v233 = vld [vmem:[%s232] sm:$0xff]
        %v234 = vld [vmem:[%s232 + $0x8] sm:$0xff]
        %v235 = vld [vmem:[%s232 + $0x10] sm:$0xf]
        %v236 = vld [vmem:[%s232 + $0x18] sm:$0xff]
        %v237 = vld [vmem:[%s232 + $0x20] sm:$0xff]
        %v238 = vld [vmem:[%s232 + $0x28] sm:$0xf]
        %s239 = scalar_lea.vmem %s212, %s231
        %v240 = vld [vmem:[%s239] sm:$0xff]
        %v241 = vld [vmem:[%s239 + $0x8] sm:$0xff]
        %v242 = vld [vmem:[%s239 + $0x10] sm:$0xf]
        %v243 = vld [vmem:[%s239 + $0x18] sm:$0xff]
        %v244 = vld [vmem:[%s239 + $0x20] sm:$0xff]
        %v245 = vld [vmem:[%s239 + $0x28] sm:$0xf]
        %247 = vset.pattern.permute.xlu0 0
        %248 = vperm.xlu0 %247, %v224
        %v249 = vpop.permute.xlu0 %248
        %252 = vset.pattern.permute.xlu0 0
        %253 = vperm.xlu0 %252, %v225
        %v254 = vpop.permute.xlu0 %253
        %257 = vset.pattern.permute.xlu0 0
        %258 = vperm.xlu0 %257, %v226
        %v259 = vpop.permute.xlu0 %258
        %v261 = vmul.f32 %v233, %v249
        %v262 = vmul.f32 %v234, %v254
        %v263 = vmul.f32 %v235, %v259
        %v264 = vmul.f32 %v236, %v249
        %v265 = vmul.f32 %v237, %v254
        %v266 = vmul.f32 %v238, %v259
        %268 = vset.pattern.permute.xlu0 0
        %269 = vperm.xlu0 %268, %v227
        %v270 = vpop.permute.xlu0 %269
        %273 = vset.pattern.permute.xlu0 0
        %274 = vperm.xlu0 %273, %v228
        %v275 = vpop.permute.xlu0 %274
        %278 = vset.pattern.permute.xlu0 0
        %279 = vperm.xlu0 %278, %v229
        %v280 = vpop.permute.xlu0 %279
        %v282 = vadd.f32 %v261, %v270
        %v283 = vadd.f32 %v262, %v275
        %v284 = vadd.f32 %v263, %v280
        %v285 = vadd.f32 %v264, %v270
        %v286 = vadd.f32 %v265, %v275
        %v287 = vadd.f32 %v266, %v280
        %v288 = vmul.f32 %v240, %v249
        %v289 = vmul.f32 %v241, %v254
        %v290 = vmul.f32 %v242, %v259
        %v291 = vmul.f32 %v243, %v249
        %v292 = vmul.f32 %v244, %v254
        %v293 = vmul.f32 %v245, %v259
        %v294 = vadd.f32 %v288, %v270
        %v295 = vadd.f32 %v289, %v275
        %v296 = vadd.f32 %v290, %v280
        %v297 = vadd.f32 %v291, %v270
        %v298 = vadd.f32 %v292, %v275
        %v299 = vadd.f32 %v293, %v280
        %v300 = vmax.f32 %v282, %v294
        %v301 = vmax.f32 %v283, %v295
        %v302 = vmax.f32 %v284, %v296
        %v303 = vmax.f32 %v285, %v297
        %v304 = vmax.f32 %v286, %v298
        %v305 = vmax.f32 %v287, %v299
        %v306 = vmax.f32 %v300, %v303
        %v307 = vmax.f32 %v301, %v304
        %v308 = vmax.f32 %v302, %v305
        %v309 = vmax.f32 %v306, 0.0
        %v310 = vmax.f32 %v307, 0.0
        %v311 = vmax.f32 %v308, 0.0
        %s312 = smul.u32 %s219, 24
        %s313 = scalar_lea.vmem %s217, %s312
        %vm314 = vcmask 211968
        %315 = vst.msk [vmem:[%s313] sm:$0xff] %vm314, %v309
        %316 = vst.msk [vmem:[%s313 + $0x8] sm:$0xff] %vm314, %v310
        %vm317 = vcmask 207872
        %318 = vst.msk [vmem:[%s313 + $0x10] sm:$0xf] %vm317, %v311
      $region41: #{net1_forward.12} parent=35 // loop_footer
        %s223 = sadd.s32 1, %s219
      $region42: #{net1_forward.12} parent=35 // loop_footer_branch
        %218 = sbr.rel target = $region38
      $region43: #{net1_forward.12} parent=35 // loop_exit
        _
      %p319 = scmp.lt.s32.totalorder %s15, 1
      %s320 = scalar_select %p319, %s15, 1
      %s321 = smul.addr %s320, 78
      %s322 = smul.addr %s321, 8
      %s323 = scalar_lea.vmem %s4, %s322
      // Predicated region
      $region44: #{net1_forward.12} parent=35 // pred_check
        %p324 = pneg %p127
      $region45: #{net1_forward.12} parent=35 // pred_check_branch
        %326 = sbr.rel (%p324) target = $region47
      $region46: #{net1_forward.12} parent=35 // pred_region
        _
      $region47: #{net1_forward.12} parent=35 // pred_fallthru
        _
    $region36: #{net1_forward.12} parent=5 // pred_fallthru
      _
    %p327 = scmp.le.s32.totalorder 2, %s10
    // Predicated region
    $region48: #{net1_forward.12} parent=5 // pred_check
      %p328 = pneg %p327
    $region49: #{net1_forward.12} parent=5 // pred_check_branch
      %330 = sbr.rel (%p328) target = $region51
    $region50: #{net1_forward.12} parent=5 // pred_region
      %s331 = ssub.s32 %s10, 2
      // Predicated region
      $region52: #{net1_forward.12} parent=50 // pred_check
        %p332 = pneg %p133
      $region53: #{net1_forward.12} parent=50 // pred_check_branch
        %334 = sbr.rel (%p332) target = $region55
      $region54: #{net1_forward.12} parent=50 // pred_region
        %p335 = scmp.lt.s32.totalorder %s16, 1
        %s336 = scalar_select %p335, %s16, 1
        %s337 = smul.addr %s336, 78
        %s338 = smul.addr %s337, 8
        %s339 = scalar_lea.vmem %s4, %s338
      $region55: #{net1_forward.12} parent=50 // pred_fallthru
        _
    $region51: #{net1_forward.12} parent=5 // pred_fallthru
      _
  $region6: #{net1_forward.12} parent=0 // loop_footer
    %s14 = sadd.s32 1, %s10
  $region7: #{net1_forward.12} parent=0 // loop_footer_branch
    %9 = sbr.rel target = $region3
  $region8: #{net1_forward.12} parent=0 // loop_exit
    _

// kernel: net1_forward.13
$region0: #{net1_forward.13}
  #allocation0 [shape = 'u32[]', space=smem, size = 0x4, offset = 0x4, fixed_abs, tag = 'smem constant byte address 0x4 - core index']
  #allocation1 [shape = 'u32[144,128]{1,0:T(1,128)}', space=vmem, size = 0x12000, scoped, tag = 'internal scratch']
  %s0 = inlined_call_operand.vmem [shape: bf16[2,3744,10], index: 0, kind: input, shape index: {}]
  %s1 = inlined_call_operand.vmem [shape: bf16[2,3744,10], index: 1, kind: input, shape index: {}]
  %s2 = inlined_call_operand.vmem [shape: bf16[40,1008], index: 2, kind: input, shape index: {}]
  %s3 = inlined_call_operand.vmem [shape: f32[40,1], index: 3, kind: input, shape index: {}]
  %s4 = inlined_call_operand.vmem [shape: f32[2,20,40,10], index: 4, kind: output, shape index: {0}]
  %s5 = inlined_call_operand.vmem [shape: f32[2,20,40,10], index: 5, kind: output, shape index: {1}]
  %s6 = inlined_call_operand.vmem [shape: f32[2,1,40,1], index: 6, kind: output, shape index: {2}]
  %s7 = inlined_call_operand.vmem [shape: f32[2,1,40,1], index: 7, kind: output, shape index: {3}]
  %8 = xla_tuple %s4, %s5, %s6, %s7
  %s9 = sld [smem:[#allocation0]]
  $region80: #{net1_forward.13} parent=0
    _
  %s11 = ssub.s32 1, %s9
  %s12 = scalar_select 0, %s11, %s9
  loop: start=0, step=1, limit=4
  $region2: #{net1_forward.13} parent=0 // loop_pre_header
    _
  $region3: #{net1_forward.13} parent=0 // loop_header
    %s14 = sphi 0, %s18
    %p15 = scmp.ge.s32.totalorder %s14, 4
    %s21 = sphi 0, %s33
    %s22 = sphi 0, %s29
    %s23 = sphi 0, %s21
    %s24 = sphi 0, %s22
    %s25 = sphi 0, %s23
    %s26 = sphi 0, %s24
    %s36 = sphi 0, %s38
    %s39 = sphi 0, %s36
    %s40 = sphi 0, %s39
    %s56 = sphi 0, %s40
    %s62 = sphi 0, %s64
    %s65 = sphi 0, %s62
    %s66 = sphi 0, %s65
    %s82 = sphi 0, %s66
    %s86 = sphi 0, %s86
    %s88 = sphi 0, %s86
    %s89 = sphi 0, %s88
    %s103 = sphi 0, %s89
    %s107 = sphi 0, %s107
    %s109 = sphi 0, %s107
    %s110 = sphi 0, %s109
    %s124 = sphi 0, %s110
    %s132 = sphi 0, %s134
    %s135 = sphi 0, %s132
    %s136 = sphi 0, %s135
    %s152 = sphi 0, %s136
    %s160 = sphi 0, %s162
    %s163 = sphi 0, %s160
    %s164 = sphi 0, %s163
    %s180 = sphi 0, %s164
    %s188 = sphi 0, %s190
    %s191 = sphi 0, %s188
    %s192 = sphi 0, %s191
    %s208 = sphi 0, %s192
    %s216 = sphi 0, %s218
    %s219 = sphi 0, %s216
    %s220 = sphi 0, %s219
    %s236 = sphi 0, %s220
  $region4: #{net1_forward.13} parent=0 // loop_header_branch
    %17 = sbr.rel (%p15) target = $region8
  $region5: #{net1_forward.13} parent=0 // loop_body
    %s19 = ssub.s32 %s14, 1
    %s20 = ssub.s32 %s14, 2
    %s27 = sadd.s32 1, %s22
    %p28 = scmp.ge.s32.totalorder %s27, 1
    %s29 = scalar_select %p28, 0, %s27
    %s30 = sadd.s32 1, %s21
    %s31 = scalar_select %p28, %s30, %s21
    %p32 = scmp.ge.s32.totalorder %s31, 2
    %s33 = scalar_select %p32, 0, %s31
    %s34 = ssub.s32 %s21, %s33
    %p35 = scmp.eq.s32.totalorder %s34, 0
    %s37 = sadd.s32 %s36, 1
    %s38 = scalar_select %p35, %s36, %s37
    %p41 = pneg %p35
    %p42 = scmp.eq.s32.totalorder %s14, 1
    %p43 = por %p41, %p42
    %p44 = scmp.ne.s32.totalorder %s36, %s39
    %p45 = scmp.eq.s32.totalorder %s14, 0
    %p46 = por %p44, %p45
    %p47 = scmp.ne.s32.totalorder %s36, %s39
    %p48 = scmp.eq.s32.totalorder %s19, 1
    %p49 = por %p47, %p48
    %p50 = scmp.ne.s32.totalorder %s39, %s40
    %p51 = scmp.eq.s32.totalorder %s19, 0
    %p52 = por %p50, %p51
    %p53 = scmp.ne.s32.totalorder %s39, %s40
    %p54 = scmp.eq.s32.totalorder %s20, 1
    %p55 = por %p53, %p54
    %p57 = scmp.ne.s32.totalorder %s40, %s56
    %p58 = scmp.eq.s32.totalorder %s20, 0
    %p59 = por %p57, %p58
    %s60 = ssub.s32 %s21, %s33
    %p61 = scmp.eq.s32.totalorder %s60, 0
    %s63 = sadd.s32 %s62, 1
    %s64 = scalar_select %p61, %s62, %s63
    %p67 = pneg %p61
    %p68 = scmp.eq.s32.totalorder %s14, 1
    %p69 = por %p67, %p68
    %p70 = scmp.ne.s32.totalorder %s62, %s65
    %p71 = scmp.eq.s32.totalorder %s14, 0
    %p72 = por %p70, %p71
    %p73 = scmp.ne.s32.totalorder %s62, %s65
    %p74 = scmp.eq.s32.totalorder %s19, 1
    %p75 = por %p73, %p74
    %p76 = scmp.ne.s32.totalorder %s65, %s66
    %p77 = scmp.eq.s32.totalorder %s19, 0
    %p78 = por %p76, %p77
    %p79 = scmp.ne.s32.totalorder %s65, %s66
    %p80 = scmp.eq.s32.totalorder %s20, 1
    %p81 = por %p79, %p80
    %p83 = scmp.ne.s32.totalorder %s66, %s82
    %p84 = scmp.eq.s32.totalorder %s20, 0
    %p85 = por %p83, %p84
    %s87 = sadd.s32 %s86, 1
    %p90 = scmp.eq.s32.totalorder %s14, 1
    %p91 = scmp.ne.s32.totalorder %s86, %s88
    %p92 = scmp.eq.s32.totalorder %s14, 0
    %p93 = por %p91, %p92
    %p94 = scmp.ne.s32.totalorder %s86, %s88
    %p95 = scmp.eq.s32.totalorder %s19, 1
    %p96 = por %p94, %p95
    %p97 = scmp.ne.s32.totalorder %s88, %s89
    %p98 = scmp.eq.s32.totalorder %s19, 0
    %p99 = por %p97, %p98
    %p100 = scmp.ne.s32.totalorder %s88, %s89
    %p101 = scmp.eq.s32.totalorder %s20, 1
    %p102 = por %p100, %p101
    %p104 = scmp.ne.s32.totalorder %s89, %s103
    %p105 = scmp.eq.s32.totalorder %s20, 0
    %p106 = por %p104, %p105
    %s108 = sadd.s32 %s107, 1
    %p111 = scmp.eq.s32.totalorder %s14, 1
    %p112 = scmp.ne.s32.totalorder %s107, %s109
    %p113 = scmp.eq.s32.totalorder %s14, 0
    %p114 = por %p112, %p113
    %p115 = scmp.ne.s32.totalorder %s107, %s109
    %p116 = scmp.eq.s32.totalorder %s19, 1
    %p117 = por %p115, %p116
    %p118 = scmp.ne.s32.totalorder %s109, %s110
    %p119 = scmp.eq.s32.totalorder %s19, 0
    %p120 = por %p118, %p119
    %p121 = scmp.ne.s32.totalorder %s109, %s110
    %p122 = scmp.eq.s32.totalorder %s20, 1
    %p123 = por %p121, %p122
    %p125 = scmp.ne.s32.totalorder %s110, %s124
    %p126 = scmp.eq.s32.totalorder %s20, 0
    %p127 = por %p125, %p126
    %s128 = ssub.s32 %s21, %s33
    %s129 = ssub.s32 %s22, %s29
    %s130 = sor.u32 %s128, %s129
    %p131 = scmp.eq.s32.totalorder %s130, 0
    %s133 = sadd.s32 %s132, 1
    %s134 = scalar_select %p131, %s132, %s133
    %p137 = pneg %p131
    %p138 = scmp.eq.s32.totalorder %s14, 1
    %p139 = por %p137, %p138
    %p140 = scmp.ne.s32.totalorder %s132, %s135
    %p141 = scmp.eq.s32.totalorder %s14, 0
    %p142 = por %p140, %p141
    %p143 = scmp.ne.s32.totalorder %s132, %s135
    %p144 = scmp.eq.s32.totalorder %s19, 1
    %p145 = por %p143, %p144
    %p146 = scmp.ne.s32.totalorder %s135, %s136
    %p147 = scmp.eq.s32.totalorder %s19, 0
    %p148 = por %p146, %p147
    %p149 = scmp.ne.s32.totalorder %s135, %s136
    %p150 = scmp.eq.s32.totalorder %s20, 1
    %p151 = por %p149, %p150
    %p153 = scmp.ne.s32.totalorder %s136, %s152
    %p154 = scmp.eq.s32.totalorder %s20, 0
    %p155 = por %p153, %p154
    %s156 = ssub.s32 %s21, %s33
    %s157 = ssub.s32 %s22, %s29
    %s158 = sor.u32 %s156, %s157
    %p159 = scmp.eq.s32.totalorder %s158, 0
    %s161 = sadd.s32 %s160, 1
    %s162 = scalar_select %p159, %s160, %s161
    %p165 = pneg %p159
    %p166 = scmp.eq.s32.totalorder %s14, 1
    %p167 = por %p165, %p166
    %p168 = scmp.ne.s32.totalorder %s160, %s163
    %p169 = scmp.eq.s32.totalorder %s14, 0
    %p170 = por %p168, %p169
    %p171 = scmp.ne.s32.totalorder %s160, %s163
    %p172 = scmp.eq.s32.totalorder %s19, 1
    %p173 = por %p171, %p172
    %p174 = scmp.ne.s32.totalorder %s163, %s164
    %p175 = scmp.eq.s32.totalorder %s19, 0
    %p176 = por %p174, %p175
    %p177 = scmp.ne.s32.totalorder %s163, %s164
    %p178 = scmp.eq.s32.totalorder %s20, 1
    %p179 = por %p177, %p178
    %p181 = scmp.ne.s32.totalorder %s164, %s180
    %p182 = scmp.eq.s32.totalorder %s20, 0
    %p183 = por %p181, %p182
    %s184 = ssub.s32 %s21, %s33
    %s185 = ssub.s32 %s22, %s29
    %s186 = sor.u32 %s184, %s185
    %p187 = scmp.eq.s32.totalorder %s186, 0
    %s189 = sadd.s32 %s188, 1
    %s190 = scalar_select %p187, %s188, %s189
    %p193 = pneg %p187
    %p194 = scmp.eq.s32.totalorder %s14, 1
    %p195 = por %p193, %p194
    %p196 = scmp.ne.s32.totalorder %s188, %s191
    %p197 = scmp.eq.s32.totalorder %s14, 0
    %p198 = por %p196, %p197
    %p199 = scmp.ne.s32.totalorder %s188, %s191
    %p200 = scmp.eq.s32.totalorder %s19, 1
    %p201 = por %p199, %p200
    %p202 = scmp.ne.s32.totalorder %s191, %s192
    %p203 = scmp.eq.s32.totalorder %s19, 0
    %p204 = por %p202, %p203
    %p205 = scmp.ne.s32.totalorder %s191, %s192
    %p206 = scmp.eq.s32.totalorder %s20, 1
    %p207 = por %p205, %p206
    %p209 = scmp.ne.s32.totalorder %s192, %s208
    %p210 = scmp.eq.s32.totalorder %s20, 0
    %p211 = por %p209, %p210
    %s212 = ssub.s32 %s21, %s33
    %s213 = ssub.s32 %s22, %s29
    %s214 = sor.u32 %s212, %s213
    %p215 = scmp.eq.s32.totalorder %s214, 0
    %s217 = sadd.s32 %s216, 1
    %s218 = scalar_select %p215, %s216, %s217
    %p221 = pneg %p215
    %p222 = scmp.eq.s32.totalorder %s14, 1
    %p223 = por %p221, %p222
    %p224 = scmp.ne.s32.totalorder %s216, %s219
    %p225 = scmp.eq.s32.totalorder %s14, 0
    %p226 = por %p224, %p225
    %p227 = scmp.ne.s32.totalorder %s216, %s219
    %p228 = scmp.eq.s32.totalorder %s19, 1
    %p229 = por %p227, %p228
    %p230 = scmp.ne.s32.totalorder %s219, %s220
    %p231 = scmp.eq.s32.totalorder %s19, 0
    %p232 = por %p230, %p231
    %p233 = scmp.ne.s32.totalorder %s219, %s220
    %p234 = scmp.eq.s32.totalorder %s20, 1
    %p235 = por %p233, %p234
    %p237 = scmp.ne.s32.totalorder %s220, %s236
    %p238 = scmp.eq.s32.totalorder %s20, 0
    %p239 = por %p237, %p238
    %p240 = scmp.le.s32.totalorder 1, %s14
    %p241 = scmp.lt.s32.totalorder %s14, 3
    %p242 = pnand %p240, %p241
    %p243 = pneg %p242
    // Predicated region
    $region9: #{net1_forward.13} parent=5 // pred_check
      _
    $region10: #{net1_forward.13} parent=5 // pred_check_branch
      %245 = sbr.rel (%p242) target = $region12
    $region11: #{net1_forward.13} parent=5 // pred_region
      %s246 = ssub.s32 %s14, 1
      // Predicated region
      $region13: #{net1_forward.13} parent=11 // pred_check
        %p247 = pneg %p99
      $region14: #{net1_forward.13} parent=11 // pred_check_branch
        %249 = sbr.rel (%p247) target = $region16
      $region15: #{net1_forward.13} parent=11 // pred_region
        _
      $region16: #{net1_forward.13} parent=11 // pred_fallthru
        _
      // Predicated region
      $region17: #{net1_forward.13} parent=11 // pred_check
        %p250 = pneg %p120
      $region18: #{net1_forward.13} parent=11 // pred_check_branch
        %252 = sbr.rel (%p250) target = $region20
      $region19: #{net1_forward.13} parent=11 // pred_region
        _
      $region20: #{net1_forward.13} parent=11 // pred_fallthru
        _
    $region12: #{net1_forward.13} parent=5 // pred_fallthru
      _
    %p253 = scmp.lt.s32.totalorder %s14, 2
    // Predicated region
    $region21: #{net1_forward.13} parent=5 // pred_check
      %p254 = pneg %p253
    $region22: #{net1_forward.13} parent=5 // pred_check_branch
      %256 = sbr.rel (%p254) target = $region24
    $region23: #{net1_forward.13} parent=5 // pred_region
      // Predicated region
      $region25: #{net1_forward.13} parent=23 // pred_check
        %p257 = pneg %p46
      $region26: #{net1_forward.13} parent=23 // pred_check_branch
        %259 = sbr.rel (%p257) target = $region28
      $region27: #{net1_forward.13} parent=23 // pred_region
        %p260 = scmp.lt.s32.totalorder %s21, 1
        %s261 = scalar_select %p260, %s21, 1
        %s262 = smul.addr %s261, 468
        %s263 = smul.addr %s262, 4
        %s264 = scalar_lea.vmem %s0, %s263
      $region28: #{net1_forward.13} parent=23 // pred_fallthru
        _
      // Predicated region
      $region29: #{net1_forward.13} parent=23 // pred_check
        %p265 = pneg %p72
      $region30: #{net1_forward.13} parent=23 // pred_check_branch
        %267 = sbr.rel (%p265) target = $region32
      $region31: #{net1_forward.13} parent=23 // pred_region
        %p268 = scmp.lt.s32.totalorder %s21, 1
        %s269 = scalar_select %p268, %s21, 1
        %s270 = smul.addr %s269, 468
        %s271 = smul.addr %s270, 4
        %s272 = scalar_lea.vmem %s1, %s271
      $region32: #{net1_forward.13} parent=23 // pred_fallthru
        _
    $region24: #{net1_forward.13} parent=5 // pred_fallthru
      _
    %p273 = scmp.le.s32.totalorder 1, %s14
    %p274 = scmp.lt.s32.totalorder %s14, 3
    %p275 = pnand %p273, %p274
    %p276 = pneg %p275
    // Predicated region
    $region33: #{net1_forward.13} parent=5 // pred_check
      _
    $region34: #{net1_forward.13} parent=5 // pred_check_branch
      %278 = sbr.rel (%p275) target = $region36
    $region35: #{net1_forward.13} parent=5 // pred_region
      %s279 = ssub.s32 %s14, 1
      %p280 = scmp.lt.s32.totalorder %s23, 1
      %s281 = scalar_select %p280, %s23, 1
      %s282 = smul.addr %s281, 468
      %s283 = smul.addr %s282, 4
      %s284 = scalar_lea.vmem %s0, %s283
      %p285 = pneg %p52
      %p286 = pneg %p49
      %p287 = scmp.lt.s32.totalorder %s23, 1
      %s288 = scalar_select %p287, %s23, 1
      %s289 = smul.addr %s288, 468
      %s290 = smul.addr %s289, 4
      %s291 = scalar_lea.vmem %s1, %s290
      %p292 = pneg %p78
      %p293 = pneg %p75
      %p294 = pneg %p99
      %p295 = pneg %p96
      %p296 = pneg %p120
      %p297 = pneg %p117
      %p298 = pneg %p148
      %p299 = pneg %p145
      %s300 = smul.u32 20, %s24
      %p301 = scmp.lt.s32.totalorder %s23, 1
      %s302 = scalar_select %p301, %s23, 1
      %p303 = scmp.lt.s32.totalorder %s300, 19
      %s304 = scalar_select %p303, %s300, 19
      %s305 = smul.addr %s304, 5
      %s306 = smul.addr %s302, 100
      %s307 = sadd.s32 %s305, %s306
      %s308 = smul.addr %s307, 8
      %s309 = scalar_lea.vmem %s4, %s308
      %p310 = pneg %p176
      %p311 = pneg %p173
      %s312 = smul.u32 20, %s24
      %p313 = scmp.lt.s32.totalorder %s23, 1
      %s314 = scalar_select %p313, %s23, 1
      %p315 = scmp.lt.s32.totalorder %s312, 19
      %s316 = scalar_select %p315, %s312, 19
      %s317 = smul.addr %s316, 5
      %s318 = smul.addr %s314, 100
      %s319 = sadd.s32 %s317, %s318
      %s320 = smul.addr %s319, 8
      %s321 = scalar_lea.vmem %s5, %s320
      %p322 = pneg %p204
      %p323 = pneg %p201
      %p324 = scmp.lt.s32.totalorder %s23, 1
      %s325 = scalar_select %p324, %s23, 1
      %p326 = scmp.lt.s32.totalorder %s24, 0
      %s327 = scalar_select %p326, %s24, 0
      %s328 = smul.addr %s327, 5
      %s329 = smul.addr %s325, 5
      %s330 = sadd.s32 %s328, %s329
      %s331 = smul.addr %s330, 8
      %s332 = scalar_lea.vmem %s6, %s331
      %p333 = pneg %p232
      %p334 = pneg %p229
      %p335 = scmp.lt.s32.totalorder %s23, 1
      %s336 = scalar_select %p335, %s23, 1
      %p337 = scmp.lt.s32.totalorder %s24, 0
      %s338 = scalar_select %p337, %s24, 0
      %s339 = smul.addr %s338, 5
      %s340 = smul.addr %s336, 5
      %s341 = sadd.s32 %s339, %s340
      %s342 = smul.addr %s341, 8
      %s343 = scalar_lea.vmem %s7, %s342
      %p344 = scmp.lt.s32.totalorder %s23, 1
      %s345 = scalar_select %p344, %s23, 1
      %s346 = smul.addr %s345, 468
      %s347 = smul.addr %s346, 4
      %s348 = scalar_lea.vmem %s0, %s347
      %p349 = scmp.lt.s32.totalorder %s23, 1
      %s350 = scalar_select %p349, %s23, 1
      %s351 = smul.addr %s350, 468
      %s352 = smul.addr %s351, 4
      %s353 = scalar_lea.vmem %s1, %s352
      %s354 = smul.u32 20, %s24
      %p355 = scmp.lt.s32.totalorder %s23, 1
      %s356 = scalar_select %p355, %s23, 1
      %p357 = scmp.lt.s32.totalorder %s354, 19
      %s358 = scalar_select %p357, %s354, 19
      %s359 = smul.addr %s358, 5
      %s360 = smul.addr %s356, 100
      %s361 = sadd.s32 %s359, %s360
      %s362 = smul.addr %s361, 8
      %s363 = scalar_lea.vmem %s4, %s362
      %s364 = smul.u32 20, %s24
      %s365 = smul.u32 20, %s24
      %p366 = scmp.lt.s32.totalorder %s23, 1
      %s367 = scalar_select %p366, %s23, 1
      %p368 = scmp.lt.s32.totalorder %s365, 19
      %s369 = scalar_select %p368, %s365, 19
      %s370 = smul.addr %s369, 5
      %s371 = smul.addr %s367, 100
      %s372 = sadd.s32 %s370, %s371
      %s373 = smul.addr %s372, 8
      %s374 = scalar_lea.vmem %s5, %s373
      %s375 = smul.u32 20, %s24
      %p376 = scmp.lt.s32.totalorder %s23, 1
      %s377 = scalar_select %p376, %s23, 1
      %p378 = scmp.lt.s32.totalorder %s24, 0
      %s379 = scalar_select %p378, %s24, 0
      %s380 = smul.addr %s379, 5
      %s381 = smul.addr %s377, 5
      %s382 = sadd.s32 %s380, %s381
      %s383 = smul.addr %s382, 8
      %s384 = scalar_lea.vmem %s6, %s383
      %p385 = scmp.lt.s32.totalorder %s23, 1
      %s386 = scalar_select %p385, %s23, 1
      %p387 = scmp.lt.s32.totalorder %s24, 0
      %s388 = scalar_select %p387, %s24, 0
      %s389 = smul.addr %s388, 5
      %s390 = smul.addr %s386, 5
      %s391 = sadd.s32 %s389, %s390
      %s392 = smul.addr %s391, 8
      %s393 = scalar_lea.vmem %s7, %s392
      loop: start=0, step=1, limit=20
      $region37: #{net1_forward.13} parent=35 // loop_pre_header
        _
      $region38: #{net1_forward.13} parent=35 // loop_header
        %s396 = sphi 0, %s400
        %p397 = scmp.ge.s32.totalorder %s396, 20
        %v401 = vphi 0.0, %v2107
        %v402 = vphi 0.0, %v2108
        %v403 = vphi 0.0, %v2109
        %v404 = vphi 0.0, %v2110
        %v405 = vphi 0.0, %v2111
        %v406 = vphi 0.0, %v2157
        %v407 = vphi 0.0, %v2158
        %v408 = vphi 0.0, %v2159
        %v409 = vphi 0.0, %v2160
        %v410 = vphi 0.0, %v2161
      $region39: #{net1_forward.13} parent=35 // loop_header_branch
        %399 = sbr.rel (%p397) target = $region43
      $region40: #{net1_forward.13} parent=35 // loop_body
        %v411 = vld [vmem:[%s3] sm:$0xff]
        %v412 = vld [vmem:[%s3 + $0x8] sm:$0xff]
        %v413 = vld [vmem:[%s3 + $0x10] sm:$0xff]
        %v414 = vld [vmem:[%s3 + $0x18] sm:$0xff]
        %v415 = vld [vmem:[%s3 + $0x20] sm:$0xff]
        %s416 = smul.u32 %s24, 20
        %s417 = sadd.s32 %s416, %s396
        %s418 = smul.u32 %s417, 144
        %v419 = vld [vmem:[%s2] sm:$0xff]
        %v420 = vld [vmem:[%s2 + $0x8] sm:$0xff]
        %v421 = vld [vmem:[%s2 + $0x20] sm:$0xff]
        %v422 = vld [vmem:[%s2 + $0x28] sm:$0xff]
        %v423 = vld [vmem:[%s2 + $0x40] sm:$0xff]
        %v424 = vld [vmem:[%s2 + $0x48] sm:$0xff]
        %v425 = vld [vmem:[%s2 + $0x60] sm:$0xff]
        %v426 = vld [vmem:[%s2 + $0x68] sm:$0xff]
        %v427 = vld [vmem:[%s2 + $0x80] sm:$0xff]
        %v428 = vld [vmem:[%s2 + $0x88] sm:$0xff]
        %s429 = sshra.s32 %s418, 3
        %s430 = sand.u32 %s418, 7
        %s431 = smul.addr %s429, 4
        %s432 = scalar_lea.vmem %s348, %s431
        %v433 = vld [vmem:[%s432] sm:$0xf]
        %v434 = vld [vmem:[%s432 + $0x4] sm:$0xf]
        %v435 = vld [vmem:[%s432 + $0x8] sm:$0xf]
        %v436 = vld [vmem:[%s432 + $0xc] sm:$0xf]
        %v437 = vld [vmem:[%s432 + $0x10] sm:$0xf]
        %v438 = vld [vmem:[%s432 + $0x14] sm:$0xf]
        %v439 = vld [vmem:[%s432 + $0x18] sm:$0xf]
        %v440 = vld [vmem:[%s432 + $0x1c] sm:$0xf]
        %v441 = vld [vmem:[%s432 + $0x20] sm:$0xf]
        %v442 = vld [vmem:[%s432 + $0x24] sm:$0xf]
        %v443 = vld [vmem:[%s432 + $0x28] sm:$0xf]
        %v444 = vld [vmem:[%s432 + $0x2c] sm:$0xf]
        %v445 = vld [vmem:[%s432 + $0x30] sm:$0xf]
        %v446 = vld [vmem:[%s432 + $0x34] sm:$0xf]
        %v447 = vld [vmem:[%s432 + $0x38] sm:$0xf]
        %v448 = vld [vmem:[%s432 + $0x3c] sm:$0xf]
        %v449 = vld [vmem:[%s432 + $0x40] sm:$0xf]
        %v450 = vld [vmem:[%s432 + $0x44] sm:$0xf]
        %v451 = vld [vmem:[%s432 + $0x48] sm:$0xf]
        %v452 = vld [vmem:[%s432 + $0x4c] sm:$0xf]
        %v453 = vld [vmem:[%s432 + $0x50] sm:$0xf]
        %v454 = vld [vmem:[%s432 + $0x54] sm:$0xf]
        %v455 = vld [vmem:[%s432 + $0x58] sm:$0xf]
        %v456 = vld [vmem:[%s432 + $0x5c] sm:$0xf]
        %v457 = vld [vmem:[%s432 + $0x60] sm:$0xf]
        %v458 = vld [vmem:[%s432 + $0x64] sm:$0xf]
        %v459 = vld [vmem:[%s432 + $0x68] sm:$0xf]
        %v460 = vld [vmem:[%s432 + $0x6c] sm:$0xf]
        %v461 = vld [vmem:[%s432 + $0x70] sm:$0xf]
        %v462 = vld [vmem:[%s432 + $0x74] sm:$0xf]
        %v463 = vld [vmem:[%s432 + $0x78] sm:$0xf]
        %v464 = vld [vmem:[%s432 + $0x7c] sm:$0xf]
        %v465 = vld [vmem:[%s432 + $0x80] sm:$0xf]
        %v466 = vld [vmem:[%s432 + $0x84] sm:$0xf]
        %v467 = vld [vmem:[%s432 + $0x88] sm:$0xf]
        %v468 = vld [vmem:[%s432 + $0x8c] sm:$0xf]
        %v469 = vld [vmem:[%s432 + $0x90] sm:$0xf]
        %v470 = vld [vmem:[%s432 + $0x94] sm:$0xf]
        %v471 = vld [vmem:[%s432 + $0x98] sm:$0xf]
        %v472 = vld [vmem:[%s432 + $0x9c] sm:$0xf]
        %v473 = vld [vmem:[%s432 + $0xa0] sm:$0xf]
        %v474 = vld [vmem:[%s432 + $0xa4] sm:$0xf]
        %v475 = vld [vmem:[%s432 + $0xa8] sm:$0xf]
        %v476 = vld [vmem:[%s432 + $0xac] sm:$0xf]
        %v477 = vld [vmem:[%s432 + $0xb0] sm:$0xf]
        %v478 = vld [vmem:[%s432 + $0xb4] sm:$0xf]
        %v479 = vld [vmem:[%s432 + $0xb8] sm:$0xf]
        %v480 = vld [vmem:[%s432 + $0xbc] sm:$0xf]
        %v481 = vld [vmem:[%s432 + $0xc0] sm:$0xf]
        %v482 = vld [vmem:[%s432 + $0xc4] sm:$0xf]
        %v483 = vld [vmem:[%s432 + $0xc8] sm:$0xf]
        %v484 = vld [vmem:[%s432 + $0xcc] sm:$0xf]
        %v485 = vld [vmem:[%s432 + $0xd0] sm:$0xf]
        %v486 = vld [vmem:[%s432 + $0xd4] sm:$0xf]
        %v487 = vld [vmem:[%s432 + $0xd8] sm:$0xf]
        %v488 = vld [vmem:[%s432 + $0xdc] sm:$0xf]
        %v489 = vld [vmem:[%s432 + $0xe0] sm:$0xf]
        %v490 = vld [vmem:[%s432 + $0xe4] sm:$0xf]
        %v491 = vld [vmem:[%s432 + $0xe8] sm:$0xf]
        %v492 = vld [vmem:[%s432 + $0xec] sm:$0xf]
        %v493 = vld [vmem:[%s432 + $0xf0] sm:$0xf]
        %v494 = vld [vmem:[%s432 + $0xf4] sm:$0xf]
        %v495 = vld [vmem:[%s432 + $0xf8] sm:$0xf]
        %v496 = vld [vmem:[%s432 + $0xfc] sm:$0xf]
        %s497 = smul.addr %s429, 4
        %s498 = scalar_lea.vmem %s353, %s497
        %v499 = vld [vmem:[%s498] sm:$0xf]
        %v500 = vld [vmem:[%s498 + $0x4] sm:$0xf]
        %v501 = vld [vmem:[%s498 + $0x8] sm:$0xf]
        %v502 = vld [vmem:[%s498 + $0xc] sm:$0xf]
        %v503 = vld [vmem:[%s498 + $0x10] sm:$0xf]
        %v504 = vld [vmem:[%s498 + $0x14] sm:$0xf]
        %v505 = vld [vmem:[%s498 + $0x18] sm:$0xf]
        %v506 = vld [vmem:[%s498 + $0x1c] sm:$0xf]
        %v507 = vld [vmem:[%s498 + $0x20] sm:$0xf]
        %v508 = vld [vmem:[%s498 + $0x24] sm:$0xf]
        %v509 = vld [vmem:[%s498 + $0x28] sm:$0xf]
        %v510 = vld [vmem:[%s498 + $0x2c] sm:$0xf]
        %v511 = vld [vmem:[%s498 + $0x30] sm:$0xf]
        %v512 = vld [vmem:[%s498 + $0x34] sm:$0xf]
        %v513 = vld [vmem:[%s498 + $0x38] sm:$0xf]
        %v514 = vld [vmem:[%s498 + $0x3c] sm:$0xf]
        %v515 = vld [vmem:[%s498 + $0x40] sm:$0xf]
        %v516 = vld [vmem:[%s498 + $0x44] sm:$0xf]
        %v517 = vld [vmem:[%s498 + $0x48] sm:$0xf]
        %v518 = vld [vmem:[%s498 + $0x4c] sm:$0xf]
        %v519 = vld [vmem:[%s498 + $0x50] sm:$0xf]
        %v520 = vld [vmem:[%s498 + $0x54] sm:$0xf]
        %v521 = vld [vmem:[%s498 + $0x58] sm:$0xf]
        %v522 = vld [vmem:[%s498 + $0x5c] sm:$0xf]
        %v523 = vld [vmem:[%s498 + $0x60] sm:$0xf]
        %v524 = vld [vmem:[%s498 + $0x64] sm:$0xf]
        %v525 = vld [vmem:[%s498 + $0x68] sm:$0xf]
        %v526 = vld [vmem:[%s498 + $0x6c] sm:$0xf]
        %v527 = vld [vmem:[%s498 + $0x70] sm:$0xf]
        %v528 = vld [vmem:[%s498 + $0x74] sm:$0xf]
        %v529 = vld [vmem:[%s498 + $0x78] sm:$0xf]
        %v530 = vld [vmem:[%s498 + $0x7c] sm:$0xf]
        %v531 = vld [vmem:[%s498 + $0x80] sm:$0xf]
        %v532 = vld [vmem:[%s498 + $0x84] sm:$0xf]
        %v533 = vld [vmem:[%s498 + $0x88] sm:$0xf]
        %v534 = vld [vmem:[%s498 + $0x8c] sm:$0xf]
        %v535 = vld [vmem:[%s498 + $0x90] sm:$0xf]
        %v536 = vld [vmem:[%s498 + $0x94] sm:$0xf]
        %v537 = vld [vmem:[%s498 + $0x98] sm:$0xf]
        %v538 = vld [vmem:[%s498 + $0x9c] sm:$0xf]
        %v539 = vld [vmem:[%s498 + $0xa0] sm:$0xf]
        %v540 = vld [vmem:[%s498 + $0xa4] sm:$0xf]
        %v541 = vld [vmem:[%s498 + $0xa8] sm:$0xf]
        %v542 = vld [vmem:[%s498 + $0xac] sm:$0xf]
        %v543 = vld [vmem:[%s498 + $0xb0] sm:$0xf]
        %v544 = vld [vmem:[%s498 + $0xb4] sm:$0xf]
        %v545 = vld [vmem:[%s498 + $0xb8] sm:$0xf]
        %v546 = vld [vmem:[%s498 + $0xbc] sm:$0xf]
        %v547 = vld [vmem:[%s498 + $0xc0] sm:$0xf]
        %v548 = vld [vmem:[%s498 + $0xc4] sm:$0xf]
        %v549 = vld [vmem:[%s498 + $0xc8] sm:$0xf]
        %v550 = vld [vmem:[%s498 + $0xcc] sm:$0xf]
        %v551 = vld [vmem:[%s498 + $0xd0] sm:$0xf]
        %v552 = vld [vmem:[%s498 + $0xd4] sm:$0xf]
        %v553 = vld [vmem:[%s498 + $0xd8] sm:$0xf]
        %v554 = vld [vmem:[%s498 + $0xdc] sm:$0xf]
        %v555 = vld [vmem:[%s498 + $0xe0] sm:$0xf]
        %v556 = vld [vmem:[%s498 + $0xe4] sm:$0xf]
        %v557 = vld [vmem:[%s498 + $0xe8] sm:$0xf]
        %v558 = vld [vmem:[%s498 + $0xec] sm:$0xf]
        %v559 = vld [vmem:[%s498 + $0xf0] sm:$0xf]
        %v560 = vld [vmem:[%s498 + $0xf4] sm:$0xf]
        %v561 = vld [vmem:[%s498 + $0xf8] sm:$0xf]
        %v562 = vld [vmem:[%s498 + $0xfc] sm:$0xf]
        %v563 = vld [vmem:[%s2 + $0x10] sm:$0xff]
        %v564 = vld [vmem:[%s2 + $0x18] sm:$0xff]
        %v565 = vld [vmem:[%s2 + $0x30] sm:$0xff]
        %v566 = vld [vmem:[%s2 + $0x38] sm:$0xff]
        %v567 = vld [vmem:[%s2 + $0x50] sm:$0xff]
        %v568 = vld [vmem:[%s2 + $0x58] sm:$0xff]
        %v569 = vld [vmem:[%s2 + $0x70] sm:$0xff]
        %v570 = vld [vmem:[%s2 + $0x78] sm:$0xff]
        %v571 = vld [vmem:[%s2 + $0x90] sm:$0xff]
        %v572 = vld [vmem:[%s2 + $0x98] sm:$0xff]
        %s573 = sadd.s32 %s418, 512
        %s574 = sshra.s32 %s573, 3
        %s575 = sand.u32 %s573, 7
        %s576 = smul.addr %s574, 4
        %s577 = scalar_lea.vmem %s348, %s576
        %v578 = vld [vmem:[%s577] sm:$0xf]
        %v579 = vld [vmem:[%s577 + $0x4] sm:$0xf]
        %v580 = vld [vmem:[%s577 + $0x8] sm:$0xf]
        %v581 = vld [vmem:[%s577 + $0xc] sm:$0xf]
        %v582 = vld [vmem:[%s577 + $0x10] sm:$0xf]
        %v583 = vld [vmem:[%s577 + $0x14] sm:$0xf]
        %v584 = vld [vmem:[%s577 + $0x18] sm:$0xf]
        %v585 = vld [vmem:[%s577 + $0x1c] sm:$0xf]
        %v586 = vld [vmem:[%s577 + $0x20] sm:$0xf]
        %v587 = vld [vmem:[%s577 + $0x24] sm:$0xf]
        %v588 = vld [vmem:[%s577 + $0x28] sm:$0xf]
        %v589 = vld [vmem:[%s577 + $0x2c] sm:$0xf]
        %v590 = vld [vmem:[%s577 + $0x30] sm:$0xf]
        %v591 = vld [vmem:[%s577 + $0x34] sm:$0xf]
        %v592 = vld [vmem:[%s577 + $0x38] sm:$0xf]
        %v593 = vld [vmem:[%s577 + $0x3c] sm:$0xf]
        %v594 = vld [vmem:[%s577 + $0x40] sm:$0xf]
        %v595 = vld [vmem:[%s577 + $0x44] sm:$0xf]
        %v596 = vld [vmem:[%s577 + $0x48] sm:$0xf]
        %v597 = vld [vmem:[%s577 + $0x4c] sm:$0xf]
        %v598 = vld [vmem:[%s577 + $0x50] sm:$0xf]
        %v599 = vld [vmem:[%s577 + $0x54] sm:$0xf]
        %v600 = vld [vmem:[%s577 + $0x58] sm:$0xf]
        %v601 = vld [vmem:[%s577 + $0x5c] sm:$0xf]
        %v602 = vld [vmem:[%s577 + $0x60] sm:$0xf]
        %v603 = vld [vmem:[%s577 + $0x64] sm:$0xf]
        %v604 = vld [vmem:[%s577 + $0x68] sm:$0xf]
        %v605 = vld [vmem:[%s577 + $0x6c] sm:$0xf]
        %v606 = vld [vmem:[%s577 + $0x70] sm:$0xf]
        %v607 = vld [vmem:[%s577 + $0x74] sm:$0xf]
        %v608 = vld [vmem:[%s577 + $0x78] sm:$0xf]
        %v609 = vld [vmem:[%s577 + $0x7c] sm:$0xf]
        %v610 = vld [vmem:[%s577 + $0x80] sm:$0xf]
        %v611 = vld [vmem:[%s577 + $0x84] sm:$0xf]
        %v612 = vld [vmem:[%s577 + $0x88] sm:$0xf]
        %v613 = vld [vmem:[%s577 + $0x8c] sm:$0xf]
        %v614 = vld [vmem:[%s577 + $0x90] sm:$0xf]
        %v615 = vld [vmem:[%s577 + $0x94] sm:$0xf]
        %v616 = vld [vmem:[%s577 + $0x98] sm:$0xf]
        %v617 = vld [vmem:[%s577 + $0x9c] sm:$0xf]
        %v618 = vld [vmem:[%s577 + $0xa0] sm:$0xf]
        %v619 = vld [vmem:[%s577 + $0xa4] sm:$0xf]
        %v620 = vld [vmem:[%s577 + $0xa8] sm:$0xf]
        %v621 = vld [vmem:[%s577 + $0xac] sm:$0xf]
        %v622 = vld [vmem:[%s577 + $0xb0] sm:$0xf]
        %v623 = vld [vmem:[%s577 + $0xb4] sm:$0xf]
        %v624 = vld [vmem:[%s577 + $0xb8] sm:$0xf]
        %v625 = vld [vmem:[%s577 + $0xbc] sm:$0xf]
        %v626 = vld [vmem:[%s577 + $0xc0] sm:$0xf]
        %v627 = vld [vmem:[%s577 + $0xc4] sm:$0xf]
        %v628 = vld [vmem:[%s577 + $0xc8] sm:$0xf]
        %v629 = vld [vmem:[%s577 + $0xcc] sm:$0xf]
        %v630 = vld [vmem:[%s577 + $0xd0] sm:$0xf]
        %v631 = vld [vmem:[%s577 + $0xd4] sm:$0xf]
        %v632 = vld [vmem:[%s577 + $0xd8] sm:$0xf]
        %v633 = vld [vmem:[%s577 + $0xdc] sm:$0xf]
        %v634 = vld [vmem:[%s577 + $0xe0] sm:$0xf]
        %v635 = vld [vmem:[%s577 + $0xe4] sm:$0xf]
        %v636 = vld [vmem:[%s577 + $0xe8] sm:$0xf]
        %v637 = vld [vmem:[%s577 + $0xec] sm:$0xf]
        %v638 = vld [vmem:[%s577 + $0xf0] sm:$0xf]
        %v639 = vld [vmem:[%s577 + $0xf4] sm:$0xf]
        %s640 = smul.addr %s574, 4
        %s641 = scalar_lea.vmem %s353, %s640
        %v642 = vld [vmem:[%s641] sm:$0xf]
        %v643 = vld [vmem:[%s641 + $0x4] sm:$0xf]
        %v644 = vld [vmem:[%s641 + $0x8] sm:$0xf]
        %v645 = vld [vmem:[%s641 + $0xc] sm:$0xf]
        %v646 = vld [vmem:[%s641 + $0x10] sm:$0xf]
        %v647 = vld [vmem:[%s641 + $0x14] sm:$0xf]
        %v648 = vld [vmem:[%s641 + $0x18] sm:$0xf]
        %v649 = vld [vmem:[%s641 + $0x1c] sm:$0xf]
        %v650 = vld [vmem:[%s641 + $0x20] sm:$0xf]
        %v651 = vld [vmem:[%s641 + $0x24] sm:$0xf]
        %v652 = vld [vmem:[%s641 + $0x28] sm:$0xf]
        %v653 = vld [vmem:[%s641 + $0x2c] sm:$0xf]
        %v654 = vld [vmem:[%s641 + $0x30] sm:$0xf]
        %v655 = vld [vmem:[%s641 + $0x34] sm:$0xf]
        %v656 = vld [vmem:[%s641 + $0x38] sm:$0xf]
        %v657 = vld [vmem:[%s641 + $0x3c] sm:$0xf]
        %v658 = vld [vmem:[%s641 + $0x40] sm:$0xf]
        %v659 = vld [vmem:[%s641 + $0x44] sm:$0xf]
        %v660 = vld [vmem:[%s641 + $0x48] sm:$0xf]
        %v661 = vld [vmem:[%s641 + $0x4c] sm:$0xf]
        %v662 = vld [vmem:[%s641 + $0x50] sm:$0xf]
        %v663 = vld [vmem:[%s641 + $0x54] sm:$0xf]
        %v664 = vld [vmem:[%s641 + $0x58] sm:$0xf]
        %v665 = vld [vmem:[%s641 + $0x5c] sm:$0xf]
        %v666 = vld [vmem:[%s641 + $0x60] sm:$0xf]
        %v667 = vld [vmem:[%s641 + $0x64] sm:$0xf]
        %v668 = vld [vmem:[%s641 + $0x68] sm:$0xf]
        %v669 = vld [vmem:[%s641 + $0x6c] sm:$0xf]
        %v670 = vld [vmem:[%s641 + $0x70] sm:$0xf]
        %v671 = vld [vmem:[%s641 + $0x74] sm:$0xf]
        %v672 = vld [vmem:[%s641 + $0x78] sm:$0xf]
        %v673 = vld [vmem:[%s641 + $0x7c] sm:$0xf]
        %v674 = vld [vmem:[%s641 + $0x80] sm:$0xf]
        %v675 = vld [vmem:[%s641 + $0x84] sm:$0xf]
        %v676 = vld [vmem:[%s641 + $0x88] sm:$0xf]
        %v677 = vld [vmem:[%s641 + $0x8c] sm:$0xf]
        %v678 = vld [vmem:[%s641 + $0x90] sm:$0xf]
        %v679 = vld [vmem:[%s641 + $0x94] sm:$0xf]
        %v680 = vld [vmem:[%s641 + $0x98] sm:$0xf]
        %v681 = vld [vmem:[%s641 + $0x9c] sm:$0xf]
        %v682 = vld [vmem:[%s641 + $0xa0] sm:$0xf]
        %v683 = vld [vmem:[%s641 + $0xa4] sm:$0xf]
        %v684 = vld [vmem:[%s641 + $0xa8] sm:$0xf]
        %v685 = vld [vmem:[%s641 + $0xac] sm:$0xf]
        %v686 = vld [vmem:[%s641 + $0xb0] sm:$0xf]
        %v687 = vld [vmem:[%s641 + $0xb4] sm:$0xf]
        %v688 = vld [vmem:[%s641 + $0xb8] sm:$0xf]
        %v689 = vld [vmem:[%s641 + $0xbc] sm:$0xf]
        %v690 = vld [vmem:[%s641 + $0xc0] sm:$0xf]
        %v691 = vld [vmem:[%s641 + $0xc4] sm:$0xf]
        %v692 = vld [vmem:[%s641 + $0xc8] sm:$0xf]
        %v693 = vld [vmem:[%s641 + $0xcc] sm:$0xf]
        %v694 = vld [vmem:[%s641 + $0xd0] sm:$0xf]
        %v695 = vld [vmem:[%s641 + $0xd4] sm:$0xf]
        %v696 = vld [vmem:[%s641 + $0xd8] sm:$0xf]
        %v697 = vld [vmem:[%s641 + $0xdc] sm:$0xf]
        %v698 = vld [vmem:[%s641 + $0xe0] sm:$0xf]
        %v699 = vld [vmem:[%s641 + $0xe4] sm:$0xf]
        %v700 = vld [vmem:[%s641 + $0xe8] sm:$0xf]
        %v701 = vld [vmem:[%s641 + $0xec] sm:$0xf]
        %v702 = vld [vmem:[%s641 + $0xf0] sm:$0xf]
        %v703 = vld [vmem:[%s641 + $0xf4] sm:$0xf]
        %v714 = vunpack.c.l.b16 %v563
        %v715 = vunpack.c.h.b16 %v563
        %v716 = vunpack.c.l.b16 %v564
        %v717 = vunpack.c.h.b16 %v564
        %v718 = vunpack.c.l.b16 %v565
        %v719 = vunpack.c.h.b16 %v565
        %v720 = vunpack.c.l.b16 %v566
        %v721 = vunpack.c.h.b16 %v566
        %v722 = vunpack.c.l.b16 %v567
        %v723 = vunpack.c.h.b16 %v567
        %v724 = vunpack.c.l.b16 %v568
        %v725 = vunpack.c.h.b16 %v568
        %v726 = vunpack.c.l.b16 %v569
        %v727 = vunpack.c.h.b16 %v569
        %v728 = vunpack.c.l.b16 %v570
        %v729 = vunpack.c.h.b16 %v570
        %v730 = vunpack.c.l.b16 %v571
        %v731 = vunpack.c.h.b16 %v571
        %v732 = vunpack.c.l.b16 %v572
        %v733 = vunpack.c.h.b16 %v572
        %v734 = vpack.c.b16 %v718, %v714
        %v735 = vpack.c.b16 %v719, %v715
        %v736 = vpack.c.b16 %v720, %v716
        %v737 = vpack.c.b16 %v721, %v717
        %v738 = vpack.c.b16 %v726, %v722
        %v739 = vpack.c.b16 %v727, %v723
        %v740 = vpack.c.b16 %v728, %v724
        %v741 = vpack.c.b16 %v729, %v725
        %v742 = vpack.c.b16 %v730, %v730
        %v743 = vpack.c.b16 %v731, %v731
        %v744 = vpack.c.b16 %v732, %v732
        %v745 = vpack.c.b16 %v733, %v733
        %v817 = vunpack.c.l.b16 %v578
        %v818 = vunpack.c.l.b16 %v579
        %v819 = vunpack.c.l.b16 %v580
        %v820 = vunpack.c.l.b16 %v581
        %v821 = vunpack.c.l.b16 %v582
        %v822 = vunpack.c.l.b16 %v583
        %v823 = vunpack.c.l.b16 %v584
        %v824 = vunpack.c.l.b16 %v585
        %v825 = vunpack.c.l.b16 %v586
        %v826 = vunpack.c.l.b16 %v587
        %v827 = vunpack.c.l.b16 %v588
        %v828 = vunpack.c.l.b16 %v589
        %v829 = vunpack.c.l.b16 %v590
        %v830 = vunpack.c.l.b16 %v591
        %v831 = vunpack.c.l.b16 %v592
        %v832 = vunpack.c.l.b16 %v593
        %v833 = vunpack.c.l.b16 %v594
        %v834 = vunpack.c.l.b16 %v595
        %v835 = vunpack.c.l.b16 %v596
        %v836 = vunpack.c.l.b16 %v597
        %v837 = vunpack.c.l.b16 %v598
        %v838 = vunpack.c.l.b16 %v599
        %v839 = vunpack.c.l.b16 %v600
        %v840 = vunpack.c.l.b16 %v601
        %v841 = vunpack.c.l.b16 %v602
        %v842 = vunpack.c.l.b16 %v603
        %v843 = vunpack.c.l.b16 %v604
        %v844 = vunpack.c.l.b16 %v605
        %v845 = vunpack.c.l.b16 %v606
        %v846 = vunpack.c.l.b16 %v607
        %v847 = vunpack.c.l.b16 %v608
        %v848 = vunpack.c.l.b16 %v609
        %v849 = vunpack.c.l.b16 %v610
        %v850 = vunpack.c.l.b16 %v611
        %v851 = vunpack.c.l.b16 %v612
        %v852 = vunpack.c.l.b16 %v613
        %v853 = vunpack.c.l.b16 %v614
        %v854 = vunpack.c.l.b16 %v615
        %v855 = vunpack.c.l.b16 %v616
        %v856 = vunpack.c.l.b16 %v617
        %v857 = vunpack.c.l.b16 %v618
        %v858 = vunpack.c.l.b16 %v619
        %v859 = vunpack.c.l.b16 %v620
        %v860 = vunpack.c.l.b16 %v621
        %v861 = vunpack.c.l.b16 %v622
        %v862 = vunpack.c.l.b16 %v623
        %v863 = vunpack.c.l.b16 %v624
        %v864 = vunpack.c.l.b16 %v625
        %v865 = vunpack.c.l.b16 %v626
        %v866 = vunpack.c.l.b16 %v627
        %v867 = vunpack.c.l.b16 %v628
        %v868 = vunpack.c.l.b16 %v629
        %v869 = vunpack.c.l.b16 %v630
        %v870 = vunpack.c.l.b16 %v631
        %v871 = vunpack.c.l.b16 %v632
        %v872 = vunpack.c.l.b16 %v633
        %v873 = vunpack.c.l.b16 %v634
        %v874 = vunpack.c.l.b16 %v635
        %v875 = vunpack.c.l.b16 %v636
        %v876 = vunpack.c.l.b16 %v637
        %v877 = vunpack.c.l.b16 %v638
        %v878 = vunpack.c.l.b16 %v639
        %v879 = vpack.c.b16 %v818, %v817
        %v880 = vpack.c.b16 %v820, %v819
        %v881 = vpack.c.b16 %v822, %v821
        %v882 = vpack.c.b16 %v824, %v823
        %v883 = vpack.c.b16 %v826, %v825
        %v884 = vpack.c.b16 %v828, %v827
        %v885 = vpack.c.b16 %v830, %v829
        %v886 = vpack.c.b16 %v832, %v831
        %v887 = vpack.c.b16 %v834, %v833
        %v888 = vpack.c.b16 %v836, %v835
        %v889 = vpack.c.b16 %v838, %v837
        %v890 = vpack.c.b16 %v840, %v839
        %v891 = vpack.c.b16 %v842, %v841
        %v892 = vpack.c.b16 %v844, %v843
        %v893 = vpack.c.b16 %v846, %v845
        %v894 = vpack.c.b16 %v848, %v847
        %v895 = vpack.c.b16 %v850, %v849
        %v896 = vpack.c.b16 %v852, %v851
        %v897 = vpack.c.b16 %v854, %v853
        %v898 = vpack.c.b16 %v856, %v855
        %v899 = vpack.c.b16 %v858, %v857
        %v900 = vpack.c.b16 %v860, %v859
        %v901 = vpack.c.b16 %v862, %v861
        %v902 = vpack.c.b16 %v864, %v863
        %v903 = vpack.c.b16 %v866, %v865
        %v904 = vpack.c.b16 %v868, %v867
        %v905 = vpack.c.b16 %v870, %v869
        %v906 = vpack.c.b16 %v872, %v871
        %v907 = vpack.c.b16 %v874, %v873
        %v908 = vpack.c.b16 %v876, %v875
        %v909 = vpack.c.b16 %v878, %v877
        %vm941 = vcmask 916480
        %v943 = vsel %vm941, %v737, 0
        %v946 = vsel %vm941, %v741, 0
        %v949 = vsel %vm941, %v745, 0
        %951 = vmatprep.subr.bf16.mxu0 0
        %952 = vmatpush1.bf16.msra.mxu0 %v879
        %953 = vmatprep.subr.bf16.mxu0 0
        %954 = vmatpush1.bf16.msra.mxu0 %v880
        %955 = vmatprep.subr.bf16.mxu0 0
        %956 = vmatpush1.bf16.msra.mxu0 %v881
        %957 = vmatprep.subr.bf16.mxu0 0
        %958 = vmatpush1.bf16.msra.mxu0 %v882
        %959 = vmatprep.subr.bf16.mxu0 0
        %960 = vmatpush1.bf16.msra.mxu0 %v883
        %961 = vmatprep.subr.bf16.mxu0 0
        %962 = vmatpush1.bf16.msra.mxu0 %v884
        %963 = vmatprep.subr.bf16.mxu0 0
        %964 = vmatpush1.bf16.msra.mxu0 %v885
        %965 = vmatprep.subr.bf16.mxu0 0
        %966 = vmatpush1.bf16.msra.mxu0 %v886
        %967 = vmatprep.subr.bf16.mxu0 0
        %968 = vmatpush1.bf16.msra.mxu0 %v887
        %969 = vmatprep.subr.bf16.mxu0 0
        %970 = vmatpush1.bf16.msra.mxu0 %v888
        %971 = vmatprep.subr.bf16.mxu0 0
        %972 = vmatpush1.bf16.msra.mxu0 %v889
        %973 = vmatprep.subr.bf16.mxu0 0
        %974 = vmatpush1.bf16.msra.mxu0 %v890
        %975 = vmatprep.subr.bf16.mxu0 0
        %976 = vmatpush1.bf16.msra.mxu0 %v891
        %977 = vmatprep.subr.bf16.mxu0 0
        %978 = vmatpush1.bf16.msra.mxu0 %v892
        %979 = vmatprep.subr.bf16.mxu0 0
        %980 = vmatpush1.bf16.msra.mxu0 %v893
        %981 = vmatprep.subr.bf16.mxu0 0
        %982 = vmatpush1.bf16.msra.mxu0 %v894
        %983 = vmatprep.mubr.bf16.mxu0 %v735
        %984 = vmatmul.mubr.bf16.gmra.mrb[0].mxu0 %v734
        %v985 = vpop.f32.mrb[0].mxu0
        %v986 = vadd.f32 0.0, %v985
        %v987 = vpop.f32.mrb[0].mxu0
        %v988 = vpop.f32.mrb[0].mxu0
        %v989 = vadd.f32 0.0, %v988
        %v990 = vpop.f32.mrb[0].mxu0
        %991 = vmatprep.mubr.bf16.mxu0 %v739
        %992 = vmatmul.mubr.bf16.gmra.mrb[0].mxu0 %v738
        %v993 = vpop.f32.mrb[0].mxu0
        %v994 = vadd.f32 0.0, %v993
        %v995 = vpop.f32.mrb[0].mxu0
        %v996 = vpop.f32.mrb[0].mxu0
        %v997 = vadd.f32 0.0, %v996
        %v998 = vpop.f32.mrb[0].mxu0
        %999 = vmatprep.mubr.bf16.mxu0 %v743
        %1000 = vmatmul.mubr.bf16.gmra.mrb[0].mxu0 %v742
        %v1001 = vpop.f32.mrb[0].mxu0
        %v1002 = vadd.f32 0.0, %v1001
        %v1003 = vpop.f32.mrb[0].mxu0
        %v1004 = vpop.f32.mrb[0].mxu0
        %v1005 = vpop.f32.mrb[0].mxu0
        %1006 = vdwg.mxu0
        %1007 = vmatprep.subr.bf16.mxu0 0
        %1008 = vmatpush1.bf16.msra.mxu0 %v895
        %1009 = vmatprep.subr.bf16.mxu0 0
        %1010 = vmatpush1.bf16.msra.mxu0 %v896
        %1011 = vmatprep.subr.bf16.mxu0 0
        %1012 = vmatpush1.bf16.msra.mxu0 %v897
        %1013 = vmatprep.subr.bf16.mxu0 0
        %1014 = vmatpush1.bf16.msra.mxu0 %v898
        %1015 = vmatprep.subr.bf16.mxu0 0
        %1016 = vmatpush1.bf16.msra.mxu0 %v899
        %1017 = vmatprep.subr.bf16.mxu0 0
        %1018 = vmatpush1.bf16.msra.mxu0 %v900
        %1019 = vmatprep.subr.bf16.mxu0 0
        %1020 = vmatpush1.bf16.msra.mxu0 %v901
        %1021 = vmatprep.subr.bf16.mxu0 0
        %1022 = vmatpush1.bf16.msra.mxu0 %v902
        %1023 = vmatprep.subr.bf16.mxu0 0
        %1024 = vmatpush1.bf16.msra.mxu0 %v903
        %1025 = vmatprep.subr.bf16.mxu0 0
        %1026 = vmatpush1.bf16.msra.mxu0 %v904
        %1027 = vmatprep.subr.bf16.mxu0 0
        %1028 = vmatpush1.bf16.msra.mxu0 %v905
        %1029 = vmatprep.subr.bf16.mxu0 0
        %1030 = vmatpush1.bf16.msra.mxu0 %v906
        %1031 = vmatprep.subr.bf16.mxu0 0
        %1032 = vmatpush1.bf16.msra.mxu0 %v907
        %1033 = vmatprep.subr.bf16.mxu0 0
        %1034 = vmatpush1.bf16.msra.mxu0 %v908
        %1035 = vmatprep.subr.bf16.mxu0 0
        %1036 = vmatpush1.bf16.msra.mxu0 %v909
        %1037 = vmatprep.subr.bf16.mxu0 0
        %1038 = vmatpush1.bf16.msra.mxu0 0
        %1039 = vmatprep.mubr.bf16.mxu0 %v943
        %1040 = vmatmul.mubr.bf16.gmra.mrb[0].mxu0 %v736
        %v1041 = vpop.f32.mrb[0].mxu0
        %v1042 = vadd.f32 %v986, %v1041
        %v1043 = vpop.f32.mrb[0].mxu0
        %v1044 = vpop.f32.mrb[0].mxu0
        %v1045 = vadd.f32 %v989, %v1044
        %v1046 = vpop.f32.mrb[0].mxu0
        %1047 = vmatprep.mubr.bf16.mxu0 %v946
        %1048 = vmatmul.mubr.bf16.gmra.mrb[0].mxu0 %v740
        %v1049 = vpop.f32.mrb[0].mxu0
        %v1050 = vadd.f32 %v994, %v1049
        %v1051 = vpop.f32.mrb[0].mxu0
        %v1052 = vpop.f32.mrb[0].mxu0
        %v1053 = vadd.f32 %v997, %v1052
        %v1054 = vpop.f32.mrb[0].mxu0
        %1055 = vmatprep.mubr.bf16.mxu0 %v949
        %1056 = vmatmul.mubr.bf16.gmra.mrb[0].mxu0 %v744
        %v1057 = vpop.f32.mrb[0].mxu0
        %v1058 = vadd.f32 %v1002, %v1057
        %v1059 = vpop.f32.mrb[0].mxu0
        %v1060 = vpop.f32.mrb[0].mxu0
        %v1061 = vpop.f32.mrb[0].mxu0
        %1062 = vdwg.mxu0
        %v1073 = vunpack.c.l.b16 %v419
        %v1074 = vunpack.c.h.b16 %v419
        %v1075 = vunpack.c.l.b16 %v420
        %v1076 = vunpack.c.h.b16 %v420
        %v1077 = vunpack.c.l.b16 %v421
        %v1078 = vunpack.c.h.b16 %v421
        %v1079 = vunpack.c.l.b16 %v422
        %v1080 = vunpack.c.h.b16 %v422
        %v1081 = vunpack.c.l.b16 %v423
        %v1082 = vunpack.c.h.b16 %v423
        %v1083 = vunpack.c.l.b16 %v424
        %v1084 = vunpack.c.h.b16 %v424
        %v1085 = vunpack.c.l.b16 %v425
        %v1086 = vunpack.c.h.b16 %v425
        %v1087 = vunpack.c.l.b16 %v426
        %v1088 = vunpack.c.h.b16 %v426
        %v1089 = vunpack.c.l.b16 %v427
        %v1090 = vunpack.c.h.b16 %v427
        %v1091 = vunpack.c.l.b16 %v428
        %v1092 = vunpack.c.h.b16 %v428
        %v1093 = vpack.c.b16 %v1077, %v1073
        %v1094 = vpack.c.b16 %v1078, %v1074
        %v1095 = vpack.c.b16 %v1079, %v1075
        %v1096 = vpack.c.b16 %v1080, %v1076
        %v1097 = vpack.c.b16 %v1085, %v1081
        %v1098 = vpack.c.b16 %v1086, %v1082
        %v1099 = vpack.c.b16 %v1087, %v1083
        %v1100 = vpack.c.b16 %v1088, %v1084
        %v1101 = vpack.c.b16 %v1089, %v1089
        %v1102 = vpack.c.b16 %v1090, %v1090
        %v1103 = vpack.c.b16 %v1091, %v1091
        %v1104 = vpack.c.b16 %v1092, %v1092
        %v1181 = vunpack.c.l.b16 %v433
        %v1182 = vunpack.c.l.b16 %v434
        %v1183 = vunpack.c.l.b16 %v435
        %v1184 = vunpack.c.l.b16 %v436
        %v1185 = vunpack.c.l.b16 %v437
        %v1186 = vunpack.c.l.b16 %v438
        %v1187 = vunpack.c.l.b16 %v439
        %v1188 = vunpack.c.l.b16 %v440
        %v1189 = vunpack.c.l.b16 %v441
        %v1190 = vunpack.c.l.b16 %v442
        %v1191 = vunpack.c.l.b16 %v443
        %v1192 = vunpack.c.l.b16 %v444
        %v1193 = vunpack.c.l.b16 %v445
        %v1194 = vunpack.c.l.b16 %v446
        %v1195 = vunpack.c.l.b16 %v447
        %v1196 = vunpack.c.l.b16 %v448
        %v1197 = vunpack.c.l.b16 %v449
        %v1198 = vunpack.c.l.b16 %v450
        %v1199 = vunpack.c.l.b16 %v451
        %v1200 = vunpack.c.l.b16 %v452
        %v1201 = vunpack.c.l.b16 %v453
        %v1202 = vunpack.c.l.b16 %v454
        %v1203 = vunpack.c.l.b16 %v455
        %v1204 = vunpack.c.l.b16 %v456
        %v1205 = vunpack.c.l.b16 %v457
        %v1206 = vunpack.c.l.b16 %v458
        %v1207 = vunpack.c.l.b16 %v459
        %v1208 = vunpack.c.l.b16 %v460
        %v1209 = vunpack.c.l.b16 %v461
        %v1210 = vunpack.c.l.b16 %v462
        %v1211 = vunpack.c.l.b16 %v463
        %v1212 = vunpack.c.l.b16 %v464
        %v1213 = vunpack.c.l.b16 %v465
        %v1214 = vunpack.c.l.b16 %v466
        %v1215 = vunpack.c.l.b16 %v467
        %v1216 = vunpack.c.l.b16 %v468
        %v1217 = vunpack.c.l.b16 %v469
        %v1218 = vunpack.c.l.b16 %v470
        %v1219 = vunpack.c.l.b16 %v471
        %v1220 = vunpack.c.l.b16 %v472
        %v1221 = vunpack.c.l.b16 %v473
        %v1222 = vunpack.c.l.b16 %v474
        %v1223 = vunpack.c.l.b16 %v475
        %v1224 = vunpack.c.l.b16 %v476
        %v1225 = vunpack.c.l.b16 %v477
        %v1226 = vunpack.c.l.b16 %v478
        %v1227 = vunpack.c.l.b16 %v479
        %v1228 = vunpack.c.l.b16 %v480
        %v1229 = vunpack.c.l.b16 %v481
        %v1230 = vunpack.c.l.b16 %v482
        %v1231 = vunpack.c.l.b16 %v483
        %v1232 = vunpack.c.l.b16 %v484
        %v1233 = vunpack.c.l.b16 %v485
        %v1234 = vunpack.c.l.b16 %v486
        %v1235 = vunpack.c.l.b16 %v487
        %v1236 = vunpack.c.l.b16 %v488
        %v1237 = vunpack.c.l.b16 %v489
        %v1238 = vunpack.c.l.b16 %v490
        %v1239 = vunpack.c.l.b16 %v491
        %v1240 = vunpack.c.l.b16 %v492
        %v1241 = vunpack.c.l.b16 %v493
        %v1242 = vunpack.c.l.b16 %v494
        %v1243 = vunpack.c.l.b16 %v495
        %v1244 = vunpack.c.l.b16 %v496
        %v1245 = vpack.c.b16 %v1182, %v1181
        %v1246 = vpack.c.b16 %v1184, %v1183
        %v1247 = vpack.c.b16 %v1186, %v1185
        %v1248 = vpack.c.b16 %v1188, %v1187
        %v1249 = vpack.c.b16 %v1190, %v1189
        %v1250 = vpack.c.b16 %v1192, %v1191
        %v1251 = vpack.c.b16 %v1194, %v1193
        %v1252 = vpack.c.b16 %v1196, %v1195
        %v1253 = vpack.c.b16 %v1198, %v1197
        %v1254 = vpack.c.b16 %v1200, %v1199
        %v1255 = vpack.c.b16 %v1202, %v1201
        %v1256 = vpack.c.b16 %v1204, %v1203
        %v1257 = vpack.c.b16 %v1206, %v1205
        %v1258 = vpack.c.b16 %v1208, %v1207
        %v1259 = vpack.c.b16 %v1210, %v1209
        %v1260 = vpack.c.b16 %v1212, %v1211
        %v1261 = vpack.c.b16 %v1214, %v1213
        %v1262 = vpack.c.b16 %v1216, %v1215
        %v1263 = vpack.c.b16 %v1218, %v1217
        %v1264 = vpack.c.b16 %v1220, %v1219
        %v1265 = vpack.c.b16 %v1222, %v1221
        %v1266 = vpack.c.b16 %v1224, %v1223
        %v1267 = vpack.c.b16 %v1226, %v1225
        %v1268 = vpack.c.b16 %v1228, %v1227
        %v1269 = vpack.c.b16 %v1230, %v1229
        %v1270 = vpack.c.b16 %v1232, %v1231
        %v1271 = vpack.c.b16 %v1234, %v1233
        %v1272 = vpack.c.b16 %v1236, %v1235
        %v1273 = vpack.c.b16 %v1238, %v1237
        %v1274 = vpack.c.b16 %v1240, %v1239
        %v1275 = vpack.c.b16 %v1242, %v1241
        %v1276 = vpack.c.b16 %v1244, %v1243
        %1309 = vmatprep.subr.bf16.mxu0 0
        %1310 = vmatpush1.bf16.msra.mxu0 %v1245
        %1311 = vmatprep.subr.bf16.mxu0 0
        %1312 = vmatpush1.bf16.msra.mxu0 %v1246
        %1313 = vmatprep.subr.bf16.mxu0 0
        %1314 = vmatpush1.bf16.msra.mxu0 %v1247
        %1315 = vmatprep.subr.bf16.mxu0 0
        %1316 = vmatpush1.bf16.msra.mxu0 %v1248
        %1317 = vmatprep.subr.bf16.mxu0 0
        %1318 = vmatpush1.bf16.msra.mxu0 %v1249
        %1319 = vmatprep.subr.bf16.mxu0 0
        %1320 = vmatpush1.bf16.msra.mxu0 %v1250
        %1321 = vmatprep.subr.bf16.mxu0 0
        %1322 = vmatpush1.bf16.msra.mxu0 %v1251
        %1323 = vmatprep.subr.bf16.mxu0 0
        %1324 = vmatpush1.bf16.msra.mxu0 %v1252
        %1325 = vmatprep.subr.bf16.mxu0 0
        %1326 = vmatpush1.bf16.msra.mxu0 %v1253
        %1327 = vmatprep.subr.bf16.mxu0 0
        %1328 = vmatpush1.bf16.msra.mxu0 %v1254
        %1329 = vmatprep.subr.bf16.mxu0 0
        %1330 = vmatpush1.bf16.msra.mxu0 %v1255
        %1331 = vmatprep.subr.bf16.mxu0 0
        %1332 = vmatpush1.bf16.msra.mxu0 %v1256
        %1333 = vmatprep.subr.bf16.mxu0 0
        %1334 = vmatpush1.bf16.msra.mxu0 %v1257
        %1335 = vmatprep.subr.bf16.mxu0 0
        %1336 = vmatpush1.bf16.msra.mxu0 %v1258
        %1337 = vmatprep.subr.bf16.mxu0 0
        %1338 = vmatpush1.bf16.msra.mxu0 %v1259
        %1339 = vmatprep.subr.bf16.mxu0 0
        %1340 = vmatpush1.bf16.msra.mxu0 %v1260
        %1341 = vmatprep.mubr.bf16.mxu0 %v1094
        %1342 = vmatmul.mubr.bf16.gmra.mrb[0].mxu0 %v1093
        %v1343 = vpop.f32.mrb[0].mxu0
        %v1344 = vadd.f32 %v1042, %v1343
        %v1345 = vpop.f32.mrb[0].mxu0
        %v1346 = vpop.f32.mrb[0].mxu0
        %v1347 = vadd.f32 %v1045, %v1346
        %v1348 = vpop.f32.mrb[0].mxu0
        %1349 = vmatprep.mubr.bf16.mxu0 %v1098
        %1350 = vmatmul.mubr.bf16.gmra.mrb[0].mxu0 %v1097
        %v1351 = vpop.f32.mrb[0].mxu0
        %v1352 = vadd.f32 %v1050, %v1351
        %v1353 = vpop.f32.mrb[0].mxu0
        %v1354 = vpop.f32.mrb[0].mxu0
        %v1355 = vadd.f32 %v1053, %v1354
        %v1356 = vpop.f32.mrb[0].mxu0
        %1357 = vmatprep.mubr.bf16.mxu0 %v1102
        %1358 = vmatmul.mubr.bf16.gmra.mrb[0].mxu0 %v1101
        %v1359 = vpop.f32.mrb[0].mxu0
        %v1360 = vadd.f32 %v1058, %v1359
        %v1361 = vpop.f32.mrb[0].mxu0
        %v1362 = vpop.f32.mrb[0].mxu0
        %v1363 = vpop.f32.mrb[0].mxu0
        %1364 = vdwg.mxu0
        %1365 = vmatprep.subr.bf16.mxu0 0
        %1366 = vmatpush1.bf16.msra.mxu0 %v1261
        %1367 = vmatprep.subr.bf16.mxu0 0
        %1368 = vmatpush1.bf16.msra.mxu0 %v1262
        %1369 = vmatprep.subr.bf16.mxu0 0
        %1370 = vmatpush1.bf16.msra.mxu0 %v1263
        %1371 = vmatprep.subr.bf16.mxu0 0
        %1372 = vmatpush1.bf16.msra.mxu0 %v1264
        %1373 = vmatprep.subr.bf16.mxu0 0
        %1374 = vmatpush1.bf16.msra.mxu0 %v1265
        %1375 = vmatprep.subr.bf16.mxu0 0
        %1376 = vmatpush1.bf16.msra.mxu0 %v1266
        %1377 = vmatprep.subr.bf16.mxu0 0
        %1378 = vmatpush1.bf16.msra.mxu0 %v1267
        %1379 = vmatprep.subr.bf16.mxu0 0
        %1380 = vmatpush1.bf16.msra.mxu0 %v1268
        %1381 = vmatprep.subr.bf16.mxu0 0
        %1382 = vmatpush1.bf16.msra.mxu0 %v1269
        %1383 = vmatprep.subr.bf16.mxu0 0
        %1384 = vmatpush1.bf16.msra.mxu0 %v1270
        %1385 = vmatprep.subr.bf16.mxu0 0
        %1386 = vmatpush1.bf16.msra.mxu0 %v1271
        %1387 = vmatprep.subr.bf16.mxu0 0
        %1388 = vmatpush1.bf16.msra.mxu0 %v1272
        %1389 = vmatprep.subr.bf16.mxu0 0
        %1390 = vmatpush1.bf16.msra.mxu0 %v1273
        %1391 = vmatprep.subr.bf16.mxu0 0
        %1392 = vmatpush1.bf16.msra.mxu0 %v1274
        %1393 = vmatprep.subr.bf16.mxu0 0
        %1394 = vmatpush1.bf16.msra.mxu0 %v1275
        %1395 = vmatprep.subr.bf16.mxu0 0
        %1396 = vmatpush1.bf16.msra.mxu0 %v1276
        %1397 = vmatprep.mubr.bf16.mxu0 %v1096
        %1398 = vmatmul.mubr.bf16.gmra.mrb[0].mxu0 %v1095
        %v1399 = vpop.f32.mrb[0].mxu0
        %v1400 = vadd.f32 %v1344, %v1399
        %v1401 = vpop.f32.mrb[0].mxu0
        %v1402 = vpop.f32.mrb[0].mxu0
        %v1403 = vadd.f32 %v1347, %v1402
        %v1404 = vpop.f32.mrb[0].mxu0
        %1405 = vmatprep.mubr.bf16.mxu0 %v1100
        %1406 = vmatmul.mubr.bf16.gmra.mrb[0].mxu0 %v1099
        %v1407 = vpop.f32.mrb[0].mxu0
        %v1408 = vadd.f32 %v1352, %v1407
        %v1409 = vpop.f32.mrb[0].mxu0
        %v1410 = vpop.f32.mrb[0].mxu0
        %v1411 = vadd.f32 %v1355, %v1410
        %v1412 = vpop.f32.mrb[0].mxu0
        %1413 = vmatprep.mubr.bf16.mxu0 %v1104
        %1414 = vmatmul.mubr.bf16.gmra.mrb[0].mxu0 %v1103
        %v1415 = vpop.f32.mrb[0].mxu0
        %v1416 = vadd.f32 %v1360, %v1415
        %v1417 = vpop.f32.mrb[0].mxu0
        %v1418 = vpop.f32.mrb[0].mxu0
        %v1419 = vpop.f32.mrb[0].mxu0
        %1420 = vdwg.mxu0
        %v1483 = vunpack.c.l.b16 %v642
        %v1484 = vunpack.c.l.b16 %v643
        %v1485 = vunpack.c.l.b16 %v644
        %v1486 = vunpack.c.l.b16 %v645
        %v1487 = vunpack.c.l.b16 %v646
        %v1488 = vunpack.c.l.b16 %v647
        %v1489 = vunpack.c.l.b16 %v648
        %v1490 = vunpack.c.l.b16 %v649
        %v1491 = vunpack.c.l.b16 %v650
        %v1492 = vunpack.c.l.b16 %v651
        %v1493 = vunpack.c.l.b16 %v652
        %v1494 = vunpack.c.l.b16 %v653
        %v1495 = vunpack.c.l.b16 %v654
        %v1496 = vunpack.c.l.b16 %v655
        %v1497 = vunpack.c.l.b16 %v656
        %v1498 = vunpack.c.l.b16 %v657
        %v1499 = vunpack.c.l.b16 %v658
        %v1500 = vunpack.c.l.b16 %v659
        %v1501 = vunpack.c.l.b16 %v660
        %v1502 = vunpack.c.l.b16 %v661
        %v1503 = vunpack.c.l.b16 %v662
        %v1504 = vunpack.c.l.b16 %v663
        %v1505 = vunpack.c.l.b16 %v664
        %v1506 = vunpack.c.l.b16 %v665
        %v1507 = vunpack.c.l.b16 %v666
        %v1508 = vunpack.c.l.b16 %v667
        %v1509 = vunpack.c.l.b16 %v668
        %v1510 = vunpack.c.l.b16 %v669
        %v1511 = vunpack.c.l.b16 %v670
        %v1512 = vunpack.c.l.b16 %v671
        %v1513 = vunpack.c.l.b16 %v672
        %v1514 = vunpack.c.l.b16 %v673
        %v1515 = vunpack.c.l.b16 %v674
        %v1516 = vunpack.c.l.b16 %v675
        %v1517 = vunpack.c.l.b16 %v676
        %v1518 = vunpack.c.l.b16 %v677
        %v1519 = vunpack.c.l.b16 %v678
        %v1520 = vunpack.c.l.b16 %v679
        %v1521 = vunpack.c.l.b16 %v680
        %v1522 = vunpack.c.l.b16 %v681
        %v1523 = vunpack.c.l.b16 %v682
        %v1524 = vunpack.c.l.b16 %v683
        %v1525 = vunpack.c.l.b16 %v684
        %v1526 = vunpack.c.l.b16 %v685
        %v1527 = vunpack.c.l.b16 %v686
        %v1528 = vunpack.c.l.b16 %v687
        %v1529 = vunpack.c.l.b16 %v688
        %v1530 = vunpack.c.l.b16 %v689
        %v1531 = vunpack.c.l.b16 %v690
        %v1532 = vunpack.c.l.b16 %v691
        %v1533 = vunpack.c.l.b16 %v692
        %v1534 = vunpack.c.l.b16 %v693
        %v1535 = vunpack.c.l.b16 %v694
        %v1536 = vunpack.c.l.b16 %v695
        %v1537 = vunpack.c.l.b16 %v696
        %v1538 = vunpack.c.l.b16 %v697
        %v1539 = vunpack.c.l.b16 %v698
        %v1540 = vunpack.c.l.b16 %v699
        %v1541 = vunpack.c.l.b16 %v700
        %v1542 = vunpack.c.l.b16 %v701
        %v1543 = vunpack.c.l.b16 %v702
        %v1544 = vunpack.c.l.b16 %v703
        %v1545 = vpack.c.b16 %v1484, %v1483
        %v1546 = vpack.c.b16 %v1486, %v1485
        %v1547 = vpack.c.b16 %v1488, %v1487
        %v1548 = vpack.c.b16 %v1490, %v1489
        %v1549 = vpack.c.b16 %v1492, %v1491
        %v1550 = vpack.c.b16 %v1494, %v1493
        %v1551 = vpack.c.b16 %v1496, %v1495
        %v1552 = vpack.c.b16 %v1498, %v1497
        %v1553 = vpack.c.b16 %v1500, %v1499
        %v1554 = vpack.c.b16 %v1502, %v1501
        %v1555 = vpack.c.b16 %v1504, %v1503
        %v1556 = vpack.c.b16 %v1506, %v1505
        %v1557 = vpack.c.b16 %v1508, %v1507
        %v1558 = vpack.c.b16 %v1510, %v1509
        %v1559 = vpack.c.b16 %v1512, %v1511
        %v1560 = vpack.c.b16 %v1514, %v1513
        %v1561 = vpack.c.b16 %v1516, %v1515
        %v1562 = vpack.c.b16 %v1518, %v1517
        %v1563 = vpack.c.b16 %v1520, %v1519
        %v1564 = vpack.c.b16 %v1522, %v1521
        %v1565 = vpack.c.b16 %v1524, %v1523
        %v1566 = vpack.c.b16 %v1526, %v1525
        %v1567 = vpack.c.b16 %v1528, %v1527
        %v1568 = vpack.c.b16 %v1530, %v1529
        %v1569 = vpack.c.b16 %v1532, %v1531
        %v1570 = vpack.c.b16 %v1534, %v1533
        %v1571 = vpack.c.b16 %v1536, %v1535
        %v1572 = vpack.c.b16 %v1538, %v1537
        %v1573 = vpack.c.b16 %v1540, %v1539
        %v1574 = vpack.c.b16 %v1542, %v1541
        %v1575 = vpack.c.b16 %v1544, %v1543
        %1607 = vmatprep.subr.bf16.mxu0 0
        %1608 = vmatpush1.bf16.msra.mxu0 %v1545
        %1609 = vmatprep.subr.bf16.mxu0 0
        %1610 = vmatpush1.bf16.msra.mxu0 %v1546
        %1611 = vmatprep.subr.bf16.mxu0 0
        %1612 = vmatpush1.bf16.msra.mxu0 %v1547
        %1613 = vmatprep.subr.bf16.mxu0 0
        %1614 = vmatpush1.bf16.msra.mxu0 %v1548
        %1615 = vmatprep.subr.bf16.mxu0 0
        %1616 = vmatpush1.bf16.msra.mxu0 %v1549
        %1617 = vmatprep.subr.bf16.mxu0 0
        %1618 = vmatpush1.bf16.msra.mxu0 %v1550
        %1619 = vmatprep.subr.bf16.mxu0 0
        %1620 = vmatpush1.bf16.msra.mxu0 %v1551
        %1621 = vmatprep.subr.bf16.mxu0 0
        %1622 = vmatpush1.bf16.msra.mxu0 %v1552
        %1623 = vmatprep.subr.bf16.mxu0 0
        %1624 = vmatpush1.bf16.msra.mxu0 %v1553
        %1625 = vmatprep.subr.bf16.mxu0 0
        %1626 = vmatpush1.bf16.msra.mxu0 %v1554
        %1627 = vmatprep.subr.bf16.mxu0 0
        %1628 = vmatpush1.bf16.msra.mxu0 %v1555
        %1629 = vmatprep.subr.bf16.mxu0 0
        %1630 = vmatpush1.bf16.msra.mxu0 %v1556
        %1631 = vmatprep.subr.bf16.mxu0 0
        %1632 = vmatpush1.bf16.msra.mxu0 %v1557
        %1633 = vmatprep.subr.bf16.mxu0 0
        %1634 = vmatpush1.bf16.msra.mxu0 %v1558
        %1635 = vmatprep.subr.bf16.mxu0 0
        %1636 = vmatpush1.bf16.msra.mxu0 %v1559
        %1637 = vmatprep.subr.bf16.mxu0 0
        %1638 = vmatpush1.bf16.msra.mxu0 %v1560
        %1639 = vmatprep.mubr.bf16.mxu0 %v735
        %1640 = vmatmul.mubr.bf16.gmra.mrb[0].mxu0 %v734
        %v1641 = vpop.f32.mrb[0].mxu0
        %v1642 = vadd.f32 0.0, %v1641
        %v1643 = vpop.f32.mrb[0].mxu0
        %v1644 = vpop.f32.mrb[0].mxu0
        %v1645 = vadd.f32 0.0, %v1644
        %v1646 = vpop.f32.mrb[0].mxu0
        %1647 = vmatprep.mubr.bf16.mxu0 %v739
        %1648 = vmatmul.mubr.bf16.gmra.mrb[0].mxu0 %v738
        %v1649 = vpop.f32.mrb[0].mxu0
        %v1650 = vadd.f32 0.0, %v1649
        %v1651 = vpop.f32.mrb[0].mxu0
        %v1652 = vpop.f32.mrb[0].mxu0
        %v1653 = vadd.f32 0.0, %v1652
        %v1654 = vpop.f32.mrb[0].mxu0
        %1655 = vmatprep.mubr.bf16.mxu0 %v743
        %1656 = vmatmul.mubr.bf16.gmra.mrb[0].mxu0 %v742
        %v1657 = vpop.f32.mrb[0].mxu0
        %v1658 = vadd.f32 0.0, %v1657
        %v1659 = vpop.f32.mrb[0].mxu0
        %v1660 = vpop.f32.mrb[0].mxu0
        %v1661 = vpop.f32.mrb[0].mxu0
        %1662 = vdwg.mxu0
        %1663 = vmatprep.subr.bf16.mxu0 0
        %1664 = vmatpush1.bf16.msra.mxu0 %v1561
        %1665 = vmatprep.subr.bf16.mxu0 0
        %1666 = vmatpush1.bf16.msra.mxu0 %v1562
        %1667 = vmatprep.subr.bf16.mxu0 0
        %1668 = vmatpush1.bf16.msra.mxu0 %v1563
        %1669 = vmatprep.subr.bf16.mxu0 0
        %1670 = vmatpush1.bf16.msra.mxu0 %v1564
        %1671 = vmatprep.subr.bf16.mxu0 0
        %1672 = vmatpush1.bf16.msra.mxu0 %v1565
        %1673 = vmatprep.subr.bf16.mxu0 0
        %1674 = vmatpush1.bf16.msra.mxu0 %v1566
        %1675 = vmatprep.subr.bf16.mxu0 0
        %1676 = vmatpush1.bf16.msra.mxu0 %v1567
        %1677 = vmatprep.subr.bf16.mxu0 0
        %1678 = vmatpush1.bf16.msra.mxu0 %v1568
        %1679 = vmatprep.subr.bf16.mxu0 0
        %1680 = vmatpush1.bf16.msra.mxu0 %v1569
        %1681 = vmatprep.subr.bf16.mxu0 0
        %1682 = vmatpush1.bf16.msra.mxu0 %v1570
        %1683 = vmatprep.subr.bf16.mxu0 0
        %1684 = vmatpush1.bf16.msra.mxu0 %v1571
        %1685 = vmatprep.subr.bf16.mxu0 0
        %1686 = vmatpush1.bf16.msra.mxu0 %v1572
        %1687 = vmatprep.subr.bf16.mxu0 0
        %1688 = vmatpush1.bf16.msra.mxu0 %v1573
        %1689 = vmatprep.subr.bf16.mxu0 0
        %1690 = vmatpush1.bf16.msra.mxu0 %v1574
        %1691 = vmatprep.subr.bf16.mxu0 0
        %1692 = vmatpush1.bf16.msra.mxu0 %v1575
        %1693 = vmatprep.subr.bf16.mxu0 0
        %1694 = vmatpush1.bf16.msra.mxu0 0
        %1695 = vmatprep.mubr.bf16.mxu0 %v943
        %1696 = vmatmul.mubr.bf16.gmra.mrb[0].mxu0 %v736
        %v1697 = vpop.f32.mrb[0].mxu0
        %v1698 = vadd.f32 %v1642, %v1697
        %v1699 = vpop.f32.mrb[0].mxu0
        %v1700 = vpop.f32.mrb[0].mxu0
        %v1701 = vadd.f32 %v1645, %v1700
        %v1702 = vpop.f32.mrb[0].mxu0
        %1703 = vmatprep.mubr.bf16.mxu0 %v946
        %1704 = vmatmul.mubr.bf16.gmra.mrb[0].mxu0 %v740
        %v1705 = vpop.f32.mrb[0].mxu0
        %v1706 = vadd.f32 %v1650, %v1705
        %v1707 = vpop.f32.mrb[0].mxu0
        %v1708 = vpop.f32.mrb[0].mxu0
        %v1709 = vadd.f32 %v1653, %v1708
        %v1710 = vpop.f32.mrb[0].mxu0
        %1711 = vmatprep.mubr.bf16.mxu0 %v949
        %1712 = vmatmul.mubr.bf16.gmra.mrb[0].mxu0 %v744
        %v1713 = vpop.f32.mrb[0].mxu0
        %v1714 = vadd.f32 %v1658, %v1713
        %v1715 = vpop.f32.mrb[0].mxu0
        %v1716 = vpop.f32.mrb[0].mxu0
        %v1717 = vpop.f32.mrb[0].mxu0
        %1718 = vdwg.mxu0
        %v1783 = vunpack.c.l.b16 %v499
        %v1784 = vunpack.c.l.b16 %v500
        %v1785 = vunpack.c.l.b16 %v501
        %v1786 = vunpack.c.l.b16 %v502
        %v1787 = vunpack.c.l.b16 %v503
        %v1788 = vunpack.c.l.b16 %v504
        %v1789 = vunpack.c.l.b16 %v505
        %v1790 = vunpack.c.l.b16 %v506
        %v1791 = vunpack.c.l.b16 %v507
        %v1792 = vunpack.c.l.b16 %v508
        %v1793 = vunpack.c.l.b16 %v509
        %v1794 = vunpack.c.l.b16 %v510
        %v1795 = vunpack.c.l.b16 %v511
        %v1796 = vunpack.c.l.b16 %v512
        %v1797 = vunpack.c.l.b16 %v513
        %v1798 = vunpack.c.l.b16 %v514
        %v1799 = vunpack.c.l.b16 %v515
        %v1800 = vunpack.c.l.b16 %v516
        %v1801 = vunpack.c.l.b16 %v517
        %v1802 = vunpack.c.l.b16 %v518
        %v1803 = vunpack.c.l.b16 %v519
        %v1804 = vunpack.c.l.b16 %v520
        %v1805 = vunpack.c.l.b16 %v521
        %v1806 = vunpack.c.l.b16 %v522
        %v1807 = vunpack.c.l.b16 %v523
        %v1808 = vunpack.c.l.b16 %v524
        %v1809 = vunpack.c.l.b16 %v525
        %v1810 = vunpack.c.l.b16 %v526
        %v1811 = vunpack.c.l.b16 %v527
        %v1812 = vunpack.c.l.b16 %v528
        %v1813 = vunpack.c.l.b16 %v529
        %v1814 = vunpack.c.l.b16 %v530
        %v1815 = vunpack.c.l.b16 %v531
        %v1816 = vunpack.c.l.b16 %v532
        %v1817 = vunpack.c.l.b16 %v533
        %v1818 = vunpack.c.l.b16 %v534
        %v1819 = vunpack.c.l.b16 %v535
        %v1820 = vunpack.c.l.b16 %v536
        %v1821 = vunpack.c.l.b16 %v537
        %v1822 = vunpack.c.l.b16 %v538
        %v1823 = vunpack.c.l.b16 %v539
        %v1824 = vunpack.c.l.b16 %v540
        %v1825 = vunpack.c.l.b16 %v541
        %v1826 = vunpack.c.l.b16 %v542
        %v1827 = vunpack.c.l.b16 %v543
        %v1828 = vunpack.c.l.b16 %v544
        %v1829 = vunpack.c.l.b16 %v545
        %v1830 = vunpack.c.l.b16 %v546
        %v1831 = vunpack.c.l.b16 %v547
        %v1832 = vunpack.c.l.b16 %v548
        %v1833 = vunpack.c.l.b16 %v549
        %v1834 = vunpack.c.l.b16 %v550
        %v1835 = vunpack.c.l.b16 %v551
        %v1836 = vunpack.c.l.b16 %v552
        %v1837 = vunpack.c.l.b16 %v553
        %v1838 = vunpack.c.l.b16 %v554
        %v1839 = vunpack.c.l.b16 %v555
        %v1840 = vunpack.c.l.b16 %v556
        %v1841 = vunpack.c.l.b16 %v557
        %v1842 = vunpack.c.l.b16 %v558
        %v1843 = vunpack.c.l.b16 %v559
        %v1844 = vunpack.c.l.b16 %v560
        %v1845 = vunpack.c.l.b16 %v561
        %v1846 = vunpack.c.l.b16 %v562
        %v1847 = vpack.c.b16 %v1784, %v1783
        %v1848 = vpack.c.b16 %v1786, %v1785
        %v1849 = vpack.c.b16 %v1788, %v1787
        %v1850 = vpack.c.b16 %v1790, %v1789
        %v1851 = vpack.c.b16 %v1792, %v1791
        %v1852 = vpack.c.b16 %v1794, %v1793
        %v1853 = vpack.c.b16 %v1796, %v1795
        %v1854 = vpack.c.b16 %v1798, %v1797
        %v1855 = vpack.c.b16 %v1800, %v1799
        %v1856 = vpack.c.b16 %v1802, %v1801
        %v1857 = vpack.c.b16 %v1804, %v1803
        %v1858 = vpack.c.b16 %v1806, %v1805
        %v1859 = vpack.c.b16 %v1808, %v1807
        %v1860 = vpack.c.b16 %v1810, %v1809
        %v1861 = vpack.c.b16 %v1812, %v1811
        %v1862 = vpack.c.b16 %v1814, %v1813
        %v1863 = vpack.c.b16 %v1816, %v1815
        %v1864 = vpack.c.b16 %v1818, %v1817
        %v1865 = vpack.c.b16 %v1820, %v1819
        %v1866 = vpack.c.b16 %v1822, %v1821
        %v1867 = vpack.c.b16 %v1824, %v1823
        %v1868 = vpack.c.b16 %v1826, %v1825
        %v1869 = vpack.c.b16 %v1828, %v1827
        %v1870 = vpack.c.b16 %v1830, %v1829
        %v1871 = vpack.c.b16 %v1832, %v1831
        %v1872 = vpack.c.b16 %v1834, %v1833
        %v1873 = vpack.c.b16 %v1836, %v1835
        %v1874 = vpack.c.b16 %v1838, %v1837
        %v1875 = vpack.c.b16 %v1840, %v1839
        %v1876 = vpack.c.b16 %v1842, %v1841
        %v1877 = vpack.c.b16 %v1844, %v1843
        %v1878 = vpack.c.b16 %v1846, %v1845
        %1911 = vmatprep.subr.bf16.mxu0 0
        %1912 = vmatpush1.bf16.msra.mxu0 %v1847
        %1913 = vmatprep.subr.bf16.mxu0 0
        %1914 = vmatpush1.bf16.msra.mxu0 %v1848
        %1915 = vmatprep.subr.bf16.mxu0 0
        %1916 = vmatpush1.bf16.msra.mxu0 %v1849
        %1917 = vmatprep.subr.bf16.mxu0 0
        %1918 = vmatpush1.bf16.msra.mxu0 %v1850
        %1919 = vmatprep.subr.bf16.mxu0 0
        %1920 = vmatpush1.bf16.msra.mxu0 %v1851
        %1921 = vmatprep.subr.bf16.mxu0 0
        %1922 = vmatpush1.bf16.msra.mxu0 %v1852
        %1923 = vmatprep.subr.bf16.mxu0 0
        %1924 = vmatpush1.bf16.msra.mxu0 %v1853
        %1925 = vmatprep.subr.bf16.mxu0 0
        %1926 = vmatpush1.bf16.msra.mxu0 %v1854
        %1927 = vmatprep.subr.bf16.mxu0 0
        %1928 = vmatpush1.bf16.msra.mxu0 %v1855
        %1929 = vmatprep.subr.bf16.mxu0 0
        %1930 = vmatpush1.bf16.msra.mxu0 %v1856
        %1931 = vmatprep.subr.bf16.mxu0 0
        %1932 = vmatpush1.bf16.msra.mxu0 %v1857
        %1933 = vmatprep.subr.bf16.mxu0 0
        %1934 = vmatpush1.bf16.msra.mxu0 %v1858
        %1935 = vmatprep.subr.bf16.mxu0 0
        %1936 = vmatpush1.bf16.msra.mxu0 %v1859
        %1937 = vmatprep.subr.bf16.mxu0 0
        %1938 = vmatpush1.bf16.msra.mxu0 %v1860
        %1939 = vmatprep.subr.bf16.mxu0 0
        %1940 = vmatpush1.bf16.msra.mxu0 %v1861
        %1941 = vmatprep.subr.bf16.mxu0 0
        %1942 = vmatpush1.bf16.msra.mxu0 %v1862
        %1943 = vmatprep.mubr.bf16.mxu0 %v1094
        %1944 = vmatmul.mubr.bf16.gmra.mrb[0].mxu0 %v1093
        %v1945 = vpop.f32.mrb[0].mxu0
        %v1946 = vadd.f32 %v1698, %v1945
        %v1947 = vpop.f32.mrb[0].mxu0
        %v1948 = vpop.f32.mrb[0].mxu0
        %v1949 = vadd.f32 %v1701, %v1948
        %v1950 = vpop.f32.mrb[0].mxu0
        %1951 = vmatprep.mubr.bf16.mxu0 %v1098
        %1952 = vmatmul.mubr.bf16.gmra.mrb[0].mxu0 %v1097
        %v1953 = vpop.f32.mrb[0].mxu0
        %v1954 = vadd.f32 %v1706, %v1953
        %v1955 = vpop.f32.mrb[0].mxu0
        %v1956 = vpop.f32.mrb[0].mxu0
        %v1957 = vadd.f32 %v1709, %v1956
        %v1958 = vpop.f32.mrb[0].mxu0
        %1959 = vmatprep.mubr.bf16.mxu0 %v1102
        %1960 = vmatmul.mubr.bf16.gmra.mrb[0].mxu0 %v1101
        %v1961 = vpop.f32.mrb[0].mxu0
        %v1962 = vadd.f32 %v1714, %v1961
        %v1963 = vpop.f32.mrb[0].mxu0
        %v1964 = vpop.f32.mrb[0].mxu0
        %v1965 = vpop.f32.mrb[0].mxu0
        %1966 = vdwg.mxu0
        %1967 = vmatprep.subr.bf16.mxu0 0
        %1968 = vmatpush1.bf16.msra.mxu0 %v1863
        %1969 = vmatprep.subr.bf16.mxu0 0
        %1970 = vmatpush1.bf16.msra.mxu0 %v1864
        %1971 = vmatprep.subr.bf16.mxu0 0
        %1972 = vmatpush1.bf16.msra.mxu0 %v1865
        %1973 = vmatprep.subr.bf16.mxu0 0
        %1974 = vmatpush1.bf16.msra.mxu0 %v1866
        %1975 = vmatprep.subr.bf16.mxu0 0
        %1976 = vmatpush1.bf16.msra.mxu0 %v1867
        %1977 = vmatprep.subr.bf16.mxu0 0
        %1978 = vmatpush1.bf16.msra.mxu0 %v1868
        %1979 = vmatprep.subr.bf16.mxu0 0
        %1980 = vmatpush1.bf16.msra.mxu0 %v1869
        %1981 = vmatprep.subr.bf16.mxu0 0
        %1982 = vmatpush1.bf16.msra.mxu0 %v1870
        %1983 = vmatprep.subr.bf16.mxu0 0
        %1984 = vmatpush1.bf16.msra.mxu0 %v1871
        %1985 = vmatprep.subr.bf16.mxu0 0
        %1986 = vmatpush1.bf16.msra.mxu0 %v1872
        %1987 = vmatprep.subr.bf16.mxu0 0
        %1988 = vmatpush1.bf16.msra.mxu0 %v1873
        %1989 = vmatprep.subr.bf16.mxu0 0
        %1990 = vmatpush1.bf16.msra.mxu0 %v1874
        %1991 = vmatprep.subr.bf16.mxu0 0
        %1992 = vmatpush1.bf16.msra.mxu0 %v1875
        %1993 = vmatprep.subr.bf16.mxu0 0
        %1994 = vmatpush1.bf16.msra.mxu0 %v1876
        %1995 = vmatprep.subr.bf16.mxu0 0
        %1996 = vmatpush1.bf16.msra.mxu0 %v1877
        %1997 = vmatprep.subr.bf16.mxu0 0
        %1998 = vmatpush1.bf16.msra.mxu0 %v1878
        %1999 = vmatprep.mubr.bf16.mxu0 %v1096
        %2000 = vmatmul.mubr.bf16.gmra.mrb[0].mxu0 %v1095
        %v2001 = vpop.f32.mrb[0].mxu0
        %v2002 = vadd.f32 %v1946, %v2001
        %v2003 = vpop.f32.mrb[0].mxu0
        %v2004 = vpop.f32.mrb[0].mxu0
        %v2005 = vadd.f32 %v1949, %v2004
        %v2006 = vpop.f32.mrb[0].mxu0
        %2007 = vmatprep.mubr.bf16.mxu0 %v1100
        %2008 = vmatmul.mubr.bf16.gmra.mrb[0].mxu0 %v1099
        %v2009 = vpop.f32.mrb[0].mxu0
        %v2010 = vadd.f32 %v1954, %v2009
        %v2011 = vpop.f32.mrb[0].mxu0
        %v2012 = vpop.f32.mrb[0].mxu0
        %v2013 = vadd.f32 %v1957, %v2012
        %v2014 = vpop.f32.mrb[0].mxu0
        %2015 = vmatprep.mubr.bf16.mxu0 %v1104
        %2016 = vmatmul.mubr.bf16.gmra.mrb[0].mxu0 %v1103
        %v2017 = vpop.f32.mrb[0].mxu0
        %v2018 = vadd.f32 %v1962, %v2017
        %v2019 = vpop.f32.mrb[0].mxu0
        %v2020 = vpop.f32.mrb[0].mxu0
        %v2021 = vpop.f32.mrb[0].mxu0
        %2022 = vdwg.mxu0
        %2024 = vset.pattern.permute.xlu0 0
        %2025 = vperm.xlu0 %2024, %v411
        %v2026 = vpop.permute.xlu0 %2025
        %2029 = vset.pattern.permute.xlu0 0
        %2030 = vperm.xlu0 %2029, %v412
        %v2031 = vpop.permute.xlu0 %2030
        %2034 = vset.pattern.permute.xlu0 0
        %2035 = vperm.xlu0 %2034, %v413
        %v2036 = vpop.permute.xlu0 %2035
        %2039 = vset.pattern.permute.xlu0 0
        %2040 = vperm.xlu0 %2039, %v414
        %v2041 = vpop.permute.xlu0 %2040
        %2044 = vset.pattern.permute.xlu0 0
        %2045 = vperm.xlu0 %2044, %v415
        %v2046 = vpop.permute.xlu0 %2045
        %v2048 = vadd.f32 %v1400, %v2026
        %v2049 = vadd.f32 %v1403, %v2031
        %v2050 = vadd.f32 %v1408, %v2036
        %v2051 = vadd.f32 %v1411, %v2041
        %v2052 = vadd.f32 %v1416, %v2046
        %v2053 = vadd.f32 %v2002, %v2026
        %v2054 = vadd.f32 %v2005, %v2031
        %v2055 = vadd.f32 %v2010, %v2036
        %v2056 = vadd.f32 %v2013, %v2041
        %v2057 = vadd.f32 %v2018, %v2046
        %s2058 = smul.u32 %s396, 40
        %s2059 = scalar_lea.vmem %s363, %s2058
        %vm2060 = vcmask 80896
        %2061 = vst.msk [vmem:[%s2059] sm:$0xff] %vm2060, %v2048
        %2062 = vst.msk [vmem:[%s2059 + $0x8] sm:$0xff] %vm2060, %v2049
        %2063 = vst.msk [vmem:[%s2059 + $0x10] sm:$0xff] %vm2060, %v2050
        %2064 = vst.msk [vmem:[%s2059 + $0x18] sm:$0xff] %vm2060, %v2051
        %2065 = vst.msk [vmem:[%s2059 + $0x20] sm:$0xff] %vm2060, %v2052
        %s2066 = scalar_lea.vmem %s374, %s2058
        %2067 = vst.msk [vmem:[%s2066] sm:$0xff] %vm2060, %v2053
        %2068 = vst.msk [vmem:[%s2066 + $0x8] sm:$0xff] %vm2060, %v2054
        %2069 = vst.msk [vmem:[%s2066 + $0x10] sm:$0xff] %vm2060, %v2055
        %2070 = vst.msk [vmem:[%s2066 + $0x18] sm:$0xff] %vm2060, %v2056
        %2071 = vst.msk [vmem:[%s2066 + $0x20] sm:$0xff] %vm2060, %v2057
        %v2072 = vsel %vm2060, %v2048, 0.0
        %2073 = vadd.xlane.f32.xlu0 %v2072
        %v2074 = vpop.xlane.xlu0 %2073
        %v2075 = vsel %vm2060, %v2049, 0.0
        %2076 = vadd.xlane.f32.xlu0 %v2075
        %v2077 = vpop.xlane.xlu0 %2076
        %v2078 = vsel %vm2060, %v2050, 0.0
        %2079 = vadd.xlane.f32.xlu0 %v2078
        %v2080 = vpop.xlane.xlu0 %2079
        %v2081 = vsel %vm2060, %v2051, 0.0
        %2082 = vadd.xlane.f32.xlu0 %v2081
        %v2083 = vpop.xlane.xlu0 %2082
        %v2084 = vsel %vm2060, %v2052, 0.0
        %2085 = vadd.xlane.f32.xlu0 %v2084
        %v2086 = vpop.xlane.xlu0 %2085
        %v2087 = vadd.f32 %v401, %v2074
        %v2088 = vadd.f32 %v402, %v2077
        %v2089 = vadd.f32 %v403, %v2080
        %v2090 = vadd.f32 %v404, %v2083
        %v2091 = vadd.f32 %v405, %v2086
        %v2092 = vsel %vm2060, %v2053, 0.0
        %2093 = vadd.xlane.f32.xlu0 %v2092
        %v2094 = vpop.xlane.xlu0 %2093
        %v2095 = vsel %vm2060, %v2054, 0.0
        %2096 = vadd.xlane.f32.xlu0 %v2095
        %v2097 = vpop.xlane.xlu0 %2096
        %v2098 = vsel %vm2060, %v2055, 0.0
        %2099 = vadd.xlane.f32.xlu0 %v2098
        %v2100 = vpop.xlane.xlu0 %2099
        %v2101 = vsel %vm2060, %v2056, 0.0
        %2102 = vadd.xlane.f32.xlu0 %v2101
        %v2103 = vpop.xlane.xlu0 %2102
        %v2104 = vsel %vm2060, %v2057, 0.0
        %2105 = vadd.xlane.f32.xlu0 %v2104
        %v2106 = vpop.xlane.xlu0 %2105
        %v2107 = vadd.f32 %v2087, %v2094
        %v2108 = vadd.f32 %v2088, %v2097
        %v2109 = vadd.f32 %v2089, %v2100
        %v2110 = vadd.f32 %v2090, %v2103
        %v2111 = vadd.f32 %v2091, %v2106
        %v2112 = vmul.f32 %v2048, %v2048
        %v2113 = vmul.f32 %v2049, %v2049
        %v2114 = vmul.f32 %v2050, %v2050
        %v2115 = vmul.f32 %v2051, %v2051
        %v2116 = vmul.f32 %v2052, %v2052
        %v2117 = vsel %vm2060, %v2112, 0.0
        %2118 = vadd.xlane.f32.xlu0 %v2117
        %v2119 = vpop.xlane.xlu0 %2118
        %v2120 = vsel %vm2060, %v2113, 0.0
        %2121 = vadd.xlane.f32.xlu0 %v2120
        %v2122 = vpop.xlane.xlu0 %2121
        %v2123 = vsel %vm2060, %v2114, 0.0
        %2124 = vadd.xlane.f32.xlu0 %v2123
        %v2125 = vpop.xlane.xlu0 %2124
        %v2126 = vsel %vm2060, %v2115, 0.0
        %2127 = vadd.xlane.f32.xlu0 %v2126
        %v2128 = vpop.xlane.xlu0 %2127
        %v2129 = vsel %vm2060, %v2116, 0.0
        %2130 = vadd.xlane.f32.xlu0 %v2129
        %v2131 = vpop.xlane.xlu0 %2130
        %v2132 = vadd.f32 %v406, %v2119
        %v2133 = vadd.f32 %v407, %v2122
        %v2134 = vadd.f32 %v408, %v2125
        %v2135 = vadd.f32 %v409, %v2128
        %v2136 = vadd.f32 %v410, %v2131
        %v2137 = vmul.f32 %v2053, %v2053
        %v2138 = vmul.f32 %v2054, %v2054
        %v2139 = vmul.f32 %v2055, %v2055
        %v2140 = vmul.f32 %v2056, %v2056
        %v2141 = vmul.f32 %v2057, %v2057
        %v2142 = vsel %vm2060, %v2137, 0.0
        %2143 = vadd.xlane.f32.xlu0 %v2142
        %v2144 = vpop.xlane.xlu0 %2143
        %v2145 = vsel %vm2060, %v2138, 0.0
        %2146 = vadd.xlane.f32.xlu0 %v2145
        %v2147 = vpop.xlane.xlu0 %2146
        %v2148 = vsel %vm2060, %v2139, 0.0
        %2149 = vadd.xlane.f32.xlu0 %v2148
        %v2150 = vpop.xlane.xlu0 %2149
        %v2151 = vsel %vm2060, %v2140, 0.0
        %2152 = vadd.xlane.f32.xlu0 %v2151
        %v2153 = vpop.xlane.xlu0 %2152
        %v2154 = vsel %vm2060, %v2141, 0.0
        %2155 = vadd.xlane.f32.xlu0 %v2154
        %v2156 = vpop.xlane.xlu0 %2155
        %v2157 = vadd.f32 %v2132, %v2144
        %v2158 = vadd.f32 %v2133, %v2147
        %v2159 = vadd.f32 %v2134, %v2150
        %v2160 = vadd.f32 %v2135, %v2153
        %v2161 = vadd.f32 %v2136, %v2156
      $region41: #{net1_forward.13} parent=35 // loop_footer
        %s400 = sadd.s32 1, %s396
      $region42: #{net1_forward.13} parent=35 // loop_footer_branch
        %395 = sbr.rel target = $region38
      $region43: #{net1_forward.13} parent=35 // loop_exit
        _
      %vm2162 = vcmask 7168
      %2163 = vst.msk [vmem:[%s384] sm:$0xff] %vm2162, %v401
      %2164 = vst.msk [vmem:[%s384 + $0x8] sm:$0xff] %vm2162, %v402
      %2165 = vst.msk [vmem:[%s384 + $0x10] sm:$0xff] %vm2162, %v403
      %2166 = vst.msk [vmem:[%s384 + $0x18] sm:$0xff] %vm2162, %v404
      %2167 = vst.msk [vmem:[%s384 + $0x20] sm:$0xff] %vm2162, %v405
      %2168 = vst.msk [vmem:[%s393] sm:$0xff] %vm2162, %v406
      %2169 = vst.msk [vmem:[%s393 + $0x8] sm:$0xff] %vm2162, %v407
      %2170 = vst.msk [vmem:[%s393 + $0x10] sm:$0xff] %vm2162, %v408
      %2171 = vst.msk [vmem:[%s393 + $0x18] sm:$0xff] %vm2162, %v409
      %2172 = vst.msk [vmem:[%s393 + $0x20] sm:$0xff] %vm2162, %v410
      %s2173 = smul.u32 20, %s24
      %p2174 = scmp.lt.s32.totalorder %s23, 1
      %s2175 = scalar_select %p2174, %s23, 1
      %p2176 = scmp.lt.s32.totalorder %s2173, 19
      %s2177 = scalar_select %p2176, %s2173, 19
      %s2178 = smul.addr %s2177, 5
      %s2179 = smul.addr %s2175, 100
      %s2180 = sadd.s32 %s2178, %s2179
      %s2181 = smul.addr %s2180, 8
      %s2182 = scalar_lea.vmem %s4, %s2181
      %s2183 = smul.u32 20, %s24
      %p2184 = scmp.lt.s32.totalorder %s23, 1
      %s2185 = scalar_select %p2184, %s23, 1
      %p2186 = scmp.lt.s32.totalorder %s2183, 19
      %s2187 = scalar_select %p2186, %s2183, 19
      %s2188 = smul.addr %s2187, 5
      %s2189 = smul.addr %s2185, 100
      %s2190 = sadd.s32 %s2188, %s2189
      %s2191 = smul.addr %s2190, 8
      %s2192 = scalar_lea.vmem %s5, %s2191
      %p2193 = scmp.lt.s32.totalorder %s23, 1
      %s2194 = scalar_select %p2193, %s23, 1
      %p2195 = scmp.lt.s32.totalorder %s24, 0
      %s2196 = scalar_select %p2195, %s24, 0
      %s2197 = smul.addr %s2196, 5
      %s2198 = smul.addr %s2194, 5
      %s2199 = sadd.s32 %s2197, %s2198
      %s2200 = smul.addr %s2199, 8
      %s2201 = scalar_lea.vmem %s6, %s2200
      %p2202 = scmp.lt.s32.totalorder %s23, 1
      %s2203 = scalar_select %p2202, %s23, 1
      %p2204 = scmp.lt.s32.totalorder %s24, 0
      %s2205 = scalar_select %p2204, %s24, 0
      %s2206 = smul.addr %s2205, 5
      %s2207 = smul.addr %s2203, 5
      %s2208 = sadd.s32 %s2206, %s2207
      %s2209 = smul.addr %s2208, 8
      %s2210 = scalar_lea.vmem %s7, %s2209
      // Predicated region
      $region44: #{net1_forward.13} parent=35 // pred_check
        %p2211 = pneg %p145
      $region45: #{net1_forward.13} parent=35 // pred_check_branch
        %2213 = sbr.rel (%p2211) target = $region47
      $region46: #{net1_forward.13} parent=35 // pred_region
        %s2214 = smul.u32 20, %s24
      $region47: #{net1_forward.13} parent=35 // pred_fallthru
        _
      // Predicated region
      $region48: #{net1_forward.13} parent=35 // pred_check
        %p2215 = pneg %p173
      $region49: #{net1_forward.13} parent=35 // pred_check_branch
        %2217 = sbr.rel (%p2215) target = $region51
      $region50: #{net1_forward.13} parent=35 // pred_region
        %s2218 = smul.u32 20, %s24
      $region51: #{net1_forward.13} parent=35 // pred_fallthru
        _
      // Predicated region
      $region52: #{net1_forward.13} parent=35 // pred_check
        %p2219 = pneg %p201
      $region53: #{net1_forward.13} parent=35 // pred_check_branch
        %2221 = sbr.rel (%p2219) target = $region55
      $region54: #{net1_forward.13} parent=35 // pred_region
        _
      $region55: #{net1_forward.13} parent=35 // pred_fallthru
        _
      // Predicated region
      $region56: #{net1_forward.13} parent=35 // pred_check
        %p2222 = pneg %p229
      $region57: #{net1_forward.13} parent=35 // pred_check_branch
        %2224 = sbr.rel (%p2222) target = $region59
      $region58: #{net1_forward.13} parent=35 // pred_region
        _
      $region59: #{net1_forward.13} parent=35 // pred_fallthru
        _
    $region36: #{net1_forward.13} parent=5 // pred_fallthru
      _
    %p2225 = scmp.le.s32.totalorder 2, %s14
    // Predicated region
    $region60: #{net1_forward.13} parent=5 // pred_check
      %p2226 = pneg %p2225
    $region61: #{net1_forward.13} parent=5 // pred_check_branch
      %2228 = sbr.rel (%p2226) target = $region63
    $region62: #{net1_forward.13} parent=5 // pred_region
      %s2229 = ssub.s32 %s14, 2
      // Predicated region
      $region64: #{net1_forward.13} parent=62 // pred_check
        %p2230 = pneg %p151
      $region65: #{net1_forward.13} parent=62 // pred_check_branch
        %2232 = sbr.rel (%p2230) target = $region67
      $region66: #{net1_forward.13} parent=62 // pred_region
        %s2233 = smul.u32 20, %s26
        %p2234 = scmp.lt.s32.totalorder %s25, 1
        %s2235 = scalar_select %p2234, %s25, 1
        %p2236 = scmp.lt.s32.totalorder %s2233, 19
        %s2237 = scalar_select %p2236, %s2233, 19
        %s2238 = smul.addr %s2237, 5
        %s2239 = smul.addr %s2235, 100
        %s2240 = sadd.s32 %s2238, %s2239
        %s2241 = smul.addr %s2240, 8
        %s2242 = scalar_lea.vmem %s4, %s2241
      $region67: #{net1_forward.13} parent=62 // pred_fallthru
        _
      // Predicated region
      $region68: #{net1_forward.13} parent=62 // pred_check
        %p2243 = pneg %p179
      $region69: #{net1_forward.13} parent=62 // pred_check_branch
        %2245 = sbr.rel (%p2243) target = $region71
      $region70: #{net1_forward.13} parent=62 // pred_region
        %s2246 = smul.u32 20, %s26
        %p2247 = scmp.lt.s32.totalorder %s25, 1
        %s2248 = scalar_select %p2247, %s25, 1
        %p2249 = scmp.lt.s32.totalorder %s2246, 19
        %s2250 = scalar_select %p2249, %s2246, 19
        %s2251 = smul.addr %s2250, 5
        %s2252 = smul.addr %s2248, 100
        %s2253 = sadd.s32 %s2251, %s2252
        %s2254 = smul.addr %s2253, 8
        %s2255 = scalar_lea.vmem %s5, %s2254
      $region71: #{net1_forward.13} parent=62 // pred_fallthru
        _
      // Predicated region
      $region72: #{net1_forward.13} parent=62 // pred_check
        %p2256 = pneg %p207
      $region73: #{net1_forward.13} parent=62 // pred_check_branch
        %2258 = sbr.rel (%p2256) target = $region75
      $region74: #{net1_forward.13} parent=62 // pred_region
        %p2259 = scmp.lt.s32.totalorder %s25, 1
        %s2260 = scalar_select %p2259, %s25, 1
        %p2261 = scmp.lt.s32.totalorder %s26, 0
        %s2262 = scalar_select %p2261, %s26, 0
        %s2263 = smul.addr %s2262, 5
        %s2264 = smul.addr %s2260, 5
        %s2265 = sadd.s32 %s2263, %s2264
        %s2266 = smul.addr %s2265, 8
        %s2267 = scalar_lea.vmem %s6, %s2266
      $region75: #{net1_forward.13} parent=62 // pred_fallthru
        _
      // Predicated region
      $region76: #{net1_forward.13} parent=62 // pred_check
        %p2268 = pneg %p235
      $region77: #{net1_forward.13} parent=62 // pred_check_branch
        %2270 = sbr.rel (%p2268) target = $region79
      $region78: #{net1_forward.13} parent=62 // pred_region
        %p2271 = scmp.lt.s32.totalorder %s25, 1
        %s2272 = scalar_select %p2271, %s25, 1
        %p2273 = scmp.lt.s32.totalorder %s26, 0
        %s2274 = scalar_select %p2273, %s26, 0
        %s2275 = smul.addr %s2274, 5
        %s2276 = smul.addr %s2272, 5
        %s2277 = sadd.s32 %s2275, %s2276
        %s2278 = smul.addr %s2277, 8
        %s2279 = scalar_lea.vmem %s7, %s2278
      $region79: #{net1_forward.13} parent=62 // pred_fallthru
        _
    $region63: #{net1_forward.13} parent=5 // pred_fallthru
      _
  $region6: #{net1_forward.13} parent=0 // loop_footer
    %s18 = sadd.s32 1, %s14
  $region7: #{net1_forward.13} parent=0 // loop_footer_branch
    %13 = sbr.rel target = $region3
  $region8: #{net1_forward.13} parent=0 // loop_exit
    _

// kernel: net1_forward.14
$region0: #{net1_forward.14}
  #allocation0 [shape = 'u32[]', space=smem, size = 0x4, offset = 0x4, fixed_abs, tag = 'smem constant byte address 0x4 - core index']
  #allocation1 [shape = 'u32[144,128]{1,0:T(1,128)}', space=vmem, size = 0x12000, scoped, tag = 'internal scratch']
  %s0 = inlined_call_operand.vmem [shape: f32[2,20,40,10], index: 0, kind: input, shape index: {}]
  %s1 = inlined_call_operand.vmem [shape: f32[2,20,40,10], index: 1, kind: input, shape index: {}]
  %s2 = inlined_call_operand.vmem [shape: f32[40,1], index: 2, kind: input, shape index: {}]
  %s3 = inlined_call_operand.vmem [shape: f32[40,1], index: 3, kind: input, shape index: {}]
  %s4 = inlined_call_operand.vmem [shape: f32[2,10,40,10], index: 4, kind: output, shape index: {}]
  %s5 = sld [smem:[#allocation0]]
  $region56: #{net1_forward.14} parent=0
    _
  %s7 = ssub.s32 1, %s5
  %s8 = scalar_select 0, %s7, %s5
  loop: start=0, step=1, limit=4
  $region2: #{net1_forward.14} parent=0 // loop_pre_header
    _
  $region3: #{net1_forward.14} parent=0 // loop_header
    %s10 = sphi 0, %s14
    %p11 = scmp.ge.s32.totalorder %s10, 4
    %s20 = sphi 0, %s22
    %s23 = sphi 0, %s20
    %s24 = sphi 0, %s23
    %s40 = sphi 0, %s24
    %s46 = sphi 0, %s48
    %s49 = sphi 0, %s46
    %s50 = sphi 0, %s49
    %s66 = sphi 0, %s50
    %s70 = sphi 0, %s70
    %s72 = sphi 0, %s70
    %s73 = sphi 0, %s72
    %s87 = sphi 0, %s73
    %s91 = sphi 0, %s91
    %s93 = sphi 0, %s91
    %s94 = sphi 0, %s93
    %s108 = sphi 0, %s94
    %s114 = sphi 0, %s116
    %s117 = sphi 0, %s114
    %s118 = sphi 0, %s117
    %s134 = sphi 0, %s118
  $region4: #{net1_forward.14} parent=0 // loop_header_branch
    %13 = sbr.rel (%p11) target = $region8
  $region5: #{net1_forward.14} parent=0 // loop_body
    %s15 = ssub.s32 %s10, 1
    %s16 = ssub.s32 %s10, 2
    %s17 = sadd.s32 %s10, 1
    %s18 = ssub.s32 %s10, %s17
    %p19 = scmp.eq.s32.totalorder %s18, 0
    %s21 = sadd.s32 %s20, 1
    %s22 = scalar_select %p19, %s20, %s21
    %p25 = pneg %p19
    %p26 = scmp.eq.s32.totalorder %s10, 1
    %p27 = por %p25, %p26
    %p28 = scmp.ne.s32.totalorder %s20, %s23
    %p29 = scmp.eq.s32.totalorder %s10, 0
    %p30 = por %p28, %p29
    %p31 = scmp.ne.s32.totalorder %s20, %s23
    %p32 = scmp.eq.s32.totalorder %s15, 1
    %p33 = por %p31, %p32
    %p34 = scmp.ne.s32.totalorder %s23, %s24
    %p35 = scmp.eq.s32.totalorder %s15, 0
    %p36 = por %p34, %p35
    %p37 = scmp.ne.s32.totalorder %s23, %s24
    %p38 = scmp.eq.s32.totalorder %s16, 1
    %p39 = por %p37, %p38
    %p41 = scmp.ne.s32.totalorder %s24, %s40
    %p42 = scmp.eq.s32.totalorder %s16, 0
    %p43 = por %p41, %p42
    %s44 = ssub.s32 %s10, %s17
    %p45 = scmp.eq.s32.totalorder %s44, 0
    %s47 = sadd.s32 %s46, 1
    %s48 = scalar_select %p45, %s46, %s47
    %p51 = pneg %p45
    %p52 = scmp.eq.s32.totalorder %s10, 1
    %p53 = por %p51, %p52
    %p54 = scmp.ne.s32.totalorder %s46, %s49
    %p55 = scmp.eq.s32.totalorder %s10, 0
    %p56 = por %p54, %p55
    %p57 = scmp.ne.s32.totalorder %s46, %s49
    %p58 = scmp.eq.s32.totalorder %s15, 1
    %p59 = por %p57, %p58
    %p60 = scmp.ne.s32.totalorder %s49, %s50
    %p61 = scmp.eq.s32.totalorder %s15, 0
    %p62 = por %p60, %p61
    %p63 = scmp.ne.s32.totalorder %s49, %s50
    %p64 = scmp.eq.s32.totalorder %s16, 1
    %p65 = por %p63, %p64
    %p67 = scmp.ne.s32.totalorder %s50, %s66
    %p68 = scmp.eq.s32.totalorder %s16, 0
    %p69 = por %p67, %p68
    %s71 = sadd.s32 %s70, 1
    %p74 = scmp.eq.s32.totalorder %s10, 1
    %p75 = scmp.ne.s32.totalorder %s70, %s72
    %p76 = scmp.eq.s32.totalorder %s10, 0
    %p77 = por %p75, %p76
    %p78 = scmp.ne.s32.totalorder %s70, %s72
    %p79 = scmp.eq.s32.totalorder %s15, 1
    %p80 = por %p78, %p79
    %p81 = scmp.ne.s32.totalorder %s72, %s73
    %p82 = scmp.eq.s32.totalorder %s15, 0
    %p83 = por %p81, %p82
    %p84 = scmp.ne.s32.totalorder %s72, %s73
    %p85 = scmp.eq.s32.totalorder %s16, 1
    %p86 = por %p84, %p85
    %p88 = scmp.ne.s32.totalorder %s73, %s87
    %p89 = scmp.eq.s32.totalorder %s16, 0
    %p90 = por %p88, %p89
    %s92 = sadd.s32 %s91, 1
    %p95 = scmp.eq.s32.totalorder %s10, 1
    %p96 = scmp.ne.s32.totalorder %s91, %s93
    %p97 = scmp.eq.s32.totalorder %s10, 0
    %p98 = por %p96, %p97
    %p99 = scmp.ne.s32.totalorder %s91, %s93
    %p100 = scmp.eq.s32.totalorder %s15, 1
    %p101 = por %p99, %p100
    %p102 = scmp.ne.s32.totalorder %s93, %s94
    %p103 = scmp.eq.s32.totalorder %s15, 0
    %p104 = por %p102, %p103
    %p105 = scmp.ne.s32.totalorder %s93, %s94
    %p106 = scmp.eq.s32.totalorder %s16, 1
    %p107 = por %p105, %p106
    %p109 = scmp.ne.s32.totalorder %s94, %s108
    %p110 = scmp.eq.s32.totalorder %s16, 0
    %p111 = por %p109, %p110
    %s112 = ssub.s32 %s10, %s17
    %p113 = scmp.eq.s32.totalorder %s112, 0
    %s115 = sadd.s32 %s114, 1
    %s116 = scalar_select %p113, %s114, %s115
    %p119 = pneg %p113
    %p120 = scmp.eq.s32.totalorder %s10, 1
    %p121 = por %p119, %p120
    %p122 = scmp.ne.s32.totalorder %s114, %s117
    %p123 = scmp.eq.s32.totalorder %s10, 0
    %p124 = por %p122, %p123
    %p125 = scmp.ne.s32.totalorder %s114, %s117
    %p126 = scmp.eq.s32.totalorder %s15, 1
    %p127 = por %p125, %p126
    %p128 = scmp.ne.s32.totalorder %s117, %s118
    %p129 = scmp.eq.s32.totalorder %s15, 0
    %p130 = por %p128, %p129
    %p131 = scmp.ne.s32.totalorder %s117, %s118
    %p132 = scmp.eq.s32.totalorder %s16, 1
    %p133 = por %p131, %p132
    %p135 = scmp.ne.s32.totalorder %s118, %s134
    %p136 = scmp.eq.s32.totalorder %s16, 0
    %p137 = por %p135, %p136
    %p138 = scmp.le.s32.totalorder 1, %s10
    %p139 = scmp.lt.s32.totalorder %s10, 3
    %p140 = pnand %p138, %p139
    %p141 = pneg %p140
    // Predicated region
    $region9: #{net1_forward.14} parent=5 // pred_check
      _
    $region10: #{net1_forward.14} parent=5 // pred_check_branch
      %143 = sbr.rel (%p140) target = $region12
    $region11: #{net1_forward.14} parent=5 // pred_region
      %s144 = ssub.s32 %s10, 1
      // Predicated region
      $region13: #{net1_forward.14} parent=11 // pred_check
        %p145 = pneg %p83
      $region14: #{net1_forward.14} parent=11 // pred_check_branch
        %147 = sbr.rel (%p145) target = $region16
      $region15: #{net1_forward.14} parent=11 // pred_region
        _
      $region16: #{net1_forward.14} parent=11 // pred_fallthru
        _
      // Predicated region
      $region17: #{net1_forward.14} parent=11 // pred_check
        %p148 = pneg %p104
      $region18: #{net1_forward.14} parent=11 // pred_check_branch
        %150 = sbr.rel (%p148) target = $region20
      $region19: #{net1_forward.14} parent=11 // pred_region
        _
      $region20: #{net1_forward.14} parent=11 // pred_fallthru
        _
    $region12: #{net1_forward.14} parent=5 // pred_fallthru
      _
    %p151 = scmp.lt.s32.totalorder %s10, 2
    // Predicated region
    $region21: #{net1_forward.14} parent=5 // pred_check
      %p152 = pneg %p151
    $region22: #{net1_forward.14} parent=5 // pred_check_branch
      %154 = sbr.rel (%p152) target = $region24
    $region23: #{net1_forward.14} parent=5 // pred_region
      // Predicated region
      $region25: #{net1_forward.14} parent=23 // pred_check
        %p155 = pneg %p30
      $region26: #{net1_forward.14} parent=23 // pred_check_branch
        %157 = sbr.rel (%p155) target = $region28
      $region27: #{net1_forward.14} parent=23 // pred_region
        %p158 = scmp.lt.s32.totalorder %s10, 1
        %s159 = scalar_select %p158, %s10, 1
        %s160 = smul.addr %s159, 100
        %s161 = smul.addr %s160, 8
        %s162 = scalar_lea.vmem %s0, %s161
      $region28: #{net1_forward.14} parent=23 // pred_fallthru
        _
      // Predicated region
      $region29: #{net1_forward.14} parent=23 // pred_check
        %p163 = pneg %p56
      $region30: #{net1_forward.14} parent=23 // pred_check_branch
        %165 = sbr.rel (%p163) target = $region32
      $region31: #{net1_forward.14} parent=23 // pred_region
        %p166 = scmp.lt.s32.totalorder %s10, 1
        %s167 = scalar_select %p166, %s10, 1
        %s168 = smul.addr %s167, 100
        %s169 = smul.addr %s168, 8
        %s170 = scalar_lea.vmem %s1, %s169
      $region32: #{net1_forward.14} parent=23 // pred_fallthru
        _
    $region24: #{net1_forward.14} parent=5 // pred_fallthru
      _
    %p171 = scmp.le.s32.totalorder 1, %s10
    %p172 = scmp.lt.s32.totalorder %s10, 3
    %p173 = pnand %p171, %p172
    %p174 = pneg %p173
    // Predicated region
    $region33: #{net1_forward.14} parent=5 // pred_check
      _
    $region34: #{net1_forward.14} parent=5 // pred_check_branch
      %176 = sbr.rel (%p173) target = $region36
    $region35: #{net1_forward.14} parent=5 // pred_region
      %s177 = ssub.s32 %s10, 1
      %p178 = scmp.lt.s32.totalorder %s15, 1
      %s179 = scalar_select %p178, %s15, 1
      %s180 = smul.addr %s179, 100
      %s181 = smul.addr %s180, 8
      %s182 = scalar_lea.vmem %s0, %s181
      %p183 = pneg %p36
      %p184 = pneg %p33
      %p185 = scmp.lt.s32.totalorder %s15, 1
      %s186 = scalar_select %p185, %s15, 1
      %s187 = smul.addr %s186, 100
      %s188 = smul.addr %s187, 8
      %s189 = scalar_lea.vmem %s1, %s188
      %p190 = pneg %p62
      %p191 = pneg %p59
      %p192 = pneg %p83
      %p193 = pneg %p80
      %p194 = pneg %p104
      %p195 = pneg %p101
      %p196 = pneg %p130
      %p197 = pneg %p127
      %p198 = scmp.lt.s32.totalorder %s15, 1
      %s199 = scalar_select %p198, %s15, 1
      %s200 = smul.addr %s199, 50
      %s201 = smul.addr %s200, 8
      %s202 = scalar_lea.vmem %s4, %s201
      %p203 = scmp.lt.s32.totalorder %s15, 1
      %s204 = scalar_select %p203, %s15, 1
      %s205 = smul.addr %s204, 100
      %s206 = smul.addr %s205, 8
      %s207 = scalar_lea.vmem %s0, %s206
      %p208 = scmp.lt.s32.totalorder %s15, 1
      %s209 = scalar_select %p208, %s15, 1
      %s210 = smul.addr %s209, 100
      %s211 = smul.addr %s210, 8
      %s212 = scalar_lea.vmem %s1, %s211
      %p213 = scmp.lt.s32.totalorder %s15, 1
      %s214 = scalar_select %p213, %s15, 1
      %s215 = smul.addr %s214, 50
      %s216 = smul.addr %s215, 8
      %s217 = scalar_lea.vmem %s4, %s216
      loop: start=0, step=1, limit=10
      $region37: #{net1_forward.14} parent=35 // loop_pre_header
        _
      $region38: #{net1_forward.14} parent=35 // loop_header
        %s219 = sphi 0, %s223
        %p220 = scmp.ge.s32.totalorder %s219, 10
      $region39: #{net1_forward.14} parent=35 // loop_header_branch
        %222 = sbr.rel (%p220) target = $region43
      $region40: #{net1_forward.14} parent=35 // loop_body
        %v224 = vld [vmem:[%s2] sm:$0xff]
        %v225 = vld [vmem:[%s2 + $0x8] sm:$0xff]
        %v226 = vld [vmem:[%s2 + $0x10] sm:$0xff]
        %v227 = vld [vmem:[%s2 + $0x18] sm:$0xff]
        %v228 = vld [vmem:[%s2 + $0x20] sm:$0xff]
        %v229 = vld [vmem:[%s3] sm:$0xff]
        %v230 = vld [vmem:[%s3 + $0x8] sm:$0xff]
        %v231 = vld [vmem:[%s3 + $0x10] sm:$0xff]
        %v232 = vld [vmem:[%s3 + $0x18] sm:$0xff]
        %v233 = vld [vmem:[%s3 + $0x20] sm:$0xff]
        %s234 = smul.u32 %s219, 2
        %s235 = smul.u32 %s234, 40
        %s236 = scalar_lea.vmem %s207, %s235
        %v237 = vld [vmem:[%s236] sm:$0xff]
        %v238 = vld [vmem:[%s236 + $0x8] sm:$0xff]
        %v239 = vld [vmem:[%s236 + $0x10] sm:$0xff]
        %v240 = vld [vmem:[%s236 + $0x18] sm:$0xff]
        %v241 = vld [vmem:[%s236 + $0x20] sm:$0xff]
        %v242 = vld [vmem:[%s236 + $0x28] sm:$0xff]
        %v243 = vld [vmem:[%s236 + $0x30] sm:$0xff]
        %v244 = vld [vmem:[%s236 + $0x38] sm:$0xff]
        %v245 = vld [vmem:[%s236 + $0x40] sm:$0xff]
        %v246 = vld [vmem:[%s236 + $0x48] sm:$0xff]
        %s247 = scalar_lea.vmem %s212, %s235
        %v248 = vld [vmem:[%s247] sm:$0xff]
        %v249 = vld [vmem:[%s247 + $0x8] sm:$0xff]
        %v250 = vld [vmem:[%s247 + $0x10] sm:$0xff]
        %v251 = vld [vmem:[%s247 + $0x18] sm:$0xff]
        %v252 = vld [vmem:[%s247 + $0x20] sm:$0xff]
        %v253 = vld [vmem:[%s247 + $0x28] sm:$0xff]
        %v254 = vld [vmem:[%s247 + $0x30] sm:$0xff]
        %v255 = vld [vmem:[%s247 + $0x38] sm:$0xff]
        %v256 = vld [vmem:[%s247 + $0x40] sm:$0xff]
        %v257 = vld [vmem:[%s247 + $0x48] sm:$0xff]
        %259 = vset.pattern.permute.xlu0 0
        %260 = vperm.xlu0 %259, %v224
        %v261 = vpop.permute.xlu0 %260
        %264 = vset.pattern.permute.xlu0 0
        %265 = vperm.xlu0 %264, %v225
        %v266 = vpop.permute.xlu0 %265
        %269 = vset.pattern.permute.xlu0 0
        %270 = vperm.xlu0 %269, %v226
        %v271 = vpop.permute.xlu0 %270
        %274 = vset.pattern.permute.xlu0 0
        %275 = vperm.xlu0 %274, %v227
        %v276 = vpop.permute.xlu0 %275
        %279 = vset.pattern.permute.xlu0 0
        %280 = vperm.xlu0 %279, %v228
        %v281 = vpop.permute.xlu0 %280
        %v283 = vmul.f32 %v237, %v261
        %v284 = vmul.f32 %v238, %v266
        %v285 = vmul.f32 %v239, %v271
        %v286 = vmul.f32 %v240, %v276
        %v287 = vmul.f32 %v241, %v281
        %v288 = vmul.f32 %v242, %v261
        %v289 = vmul.f32 %v243, %v266
        %v290 = vmul.f32 %v244, %v271
        %v291 = vmul.f32 %v245, %v276
        %v292 = vmul.f32 %v246, %v281
        %294 = vset.pattern.permute.xlu0 0
        %295 = vperm.xlu0 %294, %v229
        %v296 = vpop.permute.xlu0 %295
        %299 = vset.pattern.permute.xlu0 0
        %300 = vperm.xlu0 %299, %v230
        %v301 = vpop.permute.xlu0 %300
        %304 = vset.pattern.permute.xlu0 0
        %305 = vperm.xlu0 %304, %v231
        %v306 = vpop.permute.xlu0 %305
        %309 = vset.pattern.permute.xlu0 0
        %310 = vperm.xlu0 %309, %v232
        %v311 = vpop.permute.xlu0 %310
        %314 = vset.pattern.permute.xlu0 0
        %315 = vperm.xlu0 %314, %v233
        %v316 = vpop.permute.xlu0 %315
        %v318 = vadd.f32 %v283, %v296
        %v319 = vadd.f32 %v284, %v301
        %v320 = vadd.f32 %v285, %v306
        %v321 = vadd.f32 %v286, %v311
        %v322 = vadd.f32 %v287, %v316
        %v323 = vadd.f32 %v288, %v296
        %v324 = vadd.f32 %v289, %v301
        %v325 = vadd.f32 %v290, %v306
        %v326 = vadd.f32 %v291, %v311
        %v327 = vadd.f32 %v292, %v316
        %v328 = vmul.f32 %v248, %v261
        %v329 = vmul.f32 %v249, %v266
        %v330 = vmul.f32 %v250, %v271
        %v331 = vmul.f32 %v251, %v276
        %v332 = vmul.f32 %v252, %v281
        %v333 = vmul.f32 %v253, %v261
        %v334 = vmul.f32 %v254, %v266
        %v335 = vmul.f32 %v255, %v271
        %v336 = vmul.f32 %v256, %v276
        %v337 = vmul.f32 %v257, %v281
        %v338 = vadd.f32 %v328, %v296
        %v339 = vadd.f32 %v329, %v301
        %v340 = vadd.f32 %v330, %v306
        %v341 = vadd.f32 %v331, %v311
        %v342 = vadd.f32 %v332, %v316
        %v343 = vadd.f32 %v333, %v296
        %v344 = vadd.f32 %v334, %v301
        %v345 = vadd.f32 %v335, %v306
        %v346 = vadd.f32 %v336, %v311
        %v347 = vadd.f32 %v337, %v316
        %v348 = vmax.f32 %v318, %v338
        %v349 = vmax.f32 %v319, %v339
        %v350 = vmax.f32 %v320, %v340
        %v351 = vmax.f32 %v321, %v341
        %v352 = vmax.f32 %v322, %v342
        %v353 = vmax.f32 %v323, %v343
        %v354 = vmax.f32 %v324, %v344
        %v355 = vmax.f32 %v325, %v345
        %v356 = vmax.f32 %v326, %v346
        %v357 = vmax.f32 %v327, %v347
        %v358 = vmax.f32 %v348, %v353
        %v359 = vmax.f32 %v349, %v354
        %v360 = vmax.f32 %v350, %v355
        %v361 = vmax.f32 %v351, %v356
        %v362 = vmax.f32 %v352, %v357
        %v363 = vmax.f32 %v358, 0.0
        %v364 = vmax.f32 %v359, 0.0
        %v365 = vmax.f32 %v360, 0.0
        %v366 = vmax.f32 %v361, 0.0
        %v367 = vmax.f32 %v362, 0.0
        %s368 = smul.u32 %s219, 40
        %s369 = scalar_lea.vmem %s217, %s368
        %vm370 = vcmask 80896
        %371 = vst.msk [vmem:[%s369] sm:$0xff] %vm370, %v363
        %372 = vst.msk [vmem:[%s369 + $0x8] sm:$0xff] %vm370, %v364
        %373 = vst.msk [vmem:[%s369 + $0x10] sm:$0xff] %vm370, %v365
        %374 = vst.msk [vmem:[%s369 + $0x18] sm:$0xff] %vm370, %v366
        %375 = vst.msk [vmem:[%s369 + $0x20] sm:$0xff] %vm370, %v367
      $region41: #{net1_forward.14} parent=35 // loop_footer
        %s223 = sadd.s32 1, %s219
      $region42: #{net1_forward.14} parent=35 // loop_footer_branch
        %218 = sbr.rel target = $region38
      $region43: #{net1_forward.14} parent=35 // loop_exit
        _
      %p376 = scmp.lt.s32.totalorder %s15, 1
      %s377 = scalar_select %p376, %s15, 1
      %s378 = smul.addr %s377, 50
      %s379 = smul.addr %s378, 8
      %s380 = scalar_lea.vmem %s4, %s379
      // Predicated region
      $region44: #{net1_forward.14} parent=35 // pred_check
        %p381 = pneg %p127
      $region45: #{net1_forward.14} parent=35 // pred_check_branch
        %383 = sbr.rel (%p381) target = $region47
      $region46: #{net1_forward.14} parent=35 // pred_region
        _
      $region47: #{net1_forward.14} parent=35 // pred_fallthru
        _
    $region36: #{net1_forward.14} parent=5 // pred_fallthru
      _
    %p384 = scmp.le.s32.totalorder 2, %s10
    // Predicated region
    $region48: #{net1_forward.14} parent=5 // pred_check
      %p385 = pneg %p384
    $region49: #{net1_forward.14} parent=5 // pred_check_branch
      %387 = sbr.rel (%p385) target = $region51
    $region50: #{net1_forward.14} parent=5 // pred_region
      %s388 = ssub.s32 %s10, 2
      // Predicated region
      $region52: #{net1_forward.14} parent=50 // pred_check
        %p389 = pneg %p133
      $region53: #{net1_forward.14} parent=50 // pred_check_branch
        %391 = sbr.rel (%p389) target = $region55
      $region54: #{net1_forward.14} parent=50 // pred_region
        %p392 = scmp.lt.s32.totalorder %s16, 1
        %s393 = scalar_select %p392, %s16, 1
        %s394 = smul.addr %s393, 50
        %s395 = smul.addr %s394, 8
        %s396 = scalar_lea.vmem %s4, %s395
      $region55: #{net1_forward.14} parent=50 // pred_fallthru
        _
    $region51: #{net1_forward.14} parent=5 // pred_fallthru
      _
  $region6: #{net1_forward.14} parent=0 // loop_footer
    %s14 = sadd.s32 1, %s10
  $region7: #{net1_forward.14} parent=0 // loop_footer_branch
    %9 = sbr.rel target = $region3
  $region8: #{net1_forward.14} parent=0 // loop_exit
    _

// kernel: net1_forward.16
$region0: #{net1_forward.16}
  #allocation0 [shape = 'u32[]', space=smem, size = 0x4, offset = 0x4, fixed_abs, tag = 'smem constant byte address 0x4 - core index']
  #allocation1 [shape = 'u32[144,128]{1,0:T(1,128)}', space=vmem, size = 0x12000, scoped, tag = 'internal scratch']
  %s0 = inlined_call_operand.vmem [shape: f32[2,6,80,3], index: 0, kind: input, shape index: {}]
  %s1 = inlined_call_operand.vmem [shape: f32[2,6,80,3], index: 1, kind: input, shape index: {}]
  %s2 = inlined_call_operand.vmem [shape: f32[80,1], index: 2, kind: input, shape index: {}]
  %s3 = inlined_call_operand.vmem [shape: f32[80,1], index: 3, kind: input, shape index: {}]
  %s4 = inlined_call_operand.vmem [shape: f32[2,3,80,3], index: 4, kind: output, shape index: {}]
  %s5 = sld [smem:[#allocation0]]
  $region56: #{net1_forward.16} parent=0
    _
  %s7 = ssub.s32 1, %s5
  %s8 = scalar_select 0, %s7, %s5
  loop: start=0, step=1, limit=4
  $region2: #{net1_forward.16} parent=0 // loop_pre_header
    _
  $region3: #{net1_forward.16} parent=0 // loop_header
    %s10 = sphi 0, %s14
    %p11 = scmp.ge.s32.totalorder %s10, 4
    %s20 = sphi 0, %s22
    %s23 = sphi 0, %s20
    %s24 = sphi 0, %s23
    %s40 = sphi 0, %s24
    %s46 = sphi 0, %s48
    %s49 = sphi 0, %s46
    %s50 = sphi 0, %s49
    %s66 = sphi 0, %s50
    %s70 = sphi 0, %s70
    %s72 = sphi 0, %s70
    %s73 = sphi 0, %s72
    %s87 = sphi 0, %s73
    %s91 = sphi 0, %s91
    %s93 = sphi 0, %s91
    %s94 = sphi 0, %s93
    %s108 = sphi 0, %s94
    %s114 = sphi 0, %s116
    %s117 = sphi 0, %s114
    %s118 = sphi 0, %s117
    %s134 = sphi 0, %s118
  $region4: #{net1_forward.16} parent=0 // loop_header_branch
    %13 = sbr.rel (%p11) target = $region8
  $region5: #{net1_forward.16} parent=0 // loop_body
    %s15 = ssub.s32 %s10, 1
    %s16 = ssub.s32 %s10, 2
    %s17 = sadd.s32 %s10, 1
    %s18 = ssub.s32 %s10, %s17
    %p19 = scmp.eq.s32.totalorder %s18, 0
    %s21 = sadd.s32 %s20, 1
    %s22 = scalar_select %p19, %s20, %s21
    %p25 = pneg %p19
    %p26 = scmp.eq.s32.totalorder %s10, 1
    %p27 = por %p25, %p26
    %p28 = scmp.ne.s32.totalorder %s20, %s23
    %p29 = scmp.eq.s32.totalorder %s10, 0
    %p30 = por %p28, %p29
    %p31 = scmp.ne.s32.totalorder %s20, %s23
    %p32 = scmp.eq.s32.totalorder %s15, 1
    %p33 = por %p31, %p32
    %p34 = scmp.ne.s32.totalorder %s23, %s24
    %p35 = scmp.eq.s32.totalorder %s15, 0
    %p36 = por %p34, %p35
    %p37 = scmp.ne.s32.totalorder %s23, %s24
    %p38 = scmp.eq.s32.totalorder %s16, 1
    %p39 = por %p37, %p38
    %p41 = scmp.ne.s32.totalorder %s24, %s40
    %p42 = scmp.eq.s32.totalorder %s16, 0
    %p43 = por %p41, %p42
    %s44 = ssub.s32 %s10, %s17
    %p45 = scmp.eq.s32.totalorder %s44, 0
    %s47 = sadd.s32 %s46, 1
    %s48 = scalar_select %p45, %s46, %s47
    %p51 = pneg %p45
    %p52 = scmp.eq.s32.totalorder %s10, 1
    %p53 = por %p51, %p52
    %p54 = scmp.ne.s32.totalorder %s46, %s49
    %p55 = scmp.eq.s32.totalorder %s10, 0
    %p56 = por %p54, %p55
    %p57 = scmp.ne.s32.totalorder %s46, %s49
    %p58 = scmp.eq.s32.totalorder %s15, 1
    %p59 = por %p57, %p58
    %p60 = scmp.ne.s32.totalorder %s49, %s50
    %p61 = scmp.eq.s32.totalorder %s15, 0
    %p62 = por %p60, %p61
    %p63 = scmp.ne.s32.totalorder %s49, %s50
    %p64 = scmp.eq.s32.totalorder %s16, 1
    %p65 = por %p63, %p64
    %p67 = scmp.ne.s32.totalorder %s50, %s66
    %p68 = scmp.eq.s32.totalorder %s16, 0
    %p69 = por %p67, %p68
    %s71 = sadd.s32 %s70, 1
    %p74 = scmp.eq.s32.totalorder %s10, 1
    %p75 = scmp.ne.s32.totalorder %s70, %s72
    %p76 = scmp.eq.s32.totalorder %s10, 0
    %p77 = por %p75, %p76
    %p78 = scmp.ne.s32.totalorder %s70, %s72
    %p79 = scmp.eq.s32.totalorder %s15, 1
    %p80 = por %p78, %p79
    %p81 = scmp.ne.s32.totalorder %s72, %s73
    %p82 = scmp.eq.s32.totalorder %s15, 0
    %p83 = por %p81, %p82
    %p84 = scmp.ne.s32.totalorder %s72, %s73
    %p85 = scmp.eq.s32.totalorder %s16, 1
    %p86 = por %p84, %p85
    %p88 = scmp.ne.s32.totalorder %s73, %s87
    %p89 = scmp.eq.s32.totalorder %s16, 0
    %p90 = por %p88, %p89
    %s92 = sadd.s32 %s91, 1
    %p95 = scmp.eq.s32.totalorder %s10, 1
    %p96 = scmp.ne.s32.totalorder %s91, %s93
    %p97 = scmp.eq.s32.totalorder %s10, 0
    %p98 = por %p96, %p97
    %p99 = scmp.ne.s32.totalorder %s91, %s93
    %p100 = scmp.eq.s32.totalorder %s15, 1
    %p101 = por %p99, %p100
    %p102 = scmp.ne.s32.totalorder %s93, %s94
    %p103 = scmp.eq.s32.totalorder %s15, 0
    %p104 = por %p102, %p103
    %p105 = scmp.ne.s32.totalorder %s93, %s94
    %p106 = scmp.eq.s32.totalorder %s16, 1
    %p107 = por %p105, %p106
    %p109 = scmp.ne.s32.totalorder %s94, %s108
    %p110 = scmp.eq.s32.totalorder %s16, 0
    %p111 = por %p109, %p110
    %s112 = ssub.s32 %s10, %s17
    %p113 = scmp.eq.s32.totalorder %s112, 0
    %s115 = sadd.s32 %s114, 1
    %s116 = scalar_select %p113, %s114, %s115
    %p119 = pneg %p113
    %p120 = scmp.eq.s32.totalorder %s10, 1
    %p121 = por %p119, %p120
    %p122 = scmp.ne.s32.totalorder %s114, %s117
    %p123 = scmp.eq.s32.totalorder %s10, 0
    %p124 = por %p122, %p123
    %p125 = scmp.ne.s32.totalorder %s114, %s117
    %p126 = scmp.eq.s32.totalorder %s15, 1
    %p127 = por %p125, %p126
    %p128 = scmp.ne.s32.totalorder %s117, %s118
    %p129 = scmp.eq.s32.totalorder %s15, 0
    %p130 = por %p128, %p129
    %p131 = scmp.ne.s32.totalorder %s117, %s118
    %p132 = scmp.eq.s32.totalorder %s16, 1
    %p133 = por %p131, %p132
    %p135 = scmp.ne.s32.totalorder %s118, %s134
    %p136 = scmp.eq.s32.totalorder %s16, 0
    %p137 = por %p135, %p136
    %p138 = scmp.le.s32.totalorder 1, %s10
    %p139 = scmp.lt.s32.totalorder %s10, 3
    %p140 = pnand %p138, %p139
    %p141 = pneg %p140
    // Predicated region
    $region9: #{net1_forward.16} parent=5 // pred_check
      _
    $region10: #{net1_forward.16} parent=5 // pred_check_branch
      %143 = sbr.rel (%p140) target = $region12
    $region11: #{net1_forward.16} parent=5 // pred_region
      %s144 = ssub.s32 %s10, 1
      // Predicated region
      $region13: #{net1_forward.16} parent=11 // pred_check
        %p145 = pneg %p83
      $region14: #{net1_forward.16} parent=11 // pred_check_branch
        %147 = sbr.rel (%p145) target = $region16
      $region15: #{net1_forward.16} parent=11 // pred_region
        _
      $region16: #{net1_forward.16} parent=11 // pred_fallthru
        _
      // Predicated region
      $region17: #{net1_forward.16} parent=11 // pred_check
        %p148 = pneg %p104
      $region18: #{net1_forward.16} parent=11 // pred_check_branch
        %150 = sbr.rel (%p148) target = $region20
      $region19: #{net1_forward.16} parent=11 // pred_region
        _
      $region20: #{net1_forward.16} parent=11 // pred_fallthru
        _
    $region12: #{net1_forward.16} parent=5 // pred_fallthru
      _
    %p151 = scmp.lt.s32.totalorder %s10, 2
    // Predicated region
    $region21: #{net1_forward.16} parent=5 // pred_check
      %p152 = pneg %p151
    $region22: #{net1_forward.16} parent=5 // pred_check_branch
      %154 = sbr.rel (%p152) target = $region24
    $region23: #{net1_forward.16} parent=5 // pred_region
      // Predicated region
      $region25: #{net1_forward.16} parent=23 // pred_check
        %p155 = pneg %p30
      $region26: #{net1_forward.16} parent=23 // pred_check_branch
        %157 = sbr.rel (%p155) target = $region28
      $region27: #{net1_forward.16} parent=23 // pred_region
        %p158 = scmp.lt.s32.totalorder %s10, 1
        %s159 = scalar_select %p158, %s10, 1
        %s160 = smul.addr %s159, 60
        %s161 = smul.addr %s160, 8
        %s162 = scalar_lea.vmem %s0, %s161
      $region28: #{net1_forward.16} parent=23 // pred_fallthru
        _
      // Predicated region
      $region29: #{net1_forward.16} parent=23 // pred_check
        %p163 = pneg %p56
      $region30: #{net1_forward.16} parent=23 // pred_check_branch
        %165 = sbr.rel (%p163) target = $region32
      $region31: #{net1_forward.16} parent=23 // pred_region
        %p166 = scmp.lt.s32.totalorder %s10, 1
        %s167 = scalar_select %p166, %s10, 1
        %s168 = smul.addr %s167, 60
        %s169 = smul.addr %s168, 8
        %s170 = scalar_lea.vmem %s1, %s169
      $region32: #{net1_forward.16} parent=23 // pred_fallthru
        _
    $region24: #{net1_forward.16} parent=5 // pred_fallthru
      _
    %p171 = scmp.le.s32.totalorder 1, %s10
    %p172 = scmp.lt.s32.totalorder %s10, 3
    %p173 = pnand %p171, %p172
    %p174 = pneg %p173
    // Predicated region
    $region33: #{net1_forward.16} parent=5 // pred_check
      _
    $region34: #{net1_forward.16} parent=5 // pred_check_branch
      %176 = sbr.rel (%p173) target = $region36
    $region35: #{net1_forward.16} parent=5 // pred_region
      %s177 = ssub.s32 %s10, 1
      %p178 = scmp.lt.s32.totalorder %s15, 1
      %s179 = scalar_select %p178, %s15, 1
      %s180 = smul.addr %s179, 60
      %s181 = smul.addr %s180, 8
      %s182 = scalar_lea.vmem %s0, %s181
      %p183 = pneg %p36
      %p184 = pneg %p33
      %p185 = scmp.lt.s32.totalorder %s15, 1
      %s186 = scalar_select %p185, %s15, 1
      %s187 = smul.addr %s186, 60
      %s188 = smul.addr %s187, 8
      %s189 = scalar_lea.vmem %s1, %s188
      %p190 = pneg %p62
      %p191 = pneg %p59
      %p192 = pneg %p83
      %p193 = pneg %p80
      %p194 = pneg %p104
      %p195 = pneg %p101
      %p196 = pneg %p130
      %p197 = pneg %p127
      %p198 = scmp.lt.s32.totalorder %s15, 1
      %s199 = scalar_select %p198, %s15, 1
      %s200 = smul.addr %s199, 30
      %s201 = smul.addr %s200, 8
      %s202 = scalar_lea.vmem %s4, %s201
      %p203 = scmp.lt.s32.totalorder %s15, 1
      %s204 = scalar_select %p203, %s15, 1
      %s205 = smul.addr %s204, 60
      %s206 = smul.addr %s205, 8
      %s207 = scalar_lea.vmem %s0, %s206
      %p208 = scmp.lt.s32.totalorder %s15, 1
      %s209 = scalar_select %p208, %s15, 1
      %s210 = smul.addr %s209, 60
      %s211 = smul.addr %s210, 8
      %s212 = scalar_lea.vmem %s1, %s211
      %p213 = scmp.lt.s32.totalorder %s15, 1
      %s214 = scalar_select %p213, %s15, 1
      %s215 = smul.addr %s214, 30
      %s216 = smul.addr %s215, 8
      %s217 = scalar_lea.vmem %s4, %s216
      loop: start=0, step=1, limit=3
      $region37: #{net1_forward.16} parent=35 // loop_pre_header
        _
      $region38: #{net1_forward.16} parent=35 // loop_header
        %s219 = sphi 0, %s223
        %p220 = scmp.ge.s32.totalorder %s219, 3
      $region39: #{net1_forward.16} parent=35 // loop_header_branch
        %222 = sbr.rel (%p220) target = $region43
      $region40: #{net1_forward.16} parent=35 // loop_body
        %v224 = vld [vmem:[%s2] sm:$0xff]
        %v225 = vld [vmem:[%s2 + $0x8] sm:$0xff]
        %v226 = vld [vmem:[%s2 + $0x10] sm:$0xff]
        %v227 = vld [vmem:[%s2 + $0x18] sm:$0xff]
        %v228 = vld [vmem:[%s2 + $0x20] sm:$0xff]
        %v229 = vld [vmem:[%s2 + $0x28] sm:$0xff]
        %v230 = vld [vmem:[%s2 + $0x30] sm:$0xff]
        %v231 = vld [vmem:[%s2 + $0x38] sm:$0xff]
        %v232 = vld [vmem:[%s2 + $0x40] sm:$0xff]
        %v233 = vld [vmem:[%s2 + $0x48] sm:$0xff]
        %v234 = vld [vmem:[%s3] sm:$0xff]
        %v235 = vld [vmem:[%s3 + $0x8] sm:$0xff]
        %v236 = vld [vmem:[%s3 + $0x10] sm:$0xff]
        %v237 = vld [vmem:[%s3 + $0x18] sm:$0xff]
        %v238 = vld [vmem:[%s3 + $0x20] sm:$0xff]
        %v239 = vld [vmem:[%s3 + $0x28] sm:$0xff]
        %v240 = vld [vmem:[%s3 + $0x30] sm:$0xff]
        %v241 = vld [vmem:[%s3 + $0x38] sm:$0xff]
        %v242 = vld [vmem:[%s3 + $0x40] sm:$0xff]
        %v243 = vld [vmem:[%s3 + $0x48] sm:$0xff]
        %s244 = smul.u32 %s219, 2
        %s245 = smul.u32 %s244, 80
        %s246 = scalar_lea.vmem %s207, %s245
        %v247 = vld [vmem:[%s246] sm:$0xff]
        %v248 = vld [vmem:[%s246 + $0x8] sm:$0xff]
        %v249 = vld [vmem:[%s246 + $0x10] sm:$0xff]
        %v250 = vld [vmem:[%s246 + $0x18] sm:$0xff]
        %v251 = vld [vmem:[%s246 + $0x20] sm:$0xff]
        %v252 = vld [vmem:[%s246 + $0x28] sm:$0xff]
        %v253 = vld [vmem:[%s246 + $0x30] sm:$0xff]
        %v254 = vld [vmem:[%s246 + $0x38] sm:$0xff]
        %v255 = vld [vmem:[%s246 + $0x40] sm:$0xff]
        %v256 = vld [vmem:[%s246 + $0x48] sm:$0xff]
        %v257 = vld [vmem:[%s246 + $0x50] sm:$0xff]
        %v258 = vld [vmem:[%s246 + $0x58] sm:$0xff]
        %v259 = vld [vmem:[%s246 + $0x60] sm:$0xff]
        %v260 = vld [vmem:[%s246 + $0x68] sm:$0xff]
        %v261 = vld [vmem:[%s246 + $0x70] sm:$0xff]
        %v262 = vld [vmem:[%s246 + $0x78] sm:$0xff]
        %v263 = vld [vmem:[%s246 + $0x80] sm:$0xff]
        %v264 = vld [vmem:[%s246 + $0x88] sm:$0xff]
        %v265 = vld [vmem:[%s246 + $0x90] sm:$0xff]
        %v266 = vld [vmem:[%s246 + $0x98] sm:$0xff]
        %s267 = scalar_lea.vmem %s212, %s245
        %v268 = vld [vmem:[%s267] sm:$0xff]
        %v269 = vld [vmem:[%s267 + $0x8] sm:$0xff]
        %v270 = vld [vmem:[%s267 + $0x10] sm:$0xff]
        %v271 = vld [vmem:[%s267 + $0x18] sm:$0xff]
        %v272 = vld [vmem:[%s267 + $0x20] sm:$0xff]
        %v273 = vld [vmem:[%s267 + $0x28] sm:$0xff]
        %v274 = vld [vmem:[%s267 + $0x30] sm:$0xff]
        %v275 = vld [vmem:[%s267 + $0x38] sm:$0xff]
        %v276 = vld [vmem:[%s267 + $0x40] sm:$0xff]
        %v277 = vld [vmem:[%s267 + $0x48] sm:$0xff]
        %v278 = vld [vmem:[%s267 + $0x50] sm:$0xff]
        %v279 = vld [vmem:[%s267 + $0x58] sm:$0xff]
        %v280 = vld [vmem:[%s267 + $0x60] sm:$0xff]
        %v281 = vld [vmem:[%s267 + $0x68] sm:$0xff]
        %v282 = vld [vmem:[%s267 + $0x70] sm:$0xff]
        %v283 = vld [vmem:[%s267 + $0x78] sm:$0xff]
        %v284 = vld [vmem:[%s267 + $0x80] sm:$0xff]
        %v285 = vld [vmem:[%s267 + $0x88] sm:$0xff]
        %v286 = vld [vmem:[%s267 + $0x90] sm:$0xff]
        %v287 = vld [vmem:[%s267 + $0x98] sm:$0xff]
        %289 = vset.pattern.permute.xlu0 0
        %290 = vperm.xlu0 %289, %v224
        %v291 = vpop.permute.xlu0 %290
        %294 = vset.pattern.permute.xlu0 0
        %295 = vperm.xlu0 %294, %v225
        %v296 = vpop.permute.xlu0 %295
        %299 = vset.pattern.permute.xlu0 0
        %300 = vperm.xlu0 %299, %v226
        %v301 = vpop.permute.xlu0 %300
        %304 = vset.pattern.permute.xlu0 0
        %305 = vperm.xlu0 %304, %v227
        %v306 = vpop.permute.xlu0 %305
        %309 = vset.pattern.permute.xlu0 0
        %310 = vperm.xlu0 %309, %v228
        %v311 = vpop.permute.xlu0 %310
        %314 = vset.pattern.permute.xlu0 0
        %315 = vperm.xlu0 %314, %v229
        %v316 = vpop.permute.xlu0 %315
        %319 = vset.pattern.permute.xlu0 0
        %320 = vperm.xlu0 %319, %v230
        %v321 = vpop.permute.xlu0 %320
        %324 = vset.pattern.permute.xlu0 0
        %325 = vperm.xlu0 %324, %v231
        %v326 = vpop.permute.xlu0 %325
        %329 = vset.pattern.permute.xlu0 0
        %330 = vperm.xlu0 %329, %v232
        %v331 = vpop.permute.xlu0 %330
        %334 = vset.pattern.permute.xlu0 0
        %335 = vperm.xlu0 %334, %v233
        %v336 = vpop.permute.xlu0 %335
        %v338 = vmul.f32 %v247, %v291
        %v339 = vmul.f32 %v248, %v296
        %v340 = vmul.f32 %v249, %v301
        %v341 = vmul.f32 %v250, %v306
        %v342 = vmul.f32 %v251, %v311
        %v343 = vmul.f32 %v252, %v316
        %v344 = vmul.f32 %v253, %v321
        %v345 = vmul.f32 %v254, %v326
        %v346 = vmul.f32 %v255, %v331
        %v347 = vmul.f32 %v256, %v336
        %v348 = vmul.f32 %v257, %v291
        %v349 = vmul.f32 %v258, %v296
        %v350 = vmul.f32 %v259, %v301
        %v351 = vmul.f32 %v260, %v306
        %v352 = vmul.f32 %v261, %v311
        %v353 = vmul.f32 %v262, %v316
        %v354 = vmul.f32 %v263, %v321
        %v355 = vmul.f32 %v264, %v326
        %v356 = vmul.f32 %v265, %v331
        %v357 = vmul.f32 %v266, %v336
        %359 = vset.pattern.permute.xlu0 0
        %360 = vperm.xlu0 %359, %v234
        %v361 = vpop.permute.xlu0 %360
        %364 = vset.pattern.permute.xlu0 0
        %365 = vperm.xlu0 %364, %v235
        %v366 = vpop.permute.xlu0 %365
        %369 = vset.pattern.permute.xlu0 0
        %370 = vperm.xlu0 %369, %v236
        %v371 = vpop.permute.xlu0 %370
        %374 = vset.pattern.permute.xlu0 0
        %375 = vperm.xlu0 %374, %v237
        %v376 = vpop.permute.xlu0 %375
        %379 = vset.pattern.permute.xlu0 0
        %380 = vperm.xlu0 %379, %v238
        %v381 = vpop.permute.xlu0 %380
        %384 = vset.pattern.permute.xlu0 0
        %385 = vperm.xlu0 %384, %v239
        %v386 = vpop.permute.xlu0 %385
        %389 = vset.pattern.permute.xlu0 0
        %390 = vperm.xlu0 %389, %v240
        %v391 = vpop.permute.xlu0 %390
        %394 = vset.pattern.permute.xlu0 0
        %395 = vperm.xlu0 %394, %v241
        %v396 = vpop.permute.xlu0 %395
        %399 = vset.pattern.permute.xlu0 0
        %400 = vperm.xlu0 %399, %v242
        %v401 = vpop.permute.xlu0 %400
        %404 = vset.pattern.permute.xlu0 0
        %405 = vperm.xlu0 %404, %v243
        %v406 = vpop.permute.xlu0 %405
        %v408 = vadd.f32 %v338, %v361
        %v409 = vadd.f32 %v339, %v366
        %v410 = vadd.f32 %v340, %v371
        %v411 = vadd.f32 %v341, %v376
        %v412 = vadd.f32 %v342, %v381
        %v413 = vadd.f32 %v343, %v386
        %v414 = vadd.f32 %v344, %v391
        %v415 = vadd.f32 %v345, %v396
        %v416 = vadd.f32 %v346, %v401
        %v417 = vadd.f32 %v347, %v406
        %v418 = vadd.f32 %v348, %v361
        %v419 = vadd.f32 %v349, %v366
        %v420 = vadd.f32 %v350, %v371
        %v421 = vadd.f32 %v351, %v376
        %v422 = vadd.f32 %v352, %v381
        %v423 = vadd.f32 %v353, %v386
        %v424 = vadd.f32 %v354, %v391
        %v425 = vadd.f32 %v355, %v396
        %v426 = vadd.f32 %v356, %v401
        %v427 = vadd.f32 %v357, %v406
        %v428 = vmul.f32 %v268, %v291
        %v429 = vmul.f32 %v269, %v296
        %v430 = vmul.f32 %v270, %v301
        %v431 = vmul.f32 %v271, %v306
        %v432 = vmul.f32 %v272, %v311
        %v433 = vmul.f32 %v273, %v316
        %v434 = vmul.f32 %v274, %v321
        %v435 = vmul.f32 %v275, %v326
        %v436 = vmul.f32 %v276, %v331
        %v437 = vmul.f32 %v277, %v336
        %v438 = vmul.f32 %v278, %v291
        %v439 = vmul.f32 %v279, %v296
        %v440 = vmul.f32 %v280, %v301
        %v441 = vmul.f32 %v281, %v306
        %v442 = vmul.f32 %v282, %v311
        %v443 = vmul.f32 %v283, %v316
        %v444 = vmul.f32 %v284, %v321
        %v445 = vmul.f32 %v285, %v326
        %v446 = vmul.f32 %v286, %v331
        %v447 = vmul.f32 %v287, %v336
        %v448 = vadd.f32 %v428, %v361
        %v449 = vadd.f32 %v429, %v366
        %v450 = vadd.f32 %v430, %v371
        %v451 = vadd.f32 %v431, %v376
        %v452 = vadd.f32 %v432, %v381
        %v453 = vadd.f32 %v433, %v386
        %v454 = vadd.f32 %v434, %v391
        %v455 = vadd.f32 %v435, %v396
        %v456 = vadd.f32 %v436, %v401
        %v457 = vadd.f32 %v437, %v406
        %v458 = vadd.f32 %v438, %v361
        %v459 = vadd.f32 %v439, %v366
        %v460 = vadd.f32 %v440, %v371
        %v461 = vadd.f32 %v441, %v376
        %v462 = vadd.f32 %v442, %v381
        %v463 = vadd.f32 %v443, %v386
        %v464 = vadd.f32 %v444, %v391
        %v465 = vadd.f32 %v445, %v396
        %v466 = vadd.f32 %v446, %v401
        %v467 = vadd.f32 %v447, %v406
        %v468 = vmax.f32 %v408, %v448
        %v469 = vmax.f32 %v409, %v449
        %v470 = vmax.f32 %v410, %v450
        %v471 = vmax.f32 %v411, %v451
        %v472 = vmax.f32 %v412, %v452
        %v473 = vmax.f32 %v413, %v453
        %v474 = vmax.f32 %v414, %v454
        %v475 = vmax.f32 %v415, %v455
        %v476 = vmax.f32 %v416, %v456
        %v477 = vmax.f32 %v417, %v457
        %v478 = vmax.f32 %v418, %v458
        %v479 = vmax.f32 %v419, %v459
        %v480 = vmax.f32 %v420, %v460
        %v481 = vmax.f32 %v421, %v461
        %v482 = vmax.f32 %v422, %v462
        %v483 = vmax.f32 %v423, %v463
        %v484 = vmax.f32 %v424, %v464
        %v485 = vmax.f32 %v425, %v465
        %v486 = vmax.f32 %v426, %v466
        %v487 = vmax.f32 %v427, %v467
        %v488 = vmax.f32 %v468, %v478
        %v489 = vmax.f32 %v469, %v479
        %v490 = vmax.f32 %v470, %v480
        %v491 = vmax.f32 %v471, %v481
        %v492 = vmax.f32 %v472, %v482
        %v493 = vmax.f32 %v473, %v483
        %v494 = vmax.f32 %v474, %v484
        %v495 = vmax.f32 %v475, %v485
        %v496 = vmax.f32 %v476, %v486
        %v497 = vmax.f32 %v477, %v487
        %v498 = vmax.f32 %v488, 0.0
        %v499 = vmax.f32 %v489, 0.0
        %v500 = vmax.f32 %v490, 0.0
        %v501 = vmax.f32 %v491, 0.0
        %v502 = vmax.f32 %v492, 0.0
        %v503 = vmax.f32 %v493, 0.0
        %v504 = vmax.f32 %v494, 0.0
        %v505 = vmax.f32 %v495, 0.0
        %v506 = vmax.f32 %v496, 0.0
        %v507 = vmax.f32 %v497, 0.0
        %s508 = smul.u32 %s219, 80
        %s509 = scalar_lea.vmem %s217, %s508
        %vm510 = vcmask 23552
        %511 = vst.msk [vmem:[%s509] sm:$0xff] %vm510, %v498
        %512 = vst.msk [vmem:[%s509 + $0x8] sm:$0xff] %vm510, %v499
        %513 = vst.msk [vmem:[%s509 + $0x10] sm:$0xff] %vm510, %v500
        %514 = vst.msk [vmem:[%s509 + $0x18] sm:$0xff] %vm510, %v501
        %515 = vst.msk [vmem:[%s509 + $0x20] sm:$0xff] %vm510, %v502
        %516 = vst.msk [vmem:[%s509 + $0x28] sm:$0xff] %vm510, %v503
        %517 = vst.msk [vmem:[%s509 + $0x30] sm:$0xff] %vm510, %v504
        %518 = vst.msk [vmem:[%s509 + $0x38] sm:$0xff] %vm510, %v505
        %519 = vst.msk [vmem:[%s509 + $0x40] sm:$0xff] %vm510, %v506
        %520 = vst.msk [vmem:[%s509 + $0x48] sm:$0xff] %vm510, %v507
      $region41: #{net1_forward.16} parent=35 // loop_footer
        %s223 = sadd.s32 1, %s219
      $region42: #{net1_forward.16} parent=35 // loop_footer_branch
        %218 = sbr.rel target = $region38
      $region43: #{net1_forward.16} parent=35 // loop_exit
        _
      %p521 = scmp.lt.s32.totalorder %s15, 1
      %s522 = scalar_select %p521, %s15, 1
      %s523 = smul.addr %s522, 30
      %s524 = smul.addr %s523, 8
      %s525 = scalar_lea.vmem %s4, %s524
      // Predicated region
      $region44: #{net1_forward.16} parent=35 // pred_check
        %p526 = pneg %p127
      $region45: #{net1_forward.16} parent=35 // pred_check_branch
        %528 = sbr.rel (%p526) target = $region47
      $region46: #{net1_forward.16} parent=35 // pred_region
        _
      $region47: #{net1_forward.16} parent=35 // pred_fallthru
        _
    $region36: #{net1_forward.16} parent=5 // pred_fallthru
      _
    %p529 = scmp.le.s32.totalorder 2, %s10
    // Predicated region
    $region48: #{net1_forward.16} parent=5 // pred_check
      %p530 = pneg %p529
    $region49: #{net1_forward.16} parent=5 // pred_check_branch
      %532 = sbr.rel (%p530) target = $region51
    $region50: #{net1_forward.16} parent=5 // pred_region
      %s533 = ssub.s32 %s10, 2
      // Predicated region
      $region52: #{net1_forward.16} parent=50 // pred_check
        %p534 = pneg %p133
      $region53: #{net1_forward.16} parent=50 // pred_check_branch
        %536 = sbr.rel (%p534) target = $region55
      $region54: #{net1_forward.16} parent=50 // pred_region
        %p537 = scmp.lt.s32.totalorder %s16, 1
        %s538 = scalar_select %p537, %s16, 1
        %s539 = smul.addr %s538, 30
        %s540 = smul.addr %s539, 8
        %s541 = scalar_lea.vmem %s4, %s540
      $region55: #{net1_forward.16} parent=50 // pred_fallthru
        _
    $region51: #{net1_forward.16} parent=5 // pred_fallthru
      _
  $region6: #{net1_forward.16} parent=0 // loop_footer
    %s14 = sadd.s32 1, %s10
  $region7: #{net1_forward.16} parent=0 // loop_footer_branch
    %9 = sbr.rel target = $region3
  $region8: #{net1_forward.16} parent=0 // loop_exit
    _

// kernel: net1_forward.15
$region0: #{net1_forward.15}
  #allocation0 [shape = 'u32[]', space=smem, size = 0x4, offset = 0x4, fixed_abs, tag = 'smem constant byte address 0x4 - core index']
  #allocation1 [shape = 'u32[144,128]{1,0:T(1,128)}', space=vmem, size = 0x12000, scoped, tag = 'internal scratch']
  %s0 = inlined_call_operand.vmem [shape: bf16[2,2080,3], index: 0, kind: input, shape index: {}]
  %s1 = inlined_call_operand.vmem [shape: bf16[2,2080,3], index: 1, kind: input, shape index: {}]
  %s2 = inlined_call_operand.vmem [shape: bf16[80,1040], index: 2, kind: input, shape index: {}]
  %s3 = inlined_call_operand.vmem [shape: f32[80,1], index: 3, kind: input, shape index: {}]
  %s4 = inlined_call_operand.vmem [shape: f32[2,6,80,3], index: 4, kind: output, shape index: {0}]
  %s5 = inlined_call_operand.vmem [shape: f32[2,6,80,3], index: 5, kind: output, shape index: {1}]
  %s6 = inlined_call_operand.vmem [shape: f32[2,1,80,1], index: 6, kind: output, shape index: {2}]
  %s7 = inlined_call_operand.vmem [shape: f32[2,1,80,1], index: 7, kind: output, shape index: {3}]
  %8 = xla_tuple %s4, %s5, %s6, %s7
  %s9 = sld [smem:[#allocation0]]
  $region80: #{net1_forward.15} parent=0
    _
  %s11 = ssub.s32 1, %s9
  %s12 = scalar_select 0, %s11, %s9
  loop: start=0, step=1, limit=4
  $region2: #{net1_forward.15} parent=0 // loop_pre_header
    _
  $region3: #{net1_forward.15} parent=0 // loop_header
    %s14 = sphi 0, %s18
    %p15 = scmp.ge.s32.totalorder %s14, 4
    %s21 = sphi 0, %s33
    %s22 = sphi 0, %s29
    %s23 = sphi 0, %s21
    %s24 = sphi 0, %s22
    %s25 = sphi 0, %s23
    %s26 = sphi 0, %s24
    %s36 = sphi 0, %s38
    %s39 = sphi 0, %s36
    %s40 = sphi 0, %s39
    %s56 = sphi 0, %s40
    %s62 = sphi 0, %s64
    %s65 = sphi 0, %s62
    %s66 = sphi 0, %s65
    %s82 = sphi 0, %s66
    %s86 = sphi 0, %s86
    %s88 = sphi 0, %s86
    %s89 = sphi 0, %s88
    %s103 = sphi 0, %s89
    %s107 = sphi 0, %s107
    %s109 = sphi 0, %s107
    %s110 = sphi 0, %s109
    %s124 = sphi 0, %s110
    %s132 = sphi 0, %s134
    %s135 = sphi 0, %s132
    %s136 = sphi 0, %s135
    %s152 = sphi 0, %s136
    %s160 = sphi 0, %s162
    %s163 = sphi 0, %s160
    %s164 = sphi 0, %s163
    %s180 = sphi 0, %s164
    %s188 = sphi 0, %s190
    %s191 = sphi 0, %s188
    %s192 = sphi 0, %s191
    %s208 = sphi 0, %s192
    %s216 = sphi 0, %s218
    %s219 = sphi 0, %s216
    %s220 = sphi 0, %s219
    %s236 = sphi 0, %s220
  $region4: #{net1_forward.15} parent=0 // loop_header_branch
    %17 = sbr.rel (%p15) target = $region8
  $region5: #{net1_forward.15} parent=0 // loop_body
    %s19 = ssub.s32 %s14, 1
    %s20 = ssub.s32 %s14, 2
    %s27 = sadd.s32 1, %s22
    %p28 = scmp.ge.s32.totalorder %s27, 1
    %s29 = scalar_select %p28, 0, %s27
    %s30 = sadd.s32 1, %s21
    %s31 = scalar_select %p28, %s30, %s21
    %p32 = scmp.ge.s32.totalorder %s31, 2
    %s33 = scalar_select %p32, 0, %s31
    %s34 = ssub.s32 %s21, %s33
    %p35 = scmp.eq.s32.totalorder %s34, 0
    %s37 = sadd.s32 %s36, 1
    %s38 = scalar_select %p35, %s36, %s37
    %p41 = pneg %p35
    %p42 = scmp.eq.s32.totalorder %s14, 1
    %p43 = por %p41, %p42
    %p44 = scmp.ne.s32.totalorder %s36, %s39
    %p45 = scmp.eq.s32.totalorder %s14, 0
    %p46 = por %p44, %p45
    %p47 = scmp.ne.s32.totalorder %s36, %s39
    %p48 = scmp.eq.s32.totalorder %s19, 1
    %p49 = por %p47, %p48
    %p50 = scmp.ne.s32.totalorder %s39, %s40
    %p51 = scmp.eq.s32.totalorder %s19, 0
    %p52 = por %p50, %p51
    %p53 = scmp.ne.s32.totalorder %s39, %s40
    %p54 = scmp.eq.s32.totalorder %s20, 1
    %p55 = por %p53, %p54
    %p57 = scmp.ne.s32.totalorder %s40, %s56
    %p58 = scmp.eq.s32.totalorder %s20, 0
    %p59 = por %p57, %p58
    %s60 = ssub.s32 %s21, %s33
    %p61 = scmp.eq.s32.totalorder %s60, 0
    %s63 = sadd.s32 %s62, 1
    %s64 = scalar_select %p61, %s62, %s63
    %p67 = pneg %p61
    %p68 = scmp.eq.s32.totalorder %s14, 1
    %p69 = por %p67, %p68
    %p70 = scmp.ne.s32.totalorder %s62, %s65
    %p71 = scmp.eq.s32.totalorder %s14, 0
    %p72 = por %p70, %p71
    %p73 = scmp.ne.s32.totalorder %s62, %s65
    %p74 = scmp.eq.s32.totalorder %s19, 1
    %p75 = por %p73, %p74
    %p76 = scmp.ne.s32.totalorder %s65, %s66
    %p77 = scmp.eq.s32.totalorder %s19, 0
    %p78 = por %p76, %p77
    %p79 = scmp.ne.s32.totalorder %s65, %s66
    %p80 = scmp.eq.s32.totalorder %s20, 1
    %p81 = por %p79, %p80
    %p83 = scmp.ne.s32.totalorder %s66, %s82
    %p84 = scmp.eq.s32.totalorder %s20, 0
    %p85 = por %p83, %p84
    %s87 = sadd.s32 %s86, 1
    %p90 = scmp.eq.s32.totalorder %s14, 1
    %p91 = scmp.ne.s32.totalorder %s86, %s88
    %p92 = scmp.eq.s32.totalorder %s14, 0
    %p93 = por %p91, %p92
    %p94 = scmp.ne.s32.totalorder %s86, %s88
    %p95 = scmp.eq.s32.totalorder %s19, 1
    %p96 = por %p94, %p95
    %p97 = scmp.ne.s32.totalorder %s88, %s89
    %p98 = scmp.eq.s32.totalorder %s19, 0
    %p99 = por %p97, %p98
    %p100 = scmp.ne.s32.totalorder %s88, %s89
    %p101 = scmp.eq.s32.totalorder %s20, 1
    %p102 = por %p100, %p101
    %p104 = scmp.ne.s32.totalorder %s89, %s103
    %p105 = scmp.eq.s32.totalorder %s20, 0
    %p106 = por %p104, %p105
    %s108 = sadd.s32 %s107, 1
    %p111 = scmp.eq.s32.totalorder %s14, 1
    %p112 = scmp.ne.s32.totalorder %s107, %s109
    %p113 = scmp.eq.s32.totalorder %s14, 0
    %p114 = por %p112, %p113
    %p115 = scmp.ne.s32.totalorder %s107, %s109
    %p116 = scmp.eq.s32.totalorder %s19, 1
    %p117 = por %p115, %p116
    %p118 = scmp.ne.s32.totalorder %s109, %s110
    %p119 = scmp.eq.s32.totalorder %s19, 0
    %p120 = por %p118, %p119
    %p121 = scmp.ne.s32.totalorder %s109, %s110
    %p122 = scmp.eq.s32.totalorder %s20, 1
    %p123 = por %p121, %p122
    %p125 = scmp.ne.s32.totalorder %s110, %s124
    %p126 = scmp.eq.s32.totalorder %s20, 0
    %p127 = por %p125, %p126
    %s128 = ssub.s32 %s21, %s33
    %s129 = ssub.s32 %s22, %s29
    %s130 = sor.u32 %s128, %s129
    %p131 = scmp.eq.s32.totalorder %s130, 0
    %s133 = sadd.s32 %s132, 1
    %s134 = scalar_select %p131, %s132, %s133
    %p137 = pneg %p131
    %p138 = scmp.eq.s32.totalorder %s14, 1
    %p139 = por %p137, %p138
    %p140 = scmp.ne.s32.totalorder %s132, %s135
    %p141 = scmp.eq.s32.totalorder %s14, 0
    %p142 = por %p140, %p141
    %p143 = scmp.ne.s32.totalorder %s132, %s135
    %p144 = scmp.eq.s32.totalorder %s19, 1
    %p145 = por %p143, %p144
    %p146 = scmp.ne.s32.totalorder %s135, %s136
    %p147 = scmp.eq.s32.totalorder %s19, 0
    %p148 = por %p146, %p147
    %p149 = scmp.ne.s32.totalorder %s135, %s136
    %p150 = scmp.eq.s32.totalorder %s20, 1
    %p151 = por %p149, %p150
    %p153 = scmp.ne.s32.totalorder %s136, %s152
    %p154 = scmp.eq.s32.totalorder %s20, 0
    %p155 = por %p153, %p154
    %s156 = ssub.s32 %s21, %s33
    %s157 = ssub.s32 %s22, %s29
    %s158 = sor.u32 %s156, %s157
    %p159 = scmp.eq.s32.totalorder %s158, 0
    %s161 = sadd.s32 %s160, 1
    %s162 = scalar_select %p159, %s160, %s161
    %p165 = pneg %p159
    %p166 = scmp.eq.s32.totalorder %s14, 1
    %p167 = por %p165, %p166
    %p168 = scmp.ne.s32.totalorder %s160, %s163
    %p169 = scmp.eq.s32.totalorder %s14, 0
    %p170 = por %p168, %p169
    %p171 = scmp.ne.s32.totalorder %s160, %s163
    %p172 = scmp.eq.s32.totalorder %s19, 1
    %p173 = por %p171, %p172
    %p174 = scmp.ne.s32.totalorder %s163, %s164
    %p175 = scmp.eq.s32.totalorder %s19, 0
    %p176 = por %p174, %p175
    %p177 = scmp.ne.s32.totalorder %s163, %s164
    %p178 = scmp.eq.s32.totalorder %s20, 1
    %p179 = por %p177, %p178
    %p181 = scmp.ne.s32.totalorder %s164, %s180
    %p182 = scmp.eq.s32.totalorder %s20, 0
    %p183 = por %p181, %p182
    %s184 = ssub.s32 %s21, %s33
    %s185 = ssub.s32 %s22, %s29
    %s186 = sor.u32 %s184, %s185
    %p187 = scmp.eq.s32.totalorder %s186, 0
    %s189 = sadd.s32 %s188, 1
    %s190 = scalar_select %p187, %s188, %s189
    %p193 = pneg %p187
    %p194 = scmp.eq.s32.totalorder %s14, 1
    %p195 = por %p193, %p194
    %p196 = scmp.ne.s32.totalorder %s188, %s191
    %p197 = scmp.eq.s32.totalorder %s14, 0
    %p198 = por %p196, %p197
    %p199 = scmp.ne.s32.totalorder %s188, %s191
    %p200 = scmp.eq.s32.totalorder %s19, 1
    %p201 = por %p199, %p200
    %p202 = scmp.ne.s32.totalorder %s191, %s192
    %p203 = scmp.eq.s32.totalorder %s19, 0
    %p204 = por %p202, %p203
    %p205 = scmp.ne.s32.totalorder %s191, %s192
    %p206 = scmp.eq.s32.totalorder %s20, 1
    %p207 = por %p205, %p206
    %p209 = scmp.ne.s32.totalorder %s192, %s208
    %p210 = scmp.eq.s32.totalorder %s20, 0
    %p211 = por %p209, %p210
    %s212 = ssub.s32 %s21, %s33
    %s213 = ssub.s32 %s22, %s29
    %s214 = sor.u32 %s212, %s213
    %p215 = scmp.eq.s32.totalorder %s214, 0
    %s217 = sadd.s32 %s216, 1
    %s218 = scalar_select %p215, %s216, %s217
    %p221 = pneg %p215
    %p222 = scmp.eq.s32.totalorder %s14, 1
    %p223 = por %p221, %p222
    %p224 = scmp.ne.s32.totalorder %s216, %s219
    %p225 = scmp.eq.s32.totalorder %s14, 0
    %p226 = por %p224, %p225
    %p227 = scmp.ne.s32.totalorder %s216, %s219
    %p228 = scmp.eq.s32.totalorder %s19, 1
    %p229 = por %p227, %p228
    %p230 = scmp.ne.s32.totalorder %s219, %s220
    %p231 = scmp.eq.s32.totalorder %s19, 0
    %p232 = por %p230, %p231
    %p233 = scmp.ne.s32.totalorder %s219, %s220
    %p234 = scmp.eq.s32.totalorder %s20, 1
    %p235 = por %p233, %p234
    %p237 = scmp.ne.s32.totalorder %s220, %s236
    %p238 = scmp.eq.s32.totalorder %s20, 0
    %p239 = por %p237, %p238
    %p240 = scmp.le.s32.totalorder 1, %s14
    %p241 = scmp.lt.s32.totalorder %s14, 3
    %p242 = pnand %p240, %p241
    %p243 = pneg %p242
    // Predicated region
    $region9: #{net1_forward.15} parent=5 // pred_check
      _
    $region10: #{net1_forward.15} parent=5 // pred_check_branch
      %245 = sbr.rel (%p242) target = $region12
    $region11: #{net1_forward.15} parent=5 // pred_region
      %s246 = ssub.s32 %s14, 1
      // Predicated region
      $region13: #{net1_forward.15} parent=11 // pred_check
        %p247 = pneg %p99
      $region14: #{net1_forward.15} parent=11 // pred_check_branch
        %249 = sbr.rel (%p247) target = $region16
      $region15: #{net1_forward.15} parent=11 // pred_region
        _
      $region16: #{net1_forward.15} parent=11 // pred_fallthru
        _
      // Predicated region
      $region17: #{net1_forward.15} parent=11 // pred_check
        %p250 = pneg %p120
      $region18: #{net1_forward.15} parent=11 // pred_check_branch
        %252 = sbr.rel (%p250) target = $region20
      $region19: #{net1_forward.15} parent=11 // pred_region
        _
      $region20: #{net1_forward.15} parent=11 // pred_fallthru
        _
    $region12: #{net1_forward.15} parent=5 // pred_fallthru
      _
    %p253 = scmp.lt.s32.totalorder %s14, 2
    // Predicated region
    $region21: #{net1_forward.15} parent=5 // pred_check
      %p254 = pneg %p253
    $region22: #{net1_forward.15} parent=5 // pred_check_branch
      %256 = sbr.rel (%p254) target = $region24
    $region23: #{net1_forward.15} parent=5 // pred_region
      // Predicated region
      $region25: #{net1_forward.15} parent=23 // pred_check
        %p257 = pneg %p46
      $region26: #{net1_forward.15} parent=23 // pred_check_branch
        %259 = sbr.rel (%p257) target = $region28
      $region27: #{net1_forward.15} parent=23 // pred_region
        %p260 = scmp.lt.s32.totalorder %s21, 1
        %s261 = scalar_select %p260, %s21, 1
        %s262 = smul.addr %s261, 260
        %s263 = smul.addr %s262, 4
        %s264 = scalar_lea.vmem %s0, %s263
      $region28: #{net1_forward.15} parent=23 // pred_fallthru
        _
      // Predicated region
      $region29: #{net1_forward.15} parent=23 // pred_check
        %p265 = pneg %p72
      $region30: #{net1_forward.15} parent=23 // pred_check_branch
        %267 = sbr.rel (%p265) target = $region32
      $region31: #{net1_forward.15} parent=23 // pred_region
        %p268 = scmp.lt.s32.totalorder %s21, 1
        %s269 = scalar_select %p268, %s21, 1
        %s270 = smul.addr %s269, 260
        %s271 = smul.addr %s270, 4
        %s272 = scalar_lea.vmem %s1, %s271
      $region32: #{net1_forward.15} parent=23 // pred_fallthru
        _
    $region24: #{net1_forward.15} parent=5 // pred_fallthru
      _
    %p273 = scmp.le.s32.totalorder 1, %s14
    %p274 = scmp.lt.s32.totalorder %s14, 3
    %p275 = pnand %p273, %p274
    %p276 = pneg %p275
    // Predicated region
    $region33: #{net1_forward.15} parent=5 // pred_check
      _
    $region34: #{net1_forward.15} parent=5 // pred_check_branch
      %278 = sbr.rel (%p275) target = $region36
    $region35: #{net1_forward.15} parent=5 // pred_region
      %s279 = ssub.s32 %s14, 1
      %p280 = scmp.lt.s32.totalorder %s23, 1
      %s281 = scalar_select %p280, %s23, 1
      %s282 = smul.addr %s281, 260
      %s283 = smul.addr %s282, 4
      %s284 = scalar_lea.vmem %s0, %s283
      %p285 = pneg %p52
      %p286 = pneg %p49
      %p287 = scmp.lt.s32.totalorder %s23, 1
      %s288 = scalar_select %p287, %s23, 1
      %s289 = smul.addr %s288, 260
      %s290 = smul.addr %s289, 4
      %s291 = scalar_lea.vmem %s1, %s290
      %p292 = pneg %p78
      %p293 = pneg %p75
      %p294 = pneg %p99
      %p295 = pneg %p96
      %p296 = pneg %p120
      %p297 = pneg %p117
      %p298 = pneg %p148
      %p299 = pneg %p145
      %s300 = smul.u32 6, %s24
      %p301 = scmp.lt.s32.totalorder %s23, 1
      %s302 = scalar_select %p301, %s23, 1
      %p303 = scmp.lt.s32.totalorder %s300, 5
      %s304 = scalar_select %p303, %s300, 5
      %s305 = smul.addr %s304, 10
      %s306 = smul.addr %s302, 60
      %s307 = sadd.s32 %s305, %s306
      %s308 = smul.addr %s307, 8
      %s309 = scalar_lea.vmem %s4, %s308
      %p310 = pneg %p176
      %p311 = pneg %p173
      %s312 = smul.u32 6, %s24
      %p313 = scmp.lt.s32.totalorder %s23, 1
      %s314 = scalar_select %p313, %s23, 1
      %p315 = scmp.lt.s32.totalorder %s312, 5
      %s316 = scalar_select %p315, %s312, 5
      %s317 = smul.addr %s316, 10
      %s318 = smul.addr %s314, 60
      %s319 = sadd.s32 %s317, %s318
      %s320 = smul.addr %s319, 8
      %s321 = scalar_lea.vmem %s5, %s320
      %p322 = pneg %p204
      %p323 = pneg %p201
      %p324 = scmp.lt.s32.totalorder %s23, 1
      %s325 = scalar_select %p324, %s23, 1
      %p326 = scmp.lt.s32.totalorder %s24, 0
      %s327 = scalar_select %p326, %s24, 0
      %s328 = smul.addr %s327, 10
      %s329 = smul.addr %s325, 10
      %s330 = sadd.s32 %s328, %s329
      %s331 = smul.addr %s330, 8
      %s332 = scalar_lea.vmem %s6, %s331
      %p333 = pneg %p232
      %p334 = pneg %p229
      %p335 = scmp.lt.s32.totalorder %s23, 1
      %s336 = scalar_select %p335, %s23, 1
      %p337 = scmp.lt.s32.totalorder %s24, 0
      %s338 = scalar_select %p337, %s24, 0
      %s339 = smul.addr %s338, 10
      %s340 = smul.addr %s336, 10
      %s341 = sadd.s32 %s339, %s340
      %s342 = smul.addr %s341, 8
      %s343 = scalar_lea.vmem %s7, %s342
      %p344 = scmp.lt.s32.totalorder %s23, 1
      %s345 = scalar_select %p344, %s23, 1
      %s346 = smul.addr %s345, 260
      %s347 = smul.addr %s346, 4
      %s348 = scalar_lea.vmem %s0, %s347
      %p349 = scmp.lt.s32.totalorder %s23, 1
      %s350 = scalar_select %p349, %s23, 1
      %s351 = smul.addr %s350, 260
      %s352 = smul.addr %s351, 4
      %s353 = scalar_lea.vmem %s1, %s352
      %s354 = smul.u32 6, %s24
      %p355 = scmp.lt.s32.totalorder %s23, 1
      %s356 = scalar_select %p355, %s23, 1
      %p357 = scmp.lt.s32.totalorder %s354, 5
      %s358 = scalar_select %p357, %s354, 5
      %s359 = smul.addr %s358, 10
      %s360 = smul.addr %s356, 60
      %s361 = sadd.s32 %s359, %s360
      %s362 = smul.addr %s361, 8
      %s363 = scalar_lea.vmem %s4, %s362
      %s364 = smul.u32 6, %s24
      %s365 = smul.u32 6, %s24
      %p366 = scmp.lt.s32.totalorder %s23, 1
      %s367 = scalar_select %p366, %s23, 1
      %p368 = scmp.lt.s32.totalorder %s365, 5
      %s369 = scalar_select %p368, %s365, 5
      %s370 = smul.addr %s369, 10
      %s371 = smul.addr %s367, 60
      %s372 = sadd.s32 %s370, %s371
      %s373 = smul.addr %s372, 8
      %s374 = scalar_lea.vmem %s5, %s373
      %s375 = smul.u32 6, %s24
      %p376 = scmp.lt.s32.totalorder %s23, 1
      %s377 = scalar_select %p376, %s23, 1
      %p378 = scmp.lt.s32.totalorder %s24, 0
      %s379 = scalar_select %p378, %s24, 0
      %s380 = smul.addr %s379, 10
      %s381 = smul.addr %s377, 10
      %s382 = sadd.s32 %s380, %s381
      %s383 = smul.addr %s382, 8
      %s384 = scalar_lea.vmem %s6, %s383
      %p385 = scmp.lt.s32.totalorder %s23, 1
      %s386 = scalar_select %p385, %s23, 1
      %p387 = scmp.lt.s32.totalorder %s24, 0
      %s388 = scalar_select %p387, %s24, 0
      %s389 = smul.addr %s388, 10
      %s390 = smul.addr %s386, 10
      %s391 = sadd.s32 %s389, %s390
      %s392 = smul.addr %s391, 8
      %s393 = scalar_lea.vmem %s7, %s392
      loop: start=0, step=1, limit=6
      $region37: #{net1_forward.15} parent=35 // loop_pre_header
        _
      $region38: #{net1_forward.15} parent=35 // loop_header
        %s396 = sphi 0, %s400
        %p397 = scmp.ge.s32.totalorder %s396, 6
        %v401 = vphi 0.0, %v2699
        %v402 = vphi 0.0, %v2700
        %v403 = vphi 0.0, %v2701
        %v404 = vphi 0.0, %v2702
        %v405 = vphi 0.0, %v2703
        %v406 = vphi 0.0, %v2704
        %v407 = vphi 0.0, %v2705
        %v408 = vphi 0.0, %v2706
        %v409 = vphi 0.0, %v2707
        %v410 = vphi 0.0, %v2708
        %v411 = vphi 0.0, %v2799
        %v412 = vphi 0.0, %v2800
        %v413 = vphi 0.0, %v2801
        %v414 = vphi 0.0, %v2802
        %v415 = vphi 0.0, %v2803
        %v416 = vphi 0.0, %v2804
        %v417 = vphi 0.0, %v2805
        %v418 = vphi 0.0, %v2806
        %v419 = vphi 0.0, %v2807
        %v420 = vphi 0.0, %v2808
      $region39: #{net1_forward.15} parent=35 // loop_header_branch
        %399 = sbr.rel (%p397) target = $region43
      $region40: #{net1_forward.15} parent=35 // loop_body
        %v421 = vld [vmem:[%s3] sm:$0xff]
        %v422 = vld [vmem:[%s3 + $0x8] sm:$0xff]
        %v423 = vld [vmem:[%s3 + $0x10] sm:$0xff]
        %v424 = vld [vmem:[%s3 + $0x18] sm:$0xff]
        %v425 = vld [vmem:[%s3 + $0x20] sm:$0xff]
        %v426 = vld [vmem:[%s3 + $0x28] sm:$0xff]
        %v427 = vld [vmem:[%s3 + $0x30] sm:$0xff]
        %v428 = vld [vmem:[%s3 + $0x38] sm:$0xff]
        %v429 = vld [vmem:[%s3 + $0x40] sm:$0xff]
        %v430 = vld [vmem:[%s3 + $0x48] sm:$0xff]
        %s431 = smul.u32 %s24, 6
        %s432 = sadd.s32 %s431, %s396
        %s433 = smul.u32 %s432, 208
        %v434 = vld [vmem:[%s2] sm:$0xff]
        %v435 = vld [vmem:[%s2 + $0x8] sm:$0xff]
        %v436 = vld [vmem:[%s2 + $0x24] sm:$0xff]
        %v437 = vld [vmem:[%s2 + $0x2c] sm:$0xff]
        %v438 = vld [vmem:[%s2 + $0x48] sm:$0xff]
        %v439 = vld [vmem:[%s2 + $0x50] sm:$0xff]
        %v440 = vld [vmem:[%s2 + $0x6c] sm:$0xff]
        %v441 = vld [vmem:[%s2 + $0x74] sm:$0xff]
        %v442 = vld [vmem:[%s2 + $0x90] sm:$0xff]
        %v443 = vld [vmem:[%s2 + $0x98] sm:$0xff]
        %v444 = vld [vmem:[%s2 + $0xb4] sm:$0xff]
        %v445 = vld [vmem:[%s2 + $0xbc] sm:$0xff]
        %v446 = vld [vmem:[%s2 + $0xd8] sm:$0xff]
        %v447 = vld [vmem:[%s2 + $0xe0] sm:$0xff]
        %v448 = vld [vmem:[%s2 + $0xfc] sm:$0xff]
        %v449 = vld [vmem:[%s2 + $0x104] sm:$0xff]
        %v450 = vld [vmem:[%s2 + $0x120] sm:$0xff]
        %v451 = vld [vmem:[%s2 + $0x128] sm:$0xff]
        %v452 = vld [vmem:[%s2 + $0x144] sm:$0xff]
        %v453 = vld [vmem:[%s2 + $0x14c] sm:$0xff]
        %s454 = sshra.s32 %s433, 3
        %s455 = sand.u32 %s433, 7
        %s456 = smul.addr %s454, 4
        %s457 = scalar_lea.vmem %s348, %s456
        %v458 = vld [vmem:[%s457] sm:$0xf]
        %v459 = vld [vmem:[%s457 + $0x4] sm:$0xf]
        %v460 = vld [vmem:[%s457 + $0x8] sm:$0xf]
        %v461 = vld [vmem:[%s457 + $0xc] sm:$0xf]
        %v462 = vld [vmem:[%s457 + $0x10] sm:$0xf]
        %v463 = vld [vmem:[%s457 + $0x14] sm:$0xf]
        %v464 = vld [vmem:[%s457 + $0x18] sm:$0xf]
        %v465 = vld [vmem:[%s457 + $0x1c] sm:$0xf]
        %v466 = vld [vmem:[%s457 + $0x20] sm:$0xf]
        %v467 = vld [vmem:[%s457 + $0x24] sm:$0xf]
        %v468 = vld [vmem:[%s457 + $0x28] sm:$0xf]
        %v469 = vld [vmem:[%s457 + $0x2c] sm:$0xf]
        %v470 = vld [vmem:[%s457 + $0x30] sm:$0xf]
        %v471 = vld [vmem:[%s457 + $0x34] sm:$0xf]
        %v472 = vld [vmem:[%s457 + $0x38] sm:$0xf]
        %v473 = vld [vmem:[%s457 + $0x3c] sm:$0xf]
        %v474 = vld [vmem:[%s457 + $0x40] sm:$0xf]
        %v475 = vld [vmem:[%s457 + $0x44] sm:$0xf]
        %v476 = vld [vmem:[%s457 + $0x48] sm:$0xf]
        %v477 = vld [vmem:[%s457 + $0x4c] sm:$0xf]
        %v478 = vld [vmem:[%s457 + $0x50] sm:$0xf]
        %v479 = vld [vmem:[%s457 + $0x54] sm:$0xf]
        %v480 = vld [vmem:[%s457 + $0x58] sm:$0xf]
        %v481 = vld [vmem:[%s457 + $0x5c] sm:$0xf]
        %v482 = vld [vmem:[%s457 + $0x60] sm:$0xf]
        %v483 = vld [vmem:[%s457 + $0x64] sm:$0xf]
        %v484 = vld [vmem:[%s457 + $0x68] sm:$0xf]
        %v485 = vld [vmem:[%s457 + $0x6c] sm:$0xf]
        %v486 = vld [vmem:[%s457 + $0x70] sm:$0xf]
        %v487 = vld [vmem:[%s457 + $0x74] sm:$0xf]
        %v488 = vld [vmem:[%s457 + $0x78] sm:$0xf]
        %v489 = vld [vmem:[%s457 + $0x7c] sm:$0xf]
        %v490 = vld [vmem:[%s457 + $0x80] sm:$0xf]
        %v491 = vld [vmem:[%s457 + $0x84] sm:$0xf]
        %v492 = vld [vmem:[%s457 + $0x88] sm:$0xf]
        %v493 = vld [vmem:[%s457 + $0x8c] sm:$0xf]
        %v494 = vld [vmem:[%s457 + $0x90] sm:$0xf]
        %v495 = vld [vmem:[%s457 + $0x94] sm:$0xf]
        %v496 = vld [vmem:[%s457 + $0x98] sm:$0xf]
        %v497 = vld [vmem:[%s457 + $0x9c] sm:$0xf]
        %v498 = vld [vmem:[%s457 + $0xa0] sm:$0xf]
        %v499 = vld [vmem:[%s457 + $0xa4] sm:$0xf]
        %v500 = vld [vmem:[%s457 + $0xa8] sm:$0xf]
        %v501 = vld [vmem:[%s457 + $0xac] sm:$0xf]
        %v502 = vld [vmem:[%s457 + $0xb0] sm:$0xf]
        %v503 = vld [vmem:[%s457 + $0xb4] sm:$0xf]
        %v504 = vld [vmem:[%s457 + $0xb8] sm:$0xf]
        %v505 = vld [vmem:[%s457 + $0xbc] sm:$0xf]
        %v506 = vld [vmem:[%s457 + $0xc0] sm:$0xf]
        %v507 = vld [vmem:[%s457 + $0xc4] sm:$0xf]
        %v508 = vld [vmem:[%s457 + $0xc8] sm:$0xf]
        %v509 = vld [vmem:[%s457 + $0xcc] sm:$0xf]
        %v510 = vld [vmem:[%s457 + $0xd0] sm:$0xf]
        %v511 = vld [vmem:[%s457 + $0xd4] sm:$0xf]
        %v512 = vld [vmem:[%s457 + $0xd8] sm:$0xf]
        %v513 = vld [vmem:[%s457 + $0xdc] sm:$0xf]
        %v514 = vld [vmem:[%s457 + $0xe0] sm:$0xf]
        %v515 = vld [vmem:[%s457 + $0xe4] sm:$0xf]
        %v516 = vld [vmem:[%s457 + $0xe8] sm:$0xf]
        %v517 = vld [vmem:[%s457 + $0xec] sm:$0xf]
        %v518 = vld [vmem:[%s457 + $0xf0] sm:$0xf]
        %v519 = vld [vmem:[%s457 + $0xf4] sm:$0xf]
        %v520 = vld [vmem:[%s457 + $0xf8] sm:$0xf]
        %v521 = vld [vmem:[%s457 + $0xfc] sm:$0xf]
        %s522 = smul.addr %s454, 4
        %s523 = scalar_lea.vmem %s353, %s522
        %v524 = vld [vmem:[%s523] sm:$0xf]
        %v525 = vld [vmem:[%s523 + $0x4] sm:$0xf]
        %v526 = vld [vmem:[%s523 + $0x8] sm:$0xf]
        %v527 = vld [vmem:[%s523 + $0xc] sm:$0xf]
        %v528 = vld [vmem:[%s523 + $0x10] sm:$0xf]
        %v529 = vld [vmem:[%s523 + $0x14] sm:$0xf]
        %v530 = vld [vmem:[%s523 + $0x18] sm:$0xf]
        %v531 = vld [vmem:[%s523 + $0x1c] sm:$0xf]
        %v532 = vld [vmem:[%s523 + $0x20] sm:$0xf]
        %v533 = vld [vmem:[%s523 + $0x24] sm:$0xf]
        %v534 = vld [vmem:[%s523 + $0x28] sm:$0xf]
        %v535 = vld [vmem:[%s523 + $0x2c] sm:$0xf]
        %v536 = vld [vmem:[%s523 + $0x30] sm:$0xf]
        %v537 = vld [vmem:[%s523 + $0x34] sm:$0xf]
        %v538 = vld [vmem:[%s523 + $0x38] sm:$0xf]
        %v539 = vld [vmem:[%s523 + $0x3c] sm:$0xf]
        %v540 = vld [vmem:[%s523 + $0x40] sm:$0xf]
        %v541 = vld [vmem:[%s523 + $0x44] sm:$0xf]
        %v542 = vld [vmem:[%s523 + $0x48] sm:$0xf]
        %v543 = vld [vmem:[%s523 + $0x4c] sm:$0xf]
        %v544 = vld [vmem:[%s523 + $0x50] sm:$0xf]
        %v545 = vld [vmem:[%s523 + $0x54] sm:$0xf]
        %v546 = vld [vmem:[%s523 + $0x58] sm:$0xf]
        %v547 = vld [vmem:[%s523 + $0x5c] sm:$0xf]
        %v548 = vld [vmem:[%s523 + $0x60] sm:$0xf]
        %v549 = vld [vmem:[%s523 + $0x64] sm:$0xf]
        %v550 = vld [vmem:[%s523 + $0x68] sm:$0xf]
        %v551 = vld [vmem:[%s523 + $0x6c] sm:$0xf]
        %v552 = vld [vmem:[%s523 + $0x70] sm:$0xf]
        %v553 = vld [vmem:[%s523 + $0x74] sm:$0xf]
        %v554 = vld [vmem:[%s523 + $0x78] sm:$0xf]
        %v555 = vld [vmem:[%s523 + $0x7c] sm:$0xf]
        %v556 = vld [vmem:[%s523 + $0x80] sm:$0xf]
        %v557 = vld [vmem:[%s523 + $0x84] sm:$0xf]
        %v558 = vld [vmem:[%s523 + $0x88] sm:$0xf]
        %v559 = vld [vmem:[%s523 + $0x8c] sm:$0xf]
        %v560 = vld [vmem:[%s523 + $0x90] sm:$0xf]
        %v561 = vld [vmem:[%s523 + $0x94] sm:$0xf]
        %v562 = vld [vmem:[%s523 + $0x98] sm:$0xf]
        %v563 = vld [vmem:[%s523 + $0x9c] sm:$0xf]
        %v564 = vld [vmem:[%s523 + $0xa0] sm:$0xf]
        %v565 = vld [vmem:[%s523 + $0xa4] sm:$0xf]
        %v566 = vld [vmem:[%s523 + $0xa8] sm:$0xf]
        %v567 = vld [vmem:[%s523 + $0xac] sm:$0xf]
        %v568 = vld [vmem:[%s523 + $0xb0] sm:$0xf]
        %v569 = vld [vmem:[%s523 + $0xb4] sm:$0xf]
        %v570 = vld [vmem:[%s523 + $0xb8] sm:$0xf]
        %v571 = vld [vmem:[%s523 + $0xbc] sm:$0xf]
        %v572 = vld [vmem:[%s523 + $0xc0] sm:$0xf]
        %v573 = vld [vmem:[%s523 + $0xc4] sm:$0xf]
        %v574 = vld [vmem:[%s523 + $0xc8] sm:$0xf]
        %v575 = vld [vmem:[%s523 + $0xcc] sm:$0xf]
        %v576 = vld [vmem:[%s523 + $0xd0] sm:$0xf]
        %v577 = vld [vmem:[%s523 + $0xd4] sm:$0xf]
        %v578 = vld [vmem:[%s523 + $0xd8] sm:$0xf]
        %v579 = vld [vmem:[%s523 + $0xdc] sm:$0xf]
        %v580 = vld [vmem:[%s523 + $0xe0] sm:$0xf]
        %v581 = vld [vmem:[%s523 + $0xe4] sm:$0xf]
        %v582 = vld [vmem:[%s523 + $0xe8] sm:$0xf]
        %v583 = vld [vmem:[%s523 + $0xec] sm:$0xf]
        %v584 = vld [vmem:[%s523 + $0xf0] sm:$0xf]
        %v585 = vld [vmem:[%s523 + $0xf4] sm:$0xf]
        %v586 = vld [vmem:[%s523 + $0xf8] sm:$0xf]
        %v587 = vld [vmem:[%s523 + $0xfc] sm:$0xf]
        %v588 = vld [vmem:[%s2 + $0x10] sm:$0xff]
        %v589 = vld [vmem:[%s2 + $0x18] sm:$0xff]
        %v590 = vld [vmem:[%s2 + $0x34] sm:$0xff]
        %v591 = vld [vmem:[%s2 + $0x3c] sm:$0xff]
        %v592 = vld [vmem:[%s2 + $0x58] sm:$0xff]
        %v593 = vld [vmem:[%s2 + $0x60] sm:$0xff]
        %v594 = vld [vmem:[%s2 + $0x7c] sm:$0xff]
        %v595 = vld [vmem:[%s2 + $0x84] sm:$0xff]
        %v596 = vld [vmem:[%s2 + $0xa0] sm:$0xff]
        %v597 = vld [vmem:[%s2 + $0xa8] sm:$0xff]
        %v598 = vld [vmem:[%s2 + $0xc4] sm:$0xff]
        %v599 = vld [vmem:[%s2 + $0xcc] sm:$0xff]
        %v600 = vld [vmem:[%s2 + $0xe8] sm:$0xff]
        %v601 = vld [vmem:[%s2 + $0xf0] sm:$0xff]
        %v602 = vld [vmem:[%s2 + $0x10c] sm:$0xff]
        %v603 = vld [vmem:[%s2 + $0x114] sm:$0xff]
        %v604 = vld [vmem:[%s2 + $0x130] sm:$0xff]
        %v605 = vld [vmem:[%s2 + $0x138] sm:$0xff]
        %v606 = vld [vmem:[%s2 + $0x154] sm:$0xff]
        %v607 = vld [vmem:[%s2 + $0x15c] sm:$0xff]
        %s608 = sadd.s32 %s433, 512
        %s609 = sshra.s32 %s608, 3
        %s610 = sand.u32 %s608, 7
        %s611 = smul.addr %s609, 4
        %s612 = scalar_lea.vmem %s348, %s611
        %v613 = vld [vmem:[%s612] sm:$0xf]
        %v614 = vld [vmem:[%s612 + $0x4] sm:$0xf]
        %v615 = vld [vmem:[%s612 + $0x8] sm:$0xf]
        %v616 = vld [vmem:[%s612 + $0xc] sm:$0xf]
        %v617 = vld [vmem:[%s612 + $0x10] sm:$0xf]
        %v618 = vld [vmem:[%s612 + $0x14] sm:$0xf]
        %v619 = vld [vmem:[%s612 + $0x18] sm:$0xf]
        %v620 = vld [vmem:[%s612 + $0x1c] sm:$0xf]
        %v621 = vld [vmem:[%s612 + $0x20] sm:$0xf]
        %v622 = vld [vmem:[%s612 + $0x24] sm:$0xf]
        %v623 = vld [vmem:[%s612 + $0x28] sm:$0xf]
        %v624 = vld [vmem:[%s612 + $0x2c] sm:$0xf]
        %v625 = vld [vmem:[%s612 + $0x30] sm:$0xf]
        %v626 = vld [vmem:[%s612 + $0x34] sm:$0xf]
        %v627 = vld [vmem:[%s612 + $0x38] sm:$0xf]
        %v628 = vld [vmem:[%s612 + $0x3c] sm:$0xf]
        %v629 = vld [vmem:[%s612 + $0x40] sm:$0xf]
        %v630 = vld [vmem:[%s612 + $0x44] sm:$0xf]
        %v631 = vld [vmem:[%s612 + $0x48] sm:$0xf]
        %v632 = vld [vmem:[%s612 + $0x4c] sm:$0xf]
        %v633 = vld [vmem:[%s612 + $0x50] sm:$0xf]
        %v634 = vld [vmem:[%s612 + $0x54] sm:$0xf]
        %v635 = vld [vmem:[%s612 + $0x58] sm:$0xf]
        %v636 = vld [vmem:[%s612 + $0x5c] sm:$0xf]
        %v637 = vld [vmem:[%s612 + $0x60] sm:$0xf]
        %v638 = vld [vmem:[%s612 + $0x64] sm:$0xf]
        %v639 = vld [vmem:[%s612 + $0x68] sm:$0xf]
        %v640 = vld [vmem:[%s612 + $0x6c] sm:$0xf]
        %v641 = vld [vmem:[%s612 + $0x70] sm:$0xf]
        %v642 = vld [vmem:[%s612 + $0x74] sm:$0xf]
        %v643 = vld [vmem:[%s612 + $0x78] sm:$0xf]
        %v644 = vld [vmem:[%s612 + $0x7c] sm:$0xf]
        %v645 = vld [vmem:[%s612 + $0x80] sm:$0xf]
        %v646 = vld [vmem:[%s612 + $0x84] sm:$0xf]
        %v647 = vld [vmem:[%s612 + $0x88] sm:$0xf]
        %v648 = vld [vmem:[%s612 + $0x8c] sm:$0xf]
        %v649 = vld [vmem:[%s612 + $0x90] sm:$0xf]
        %v650 = vld [vmem:[%s612 + $0x94] sm:$0xf]
        %v651 = vld [vmem:[%s612 + $0x98] sm:$0xf]
        %v652 = vld [vmem:[%s612 + $0x9c] sm:$0xf]
        %v653 = vld [vmem:[%s612 + $0xa0] sm:$0xf]
        %v654 = vld [vmem:[%s612 + $0xa4] sm:$0xf]
        %v655 = vld [vmem:[%s612 + $0xa8] sm:$0xf]
        %v656 = vld [vmem:[%s612 + $0xac] sm:$0xf]
        %v657 = vld [vmem:[%s612 + $0xb0] sm:$0xf]
        %v658 = vld [vmem:[%s612 + $0xb4] sm:$0xf]
        %v659 = vld [vmem:[%s612 + $0xb8] sm:$0xf]
        %v660 = vld [vmem:[%s612 + $0xbc] sm:$0xf]
        %v661 = vld [vmem:[%s612 + $0xc0] sm:$0xf]
        %v662 = vld [vmem:[%s612 + $0xc4] sm:$0xf]
        %v663 = vld [vmem:[%s612 + $0xc8] sm:$0xf]
        %v664 = vld [vmem:[%s612 + $0xcc] sm:$0xf]
        %v665 = vld [vmem:[%s612 + $0xd0] sm:$0xf]
        %v666 = vld [vmem:[%s612 + $0xd4] sm:$0xf]
        %v667 = vld [vmem:[%s612 + $0xd8] sm:$0xf]
        %v668 = vld [vmem:[%s612 + $0xdc] sm:$0xf]
        %v669 = vld [vmem:[%s612 + $0xe0] sm:$0xf]
        %v670 = vld [vmem:[%s612 + $0xe4] sm:$0xf]
        %v671 = vld [vmem:[%s612 + $0xe8] sm:$0xf]
        %v672 = vld [vmem:[%s612 + $0xec] sm:$0xf]
        %v673 = vld [vmem:[%s612 + $0xf0] sm:$0xf]
        %v674 = vld [vmem:[%s612 + $0xf4] sm:$0xf]
        %v675 = vld [vmem:[%s612 + $0xf8] sm:$0xf]
        %v676 = vld [vmem:[%s612 + $0xfc] sm:$0xf]
        %s677 = smul.addr %s609, 4
        %s678 = scalar_lea.vmem %s353, %s677
        %v679 = vld [vmem:[%s678] sm:$0xf]
        %v680 = vld [vmem:[%s678 + $0x4] sm:$0xf]
        %v681 = vld [vmem:[%s678 + $0x8] sm:$0xf]
        %v682 = vld [vmem:[%s678 + $0xc] sm:$0xf]
        %v683 = vld [vmem:[%s678 + $0x10] sm:$0xf]
        %v684 = vld [vmem:[%s678 + $0x14] sm:$0xf]
        %v685 = vld [vmem:[%s678 + $0x18] sm:$0xf]
        %v686 = vld [vmem:[%s678 + $0x1c] sm:$0xf]
        %v687 = vld [vmem:[%s678 + $0x20] sm:$0xf]
        %v688 = vld [vmem:[%s678 + $0x24] sm:$0xf]
        %v689 = vld [vmem:[%s678 + $0x28] sm:$0xf]
        %v690 = vld [vmem:[%s678 + $0x2c] sm:$0xf]
        %v691 = vld [vmem:[%s678 + $0x30] sm:$0xf]
        %v692 = vld [vmem:[%s678 + $0x34] sm:$0xf]
        %v693 = vld [vmem:[%s678 + $0x38] sm:$0xf]
        %v694 = vld [vmem:[%s678 + $0x3c] sm:$0xf]
        %v695 = vld [vmem:[%s678 + $0x40] sm:$0xf]
        %v696 = vld [vmem:[%s678 + $0x44] sm:$0xf]
        %v697 = vld [vmem:[%s678 + $0x48] sm:$0xf]
        %v698 = vld [vmem:[%s678 + $0x4c] sm:$0xf]
        %v699 = vld [vmem:[%s678 + $0x50] sm:$0xf]
        %v700 = vld [vmem:[%s678 + $0x54] sm:$0xf]
        %v701 = vld [vmem:[%s678 + $0x58] sm:$0xf]
        %v702 = vld [vmem:[%s678 + $0x5c] sm:$0xf]
        %v703 = vld [vmem:[%s678 + $0x60] sm:$0xf]
        %v704 = vld [vmem:[%s678 + $0x64] sm:$0xf]
        %v705 = vld [vmem:[%s678 + $0x68] sm:$0xf]
        %v706 = vld [vmem:[%s678 + $0x6c] sm:$0xf]
        %v707 = vld [vmem:[%s678 + $0x70] sm:$0xf]
        %v708 = vld [vmem:[%s678 + $0x74] sm:$0xf]
        %v709 = vld [vmem:[%s678 + $0x78] sm:$0xf]
        %v710 = vld [vmem:[%s678 + $0x7c] sm:$0xf]
        %v711 = vld [vmem:[%s678 + $0x80] sm:$0xf]
        %v712 = vld [vmem:[%s678 + $0x84] sm:$0xf]
        %v713 = vld [vmem:[%s678 + $0x88] sm:$0xf]
        %v714 = vld [vmem:[%s678 + $0x8c] sm:$0xf]
        %v715 = vld [vmem:[%s678 + $0x90] sm:$0xf]
        %v716 = vld [vmem:[%s678 + $0x94] sm:$0xf]
        %v717 = vld [vmem:[%s678 + $0x98] sm:$0xf]
        %v718 = vld [vmem:[%s678 + $0x9c] sm:$0xf]
        %v719 = vld [vmem:[%s678 + $0xa0] sm:$0xf]
        %v720 = vld [vmem:[%s678 + $0xa4] sm:$0xf]
        %v721 = vld [vmem:[%s678 + $0xa8] sm:$0xf]
        %v722 = vld [vmem:[%s678 + $0xac] sm:$0xf]
        %v723 = vld [vmem:[%s678 + $0xb0] sm:$0xf]
        %v724 = vld [vmem:[%s678 + $0xb4] sm:$0xf]
        %v725 = vld [vmem:[%s678 + $0xb8] sm:$0xf]
        %v726 = vld [vmem:[%s678 + $0xbc] sm:$0xf]
        %v727 = vld [vmem:[%s678 + $0xc0] sm:$0xf]
        %v728 = vld [vmem:[%s678 + $0xc4] sm:$0xf]
        %v729 = vld [vmem:[%s678 + $0xc8] sm:$0xf]
        %v730 = vld [vmem:[%s678 + $0xcc] sm:$0xf]
        %v731 = vld [vmem:[%s678 + $0xd0] sm:$0xf]
        %v732 = vld [vmem:[%s678 + $0xd4] sm:$0xf]
        %v733 = vld [vmem:[%s678 + $0xd8] sm:$0xf]
        %v734 = vld [vmem:[%s678 + $0xdc] sm:$0xf]
        %v735 = vld [vmem:[%s678 + $0xe0] sm:$0xf]
        %v736 = vld [vmem:[%s678 + $0xe4] sm:$0xf]
        %v737 = vld [vmem:[%s678 + $0xe8] sm:$0xf]
        %v738 = vld [vmem:[%s678 + $0xec] sm:$0xf]
        %v739 = vld [vmem:[%s678 + $0xf0] sm:$0xf]
        %v740 = vld [vmem:[%s678 + $0xf4] sm:$0xf]
        %v741 = vld [vmem:[%s678 + $0xf8] sm:$0xf]
        %v742 = vld [vmem:[%s678 + $0xfc] sm:$0xf]
        %v763 = vunpack.c.l.b16 %v588
        %v764 = vunpack.c.h.b16 %v588
        %v765 = vunpack.c.l.b16 %v589
        %v766 = vunpack.c.h.b16 %v589
        %v767 = vunpack.c.l.b16 %v590
        %v768 = vunpack.c.h.b16 %v590
        %v769 = vunpack.c.l.b16 %v591
        %v770 = vunpack.c.h.b16 %v591
        %v771 = vunpack.c.l.b16 %v592
        %v772 = vunpack.c.h.b16 %v592
        %v773 = vunpack.c.l.b16 %v593
        %v774 = vunpack.c.h.b16 %v593
        %v775 = vunpack.c.l.b16 %v594
        %v776 = vunpack.c.h.b16 %v594
        %v777 = vunpack.c.l.b16 %v595
        %v778 = vunpack.c.h.b16 %v595
        %v779 = vunpack.c.l.b16 %v596
        %v780 = vunpack.c.h.b16 %v596
        %v781 = vunpack.c.l.b16 %v597
        %v782 = vunpack.c.h.b16 %v597
        %v783 = vunpack.c.l.b16 %v598
        %v784 = vunpack.c.h.b16 %v598
        %v785 = vunpack.c.l.b16 %v599
        %v786 = vunpack.c.h.b16 %v599
        %v787 = vunpack.c.l.b16 %v600
        %v788 = vunpack.c.h.b16 %v600
        %v789 = vunpack.c.l.b16 %v601
        %v790 = vunpack.c.h.b16 %v601
        %v791 = vunpack.c.l.b16 %v602
        %v792 = vunpack.c.h.b16 %v602
        %v793 = vunpack.c.l.b16 %v603
        %v794 = vunpack.c.h.b16 %v603
        %v795 = vunpack.c.l.b16 %v604
        %v796 = vunpack.c.h.b16 %v604
        %v797 = vunpack.c.l.b16 %v605
        %v798 = vunpack.c.h.b16 %v605
        %v799 = vunpack.c.l.b16 %v606
        %v800 = vunpack.c.h.b16 %v606
        %v801 = vunpack.c.l.b16 %v607
        %v802 = vunpack.c.h.b16 %v607
        %v803 = vpack.c.b16 %v767, %v763
        %v804 = vpack.c.b16 %v768, %v764
        %v805 = vpack.c.b16 %v769, %v765
        %v806 = vpack.c.b16 %v770, %v766
        %v807 = vpack.c.b16 %v775, %v771
        %v808 = vpack.c.b16 %v776, %v772
        %v809 = vpack.c.b16 %v777, %v773
        %v810 = vpack.c.b16 %v778, %v774
        %v811 = vpack.c.b16 %v783, %v779
        %v812 = vpack.c.b16 %v784, %v780
        %v813 = vpack.c.b16 %v785, %v781
        %v814 = vpack.c.b16 %v786, %v782
        %v815 = vpack.c.b16 %v791, %v787
        %v816 = vpack.c.b16 %v792, %v788
        %v817 = vpack.c.b16 %v793, %v789
        %v818 = vpack.c.b16 %v794, %v790
        %v819 = vpack.c.b16 %v799, %v795
        %v820 = vpack.c.b16 %v800, %v796
        %v821 = vpack.c.b16 %v801, %v797
        %v822 = vpack.c.b16 %v802, %v798
        %v907 = vunpack.c.l.b16 %v613
        %v908 = vunpack.c.l.b16 %v614
        %v909 = vunpack.c.l.b16 %v615
        %v910 = vunpack.c.l.b16 %v616
        %v911 = vunpack.c.l.b16 %v617
        %v912 = vunpack.c.l.b16 %v618
        %v913 = vunpack.c.l.b16 %v619
        %v914 = vunpack.c.l.b16 %v620
        %v915 = vunpack.c.l.b16 %v621
        %v916 = vunpack.c.l.b16 %v622
        %v917 = vunpack.c.l.b16 %v623
        %v918 = vunpack.c.l.b16 %v624
        %v919 = vunpack.c.l.b16 %v625
        %v920 = vunpack.c.l.b16 %v626
        %v921 = vunpack.c.l.b16 %v627
        %v922 = vunpack.c.l.b16 %v628
        %v923 = vunpack.c.l.b16 %v629
        %v924 = vunpack.c.l.b16 %v630
        %v925 = vunpack.c.l.b16 %v631
        %v926 = vunpack.c.l.b16 %v632
        %v927 = vunpack.c.l.b16 %v633
        %v928 = vunpack.c.l.b16 %v634
        %v929 = vunpack.c.l.b16 %v635
        %v930 = vunpack.c.l.b16 %v636
        %v931 = vunpack.c.l.b16 %v637
        %v932 = vunpack.c.l.b16 %v638
        %v933 = vunpack.c.l.b16 %v639
        %v934 = vunpack.c.l.b16 %v640
        %v935 = vunpack.c.l.b16 %v641
        %v936 = vunpack.c.l.b16 %v642
        %v937 = vunpack.c.l.b16 %v643
        %v938 = vunpack.c.l.b16 %v644
        %v939 = vunpack.c.l.b16 %v645
        %v940 = vunpack.c.l.b16 %v646
        %v941 = vunpack.c.l.b16 %v647
        %v942 = vunpack.c.l.b16 %v648
        %v943 = vunpack.c.l.b16 %v649
        %v944 = vunpack.c.l.b16 %v650
        %v945 = vunpack.c.l.b16 %v651
        %v946 = vunpack.c.l.b16 %v652
        %v947 = vunpack.c.l.b16 %v653
        %v948 = vunpack.c.l.b16 %v654
        %v949 = vunpack.c.l.b16 %v655
        %v950 = vunpack.c.l.b16 %v656
        %v951 = vunpack.c.l.b16 %v657
        %v952 = vunpack.c.l.b16 %v658
        %v953 = vunpack.c.l.b16 %v659
        %v954 = vunpack.c.l.b16 %v660
        %v955 = vunpack.c.l.b16 %v661
        %v956 = vunpack.c.l.b16 %v662
        %v957 = vunpack.c.l.b16 %v663
        %v958 = vunpack.c.l.b16 %v664
        %v959 = vunpack.c.l.b16 %v665
        %v960 = vunpack.c.l.b16 %v666
        %v961 = vunpack.c.l.b16 %v667
        %v962 = vunpack.c.l.b16 %v668
        %v963 = vunpack.c.l.b16 %v669
        %v964 = vunpack.c.l.b16 %v670
        %v965 = vunpack.c.l.b16 %v671
        %v966 = vunpack.c.l.b16 %v672
        %v967 = vunpack.c.l.b16 %v673
        %v968 = vunpack.c.l.b16 %v674
        %v969 = vunpack.c.l.b16 %v675
        %v970 = vunpack.c.l.b16 %v676
        %v971 = vpack.c.b16 %v908, %v907
        %v972 = vpack.c.b16 %v910, %v909
        %v973 = vpack.c.b16 %v912, %v911
        %v974 = vpack.c.b16 %v914, %v913
        %v975 = vpack.c.b16 %v916, %v915
        %v976 = vpack.c.b16 %v918, %v917
        %v977 = vpack.c.b16 %v920, %v919
        %v978 = vpack.c.b16 %v922, %v921
        %v979 = vpack.c.b16 %v924, %v923
        %v980 = vpack.c.b16 %v926, %v925
        %v981 = vpack.c.b16 %v928, %v927
        %v982 = vpack.c.b16 %v930, %v929
        %v983 = vpack.c.b16 %v932, %v931
        %v984 = vpack.c.b16 %v934, %v933
        %v985 = vpack.c.b16 %v936, %v935
        %v986 = vpack.c.b16 %v938, %v937
        %v987 = vpack.c.b16 %v940, %v939
        %v988 = vpack.c.b16 %v942, %v941
        %v989 = vpack.c.b16 %v944, %v943
        %v990 = vpack.c.b16 %v946, %v945
        %v991 = vpack.c.b16 %v948, %v947
        %v992 = vpack.c.b16 %v950, %v949
        %v993 = vpack.c.b16 %v952, %v951
        %v994 = vpack.c.b16 %v954, %v953
        %v995 = vpack.c.b16 %v956, %v955
        %v996 = vpack.c.b16 %v958, %v957
        %v997 = vpack.c.b16 %v960, %v959
        %v998 = vpack.c.b16 %v962, %v961
        %v999 = vpack.c.b16 %v964, %v963
        %v1000 = vpack.c.b16 %v966, %v965
        %v1001 = vpack.c.b16 %v968, %v967
        %v1002 = vpack.c.b16 %v970, %v969
        %1035 = vmatprep.subr.bf16.mxu0 0
        %1036 = vmatpush1.bf16.msra.mxu0 %v971
        %1037 = vmatprep.subr.bf16.mxu0 0
        %1038 = vmatpush1.bf16.msra.mxu0 %v972
        %1039 = vmatprep.subr.bf16.mxu0 0
        %1040 = vmatpush1.bf16.msra.mxu0 %v973
        %1041 = vmatprep.subr.bf16.mxu0 0
        %1042 = vmatpush1.bf16.msra.mxu0 %v974
        %1043 = vmatprep.subr.bf16.mxu0 0
        %1044 = vmatpush1.bf16.msra.mxu0 %v975
        %1045 = vmatprep.subr.bf16.mxu0 0
        %1046 = vmatpush1.bf16.msra.mxu0 %v976
        %1047 = vmatprep.subr.bf16.mxu0 0
        %1048 = vmatpush1.bf16.msra.mxu0 %v977
        %1049 = vmatprep.subr.bf16.mxu0 0
        %1050 = vmatpush1.bf16.msra.mxu0 %v978
        %1051 = vmatprep.subr.bf16.mxu0 0
        %1052 = vmatpush1.bf16.msra.mxu0 %v979
        %1053 = vmatprep.subr.bf16.mxu0 0
        %1054 = vmatpush1.bf16.msra.mxu0 %v980
        %1055 = vmatprep.subr.bf16.mxu0 0
        %1056 = vmatpush1.bf16.msra.mxu0 %v981
        %1057 = vmatprep.subr.bf16.mxu0 0
        %1058 = vmatpush1.bf16.msra.mxu0 %v982
        %1059 = vmatprep.subr.bf16.mxu0 0
        %1060 = vmatpush1.bf16.msra.mxu0 %v983
        %1061 = vmatprep.subr.bf16.mxu0 0
        %1062 = vmatpush1.bf16.msra.mxu0 %v984
        %1063 = vmatprep.subr.bf16.mxu0 0
        %1064 = vmatpush1.bf16.msra.mxu0 %v985
        %1065 = vmatprep.subr.bf16.mxu0 0
        %1066 = vmatpush1.bf16.msra.mxu0 %v986
        %1067 = vmatprep.mubr.bf16.mxu0 %v804
        %1068 = vmatmul.mubr.bf16.gmra.mrb[0].mxu0 %v803
        %v1069 = vpop.f32.mrb[0].mxu0
        %v1070 = vadd.f32 0.0, %v1069
        %v1071 = vpop.f32.mrb[0].mxu0
        %v1072 = vpop.f32.mrb[0].mxu0
        %v1073 = vadd.f32 0.0, %v1072
        %v1074 = vpop.f32.mrb[0].mxu0
        %1075 = vmatprep.mubr.bf16.mxu0 %v808
        %1076 = vmatmul.mubr.bf16.gmra.mrb[0].mxu0 %v807
        %v1077 = vpop.f32.mrb[0].mxu0
        %v1078 = vadd.f32 0.0, %v1077
        %v1079 = vpop.f32.mrb[0].mxu0
        %v1080 = vpop.f32.mrb[0].mxu0
        %v1081 = vadd.f32 0.0, %v1080
        %v1082 = vpop.f32.mrb[0].mxu0
        %1083 = vmatprep.mubr.bf16.mxu0 %v812
        %1084 = vmatmul.mubr.bf16.gmra.mrb[0].mxu0 %v811
        %v1085 = vpop.f32.mrb[0].mxu0
        %v1086 = vadd.f32 0.0, %v1085
        %v1087 = vpop.f32.mrb[0].mxu0
        %v1088 = vpop.f32.mrb[0].mxu0
        %v1089 = vadd.f32 0.0, %v1088
        %v1090 = vpop.f32.mrb[0].mxu0
        %1091 = vmatprep.mubr.bf16.mxu0 %v816
        %1092 = vmatmul.mubr.bf16.gmra.mrb[0].mxu0 %v815
        %v1093 = vpop.f32.mrb[0].mxu0
        %v1094 = vadd.f32 0.0, %v1093
        %v1095 = vpop.f32.mrb[0].mxu0
        %v1096 = vpop.f32.mrb[0].mxu0
        %v1097 = vadd.f32 0.0, %v1096
        %v1098 = vpop.f32.mrb[0].mxu0
        %1099 = vmatprep.mubr.bf16.mxu0 %v820
        %1100 = vmatmul.mubr.bf16.gmra.mrb[0].mxu0 %v819
        %v1101 = vpop.f32.mrb[0].mxu0
        %v1102 = vadd.f32 0.0, %v1101
        %v1103 = vpop.f32.mrb[0].mxu0
        %v1104 = vpop.f32.mrb[0].mxu0
        %v1105 = vadd.f32 0.0, %v1104
        %v1106 = vpop.f32.mrb[0].mxu0
        %1107 = vdwg.mxu0
        %1108 = vmatprep.subr.bf16.mxu0 0
        %1109 = vmatpush1.bf16.msra.mxu0 %v987
        %1110 = vmatprep.subr.bf16.mxu0 0
        %1111 = vmatpush1.bf16.msra.mxu0 %v988
        %1112 = vmatprep.subr.bf16.mxu0 0
        %1113 = vmatpush1.bf16.msra.mxu0 %v989
        %1114 = vmatprep.subr.bf16.mxu0 0
        %1115 = vmatpush1.bf16.msra.mxu0 %v990
        %1116 = vmatprep.subr.bf16.mxu0 0
        %1117 = vmatpush1.bf16.msra.mxu0 %v991
        %1118 = vmatprep.subr.bf16.mxu0 0
        %1119 = vmatpush1.bf16.msra.mxu0 %v992
        %1120 = vmatprep.subr.bf16.mxu0 0
        %1121 = vmatpush1.bf16.msra.mxu0 %v993
        %1122 = vmatprep.subr.bf16.mxu0 0
        %1123 = vmatpush1.bf16.msra.mxu0 %v994
        %1124 = vmatprep.subr.bf16.mxu0 0
        %1125 = vmatpush1.bf16.msra.mxu0 %v995
        %1126 = vmatprep.subr.bf16.mxu0 0
        %1127 = vmatpush1.bf16.msra.mxu0 %v996
        %1128 = vmatprep.subr.bf16.mxu0 0
        %1129 = vmatpush1.bf16.msra.mxu0 %v997
        %1130 = vmatprep.subr.bf16.mxu0 0
        %1131 = vmatpush1.bf16.msra.mxu0 %v998
        %1132 = vmatprep.subr.bf16.mxu0 0
        %1133 = vmatpush1.bf16.msra.mxu0 %v999
        %1134 = vmatprep.subr.bf16.mxu0 0
        %1135 = vmatpush1.bf16.msra.mxu0 %v1000
        %1136 = vmatprep.subr.bf16.mxu0 0
        %1137 = vmatpush1.bf16.msra.mxu0 %v1001
        %1138 = vmatprep.subr.bf16.mxu0 0
        %1139 = vmatpush1.bf16.msra.mxu0 %v1002
        %1140 = vmatprep.mubr.bf16.mxu0 %v806
        %1141 = vmatmul.mubr.bf16.gmra.mrb[0].mxu0 %v805
        %v1142 = vpop.f32.mrb[0].mxu0
        %v1143 = vadd.f32 %v1070, %v1142
        %v1144 = vpop.f32.mrb[0].mxu0
        %v1145 = vpop.f32.mrb[0].mxu0
        %v1146 = vadd.f32 %v1073, %v1145
        %v1147 = vpop.f32.mrb[0].mxu0
        %1148 = vmatprep.mubr.bf16.mxu0 %v810
        %1149 = vmatmul.mubr.bf16.gmra.mrb[0].mxu0 %v809
        %v1150 = vpop.f32.mrb[0].mxu0
        %v1151 = vadd.f32 %v1078, %v1150
        %v1152 = vpop.f32.mrb[0].mxu0
        %v1153 = vpop.f32.mrb[0].mxu0
        %v1154 = vadd.f32 %v1081, %v1153
        %v1155 = vpop.f32.mrb[0].mxu0
        %1156 = vmatprep.mubr.bf16.mxu0 %v814
        %1157 = vmatmul.mubr.bf16.gmra.mrb[0].mxu0 %v813
        %v1158 = vpop.f32.mrb[0].mxu0
        %v1159 = vadd.f32 %v1086, %v1158
        %v1160 = vpop.f32.mrb[0].mxu0
        %v1161 = vpop.f32.mrb[0].mxu0
        %v1162 = vadd.f32 %v1089, %v1161
        %v1163 = vpop.f32.mrb[0].mxu0
        %1164 = vmatprep.mubr.bf16.mxu0 %v818
        %1165 = vmatmul.mubr.bf16.gmra.mrb[0].mxu0 %v817
        %v1166 = vpop.f32.mrb[0].mxu0
        %v1167 = vadd.f32 %v1094, %v1166
        %v1168 = vpop.f32.mrb[0].mxu0
        %v1169 = vpop.f32.mrb[0].mxu0
        %v1170 = vadd.f32 %v1097, %v1169
        %v1171 = vpop.f32.mrb[0].mxu0
        %1172 = vmatprep.mubr.bf16.mxu0 %v822
        %1173 = vmatmul.mubr.bf16.gmra.mrb[0].mxu0 %v821
        %v1174 = vpop.f32.mrb[0].mxu0
        %v1175 = vadd.f32 %v1102, %v1174
        %v1176 = vpop.f32.mrb[0].mxu0
        %v1177 = vpop.f32.mrb[0].mxu0
        %v1178 = vadd.f32 %v1105, %v1177
        %v1179 = vpop.f32.mrb[0].mxu0
        %1180 = vdwg.mxu0
        %v1201 = vunpack.c.l.b16 %v434
        %v1202 = vunpack.c.h.b16 %v434
        %v1203 = vunpack.c.l.b16 %v435
        %v1204 = vunpack.c.h.b16 %v435
        %v1205 = vunpack.c.l.b16 %v436
        %v1206 = vunpack.c.h.b16 %v436
        %v1207 = vunpack.c.l.b16 %v437
        %v1208 = vunpack.c.h.b16 %v437
        %v1209 = vunpack.c.l.b16 %v438
        %v1210 = vunpack.c.h.b16 %v438
        %v1211 = vunpack.c.l.b16 %v439
        %v1212 = vunpack.c.h.b16 %v439
        %v1213 = vunpack.c.l.b16 %v440
        %v1214 = vunpack.c.h.b16 %v440
        %v1215 = vunpack.c.l.b16 %v441
        %v1216 = vunpack.c.h.b16 %v441
        %v1217 = vunpack.c.l.b16 %v442
        %v1218 = vunpack.c.h.b16 %v442
        %v1219 = vunpack.c.l.b16 %v443
        %v1220 = vunpack.c.h.b16 %v443
        %v1221 = vunpack.c.l.b16 %v444
        %v1222 = vunpack.c.h.b16 %v444
        %v1223 = vunpack.c.l.b16 %v445
        %v1224 = vunpack.c.h.b16 %v445
        %v1225 = vunpack.c.l.b16 %v446
        %v1226 = vunpack.c.h.b16 %v446
        %v1227 = vunpack.c.l.b16 %v447
        %v1228 = vunpack.c.h.b16 %v447
        %v1229 = vunpack.c.l.b16 %v448
        %v1230 = vunpack.c.h.b16 %v448
        %v1231 = vunpack.c.l.b16 %v449
        %v1232 = vunpack.c.h.b16 %v449
        %v1233 = vunpack.c.l.b16 %v450
        %v1234 = vunpack.c.h.b16 %v450
        %v1235 = vunpack.c.l.b16 %v451
        %v1236 = vunpack.c.h.b16 %v451
        %v1237 = vunpack.c.l.b16 %v452
        %v1238 = vunpack.c.h.b16 %v452
        %v1239 = vunpack.c.l.b16 %v453
        %v1240 = vunpack.c.h.b16 %v453
        %v1241 = vpack.c.b16 %v1205, %v1201
        %v1242 = vpack.c.b16 %v1206, %v1202
        %v1243 = vpack.c.b16 %v1207, %v1203
        %v1244 = vpack.c.b16 %v1208, %v1204
        %v1245 = vpack.c.b16 %v1213, %v1209
        %v1246 = vpack.c.b16 %v1214, %v1210
        %v1247 = vpack.c.b16 %v1215, %v1211
        %v1248 = vpack.c.b16 %v1216, %v1212
        %v1249 = vpack.c.b16 %v1221, %v1217
        %v1250 = vpack.c.b16 %v1222, %v1218
        %v1251 = vpack.c.b16 %v1223, %v1219
        %v1252 = vpack.c.b16 %v1224, %v1220
        %v1253 = vpack.c.b16 %v1229, %v1225
        %v1254 = vpack.c.b16 %v1230, %v1226
        %v1255 = vpack.c.b16 %v1231, %v1227
        %v1256 = vpack.c.b16 %v1232, %v1228
        %v1257 = vpack.c.b16 %v1237, %v1233
        %v1258 = vpack.c.b16 %v1238, %v1234
        %v1259 = vpack.c.b16 %v1239, %v1235
        %v1260 = vpack.c.b16 %v1240, %v1236
        %v1345 = vunpack.c.l.b16 %v458
        %v1346 = vunpack.c.l.b16 %v459
        %v1347 = vunpack.c.l.b16 %v460
        %v1348 = vunpack.c.l.b16 %v461
        %v1349 = vunpack.c.l.b16 %v462
        %v1350 = vunpack.c.l.b16 %v463
        %v1351 = vunpack.c.l.b16 %v464
        %v1352 = vunpack.c.l.b16 %v465
        %v1353 = vunpack.c.l.b16 %v466
        %v1354 = vunpack.c.l.b16 %v467
        %v1355 = vunpack.c.l.b16 %v468
        %v1356 = vunpack.c.l.b16 %v469
        %v1357 = vunpack.c.l.b16 %v470
        %v1358 = vunpack.c.l.b16 %v471
        %v1359 = vunpack.c.l.b16 %v472
        %v1360 = vunpack.c.l.b16 %v473
        %v1361 = vunpack.c.l.b16 %v474
        %v1362 = vunpack.c.l.b16 %v475
        %v1363 = vunpack.c.l.b16 %v476
        %v1364 = vunpack.c.l.b16 %v477
        %v1365 = vunpack.c.l.b16 %v478
        %v1366 = vunpack.c.l.b16 %v479
        %v1367 = vunpack.c.l.b16 %v480
        %v1368 = vunpack.c.l.b16 %v481
        %v1369 = vunpack.c.l.b16 %v482
        %v1370 = vunpack.c.l.b16 %v483
        %v1371 = vunpack.c.l.b16 %v484
        %v1372 = vunpack.c.l.b16 %v485
        %v1373 = vunpack.c.l.b16 %v486
        %v1374 = vunpack.c.l.b16 %v487
        %v1375 = vunpack.c.l.b16 %v488
        %v1376 = vunpack.c.l.b16 %v489
        %v1377 = vunpack.c.l.b16 %v490
        %v1378 = vunpack.c.l.b16 %v491
        %v1379 = vunpack.c.l.b16 %v492
        %v1380 = vunpack.c.l.b16 %v493
        %v1381 = vunpack.c.l.b16 %v494
        %v1382 = vunpack.c.l.b16 %v495
        %v1383 = vunpack.c.l.b16 %v496
        %v1384 = vunpack.c.l.b16 %v497
        %v1385 = vunpack.c.l.b16 %v498
        %v1386 = vunpack.c.l.b16 %v499
        %v1387 = vunpack.c.l.b16 %v500
        %v1388 = vunpack.c.l.b16 %v501
        %v1389 = vunpack.c.l.b16 %v502
        %v1390 = vunpack.c.l.b16 %v503
        %v1391 = vunpack.c.l.b16 %v504
        %v1392 = vunpack.c.l.b16 %v505
        %v1393 = vunpack.c.l.b16 %v506
        %v1394 = vunpack.c.l.b16 %v507
        %v1395 = vunpack.c.l.b16 %v508
        %v1396 = vunpack.c.l.b16 %v509
        %v1397 = vunpack.c.l.b16 %v510
        %v1398 = vunpack.c.l.b16 %v511
        %v1399 = vunpack.c.l.b16 %v512
        %v1400 = vunpack.c.l.b16 %v513
        %v1401 = vunpack.c.l.b16 %v514
        %v1402 = vunpack.c.l.b16 %v515
        %v1403 = vunpack.c.l.b16 %v516
        %v1404 = vunpack.c.l.b16 %v517
        %v1405 = vunpack.c.l.b16 %v518
        %v1406 = vunpack.c.l.b16 %v519
        %v1407 = vunpack.c.l.b16 %v520
        %v1408 = vunpack.c.l.b16 %v521
        %v1409 = vpack.c.b16 %v1346, %v1345
        %v1410 = vpack.c.b16 %v1348, %v1347
        %v1411 = vpack.c.b16 %v1350, %v1349
        %v1412 = vpack.c.b16 %v1352, %v1351
        %v1413 = vpack.c.b16 %v1354, %v1353
        %v1414 = vpack.c.b16 %v1356, %v1355
        %v1415 = vpack.c.b16 %v1358, %v1357
        %v1416 = vpack.c.b16 %v1360, %v1359
        %v1417 = vpack.c.b16 %v1362, %v1361
        %v1418 = vpack.c.b16 %v1364, %v1363
        %v1419 = vpack.c.b16 %v1366, %v1365
        %v1420 = vpack.c.b16 %v1368, %v1367
        %v1421 = vpack.c.b16 %v1370, %v1369
        %v1422 = vpack.c.b16 %v1372, %v1371
        %v1423 = vpack.c.b16 %v1374, %v1373
        %v1424 = vpack.c.b16 %v1376, %v1375
        %v1425 = vpack.c.b16 %v1378, %v1377
        %v1426 = vpack.c.b16 %v1380, %v1379
        %v1427 = vpack.c.b16 %v1382, %v1381
        %v1428 = vpack.c.b16 %v1384, %v1383
        %v1429 = vpack.c.b16 %v1386, %v1385
        %v1430 = vpack.c.b16 %v1388, %v1387
        %v1431 = vpack.c.b16 %v1390, %v1389
        %v1432 = vpack.c.b16 %v1392, %v1391
        %v1433 = vpack.c.b16 %v1394, %v1393
        %v1434 = vpack.c.b16 %v1396, %v1395
        %v1435 = vpack.c.b16 %v1398, %v1397
        %v1436 = vpack.c.b16 %v1400, %v1399
        %v1437 = vpack.c.b16 %v1402, %v1401
        %v1438 = vpack.c.b16 %v1404, %v1403
        %v1439 = vpack.c.b16 %v1406, %v1405
        %v1440 = vpack.c.b16 %v1408, %v1407
        %1473 = vmatprep.subr.bf16.mxu0 0
        %1474 = vmatpush1.bf16.msra.mxu0 %v1409
        %1475 = vmatprep.subr.bf16.mxu0 0
        %1476 = vmatpush1.bf16.msra.mxu0 %v1410
        %1477 = vmatprep.subr.bf16.mxu0 0
        %1478 = vmatpush1.bf16.msra.mxu0 %v1411
        %1479 = vmatprep.subr.bf16.mxu0 0
        %1480 = vmatpush1.bf16.msra.mxu0 %v1412
        %1481 = vmatprep.subr.bf16.mxu0 0
        %1482 = vmatpush1.bf16.msra.mxu0 %v1413
        %1483 = vmatprep.subr.bf16.mxu0 0
        %1484 = vmatpush1.bf16.msra.mxu0 %v1414
        %1485 = vmatprep.subr.bf16.mxu0 0
        %1486 = vmatpush1.bf16.msra.mxu0 %v1415
        %1487 = vmatprep.subr.bf16.mxu0 0
        %1488 = vmatpush1.bf16.msra.mxu0 %v1416
        %1489 = vmatprep.subr.bf16.mxu0 0
        %1490 = vmatpush1.bf16.msra.mxu0 %v1417
        %1491 = vmatprep.subr.bf16.mxu0 0
        %1492 = vmatpush1.bf16.msra.mxu0 %v1418
        %1493 = vmatprep.subr.bf16.mxu0 0
        %1494 = vmatpush1.bf16.msra.mxu0 %v1419
        %1495 = vmatprep.subr.bf16.mxu0 0
        %1496 = vmatpush1.bf16.msra.mxu0 %v1420
        %1497 = vmatprep.subr.bf16.mxu0 0
        %1498 = vmatpush1.bf16.msra.mxu0 %v1421
        %1499 = vmatprep.subr.bf16.mxu0 0
        %1500 = vmatpush1.bf16.msra.mxu0 %v1422
        %1501 = vmatprep.subr.bf16.mxu0 0
        %1502 = vmatpush1.bf16.msra.mxu0 %v1423
        %1503 = vmatprep.subr.bf16.mxu0 0
        %1504 = vmatpush1.bf16.msra.mxu0 %v1424
        %1505 = vmatprep.mubr.bf16.mxu0 %v1242
        %1506 = vmatmul.mubr.bf16.gmra.mrb[0].mxu0 %v1241
        %v1507 = vpop.f32.mrb[0].mxu0
        %v1508 = vadd.f32 %v1143, %v1507
        %v1509 = vpop.f32.mrb[0].mxu0
        %v1510 = vpop.f32.mrb[0].mxu0
        %v1511 = vadd.f32 %v1146, %v1510
        %v1512 = vpop.f32.mrb[0].mxu0
        %1513 = vmatprep.mubr.bf16.mxu0 %v1246
        %1514 = vmatmul.mubr.bf16.gmra.mrb[0].mxu0 %v1245
        %v1515 = vpop.f32.mrb[0].mxu0
        %v1516 = vadd.f32 %v1151, %v1515
        %v1517 = vpop.f32.mrb[0].mxu0
        %v1518 = vpop.f32.mrb[0].mxu0
        %v1519 = vadd.f32 %v1154, %v1518
        %v1520 = vpop.f32.mrb[0].mxu0
        %1521 = vmatprep.mubr.bf16.mxu0 %v1250
        %1522 = vmatmul.mubr.bf16.gmra.mrb[0].mxu0 %v1249
        %v1523 = vpop.f32.mrb[0].mxu0
        %v1524 = vadd.f32 %v1159, %v1523
        %v1525 = vpop.f32.mrb[0].mxu0
        %v1526 = vpop.f32.mrb[0].mxu0
        %v1527 = vadd.f32 %v1162, %v1526
        %v1528 = vpop.f32.mrb[0].mxu0
        %1529 = vmatprep.mubr.bf16.mxu0 %v1254
        %1530 = vmatmul.mubr.bf16.gmra.mrb[0].mxu0 %v1253
        %v1531 = vpop.f32.mrb[0].mxu0
        %v1532 = vadd.f32 %v1167, %v1531
        %v1533 = vpop.f32.mrb[0].mxu0
        %v1534 = vpop.f32.mrb[0].mxu0
        %v1535 = vadd.f32 %v1170, %v1534
        %v1536 = vpop.f32.mrb[0].mxu0
        %1537 = vmatprep.mubr.bf16.mxu0 %v1258
        %1538 = vmatmul.mubr.bf16.gmra.mrb[0].mxu0 %v1257
        %v1539 = vpop.f32.mrb[0].mxu0
        %v1540 = vadd.f32 %v1175, %v1539
        %v1541 = vpop.f32.mrb[0].mxu0
        %v1542 = vpop.f32.mrb[0].mxu0
        %v1543 = vadd.f32 %v1178, %v1542
        %v1544 = vpop.f32.mrb[0].mxu0
        %1545 = vdwg.mxu0
        %1546 = vmatprep.subr.bf16.mxu0 0
        %1547 = vmatpush1.bf16.msra.mxu0 %v1425
        %1548 = vmatprep.subr.bf16.mxu0 0
        %1549 = vmatpush1.bf16.msra.mxu0 %v1426
        %1550 = vmatprep.subr.bf16.mxu0 0
        %1551 = vmatpush1.bf16.msra.mxu0 %v1427
        %1552 = vmatprep.subr.bf16.mxu0 0
        %1553 = vmatpush1.bf16.msra.mxu0 %v1428
        %1554 = vmatprep.subr.bf16.mxu0 0
        %1555 = vmatpush1.bf16.msra.mxu0 %v1429
        %1556 = vmatprep.subr.bf16.mxu0 0
        %1557 = vmatpush1.bf16.msra.mxu0 %v1430
        %1558 = vmatprep.subr.bf16.mxu0 0
        %1559 = vmatpush1.bf16.msra.mxu0 %v1431
        %1560 = vmatprep.subr.bf16.mxu0 0
        %1561 = vmatpush1.bf16.msra.mxu0 %v1432
        %1562 = vmatprep.subr.bf16.mxu0 0
        %1563 = vmatpush1.bf16.msra.mxu0 %v1433
        %1564 = vmatprep.subr.bf16.mxu0 0
        %1565 = vmatpush1.bf16.msra.mxu0 %v1434
        %1566 = vmatprep.subr.bf16.mxu0 0
        %1567 = vmatpush1.bf16.msra.mxu0 %v1435
        %1568 = vmatprep.subr.bf16.mxu0 0
        %1569 = vmatpush1.bf16.msra.mxu0 %v1436
        %1570 = vmatprep.subr.bf16.mxu0 0
        %1571 = vmatpush1.bf16.msra.mxu0 %v1437
        %1572 = vmatprep.subr.bf16.mxu0 0
        %1573 = vmatpush1.bf16.msra.mxu0 %v1438
        %1574 = vmatprep.subr.bf16.mxu0 0
        %1575 = vmatpush1.bf16.msra.mxu0 %v1439
        %1576 = vmatprep.subr.bf16.mxu0 0
        %1577 = vmatpush1.bf16.msra.mxu0 %v1440
        %1578 = vmatprep.mubr.bf16.mxu0 %v1244
        %1579 = vmatmul.mubr.bf16.gmra.mrb[0].mxu0 %v1243
        %v1580 = vpop.f32.mrb[0].mxu0
        %v1581 = vadd.f32 %v1508, %v1580
        %v1582 = vpop.f32.mrb[0].mxu0
        %v1583 = vpop.f32.mrb[0].mxu0
        %v1584 = vadd.f32 %v1511, %v1583
        %v1585 = vpop.f32.mrb[0].mxu0
        %1586 = vmatprep.mubr.bf16.mxu0 %v1248
        %1587 = vmatmul.mubr.bf16.gmra.mrb[0].mxu0 %v1247
        %v1588 = vpop.f32.mrb[0].mxu0
        %v1589 = vadd.f32 %v1516, %v1588
        %v1590 = vpop.f32.mrb[0].mxu0
        %v1591 = vpop.f32.mrb[0].mxu0
        %v1592 = vadd.f32 %v1519, %v1591
        %v1593 = vpop.f32.mrb[0].mxu0
        %1594 = vmatprep.mubr.bf16.mxu0 %v1252
        %1595 = vmatmul.mubr.bf16.gmra.mrb[0].mxu0 %v1251
        %v1596 = vpop.f32.mrb[0].mxu0
        %v1597 = vadd.f32 %v1524, %v1596
        %v1598 = vpop.f32.mrb[0].mxu0
        %v1599 = vpop.f32.mrb[0].mxu0
        %v1600 = vadd.f32 %v1527, %v1599
        %v1601 = vpop.f32.mrb[0].mxu0
        %1602 = vmatprep.mubr.bf16.mxu0 %v1256
        %1603 = vmatmul.mubr.bf16.gmra.mrb[0].mxu0 %v1255
        %v1604 = vpop.f32.mrb[0].mxu0
        %v1605 = vadd.f32 %v1532, %v1604
        %v1606 = vpop.f32.mrb[0].mxu0
        %v1607 = vpop.f32.mrb[0].mxu0
        %v1608 = vadd.f32 %v1535, %v1607
        %v1609 = vpop.f32.mrb[0].mxu0
        %1610 = vmatprep.mubr.bf16.mxu0 %v1260
        %1611 = vmatmul.mubr.bf16.gmra.mrb[0].mxu0 %v1259
        %v1612 = vpop.f32.mrb[0].mxu0
        %v1613 = vadd.f32 %v1540, %v1612
        %v1614 = vpop.f32.mrb[0].mxu0
        %v1615 = vpop.f32.mrb[0].mxu0
        %v1616 = vadd.f32 %v1543, %v1615
        %v1617 = vpop.f32.mrb[0].mxu0
        %1618 = vdwg.mxu0
        %v1683 = vunpack.c.l.b16 %v679
        %v1684 = vunpack.c.l.b16 %v680
        %v1685 = vunpack.c.l.b16 %v681
        %v1686 = vunpack.c.l.b16 %v682
        %v1687 = vunpack.c.l.b16 %v683
        %v1688 = vunpack.c.l.b16 %v684
        %v1689 = vunpack.c.l.b16 %v685
        %v1690 = vunpack.c.l.b16 %v686
        %v1691 = vunpack.c.l.b16 %v687
        %v1692 = vunpack.c.l.b16 %v688
        %v1693 = vunpack.c.l.b16 %v689
        %v1694 = vunpack.c.l.b16 %v690
        %v1695 = vunpack.c.l.b16 %v691
        %v1696 = vunpack.c.l.b16 %v692
        %v1697 = vunpack.c.l.b16 %v693
        %v1698 = vunpack.c.l.b16 %v694
        %v1699 = vunpack.c.l.b16 %v695
        %v1700 = vunpack.c.l.b16 %v696
        %v1701 = vunpack.c.l.b16 %v697
        %v1702 = vunpack.c.l.b16 %v698
        %v1703 = vunpack.c.l.b16 %v699
        %v1704 = vunpack.c.l.b16 %v700
        %v1705 = vunpack.c.l.b16 %v701
        %v1706 = vunpack.c.l.b16 %v702
        %v1707 = vunpack.c.l.b16 %v703
        %v1708 = vunpack.c.l.b16 %v704
        %v1709 = vunpack.c.l.b16 %v705
        %v1710 = vunpack.c.l.b16 %v706
        %v1711 = vunpack.c.l.b16 %v707
        %v1712 = vunpack.c.l.b16 %v708
        %v1713 = vunpack.c.l.b16 %v709
        %v1714 = vunpack.c.l.b16 %v710
        %v1715 = vunpack.c.l.b16 %v711
        %v1716 = vunpack.c.l.b16 %v712
        %v1717 = vunpack.c.l.b16 %v713
        %v1718 = vunpack.c.l.b16 %v714
        %v1719 = vunpack.c.l.b16 %v715
        %v1720 = vunpack.c.l.b16 %v716
        %v1721 = vunpack.c.l.b16 %v717
        %v1722 = vunpack.c.l.b16 %v718
        %v1723 = vunpack.c.l.b16 %v719
        %v1724 = vunpack.c.l.b16 %v720
        %v1725 = vunpack.c.l.b16 %v721
        %v1726 = vunpack.c.l.b16 %v722
        %v1727 = vunpack.c.l.b16 %v723
        %v1728 = vunpack.c.l.b16 %v724
        %v1729 = vunpack.c.l.b16 %v725
        %v1730 = vunpack.c.l.b16 %v726
        %v1731 = vunpack.c.l.b16 %v727
        %v1732 = vunpack.c.l.b16 %v728
        %v1733 = vunpack.c.l.b16 %v729
        %v1734 = vunpack.c.l.b16 %v730
        %v1735 = vunpack.c.l.b16 %v731
        %v1736 = vunpack.c.l.b16 %v732
        %v1737 = vunpack.c.l.b16 %v733
        %v1738 = vunpack.c.l.b16 %v734
        %v1739 = vunpack.c.l.b16 %v735
        %v1740 = vunpack.c.l.b16 %v736
        %v1741 = vunpack.c.l.b16 %v737
        %v1742 = vunpack.c.l.b16 %v738
        %v1743 = vunpack.c.l.b16 %v739
        %v1744 = vunpack.c.l.b16 %v740
        %v1745 = vunpack.c.l.b16 %v741
        %v1746 = vunpack.c.l.b16 %v742
        %v1747 = vpack.c.b16 %v1684, %v1683
        %v1748 = vpack.c.b16 %v1686, %v1685
        %v1749 = vpack.c.b16 %v1688, %v1687
        %v1750 = vpack.c.b16 %v1690, %v1689
        %v1751 = vpack.c.b16 %v1692, %v1691
        %v1752 = vpack.c.b16 %v1694, %v1693
        %v1753 = vpack.c.b16 %v1696, %v1695
        %v1754 = vpack.c.b16 %v1698, %v1697
        %v1755 = vpack.c.b16 %v1700, %v1699
        %v1756 = vpack.c.b16 %v1702, %v1701
        %v1757 = vpack.c.b16 %v1704, %v1703
        %v1758 = vpack.c.b16 %v1706, %v1705
        %v1759 = vpack.c.b16 %v1708, %v1707
        %v1760 = vpack.c.b16 %v1710, %v1709
        %v1761 = vpack.c.b16 %v1712, %v1711
        %v1762 = vpack.c.b16 %v1714, %v1713
        %v1763 = vpack.c.b16 %v1716, %v1715
        %v1764 = vpack.c.b16 %v1718, %v1717
        %v1765 = vpack.c.b16 %v1720, %v1719
        %v1766 = vpack.c.b16 %v1722, %v1721
        %v1767 = vpack.c.b16 %v1724, %v1723
        %v1768 = vpack.c.b16 %v1726, %v1725
        %v1769 = vpack.c.b16 %v1728, %v1727
        %v1770 = vpack.c.b16 %v1730, %v1729
        %v1771 = vpack.c.b16 %v1732, %v1731
        %v1772 = vpack.c.b16 %v1734, %v1733
        %v1773 = vpack.c.b16 %v1736, %v1735
        %v1774 = vpack.c.b16 %v1738, %v1737
        %v1775 = vpack.c.b16 %v1740, %v1739
        %v1776 = vpack.c.b16 %v1742, %v1741
        %v1777 = vpack.c.b16 %v1744, %v1743
        %v1778 = vpack.c.b16 %v1746, %v1745
        %1811 = vmatprep.subr.bf16.mxu0 0
        %1812 = vmatpush1.bf16.msra.mxu0 %v1747
        %1813 = vmatprep.subr.bf16.mxu0 0
        %1814 = vmatpush1.bf16.msra.mxu0 %v1748
        %1815 = vmatprep.subr.bf16.mxu0 0
        %1816 = vmatpush1.bf16.msra.mxu0 %v1749
        %1817 = vmatprep.subr.bf16.mxu0 0
        %1818 = vmatpush1.bf16.msra.mxu0 %v1750
        %1819 = vmatprep.subr.bf16.mxu0 0
        %1820 = vmatpush1.bf16.msra.mxu0 %v1751
        %1821 = vmatprep.subr.bf16.mxu0 0
        %1822 = vmatpush1.bf16.msra.mxu0 %v1752
        %1823 = vmatprep.subr.bf16.mxu0 0
        %1824 = vmatpush1.bf16.msra.mxu0 %v1753
        %1825 = vmatprep.subr.bf16.mxu0 0
        %1826 = vmatpush1.bf16.msra.mxu0 %v1754
        %1827 = vmatprep.subr.bf16.mxu0 0
        %1828 = vmatpush1.bf16.msra.mxu0 %v1755
        %1829 = vmatprep.subr.bf16.mxu0 0
        %1830 = vmatpush1.bf16.msra.mxu0 %v1756
        %1831 = vmatprep.subr.bf16.mxu0 0
        %1832 = vmatpush1.bf16.msra.mxu0 %v1757
        %1833 = vmatprep.subr.bf16.mxu0 0
        %1834 = vmatpush1.bf16.msra.mxu0 %v1758
        %1835 = vmatprep.subr.bf16.mxu0 0
        %1836 = vmatpush1.bf16.msra.mxu0 %v1759
        %1837 = vmatprep.subr.bf16.mxu0 0
        %1838 = vmatpush1.bf16.msra.mxu0 %v1760
        %1839 = vmatprep.subr.bf16.mxu0 0
        %1840 = vmatpush1.bf16.msra.mxu0 %v1761
        %1841 = vmatprep.subr.bf16.mxu0 0
        %1842 = vmatpush1.bf16.msra.mxu0 %v1762
        %1843 = vmatprep.mubr.bf16.mxu0 %v804
        %1844 = vmatmul.mubr.bf16.gmra.mrb[0].mxu0 %v803
        %v1845 = vpop.f32.mrb[0].mxu0
        %v1846 = vadd.f32 0.0, %v1845
        %v1847 = vpop.f32.mrb[0].mxu0
        %v1848 = vpop.f32.mrb[0].mxu0
        %v1849 = vadd.f32 0.0, %v1848
        %v1850 = vpop.f32.mrb[0].mxu0
        %1851 = vmatprep.mubr.bf16.mxu0 %v808
        %1852 = vmatmul.mubr.bf16.gmra.mrb[0].mxu0 %v807
        %v1853 = vpop.f32.mrb[0].mxu0
        %v1854 = vadd.f32 0.0, %v1853
        %v1855 = vpop.f32.mrb[0].mxu0
        %v1856 = vpop.f32.mrb[0].mxu0
        %v1857 = vadd.f32 0.0, %v1856
        %v1858 = vpop.f32.mrb[0].mxu0
        %1859 = vmatprep.mubr.bf16.mxu0 %v812
        %1860 = vmatmul.mubr.bf16.gmra.mrb[0].mxu0 %v811
        %v1861 = vpop.f32.mrb[0].mxu0
        %v1862 = vadd.f32 0.0, %v1861
        %v1863 = vpop.f32.mrb[0].mxu0
        %v1864 = vpop.f32.mrb[0].mxu0
        %v1865 = vadd.f32 0.0, %v1864
        %v1866 = vpop.f32.mrb[0].mxu0
        %1867 = vmatprep.mubr.bf16.mxu0 %v816
        %1868 = vmatmul.mubr.bf16.gmra.mrb[0].mxu0 %v815
        %v1869 = vpop.f32.mrb[0].mxu0
        %v1870 = vadd.f32 0.0, %v1869
        %v1871 = vpop.f32.mrb[0].mxu0
        %v1872 = vpop.f32.mrb[0].mxu0
        %v1873 = vadd.f32 0.0, %v1872
        %v1874 = vpop.f32.mrb[0].mxu0
        %1875 = vmatprep.mubr.bf16.mxu0 %v820
        %1876 = vmatmul.mubr.bf16.gmra.mrb[0].mxu0 %v819
        %v1877 = vpop.f32.mrb[0].mxu0
        %v1878 = vadd.f32 0.0, %v1877
        %v1879 = vpop.f32.mrb[0].mxu0
        %v1880 = vpop.f32.mrb[0].mxu0
        %v1881 = vadd.f32 0.0, %v1880
        %v1882 = vpop.f32.mrb[0].mxu0
        %1883 = vdwg.mxu0
        %1884 = vmatprep.subr.bf16.mxu0 0
        %1885 = vmatpush1.bf16.msra.mxu0 %v1763
        %1886 = vmatprep.subr.bf16.mxu0 0
        %1887 = vmatpush1.bf16.msra.mxu0 %v1764
        %1888 = vmatprep.subr.bf16.mxu0 0
        %1889 = vmatpush1.bf16.msra.mxu0 %v1765
        %1890 = vmatprep.subr.bf16.mxu0 0
        %1891 = vmatpush1.bf16.msra.mxu0 %v1766
        %1892 = vmatprep.subr.bf16.mxu0 0
        %1893 = vmatpush1.bf16.msra.mxu0 %v1767
        %1894 = vmatprep.subr.bf16.mxu0 0
        %1895 = vmatpush1.bf16.msra.mxu0 %v1768
        %1896 = vmatprep.subr.bf16.mxu0 0
        %1897 = vmatpush1.bf16.msra.mxu0 %v1769
        %1898 = vmatprep.subr.bf16.mxu0 0
        %1899 = vmatpush1.bf16.msra.mxu0 %v1770
        %1900 = vmatprep.subr.bf16.mxu0 0
        %1901 = vmatpush1.bf16.msra.mxu0 %v1771
        %1902 = vmatprep.subr.bf16.mxu0 0
        %1903 = vmatpush1.bf16.msra.mxu0 %v1772
        %1904 = vmatprep.subr.bf16.mxu0 0
        %1905 = vmatpush1.bf16.msra.mxu0 %v1773
        %1906 = vmatprep.subr.bf16.mxu0 0
        %1907 = vmatpush1.bf16.msra.mxu0 %v1774
        %1908 = vmatprep.subr.bf16.mxu0 0
        %1909 = vmatpush1.bf16.msra.mxu0 %v1775
        %1910 = vmatprep.subr.bf16.mxu0 0
        %1911 = vmatpush1.bf16.msra.mxu0 %v1776
        %1912 = vmatprep.subr.bf16.mxu0 0
        %1913 = vmatpush1.bf16.msra.mxu0 %v1777
        %1914 = vmatprep.subr.bf16.mxu0 0
        %1915 = vmatpush1.bf16.msra.mxu0 %v1778
        %1916 = vmatprep.mubr.bf16.mxu0 %v806
        %1917 = vmatmul.mubr.bf16.gmra.mrb[0].mxu0 %v805
        %v1918 = vpop.f32.mrb[0].mxu0
        %v1919 = vadd.f32 %v1846, %v1918
        %v1920 = vpop.f32.mrb[0].mxu0
        %v1921 = vpop.f32.mrb[0].mxu0
        %v1922 = vadd.f32 %v1849, %v1921
        %v1923 = vpop.f32.mrb[0].mxu0
        %1924 = vmatprep.mubr.bf16.mxu0 %v810
        %1925 = vmatmul.mubr.bf16.gmra.mrb[0].mxu0 %v809
        %v1926 = vpop.f32.mrb[0].mxu0
        %v1927 = vadd.f32 %v1854, %v1926
        %v1928 = vpop.f32.mrb[0].mxu0
        %v1929 = vpop.f32.mrb[0].mxu0
        %v1930 = vadd.f32 %v1857, %v1929
        %v1931 = vpop.f32.mrb[0].mxu0
        %1932 = vmatprep.mubr.bf16.mxu0 %v814
        %1933 = vmatmul.mubr.bf16.gmra.mrb[0].mxu0 %v813
        %v1934 = vpop.f32.mrb[0].mxu0
        %v1935 = vadd.f32 %v1862, %v1934
        %v1936 = vpop.f32.mrb[0].mxu0
        %v1937 = vpop.f32.mrb[0].mxu0
        %v1938 = vadd.f32 %v1865, %v1937
        %v1939 = vpop.f32.mrb[0].mxu0
        %1940 = vmatprep.mubr.bf16.mxu0 %v818
        %1941 = vmatmul.mubr.bf16.gmra.mrb[0].mxu0 %v817
        %v1942 = vpop.f32.mrb[0].mxu0
        %v1943 = vadd.f32 %v1870, %v1942
        %v1944 = vpop.f32.mrb[0].mxu0
        %v1945 = vpop.f32.mrb[0].mxu0
        %v1946 = vadd.f32 %v1873, %v1945
        %v1947 = vpop.f32.mrb[0].mxu0
        %1948 = vmatprep.mubr.bf16.mxu0 %v822
        %1949 = vmatmul.mubr.bf16.gmra.mrb[0].mxu0 %v821
        %v1950 = vpop.f32.mrb[0].mxu0
        %v1951 = vadd.f32 %v1878, %v1950
        %v1952 = vpop.f32.mrb[0].mxu0
        %v1953 = vpop.f32.mrb[0].mxu0
        %v1954 = vadd.f32 %v1881, %v1953
        %v1955 = vpop.f32.mrb[0].mxu0
        %1956 = vdwg.mxu0
        %v2021 = vunpack.c.l.b16 %v524
        %v2022 = vunpack.c.l.b16 %v525
        %v2023 = vunpack.c.l.b16 %v526
        %v2024 = vunpack.c.l.b16 %v527
        %v2025 = vunpack.c.l.b16 %v528
        %v2026 = vunpack.c.l.b16 %v529
        %v2027 = vunpack.c.l.b16 %v530
        %v2028 = vunpack.c.l.b16 %v531
        %v2029 = vunpack.c.l.b16 %v532
        %v2030 = vunpack.c.l.b16 %v533
        %v2031 = vunpack.c.l.b16 %v534
        %v2032 = vunpack.c.l.b16 %v535
        %v2033 = vunpack.c.l.b16 %v536
        %v2034 = vunpack.c.l.b16 %v537
        %v2035 = vunpack.c.l.b16 %v538
        %v2036 = vunpack.c.l.b16 %v539
        %v2037 = vunpack.c.l.b16 %v540
        %v2038 = vunpack.c.l.b16 %v541
        %v2039 = vunpack.c.l.b16 %v542
        %v2040 = vunpack.c.l.b16 %v543
        %v2041 = vunpack.c.l.b16 %v544
        %v2042 = vunpack.c.l.b16 %v545
        %v2043 = vunpack.c.l.b16 %v546
        %v2044 = vunpack.c.l.b16 %v547
        %v2045 = vunpack.c.l.b16 %v548
        %v2046 = vunpack.c.l.b16 %v549
        %v2047 = vunpack.c.l.b16 %v550
        %v2048 = vunpack.c.l.b16 %v551
        %v2049 = vunpack.c.l.b16 %v552
        %v2050 = vunpack.c.l.b16 %v553
        %v2051 = vunpack.c.l.b16 %v554
        %v2052 = vunpack.c.l.b16 %v555
        %v2053 = vunpack.c.l.b16 %v556
        %v2054 = vunpack.c.l.b16 %v557
        %v2055 = vunpack.c.l.b16 %v558
        %v2056 = vunpack.c.l.b16 %v559
        %v2057 = vunpack.c.l.b16 %v560
        %v2058 = vunpack.c.l.b16 %v561
        %v2059 = vunpack.c.l.b16 %v562
        %v2060 = vunpack.c.l.b16 %v563
        %v2061 = vunpack.c.l.b16 %v564
        %v2062 = vunpack.c.l.b16 %v565
        %v2063 = vunpack.c.l.b16 %v566
        %v2064 = vunpack.c.l.b16 %v567
        %v2065 = vunpack.c.l.b16 %v568
        %v2066 = vunpack.c.l.b16 %v569
        %v2067 = vunpack.c.l.b16 %v570
        %v2068 = vunpack.c.l.b16 %v571
        %v2069 = vunpack.c.l.b16 %v572
        %v2070 = vunpack.c.l.b16 %v573
        %v2071 = vunpack.c.l.b16 %v574
        %v2072 = vunpack.c.l.b16 %v575
        %v2073 = vunpack.c.l.b16 %v576
        %v2074 = vunpack.c.l.b16 %v577
        %v2075 = vunpack.c.l.b16 %v578
        %v2076 = vunpack.c.l.b16 %v579
        %v2077 = vunpack.c.l.b16 %v580
        %v2078 = vunpack.c.l.b16 %v581
        %v2079 = vunpack.c.l.b16 %v582
        %v2080 = vunpack.c.l.b16 %v583
        %v2081 = vunpack.c.l.b16 %v584
        %v2082 = vunpack.c.l.b16 %v585
        %v2083 = vunpack.c.l.b16 %v586
        %v2084 = vunpack.c.l.b16 %v587
        %v2085 = vpack.c.b16 %v2022, %v2021
        %v2086 = vpack.c.b16 %v2024, %v2023
        %v2087 = vpack.c.b16 %v2026, %v2025
        %v2088 = vpack.c.b16 %v2028, %v2027
        %v2089 = vpack.c.b16 %v2030, %v2029
        %v2090 = vpack.c.b16 %v2032, %v2031
        %v2091 = vpack.c.b16 %v2034, %v2033
        %v2092 = vpack.c.b16 %v2036, %v2035
        %v2093 = vpack.c.b16 %v2038, %v2037
        %v2094 = vpack.c.b16 %v2040, %v2039
        %v2095 = vpack.c.b16 %v2042, %v2041
        %v2096 = vpack.c.b16 %v2044, %v2043
        %v2097 = vpack.c.b16 %v2046, %v2045
        %v2098 = vpack.c.b16 %v2048, %v2047
        %v2099 = vpack.c.b16 %v2050, %v2049
        %v2100 = vpack.c.b16 %v2052, %v2051
        %v2101 = vpack.c.b16 %v2054, %v2053
        %v2102 = vpack.c.b16 %v2056, %v2055
        %v2103 = vpack.c.b16 %v2058, %v2057
        %v2104 = vpack.c.b16 %v2060, %v2059
        %v2105 = vpack.c.b16 %v2062, %v2061
        %v2106 = vpack.c.b16 %v2064, %v2063
        %v2107 = vpack.c.b16 %v2066, %v2065
        %v2108 = vpack.c.b16 %v2068, %v2067
        %v2109 = vpack.c.b16 %v2070, %v2069
        %v2110 = vpack.c.b16 %v2072, %v2071
        %v2111 = vpack.c.b16 %v2074, %v2073
        %v2112 = vpack.c.b16 %v2076, %v2075
        %v2113 = vpack.c.b16 %v2078, %v2077
        %v2114 = vpack.c.b16 %v2080, %v2079
        %v2115 = vpack.c.b16 %v2082, %v2081
        %v2116 = vpack.c.b16 %v2084, %v2083
        %2149 = vmatprep.subr.bf16.mxu0 0
        %2150 = vmatpush1.bf16.msra.mxu0 %v2085
        %2151 = vmatprep.subr.bf16.mxu0 0
        %2152 = vmatpush1.bf16.msra.mxu0 %v2086
        %2153 = vmatprep.subr.bf16.mxu0 0
        %2154 = vmatpush1.bf16.msra.mxu0 %v2087
        %2155 = vmatprep.subr.bf16.mxu0 0
        %2156 = vmatpush1.bf16.msra.mxu0 %v2088
        %2157 = vmatprep.subr.bf16.mxu0 0
        %2158 = vmatpush1.bf16.msra.mxu0 %v2089
        %2159 = vmatprep.subr.bf16.mxu0 0
        %2160 = vmatpush1.bf16.msra.mxu0 %v2090
        %2161 = vmatprep.subr.bf16.mxu0 0
        %2162 = vmatpush1.bf16.msra.mxu0 %v2091
        %2163 = vmatprep.subr.bf16.mxu0 0
        %2164 = vmatpush1.bf16.msra.mxu0 %v2092
        %2165 = vmatprep.subr.bf16.mxu0 0
        %2166 = vmatpush1.bf16.msra.mxu0 %v2093
        %2167 = vmatprep.subr.bf16.mxu0 0
        %2168 = vmatpush1.bf16.msra.mxu0 %v2094
        %2169 = vmatprep.subr.bf16.mxu0 0
        %2170 = vmatpush1.bf16.msra.mxu0 %v2095
        %2171 = vmatprep.subr.bf16.mxu0 0
        %2172 = vmatpush1.bf16.msra.mxu0 %v2096
        %2173 = vmatprep.subr.bf16.mxu0 0
        %2174 = vmatpush1.bf16.msra.mxu0 %v2097
        %2175 = vmatprep.subr.bf16.mxu0 0
        %2176 = vmatpush1.bf16.msra.mxu0 %v2098
        %2177 = vmatprep.subr.bf16.mxu0 0
        %2178 = vmatpush1.bf16.msra.mxu0 %v2099
        %2179 = vmatprep.subr.bf16.mxu0 0
        %2180 = vmatpush1.bf16.msra.mxu0 %v2100
        %2181 = vmatprep.mubr.bf16.mxu0 %v1242
        %2182 = vmatmul.mubr.bf16.gmra.mrb[0].mxu0 %v1241
        %v2183 = vpop.f32.mrb[0].mxu0
        %v2184 = vadd.f32 %v1919, %v2183
        %v2185 = vpop.f32.mrb[0].mxu0
        %v2186 = vpop.f32.mrb[0].mxu0
        %v2187 = vadd.f32 %v1922, %v2186
        %v2188 = vpop.f32.mrb[0].mxu0
        %2189 = vmatprep.mubr.bf16.mxu0 %v1246
        %2190 = vmatmul.mubr.bf16.gmra.mrb[0].mxu0 %v1245
        %v2191 = vpop.f32.mrb[0].mxu0
        %v2192 = vadd.f32 %v1927, %v2191
        %v2193 = vpop.f32.mrb[0].mxu0
        %v2194 = vpop.f32.mrb[0].mxu0
        %v2195 = vadd.f32 %v1930, %v2194
        %v2196 = vpop.f32.mrb[0].mxu0
        %2197 = vmatprep.mubr.bf16.mxu0 %v1250
        %2198 = vmatmul.mubr.bf16.gmra.mrb[0].mxu0 %v1249
        %v2199 = vpop.f32.mrb[0].mxu0
        %v2200 = vadd.f32 %v1935, %v2199
        %v2201 = vpop.f32.mrb[0].mxu0
        %v2202 = vpop.f32.mrb[0].mxu0
        %v2203 = vadd.f32 %v1938, %v2202
        %v2204 = vpop.f32.mrb[0].mxu0
        %2205 = vmatprep.mubr.bf16.mxu0 %v1254
        %2206 = vmatmul.mubr.bf16.gmra.mrb[0].mxu0 %v1253
        %v2207 = vpop.f32.mrb[0].mxu0
        %v2208 = vadd.f32 %v1943, %v2207
        %v2209 = vpop.f32.mrb[0].mxu0
        %v2210 = vpop.f32.mrb[0].mxu0
        %v2211 = vadd.f32 %v1946, %v2210
        %v2212 = vpop.f32.mrb[0].mxu0
        %2213 = vmatprep.mubr.bf16.mxu0 %v1258
        %2214 = vmatmul.mubr.bf16.gmra.mrb[0].mxu0 %v1257
        %v2215 = vpop.f32.mrb[0].mxu0
        %v2216 = vadd.f32 %v1951, %v2215
        %v2217 = vpop.f32.mrb[0].mxu0
        %v2218 = vpop.f32.mrb[0].mxu0
        %v2219 = vadd.f32 %v1954, %v2218
        %v2220 = vpop.f32.mrb[0].mxu0
        %2221 = vdwg.mxu0
        %2222 = vmatprep.subr.bf16.mxu0 0
        %2223 = vmatpush1.bf16.msra.mxu0 %v2101
        %2224 = vmatprep.subr.bf16.mxu0 0
        %2225 = vmatpush1.bf16.msra.mxu0 %v2102
        %2226 = vmatprep.subr.bf16.mxu0 0
        %2227 = vmatpush1.bf16.msra.mxu0 %v2103
        %2228 = vmatprep.subr.bf16.mxu0 0
        %2229 = vmatpush1.bf16.msra.mxu0 %v2104
        %2230 = vmatprep.subr.bf16.mxu0 0
        %2231 = vmatpush1.bf16.msra.mxu0 %v2105
        %2232 = vmatprep.subr.bf16.mxu0 0
        %2233 = vmatpush1.bf16.msra.mxu0 %v2106
        %2234 = vmatprep.subr.bf16.mxu0 0
        %2235 = vmatpush1.bf16.msra.mxu0 %v2107
        %2236 = vmatprep.subr.bf16.mxu0 0
        %2237 = vmatpush1.bf16.msra.mxu0 %v2108
        %2238 = vmatprep.subr.bf16.mxu0 0
        %2239 = vmatpush1.bf16.msra.mxu0 %v2109
        %2240 = vmatprep.subr.bf16.mxu0 0
        %2241 = vmatpush1.bf16.msra.mxu0 %v2110
        %2242 = vmatprep.subr.bf16.mxu0 0
        %2243 = vmatpush1.bf16.msra.mxu0 %v2111
        %2244 = vmatprep.subr.bf16.mxu0 0
        %2245 = vmatpush1.bf16.msra.mxu0 %v2112
        %2246 = vmatprep.subr.bf16.mxu0 0
        %2247 = vmatpush1.bf16.msra.mxu0 %v2113
        %2248 = vmatprep.subr.bf16.mxu0 0
        %2249 = vmatpush1.bf16.msra.mxu0 %v2114
        %2250 = vmatprep.subr.bf16.mxu0 0
        %2251 = vmatpush1.bf16.msra.mxu0 %v2115
        %2252 = vmatprep.subr.bf16.mxu0 0
        %2253 = vmatpush1.bf16.msra.mxu0 %v2116
        %2254 = vmatprep.mubr.bf16.mxu0 %v1244
        %2255 = vmatmul.mubr.bf16.gmra.mrb[0].mxu0 %v1243
        %v2256 = vpop.f32.mrb[0].mxu0
        %v2257 = vadd.f32 %v2184, %v2256
        %v2258 = vpop.f32.mrb[0].mxu0
        %v2259 = vpop.f32.mrb[0].mxu0
        %v2260 = vadd.f32 %v2187, %v2259
        %v2261 = vpop.f32.mrb[0].mxu0
        %2262 = vmatprep.mubr.bf16.mxu0 %v1248
        %2263 = vmatmul.mubr.bf16.gmra.mrb[0].mxu0 %v1247
        %v2264 = vpop.f32.mrb[0].mxu0
        %v2265 = vadd.f32 %v2192, %v2264
        %v2266 = vpop.f32.mrb[0].mxu0
        %v2267 = vpop.f32.mrb[0].mxu0
        %v2268 = vadd.f32 %v2195, %v2267
        %v2269 = vpop.f32.mrb[0].mxu0
        %2270 = vmatprep.mubr.bf16.mxu0 %v1252
        %2271 = vmatmul.mubr.bf16.gmra.mrb[0].mxu0 %v1251
        %v2272 = vpop.f32.mrb[0].mxu0
        %v2273 = vadd.f32 %v2200, %v2272
        %v2274 = vpop.f32.mrb[0].mxu0
        %v2275 = vpop.f32.mrb[0].mxu0
        %v2276 = vadd.f32 %v2203, %v2275
        %v2277 = vpop.f32.mrb[0].mxu0
        %2278 = vmatprep.mubr.bf16.mxu0 %v1256
        %2279 = vmatmul.mubr.bf16.gmra.mrb[0].mxu0 %v1255
        %v2280 = vpop.f32.mrb[0].mxu0
        %v2281 = vadd.f32 %v2208, %v2280
        %v2282 = vpop.f32.mrb[0].mxu0
        %v2283 = vpop.f32.mrb[0].mxu0
        %v2284 = vadd.f32 %v2211, %v2283
        %v2285 = vpop.f32.mrb[0].mxu0
        %2286 = vmatprep.mubr.bf16.mxu0 %v1260
        %2287 = vmatmul.mubr.bf16.gmra.mrb[0].mxu0 %v1259
        %v2288 = vpop.f32.mrb[0].mxu0
        %v2289 = vadd.f32 %v2216, %v2288
        %v2290 = vpop.f32.mrb[0].mxu0
        %v2291 = vpop.f32.mrb[0].mxu0
        %v2292 = vadd.f32 %v2219, %v2291
        %v2293 = vpop.f32.mrb[0].mxu0
        %2294 = vdwg.mxu0
        %v2295 = vld [vmem:[%s2 + $0x20] sm:$0xf]
        %v2296 = vld [vmem:[%s2 + $0x44] sm:$0xf]
        %v2297 = vld [vmem:[%s2 + $0x68] sm:$0xf]
        %v2298 = vld [vmem:[%s2 + $0x8c] sm:$0xf]
        %v2299 = vld [vmem:[%s2 + $0xb0] sm:$0xf]
        %v2300 = vld [vmem:[%s2 + $0xd4] sm:$0xf]
        %v2301 = vld [vmem:[%s2 + $0xf8] sm:$0xf]
        %v2302 = vld [vmem:[%s2 + $0x11c] sm:$0xf]
        %v2303 = vld [vmem:[%s2 + $0x140] sm:$0xf]
        %v2304 = vld [vmem:[%s2 + $0x164] sm:$0xf]
        %s2305 = sadd.s32 %s433, 1024
        %s2306 = sshra.s32 %s2305, 3
        %s2307 = sand.u32 %s2305, 7
        %s2308 = smul.addr %s2306, 4
        %s2309 = scalar_lea.vmem %s348, %s2308
        %v2310 = vld [vmem:[%s2309] sm:$0xf]
        %v2311 = vld [vmem:[%s2309 + $0x4] sm:$0xf]
        %s2312 = smul.addr %s2306, 4
        %s2313 = scalar_lea.vmem %s353, %s2312
        %v2314 = vld [vmem:[%s2313] sm:$0xf]
        %v2315 = vld [vmem:[%s2313 + $0x4] sm:$0xf]
        %v2326 = vunpack.c.l.b16 %v2295
        %v2327 = vunpack.c.l.b16 %v2296
        %v2328 = vunpack.c.l.b16 %v2297
        %v2329 = vunpack.c.l.b16 %v2298
        %v2330 = vunpack.c.l.b16 %v2299
        %v2331 = vunpack.c.l.b16 %v2300
        %v2332 = vunpack.c.l.b16 %v2301
        %v2333 = vunpack.c.l.b16 %v2302
        %v2334 = vunpack.c.l.b16 %v2303
        %v2335 = vunpack.c.l.b16 %v2304
        %v2336 = vpack.c.b16 %v2327, %v2326
        %v2337 = vpack.c.b16 %v2329, %v2328
        %v2338 = vpack.c.b16 %v2331, %v2330
        %v2339 = vpack.c.b16 %v2333, %v2332
        %v2340 = vpack.c.b16 %v2335, %v2334
        %v2343 = vunpack.c.l.b16 %v2310
        %v2344 = vunpack.c.l.b16 %v2311
        %v2345 = vpack.c.b16 %v2344, %v2343
        %vm2347 = vcmask 130048
        %v2349 = vsel %vm2347, %v2336, 0
        %v2352 = vsel %vm2347, %v2337, 0
        %v2355 = vsel %vm2347, %v2338, 0
        %v2358 = vsel %vm2347, %v2339, 0
        %v2361 = vsel %vm2347, %v2340, 0
        %2363 = vmatprep.subr.bf16.mxu0 0
        %2364 = vmatpush1.bf16.msra.mxu0 %v2345
        %2365 = vmatprep.subr.bf16.mxu0 0
        %2366 = vmatpush1.bf16.msra.mxu0 0
        %2367 = vmatprep.subr.bf16.mxu0 0
        %2368 = vmatpush1.bf16.msra.mxu0 0
        %2369 = vmatprep.subr.bf16.mxu0 0
        %2370 = vmatpush1.bf16.msra.mxu0 0
        %2371 = vmatprep.subr.bf16.mxu0 0
        %2372 = vmatpush1.bf16.msra.mxu0 0
        %2373 = vmatprep.subr.bf16.mxu0 0
        %2374 = vmatpush1.bf16.msra.mxu0 0
        %2375 = vmatprep.subr.bf16.mxu0 0
        %2376 = vmatpush1.bf16.msra.mxu0 0
        %2377 = vmatprep.subr.bf16.mxu0 0
        %2378 = vmatpush1.bf16.msra.mxu0 0
        %2379 = vmatprep.subr.bf16.mxu0 0
        %2380 = vmatpush1.bf16.msra.mxu0 0
        %2381 = vmatprep.subr.bf16.mxu0 0
        %2382 = vmatpush1.bf16.msra.mxu0 0
        %2383 = vmatprep.subr.bf16.mxu0 0
        %2384 = vmatpush1.bf16.msra.mxu0 0
        %2385 = vmatprep.subr.bf16.mxu0 0
        %2386 = vmatpush1.bf16.msra.mxu0 0
        %2387 = vmatprep.subr.bf16.mxu0 0
        %2388 = vmatpush1.bf16.msra.mxu0 0
        %2389 = vmatprep.subr.bf16.mxu0 0
        %2390 = vmatpush1.bf16.msra.mxu0 0
        %2391 = vmatprep.subr.bf16.mxu0 0
        %2392 = vmatpush1.bf16.msra.mxu0 0
        %2393 = vmatprep.subr.bf16.mxu0 0
        %2394 = vmatpush1.bf16.msra.mxu0 0
        %2395 = vmatprep.mubr.bf16.mxu0 0
        %2396 = vmatmul.mubr.bf16.gmra.mrb[0].mxu0 %v2349
        %v2397 = vpop.f32.mrb[0].mxu0
        %v2398 = vadd.f32 0.0, %v2397
        %v2399 = vpop.f32.mrb[0].mxu0
        %v2400 = vpop.f32.mrb[0].mxu0
        %v2401 = vadd.f32 0.0, %v2400
        %v2402 = vpop.f32.mrb[0].mxu0
        %2403 = vmatprep.mubr.bf16.mxu0 0
        %2404 = vmatmul.mubr.bf16.gmra.mrb[0].mxu0 %v2352
        %v2405 = vpop.f32.mrb[0].mxu0
        %v2406 = vadd.f32 0.0, %v2405
        %v2407 = vpop.f32.mrb[0].mxu0
        %v2408 = vpop.f32.mrb[0].mxu0
        %v2409 = vadd.f32 0.0, %v2408
        %v2410 = vpop.f32.mrb[0].mxu0
        %2411 = vmatprep.mubr.bf16.mxu0 0
        %2412 = vmatmul.mubr.bf16.gmra.mrb[0].mxu0 %v2355
        %v2413 = vpop.f32.mrb[0].mxu0
        %v2414 = vadd.f32 0.0, %v2413
        %v2415 = vpop.f32.mrb[0].mxu0
        %v2416 = vpop.f32.mrb[0].mxu0
        %v2417 = vadd.f32 0.0, %v2416
        %v2418 = vpop.f32.mrb[0].mxu0
        %2419 = vmatprep.mubr.bf16.mxu0 0
        %2420 = vmatmul.mubr.bf16.gmra.mrb[0].mxu0 %v2358
        %v2421 = vpop.f32.mrb[0].mxu0
        %v2422 = vadd.f32 0.0, %v2421
        %v2423 = vpop.f32.mrb[0].mxu0
        %v2424 = vpop.f32.mrb[0].mxu0
        %v2425 = vadd.f32 0.0, %v2424
        %v2426 = vpop.f32.mrb[0].mxu0
        %2427 = vmatprep.mubr.bf16.mxu0 0
        %2428 = vmatmul.mubr.bf16.gmra.mrb[0].mxu0 %v2361
        %v2429 = vpop.f32.mrb[0].mxu0
        %v2430 = vadd.f32 0.0, %v2429
        %v2431 = vpop.f32.mrb[0].mxu0
        %v2432 = vpop.f32.mrb[0].mxu0
        %v2433 = vadd.f32 0.0, %v2432
        %v2434 = vpop.f32.mrb[0].mxu0
        %2435 = vdwg.mxu0
        %v2436 = vadd.f32 %v1581, %v2398
        %v2437 = vadd.f32 %v1584, %v2401
        %v2438 = vadd.f32 %v1589, %v2406
        %v2439 = vadd.f32 %v1592, %v2409
        %v2440 = vadd.f32 %v1597, %v2414
        %v2441 = vadd.f32 %v1600, %v2417
        %v2442 = vadd.f32 %v1605, %v2422
        %v2443 = vadd.f32 %v1608, %v2425
        %v2444 = vadd.f32 %v1613, %v2430
        %v2445 = vadd.f32 %v1616, %v2433
        %v2448 = vunpack.c.l.b16 %v2314
        %v2449 = vunpack.c.l.b16 %v2315
        %v2450 = vpack.c.b16 %v2449, %v2448
        %2452 = vmatprep.subr.bf16.mxu0 0
        %2453 = vmatpush1.bf16.msra.mxu0 %v2450
        %2454 = vmatprep.subr.bf16.mxu0 0
        %2455 = vmatpush1.bf16.msra.mxu0 0
        %2456 = vmatprep.subr.bf16.mxu0 0
        %2457 = vmatpush1.bf16.msra.mxu0 0
        %2458 = vmatprep.subr.bf16.mxu0 0
        %2459 = vmatpush1.bf16.msra.mxu0 0
        %2460 = vmatprep.subr.bf16.mxu0 0
        %2461 = vmatpush1.bf16.msra.mxu0 0
        %2462 = vmatprep.subr.bf16.mxu0 0
        %2463 = vmatpush1.bf16.msra.mxu0 0
        %2464 = vmatprep.subr.bf16.mxu0 0
        %2465 = vmatpush1.bf16.msra.mxu0 0
        %2466 = vmatprep.subr.bf16.mxu0 0
        %2467 = vmatpush1.bf16.msra.mxu0 0
        %2468 = vmatprep.subr.bf16.mxu0 0
        %2469 = vmatpush1.bf16.msra.mxu0 0
        %2470 = vmatprep.subr.bf16.mxu0 0
        %2471 = vmatpush1.bf16.msra.mxu0 0
        %2472 = vmatprep.subr.bf16.mxu0 0
        %2473 = vmatpush1.bf16.msra.mxu0 0
        %2474 = vmatprep.subr.bf16.mxu0 0
        %2475 = vmatpush1.bf16.msra.mxu0 0
        %2476 = vmatprep.subr.bf16.mxu0 0
        %2477 = vmatpush1.bf16.msra.mxu0 0
        %2478 = vmatprep.subr.bf16.mxu0 0
        %2479 = vmatpush1.bf16.msra.mxu0 0
        %2480 = vmatprep.subr.bf16.mxu0 0
        %2481 = vmatpush1.bf16.msra.mxu0 0
        %2482 = vmatprep.subr.bf16.mxu0 0
        %2483 = vmatpush1.bf16.msra.mxu0 0
        %2484 = vmatprep.mubr.bf16.mxu0 0
        %2485 = vmatmul.mubr.bf16.gmra.mrb[0].mxu0 %v2349
        %v2486 = vpop.f32.mrb[0].mxu0
        %v2487 = vadd.f32 0.0, %v2486
        %v2488 = vpop.f32.mrb[0].mxu0
        %v2489 = vpop.f32.mrb[0].mxu0
        %v2490 = vadd.f32 0.0, %v2489
        %v2491 = vpop.f32.mrb[0].mxu0
        %2492 = vmatprep.mubr.bf16.mxu0 0
        %2493 = vmatmul.mubr.bf16.gmra.mrb[0].mxu0 %v2352
        %v2494 = vpop.f32.mrb[0].mxu0
        %v2495 = vadd.f32 0.0, %v2494
        %v2496 = vpop.f32.mrb[0].mxu0
        %v2497 = vpop.f32.mrb[0].mxu0
        %v2498 = vadd.f32 0.0, %v2497
        %v2499 = vpop.f32.mrb[0].mxu0
        %2500 = vmatprep.mubr.bf16.mxu0 0
        %2501 = vmatmul.mubr.bf16.gmra.mrb[0].mxu0 %v2355
        %v2502 = vpop.f32.mrb[0].mxu0
        %v2503 = vadd.f32 0.0, %v2502
        %v2504 = vpop.f32.mrb[0].mxu0
        %v2505 = vpop.f32.mrb[0].mxu0
        %v2506 = vadd.f32 0.0, %v2505
        %v2507 = vpop.f32.mrb[0].mxu0
        %2508 = vmatprep.mubr.bf16.mxu0 0
        %2509 = vmatmul.mubr.bf16.gmra.mrb[0].mxu0 %v2358
        %v2510 = vpop.f32.mrb[0].mxu0
        %v2511 = vadd.f32 0.0, %v2510
        %v2512 = vpop.f32.mrb[0].mxu0
        %v2513 = vpop.f32.mrb[0].mxu0
        %v2514 = vadd.f32 0.0, %v2513
        %v2515 = vpop.f32.mrb[0].mxu0
        %2516 = vmatprep.mubr.bf16.mxu0 0
        %2517 = vmatmul.mubr.bf16.gmra.mrb[0].mxu0 %v2361
        %v2518 = vpop.f32.mrb[0].mxu0
        %v2519 = vadd.f32 0.0, %v2518
        %v2520 = vpop.f32.mrb[0].mxu0
        %v2521 = vpop.f32.mrb[0].mxu0
        %v2522 = vadd.f32 0.0, %v2521
        %v2523 = vpop.f32.mrb[0].mxu0
        %2524 = vdwg.mxu0
        %v2525 = vadd.f32 %v2257, %v2487
        %v2526 = vadd.f32 %v2260, %v2490
        %v2527 = vadd.f32 %v2265, %v2495
        %v2528 = vadd.f32 %v2268, %v2498
        %v2529 = vadd.f32 %v2273, %v2503
        %v2530 = vadd.f32 %v2276, %v2506
        %v2531 = vadd.f32 %v2281, %v2511
        %v2532 = vadd.f32 %v2284, %v2514
        %v2533 = vadd.f32 %v2289, %v2519
        %v2534 = vadd.f32 %v2292, %v2522
        %2536 = vset.pattern.permute.xlu0 0
        %2537 = vperm.xlu0 %2536, %v421
        %v2538 = vpop.permute.xlu0 %2537
        %2541 = vset.pattern.permute.xlu0 0
        %2542 = vperm.xlu0 %2541, %v422
        %v2543 = vpop.permute.xlu0 %2542
        %2546 = vset.pattern.permute.xlu0 0
        %2547 = vperm.xlu0 %2546, %v423
        %v2548 = vpop.permute.xlu0 %2547
        %2551 = vset.pattern.permute.xlu0 0
        %2552 = vperm.xlu0 %2551, %v424
        %v2553 = vpop.permute.xlu0 %2552
        %2556 = vset.pattern.permute.xlu0 0
        %2557 = vperm.xlu0 %2556, %v425
        %v2558 = vpop.permute.xlu0 %2557
        %2561 = vset.pattern.permute.xlu0 0
        %2562 = vperm.xlu0 %2561, %v426
        %v2563 = vpop.permute.xlu0 %2562
        %2566 = vset.pattern.permute.xlu0 0
        %2567 = vperm.xlu0 %2566, %v427
        %v2568 = vpop.permute.xlu0 %2567
        %2571 = vset.pattern.permute.xlu0 0
        %2572 = vperm.xlu0 %2571, %v428
        %v2573 = vpop.permute.xlu0 %2572
        %2576 = vset.pattern.permute.xlu0 0
        %2577 = vperm.xlu0 %2576, %v429
        %v2578 = vpop.permute.xlu0 %2577
        %2581 = vset.pattern.permute.xlu0 0
        %2582 = vperm.xlu0 %2581, %v430
        %v2583 = vpop.permute.xlu0 %2582
        %v2585 = vadd.f32 %v2436, %v2538
        %v2586 = vadd.f32 %v2437, %v2543
        %v2587 = vadd.f32 %v2438, %v2548
        %v2588 = vadd.f32 %v2439, %v2553
        %v2589 = vadd.f32 %v2440, %v2558
        %v2590 = vadd.f32 %v2441, %v2563
        %v2591 = vadd.f32 %v2442, %v2568
        %v2592 = vadd.f32 %v2443, %v2573
        %v2593 = vadd.f32 %v2444, %v2578
        %v2594 = vadd.f32 %v2445, %v2583
        %v2595 = vadd.f32 %v2525, %v2538
        %v2596 = vadd.f32 %v2526, %v2543
        %v2597 = vadd.f32 %v2527, %v2548
        %v2598 = vadd.f32 %v2528, %v2553
        %v2599 = vadd.f32 %v2529, %v2558
        %v2600 = vadd.f32 %v2530, %v2563
        %v2601 = vadd.f32 %v2531, %v2568
        %v2602 = vadd.f32 %v2532, %v2573
        %v2603 = vadd.f32 %v2533, %v2578
        %v2604 = vadd.f32 %v2534, %v2583
        %s2605 = smul.u32 %s396, 80
        %s2606 = scalar_lea.vmem %s363, %s2605
        %vm2607 = vcmask 23552
        %2608 = vst.msk [vmem:[%s2606] sm:$0xff] %vm2607, %v2585
        %2609 = vst.msk [vmem:[%s2606 + $0x8] sm:$0xff] %vm2607, %v2586
        %2610 = vst.msk [vmem:[%s2606 + $0x10] sm:$0xff] %vm2607, %v2587
        %2611 = vst.msk [vmem:[%s2606 + $0x18] sm:$0xff] %vm2607, %v2588
        %2612 = vst.msk [vmem:[%s2606 + $0x20] sm:$0xff] %vm2607, %v2589
        %2613 = vst.msk [vmem:[%s2606 + $0x28] sm:$0xff] %vm2607, %v2590
        %2614 = vst.msk [vmem:[%s2606 + $0x30] sm:$0xff] %vm2607, %v2591
        %2615 = vst.msk [vmem:[%s2606 + $0x38] sm:$0xff] %vm2607, %v2592
        %2616 = vst.msk [vmem:[%s2606 + $0x40] sm:$0xff] %vm2607, %v2593
        %2617 = vst.msk [vmem:[%s2606 + $0x48] sm:$0xff] %vm2607, %v2594
        %s2618 = scalar_lea.vmem %s374, %s2605
        %2619 = vst.msk [vmem:[%s2618] sm:$0xff] %vm2607, %v2595
        %2620 = vst.msk [vmem:[%s2618 + $0x8] sm:$0xff] %vm2607, %v2596
        %2621 = vst.msk [vmem:[%s2618 + $0x10] sm:$0xff] %vm2607, %v2597
        %2622 = vst.msk [vmem:[%s2618 + $0x18] sm:$0xff] %vm2607, %v2598
        %2623 = vst.msk [vmem:[%s2618 + $0x20] sm:$0xff] %vm2607, %v2599
        %2624 = vst.msk [vmem:[%s2618 + $0x28] sm:$0xff] %vm2607, %v2600
        %2625 = vst.msk [vmem:[%s2618 + $0x30] sm:$0xff] %vm2607, %v2601
        %2626 = vst.msk [vmem:[%s2618 + $0x38] sm:$0xff] %vm2607, %v2602
        %2627 = vst.msk [vmem:[%s2618 + $0x40] sm:$0xff] %vm2607, %v2603
        %2628 = vst.msk [vmem:[%s2618 + $0x48] sm:$0xff] %vm2607, %v2604
        %v2629 = vsel %vm2607, %v2585, 0.0
        %2630 = vadd.xlane.f32.xlu0 %v2629
        %v2631 = vpop.xlane.xlu0 %2630
        %v2632 = vsel %vm2607, %v2586, 0.0
        %2633 = vadd.xlane.f32.xlu0 %v2632
        %v2634 = vpop.xlane.xlu0 %2633
        %v2635 = vsel %vm2607, %v2587, 0.0
        %2636 = vadd.xlane.f32.xlu0 %v2635
        %v2637 = vpop.xlane.xlu0 %2636
        %v2638 = vsel %vm2607, %v2588, 0.0
        %2639 = vadd.xlane.f32.xlu0 %v2638
        %v2640 = vpop.xlane.xlu0 %2639
        %v2641 = vsel %vm2607, %v2589, 0.0
        %2642 = vadd.xlane.f32.xlu0 %v2641
        %v2643 = vpop.xlane.xlu0 %2642
        %v2644 = vsel %vm2607, %v2590, 0.0
        %2645 = vadd.xlane.f32.xlu0 %v2644
        %v2646 = vpop.xlane.xlu0 %2645
        %v2647 = vsel %vm2607, %v2591, 0.0
        %2648 = vadd.xlane.f32.xlu0 %v2647
        %v2649 = vpop.xlane.xlu0 %2648
        %v2650 = vsel %vm2607, %v2592, 0.0
        %2651 = vadd.xlane.f32.xlu0 %v2650
        %v2652 = vpop.xlane.xlu0 %2651
        %v2653 = vsel %vm2607, %v2593, 0.0
        %2654 = vadd.xlane.f32.xlu0 %v2653
        %v2655 = vpop.xlane.xlu0 %2654
        %v2656 = vsel %vm2607, %v2594, 0.0
        %2657 = vadd.xlane.f32.xlu0 %v2656
        %v2658 = vpop.xlane.xlu0 %2657
        %v2659 = vadd.f32 %v401, %v2631
        %v2660 = vadd.f32 %v402, %v2634
        %v2661 = vadd.f32 %v403, %v2637
        %v2662 = vadd.f32 %v404, %v2640
        %v2663 = vadd.f32 %v405, %v2643
        %v2664 = vadd.f32 %v406, %v2646
        %v2665 = vadd.f32 %v407, %v2649
        %v2666 = vadd.f32 %v408, %v2652
        %v2667 = vadd.f32 %v409, %v2655
        %v2668 = vadd.f32 %v410, %v2658
        %v2669 = vsel %vm2607, %v2595, 0.0
        %2670 = vadd.xlane.f32.xlu0 %v2669
        %v2671 = vpop.xlane.xlu0 %2670
        %v2672 = vsel %vm2607, %v2596, 0.0
        %2673 = vadd.xlane.f32.xlu0 %v2672
        %v2674 = vpop.xlane.xlu0 %2673
        %v2675 = vsel %vm2607, %v2597, 0.0
        %2676 = vadd.xlane.f32.xlu0 %v2675
        %v2677 = vpop.xlane.xlu0 %2676
        %v2678 = vsel %vm2607, %v2598, 0.0
        %2679 = vadd.xlane.f32.xlu0 %v2678
        %v2680 = vpop.xlane.xlu0 %2679
        %v2681 = vsel %vm2607, %v2599, 0.0
        %2682 = vadd.xlane.f32.xlu0 %v2681
        %v2683 = vpop.xlane.xlu0 %2682
        %v2684 = vsel %vm2607, %v2600, 0.0
        %2685 = vadd.xlane.f32.xlu0 %v2684
        %v2686 = vpop.xlane.xlu0 %2685
        %v2687 = vsel %vm2607, %v2601, 0.0
        %2688 = vadd.xlane.f32.xlu0 %v2687
        %v2689 = vpop.xlane.xlu0 %2688
        %v2690 = vsel %vm2607, %v2602, 0.0
        %2691 = vadd.xlane.f32.xlu0 %v2690
        %v2692 = vpop.xlane.xlu0 %2691
        %v2693 = vsel %vm2607, %v2603, 0.0
        %2694 = vadd.xlane.f32.xlu0 %v2693
        %v2695 = vpop.xlane.xlu0 %2694
        %v2696 = vsel %vm2607, %v2604, 0.0
        %2697 = vadd.xlane.f32.xlu0 %v2696
        %v2698 = vpop.xlane.xlu0 %2697
        %v2699 = vadd.f32 %v2659, %v2671
        %v2700 = vadd.f32 %v2660, %v2674
        %v2701 = vadd.f32 %v2661, %v2677
        %v2702 = vadd.f32 %v2662, %v2680
        %v2703 = vadd.f32 %v2663, %v2683
        %v2704 = vadd.f32 %v2664, %v2686
        %v2705 = vadd.f32 %v2665, %v2689
        %v2706 = vadd.f32 %v2666, %v2692
        %v2707 = vadd.f32 %v2667, %v2695
        %v2708 = vadd.f32 %v2668, %v2698
        %v2709 = vmul.f32 %v2585, %v2585
        %v2710 = vmul.f32 %v2586, %v2586
        %v2711 = vmul.f32 %v2587, %v2587
        %v2712 = vmul.f32 %v2588, %v2588
        %v2713 = vmul.f32 %v2589, %v2589
        %v2714 = vmul.f32 %v2590, %v2590
        %v2715 = vmul.f32 %v2591, %v2591
        %v2716 = vmul.f32 %v2592, %v2592
        %v2717 = vmul.f32 %v2593, %v2593
        %v2718 = vmul.f32 %v2594, %v2594
        %v2719 = vsel %vm2607, %v2709, 0.0
        %2720 = vadd.xlane.f32.xlu0 %v2719
        %v2721 = vpop.xlane.xlu0 %2720
        %v2722 = vsel %vm2607, %v2710, 0.0
        %2723 = vadd.xlane.f32.xlu0 %v2722
        %v2724 = vpop.xlane.xlu0 %2723
        %v2725 = vsel %vm2607, %v2711, 0.0
        %2726 = vadd.xlane.f32.xlu0 %v2725
        %v2727 = vpop.xlane.xlu0 %2726
        %v2728 = vsel %vm2607, %v2712, 0.0
        %2729 = vadd.xlane.f32.xlu0 %v2728
        %v2730 = vpop.xlane.xlu0 %2729
        %v2731 = vsel %vm2607, %v2713, 0.0
        %2732 = vadd.xlane.f32.xlu0 %v2731
        %v2733 = vpop.xlane.xlu0 %2732
        %v2734 = vsel %vm2607, %v2714, 0.0
        %2735 = vadd.xlane.f32.xlu0 %v2734
        %v2736 = vpop.xlane.xlu0 %2735
        %v2737 = vsel %vm2607, %v2715, 0.0
        %2738 = vadd.xlane.f32.xlu0 %v2737
        %v2739 = vpop.xlane.xlu0 %2738
        %v2740 = vsel %vm2607, %v2716, 0.0
        %2741 = vadd.xlane.f32.xlu0 %v2740
        %v2742 = vpop.xlane.xlu0 %2741
        %v2743 = vsel %vm2607, %v2717, 0.0
        %2744 = vadd.xlane.f32.xlu0 %v2743
        %v2745 = vpop.xlane.xlu0 %2744
        %v2746 = vsel %vm2607, %v2718, 0.0
        %2747 = vadd.xlane.f32.xlu0 %v2746
        %v2748 = vpop.xlane.xlu0 %2747
        %v2749 = vadd.f32 %v411, %v2721
        %v2750 = vadd.f32 %v412, %v2724
        %v2751 = vadd.f32 %v413, %v2727
        %v2752 = vadd.f32 %v414, %v2730
        %v2753 = vadd.f32 %v415, %v2733
        %v2754 = vadd.f32 %v416, %v2736
        %v2755 = vadd.f32 %v417, %v2739
        %v2756 = vadd.f32 %v418, %v2742
        %v2757 = vadd.f32 %v419, %v2745
        %v2758 = vadd.f32 %v420, %v2748
        %v2759 = vmul.f32 %v2595, %v2595
        %v2760 = vmul.f32 %v2596, %v2596
        %v2761 = vmul.f32 %v2597, %v2597
        %v2762 = vmul.f32 %v2598, %v2598
        %v2763 = vmul.f32 %v2599, %v2599
        %v2764 = vmul.f32 %v2600, %v2600
        %v2765 = vmul.f32 %v2601, %v2601
        %v2766 = vmul.f32 %v2602, %v2602
        %v2767 = vmul.f32 %v2603, %v2603
        %v2768 = vmul.f32 %v2604, %v2604
        %v2769 = vsel %vm2607, %v2759, 0.0
        %2770 = vadd.xlane.f32.xlu0 %v2769
        %v2771 = vpop.xlane.xlu0 %2770
        %v2772 = vsel %vm2607, %v2760, 0.0
        %2773 = vadd.xlane.f32.xlu0 %v2772
        %v2774 = vpop.xlane.xlu0 %2773
        %v2775 = vsel %vm2607, %v2761, 0.0
        %2776 = vadd.xlane.f32.xlu0 %v2775
        %v2777 = vpop.xlane.xlu0 %2776
        %v2778 = vsel %vm2607, %v2762, 0.0
        %2779 = vadd.xlane.f32.xlu0 %v2778
        %v2780 = vpop.xlane.xlu0 %2779
        %v2781 = vsel %vm2607, %v2763, 0.0
        %2782 = vadd.xlane.f32.xlu0 %v2781
        %v2783 = vpop.xlane.xlu0 %2782
        %v2784 = vsel %vm2607, %v2764, 0.0
        %2785 = vadd.xlane.f32.xlu0 %v2784
        %v2786 = vpop.xlane.xlu0 %2785
        %v2787 = vsel %vm2607, %v2765, 0.0
        %2788 = vadd.xlane.f32.xlu0 %v2787
        %v2789 = vpop.xlane.xlu0 %2788
        %v2790 = vsel %vm2607, %v2766, 0.0
        %2791 = vadd.xlane.f32.xlu0 %v2790
        %v2792 = vpop.xlane.xlu0 %2791
        %v2793 = vsel %vm2607, %v2767, 0.0
        %2794 = vadd.xlane.f32.xlu0 %v2793
        %v2795 = vpop.xlane.xlu0 %2794
        %v2796 = vsel %vm2607, %v2768, 0.0
        %2797 = vadd.xlane.f32.xlu0 %v2796
        %v2798 = vpop.xlane.xlu0 %2797
        %v2799 = vadd.f32 %v2749, %v2771
        %v2800 = vadd.f32 %v2750, %v2774
        %v2801 = vadd.f32 %v2751, %v2777
        %v2802 = vadd.f32 %v2752, %v2780
        %v2803 = vadd.f32 %v2753, %v2783
        %v2804 = vadd.f32 %v2754, %v2786
        %v2805 = vadd.f32 %v2755, %v2789
        %v2806 = vadd.f32 %v2756, %v2792
        %v2807 = vadd.f32 %v2757, %v2795
        %v2808 = vadd.f32 %v2758, %v2798
      $region41: #{net1_forward.15} parent=35 // loop_footer
        %s400 = sadd.s32 1, %s396
      $region42: #{net1_forward.15} parent=35 // loop_footer_branch
        %395 = sbr.rel target = $region38
      $region43: #{net1_forward.15} parent=35 // loop_exit
        _
      %vm2809 = vcmask 7168
      %2810 = vst.msk [vmem:[%s384] sm:$0xff] %vm2809, %v401
      %2811 = vst.msk [vmem:[%s384 + $0x8] sm:$0xff] %vm2809, %v402
      %2812 = vst.msk [vmem:[%s384 + $0x10] sm:$0xff] %vm2809, %v403
      %2813 = vst.msk [vmem:[%s384 + $0x18] sm:$0xff] %vm2809, %v404
      %2814 = vst.msk [vmem:[%s384 + $0x20] sm:$0xff] %vm2809, %v405
      %2815 = vst.msk [vmem:[%s384 + $0x28] sm:$0xff] %vm2809, %v406
      %2816 = vst.msk [vmem:[%s384 + $0x30] sm:$0xff] %vm2809, %v407
      %2817 = vst.msk [vmem:[%s384 + $0x38] sm:$0xff] %vm2809, %v408
      %2818 = vst.msk [vmem:[%s384 + $0x40] sm:$0xff] %vm2809, %v409
      %2819 = vst.msk [vmem:[%s384 + $0x48] sm:$0xff] %vm2809, %v410
      %2820 = vst.msk [vmem:[%s393] sm:$0xff] %vm2809, %v411
      %2821 = vst.msk [vmem:[%s393 + $0x8] sm:$0xff] %vm2809, %v412
      %2822 = vst.msk [vmem:[%s393 + $0x10] sm:$0xff] %vm2809, %v413
      %2823 = vst.msk [vmem:[%s393 + $0x18] sm:$0xff] %vm2809, %v414
      %2824 = vst.msk [vmem:[%s393 + $0x20] sm:$0xff] %vm2809, %v415
      %2825 = vst.msk [vmem:[%s393 + $0x28] sm:$0xff] %vm2809, %v416
      %2826 = vst.msk [vmem:[%s393 + $0x30] sm:$0xff] %vm2809, %v417
      %2827 = vst.msk [vmem:[%s393 + $0x38] sm:$0xff] %vm2809, %v418
      %2828 = vst.msk [vmem:[%s393 + $0x40] sm:$0xff] %vm2809, %v419
      %2829 = vst.msk [vmem:[%s393 + $0x48] sm:$0xff] %vm2809, %v420
      %s2830 = smul.u32 6, %s24
      %p2831 = scmp.lt.s32.totalorder %s23, 1
      %s2832 = scalar_select %p2831, %s23, 1
      %p2833 = scmp.lt.s32.totalorder %s2830, 5
      %s2834 = scalar_select %p2833, %s2830, 5
      %s2835 = smul.addr %s2834, 10
      %s2836 = smul.addr %s2832, 60
      %s2837 = sadd.s32 %s2835, %s2836
      %s2838 = smul.addr %s2837, 8
      %s2839 = scalar_lea.vmem %s4, %s2838
      %s2840 = smul.u32 6, %s24
      %p2841 = scmp.lt.s32.totalorder %s23, 1
      %s2842 = scalar_select %p2841, %s23, 1
      %p2843 = scmp.lt.s32.totalorder %s2840, 5
      %s2844 = scalar_select %p2843, %s2840, 5
      %s2845 = smul.addr %s2844, 10
      %s2846 = smul.addr %s2842, 60
      %s2847 = sadd.s32 %s2845, %s2846
      %s2848 = smul.addr %s2847, 8
      %s2849 = scalar_lea.vmem %s5, %s2848
      %p2850 = scmp.lt.s32.totalorder %s23, 1
      %s2851 = scalar_select %p2850, %s23, 1
      %p2852 = scmp.lt.s32.totalorder %s24, 0
      %s2853 = scalar_select %p2852, %s24, 0
      %s2854 = smul.addr %s2853, 10
      %s2855 = smul.addr %s2851, 10
      %s2856 = sadd.s32 %s2854, %s2855
      %s2857 = smul.addr %s2856, 8
      %s2858 = scalar_lea.vmem %s6, %s2857
      %p2859 = scmp.lt.s32.totalorder %s23, 1
      %s2860 = scalar_select %p2859, %s23, 1
      %p2861 = scmp.lt.s32.totalorder %s24, 0
      %s2862 = scalar_select %p2861, %s24, 0
      %s2863 = smul.addr %s2862, 10
      %s2864 = smul.addr %s2860, 10
      %s2865 = sadd.s32 %s2863, %s2864
      %s2866 = smul.addr %s2865, 8
      %s2867 = scalar_lea.vmem %s7, %s2866
      // Predicated region
      $region44: #{net1_forward.15} parent=35 // pred_check
        %p2868 = pneg %p145
      $region45: #{net1_forward.15} parent=35 // pred_check_branch
        %2870 = sbr.rel (%p2868) target = $region47
      $region46: #{net1_forward.15} parent=35 // pred_region
        %s2871 = smul.u32 6, %s24
      $region47: #{net1_forward.15} parent=35 // pred_fallthru
        _
      // Predicated region
      $region48: #{net1_forward.15} parent=35 // pred_check
        %p2872 = pneg %p173
      $region49: #{net1_forward.15} parent=35 // pred_check_branch
        %2874 = sbr.rel (%p2872) target = $region51
      $region50: #{net1_forward.15} parent=35 // pred_region
        %s2875 = smul.u32 6, %s24
      $region51: #{net1_forward.15} parent=35 // pred_fallthru
        _
      // Predicated region
      $region52: #{net1_forward.15} parent=35 // pred_check
        %p2876 = pneg %p201
      $region53: #{net1_forward.15} parent=35 // pred_check_branch
        %2878 = sbr.rel (%p2876) target = $region55
      $region54: #{net1_forward.15} parent=35 // pred_region
        _
      $region55: #{net1_forward.15} parent=35 // pred_fallthru
        _
      // Predicated region
      $region56: #{net1_forward.15} parent=35 // pred_check
        %p2879 = pneg %p229
      $region57: #{net1_forward.15} parent=35 // pred_check_branch
        %2881 = sbr.rel (%p2879) target = $region59
      $region58: #{net1_forward.15} parent=35 // pred_region
        _
      $region59: #{net1_forward.15} parent=35 // pred_fallthru
        _
    $region36: #{net1_forward.15} parent=5 // pred_fallthru
      _
    %p2882 = scmp.le.s32.totalorder 2, %s14
    // Predicated region
    $region60: #{net1_forward.15} parent=5 // pred_check
      %p2883 = pneg %p2882
    $region61: #{net1_forward.15} parent=5 // pred_check_branch
      %2885 = sbr.rel (%p2883) target = $region63
    $region62: #{net1_forward.15} parent=5 // pred_region
      %s2886 = ssub.s32 %s14, 2
      // Predicated region
      $region64: #{net1_forward.15} parent=62 // pred_check
        %p2887 = pneg %p151
      $region65: #{net1_forward.15} parent=62 // pred_check_branch
        %2889 = sbr.rel (%p2887) target = $region67
      $region66: #{net1_forward.15} parent=62 // pred_region
        %s2890 = smul.u32 6, %s26
        %p2891 = scmp.lt.s32.totalorder %s25, 1
        %s2892 = scalar_select %p2891, %s25, 1
        %p2893 = scmp.lt.s32.totalorder %s2890, 5
        %s2894 = scalar_select %p2893, %s2890, 5
        %s2895 = smul.addr %s2894, 10
        %s2896 = smul.addr %s2892, 60
        %s2897 = sadd.s32 %s2895, %s2896
        %s2898 = smul.addr %s2897, 8
        %s2899 = scalar_lea.vmem %s4, %s2898
      $region67: #{net1_forward.15} parent=62 // pred_fallthru
        _
      // Predicated region
      $region68: #{net1_forward.15} parent=62 // pred_check
        %p2900 = pneg %p179
      $region69: #{net1_forward.15} parent=62 // pred_check_branch
        %2902 = sbr.rel (%p2900) target = $region71
      $region70: #{net1_forward.15} parent=62 // pred_region
        %s2903 = smul.u32 6, %s26
        %p2904 = scmp.lt.s32.totalorder %s25, 1
        %s2905 = scalar_select %p2904, %s25, 1
        %p2906 = scmp.lt.s32.totalorder %s2903, 5
        %s2907 = scalar_select %p2906, %s2903, 5
        %s2908 = smul.addr %s2907, 10
        %s2909 = smul.addr %s2905, 60
        %s2910 = sadd.s32 %s2908, %s2909
        %s2911 = smul.addr %s2910, 8
        %s2912 = scalar_lea.vmem %s5, %s2911
      $region71: #{net1_forward.15} parent=62 // pred_fallthru
        _
      // Predicated region
      $region72: #{net1_forward.15} parent=62 // pred_check
        %p2913 = pneg %p207
      $region73: #{net1_forward.15} parent=62 // pred_check_branch
        %2915 = sbr.rel (%p2913) target = $region75
      $region74: #{net1_forward.15} parent=62 // pred_region
        %p2916 = scmp.lt.s32.totalorder %s25, 1
        %s2917 = scalar_select %p2916, %s25, 1
        %p2918 = scmp.lt.s32.totalorder %s26, 0
        %s2919 = scalar_select %p2918, %s26, 0
        %s2920 = smul.addr %s2919, 10
        %s2921 = smul.addr %s2917, 10
        %s2922 = sadd.s32 %s2920, %s2921
        %s2923 = smul.addr %s2922, 8
        %s2924 = scalar_lea.vmem %s6, %s2923
      $region75: #{net1_forward.15} parent=62 // pred_fallthru
        _
      // Predicated region
      $region76: #{net1_forward.15} parent=62 // pred_check
        %p2925 = pneg %p235
      $region77: #{net1_forward.15} parent=62 // pred_check_branch
        %2927 = sbr.rel (%p2925) target = $region79
      $region78: #{net1_forward.15} parent=62 // pred_region
        %p2928 = scmp.lt.s32.totalorder %s25, 1
        %s2929 = scalar_select %p2928, %s25, 1
        %p2930 = scmp.lt.s32.totalorder %s26, 0
        %s2931 = scalar_select %p2930, %s26, 0
        %s2932 = smul.addr %s2931, 10
        %s2933 = smul.addr %s2929, 10
        %s2934 = sadd.s32 %s2932, %s2933
        %s2935 = smul.addr %s2934, 8
        %s2936 = scalar_lea.vmem %s7, %s2935
      $region79: #{net1_forward.15} parent=62 // pred_fallthru
        _
    $region63: #{net1_forward.15} parent=5 // pred_fallthru
      _
  $region6: #{net1_forward.15} parent=0 // loop_footer
    %s18 = sadd.s32 1, %s14
  $region7: #{net1_forward.15} parent=0 // loop_footer_branch
    %13 = sbr.rel target = $region3
  $region8: #{net1_forward.15} parent=0 // loop_exit
    _

// kernel: net1_forward.17
$region0: #{net1_forward.17}
  #allocation0 [shape = 'u32[]', space=smem, size = 0x4, offset = 0x4, fixed_abs, tag = 'smem constant byte address 0x4 - core index']
  #allocation1 [shape = 'u32[144,128]{1,0:T(1,128)}', space=vmem, size = 0x12000, scoped, tag = 'internal scratch']
  #allocation2 [shape = 'f32[1,1]{1,0:T(1,128)S(1)}', space=vmem, size = 0x200, scoped, tag = 'scoped memory for net1_forward.17']
  %s0 = inlined_call_operand.vmem [shape: bf16[2,720], index: 0, kind: input, shape index: {}]
  %s1 = inlined_call_operand.vmem [shape: bf16[720,400], index: 1, kind: input, shape index: {}]
  %s2 = inlined_call_operand.vmem [shape: f32[1,400], index: 2, kind: input, shape index: {}]
  %s3 = inlined_call_operand.vmem [shape: f32[1,400], index: 3, kind: input, shape index: {}]
  %s4 = inlined_call_operand.<no memory space> [shape: f32[1,1], index: 4, kind: input, shape index: {}]
  %s5 = inlined_call_operand.vmem [shape: f32[2,1], index: 5, kind: output, shape index: {}]
  %s6 = sld [smem:[#allocation0]]
  $region30: #{net1_forward.17} parent=0
    _
  %s8 = ssub.s32 1, %s6
  %s9 = scalar_select 0, %s8, %s6
  %v10 = vstv %s4
  %11 = vst [vmem:[#allocation2] sm:$0x1] %v10
  // Predicated region
  $region2: #{net1_forward.17} parent=0 // pred_check
    _
  $region3: #{net1_forward.17} parent=0 // pred_check_branch
    %13 = sbr.rel (0) target = $region5
  $region4: #{net1_forward.17} parent=0 // pred_region
    _
  $region5: #{net1_forward.17} parent=0 // pred_fallthru
    _
  // Predicated region
  $region6: #{net1_forward.17} parent=0 // pred_check
    _
  $region7: #{net1_forward.17} parent=0 // pred_check_branch
    %15 = sbr.rel (0) target = $region9
  $region8: #{net1_forward.17} parent=0 // pred_region
    _
  $region9: #{net1_forward.17} parent=0 // pred_fallthru
    _
  // Predicated region
  $region10: #{net1_forward.17} parent=0 // pred_check
    _
  $region11: #{net1_forward.17} parent=0 // pred_check_branch
    %17 = sbr.rel (0) target = $region13
  $region12: #{net1_forward.17} parent=0 // pred_region
    _
  $region13: #{net1_forward.17} parent=0 // pred_fallthru
    _
  // Predicated region
  $region14: #{net1_forward.17} parent=0 // pred_check
    _
  $region15: #{net1_forward.17} parent=0 // pred_check_branch
    %19 = sbr.rel (0) target = $region17
  $region16: #{net1_forward.17} parent=0 // pred_region
    _
  $region17: #{net1_forward.17} parent=0 // pred_fallthru
    _
  // Predicated region
  $region18: #{net1_forward.17} parent=0 // pred_check
    _
  $region19: #{net1_forward.17} parent=0 // pred_check_branch
    %21 = sbr.rel (0) target = $region21
  $region20: #{net1_forward.17} parent=0 // pred_region
    _
  $region21: #{net1_forward.17} parent=0 // pred_fallthru
    _
  %v23 = vld [vmem:[%s0] sm:$0x3f]
  %v24 = vld [vmem:[%s1] sm:$0xff]
  %v25 = vld [vmem:[%s1 + $0x8] sm:$0xff]
  %v26 = vld [vmem:[%s1 + $0x10] sm:$0xff]
  %v27 = vld [vmem:[%s1 + $0x18] sm:$0xff]
  %v28 = vld [vmem:[%s1 + $0x20] sm:$0xff]
  %v29 = vld [vmem:[%s1 + $0x28] sm:$0xff]
  %v30 = vld [vmem:[%s1 + $0x30] sm:$0xff]
  %v31 = vld [vmem:[%s1 + $0x38] sm:$0xff]
  %v32 = vld [vmem:[%s1 + $0x40] sm:$0xff]
  %v33 = vld [vmem:[%s1 + $0x48] sm:$0xff]
  %v34 = vld [vmem:[%s1 + $0x50] sm:$0xff]
  %v35 = vld [vmem:[%s1 + $0x58] sm:$0xff]
  %v36 = vld [vmem:[%s1 + $0x60] sm:$0xff]
  %v37 = vld [vmem:[%s1 + $0x68] sm:$0xff]
  %v38 = vld [vmem:[%s1 + $0x70] sm:$0xff]
  %v39 = vld [vmem:[%s1 + $0x78] sm:$0xff]
  %v40 = vld [vmem:[%s1 + $0x80] sm:$0xff]
  %v41 = vld [vmem:[%s1 + $0x88] sm:$0xff]
  %v42 = vld [vmem:[%s1 + $0x90] sm:$0xff]
  %v43 = vld [vmem:[%s1 + $0x98] sm:$0xff]
  %v44 = vld [vmem:[%s1 + $0xa0] sm:$0xff]
  %v45 = vld [vmem:[%s1 + $0xa8] sm:$0xff]
  %v46 = vld [vmem:[%s1 + $0xb0] sm:$0xff]
  %v47 = vld [vmem:[%s1 + $0xb8] sm:$0xff]
  %v48 = vld [vmem:[%s1 + $0xc0] sm:$0xff]
  %v49 = vld [vmem:[%s1 + $0xc8] sm:$0xff]
  %v50 = vld [vmem:[%s1 + $0xd0] sm:$0xff]
  %v51 = vld [vmem:[%s1 + $0xd8] sm:$0xff]
  %v52 = vld [vmem:[%s1 + $0xe0] sm:$0xff]
  %v53 = vld [vmem:[%s1 + $0xe8] sm:$0xff]
  %v54 = vld [vmem:[%s1 + $0xf0] sm:$0xff]
  %v55 = vld [vmem:[%s1 + $0xf8] sm:$0xff]
  %v56 = vld [vmem:[%s1 + $0x100] sm:$0xff]
  %v57 = vld [vmem:[%s1 + $0x108] sm:$0xff]
  %v58 = vld [vmem:[%s1 + $0x110] sm:$0xff]
  %v59 = vld [vmem:[%s1 + $0x118] sm:$0xff]
  %v60 = vld [vmem:[%s1 + $0x120] sm:$0xff]
  %v61 = vld [vmem:[%s1 + $0x128] sm:$0xff]
  %v62 = vld [vmem:[%s1 + $0x130] sm:$0xff]
  %v63 = vld [vmem:[%s1 + $0x138] sm:$0xff]
  %v64 = vld [vmem:[%s1 + $0x140] sm:$0xff]
  %v65 = vld [vmem:[%s1 + $0x148] sm:$0xff]
  %v66 = vld [vmem:[%s1 + $0x150] sm:$0xff]
  %v67 = vld [vmem:[%s1 + $0x158] sm:$0xff]
  %v68 = vld [vmem:[%s1 + $0x160] sm:$0xff]
  %v69 = vld [vmem:[%s1 + $0x168] sm:$0xff]
  %v70 = vld [vmem:[%s1 + $0x170] sm:$0xff]
  %v71 = vld [vmem:[%s1 + $0x178] sm:$0xff]
  %v72 = vld [vmem:[%s1 + $0x180] sm:$0xff]
  %v73 = vld [vmem:[%s1 + $0x188] sm:$0xff]
  %v74 = vld [vmem:[%s1 + $0x190] sm:$0xff]
  %v75 = vld [vmem:[%s1 + $0x198] sm:$0xff]
  %v76 = vld [vmem:[%s1 + $0x1a0] sm:$0xff]
  %v77 = vld [vmem:[%s1 + $0x1a8] sm:$0xff]
  %v78 = vld [vmem:[%s1 + $0x1b0] sm:$0xff]
  %v79 = vld [vmem:[%s1 + $0x1b8] sm:$0xff]
  %v80 = vld [vmem:[%s1 + $0x1c0] sm:$0xff]
  %v81 = vld [vmem:[%s1 + $0x1c8] sm:$0xff]
  %v82 = vld [vmem:[%s1 + $0x1d0] sm:$0xff]
  %v83 = vld [vmem:[%s1 + $0x1d8] sm:$0xff]
  %v84 = vld [vmem:[%s1 + $0x1e0] sm:$0xff]
  %v85 = vld [vmem:[%s1 + $0x1e8] sm:$0xff]
  %v86 = vld [vmem:[%s1 + $0x1f0] sm:$0xff]
  %v87 = vld [vmem:[%s1 + $0x1f8] sm:$0xff]
  %v88 = vld [vmem:[%s1 + $0x200] sm:$0xff]
  %v89 = vld [vmem:[%s1 + $0x208] sm:$0xff]
  %v90 = vld [vmem:[%s1 + $0x210] sm:$0xff]
  %v91 = vld [vmem:[%s1 + $0x218] sm:$0xff]
  %v92 = vld [vmem:[%s1 + $0x220] sm:$0xff]
  %v93 = vld [vmem:[%s1 + $0x228] sm:$0xff]
  %v94 = vld [vmem:[%s1 + $0x230] sm:$0xff]
  %v95 = vld [vmem:[%s1 + $0x238] sm:$0xff]
  %v96 = vld [vmem:[%s1 + $0x240] sm:$0xff]
  %v97 = vld [vmem:[%s1 + $0x248] sm:$0xff]
  %v98 = vld [vmem:[%s1 + $0x250] sm:$0xff]
  %v99 = vld [vmem:[%s1 + $0x258] sm:$0xff]
  %v100 = vld [vmem:[%s1 + $0x260] sm:$0xff]
  %v101 = vld [vmem:[%s1 + $0x268] sm:$0xff]
  %v102 = vld [vmem:[%s1 + $0x270] sm:$0xff]
  %v103 = vld [vmem:[%s1 + $0x278] sm:$0xff]
  %v104 = vld [vmem:[%s1 + $0x280] sm:$0xff]
  %v105 = vld [vmem:[%s1 + $0x288] sm:$0xff]
  %v106 = vld [vmem:[%s1 + $0x290] sm:$0xff]
  %v107 = vld [vmem:[%s1 + $0x298] sm:$0xff]
  %v108 = vld [vmem:[%s1 + $0x2a0] sm:$0xff]
  %v109 = vld [vmem:[%s1 + $0x2a8] sm:$0xff]
  %v110 = vld [vmem:[%s1 + $0x2b0] sm:$0xff]
  %v111 = vld [vmem:[%s1 + $0x2b8] sm:$0xff]
  %v112 = vld [vmem:[%s1 + $0x2c0] sm:$0xff]
  %v113 = vld [vmem:[%s1 + $0x2c8] sm:$0xff]
  %v114 = vld [vmem:[%s1 + $0x2d0] sm:$0xff]
  %v115 = vld [vmem:[%s1 + $0x2d8] sm:$0xff]
  %v116 = vld [vmem:[%s1 + $0x2e0] sm:$0xff]
  %v117 = vld [vmem:[%s1 + $0x2e8] sm:$0xff]
  %v118 = vld [vmem:[%s1 + $0x2f0] sm:$0xff]
  %v119 = vld [vmem:[%s1 + $0x2f8] sm:$0xff]
  %v120 = vld [vmem:[%s1 + $0x300] sm:$0xff]
  %v121 = vld [vmem:[%s1 + $0x308] sm:$0xff]
  %v122 = vld [vmem:[%s1 + $0x310] sm:$0xff]
  %v123 = vld [vmem:[%s1 + $0x318] sm:$0xff]
  %v124 = vld [vmem:[%s1 + $0x320] sm:$0xff]
  %v125 = vld [vmem:[%s1 + $0x328] sm:$0xff]
  %v126 = vld [vmem:[%s1 + $0x330] sm:$0xff]
  %v127 = vld [vmem:[%s1 + $0x338] sm:$0xff]
  %v128 = vld [vmem:[%s1 + $0x340] sm:$0xff]
  %v129 = vld [vmem:[%s1 + $0x348] sm:$0xff]
  %v130 = vld [vmem:[%s1 + $0x350] sm:$0xff]
  %v131 = vld [vmem:[%s1 + $0x358] sm:$0xff]
  %v132 = vld [vmem:[%s1 + $0x360] sm:$0xff]
  %v133 = vld [vmem:[%s1 + $0x368] sm:$0xff]
  %v134 = vld [vmem:[%s1 + $0x370] sm:$0xff]
  %v135 = vld [vmem:[%s1 + $0x378] sm:$0xff]
  %v136 = vld [vmem:[%s1 + $0x380] sm:$0xff]
  %v137 = vld [vmem:[%s1 + $0x388] sm:$0xff]
  %v138 = vld [vmem:[%s1 + $0x390] sm:$0xff]
  %v139 = vld [vmem:[%s1 + $0x398] sm:$0xff]
  %v140 = vld [vmem:[%s1 + $0x3a0] sm:$0xff]
  %v141 = vld [vmem:[%s1 + $0x3a8] sm:$0xff]
  %v142 = vld [vmem:[%s1 + $0x3b0] sm:$0xff]
  %v143 = vld [vmem:[%s1 + $0x3b8] sm:$0xff]
  %v144 = vld [vmem:[%s1 + $0x3c0] sm:$0xff]
  %v145 = vld [vmem:[%s1 + $0x3c8] sm:$0xff]
  %v146 = vld [vmem:[%s1 + $0x3d0] sm:$0xff]
  %v147 = vld [vmem:[%s1 + $0x3d8] sm:$0xff]
  %v148 = vld [vmem:[%s1 + $0x3e0] sm:$0xff]
  %v149 = vld [vmem:[%s1 + $0x3e8] sm:$0xff]
  %v150 = vld [vmem:[%s1 + $0x3f0] sm:$0xff]
  %v151 = vld [vmem:[%s1 + $0x3f8] sm:$0xff]
  %v152 = vld [vmem:[%s1 + $0x400] sm:$0xff]
  %v153 = vld [vmem:[%s1 + $0x408] sm:$0xff]
  %v154 = vld [vmem:[%s1 + $0x410] sm:$0xff]
  %v155 = vld [vmem:[%s1 + $0x418] sm:$0xff]
  %v156 = vld [vmem:[%s1 + $0x420] sm:$0xff]
  %v157 = vld [vmem:[%s1 + $0x428] sm:$0xff]
  %v158 = vld [vmem:[%s1 + $0x430] sm:$0xff]
  %v159 = vld [vmem:[%s1 + $0x438] sm:$0xff]
  %v160 = vld [vmem:[%s1 + $0x440] sm:$0xff]
  %v161 = vld [vmem:[%s1 + $0x448] sm:$0xff]
  %v162 = vld [vmem:[%s1 + $0x450] sm:$0xff]
  %v163 = vld [vmem:[%s1 + $0x458] sm:$0xff]
  %v164 = vld [vmem:[%s1 + $0x460] sm:$0xff]
  %v165 = vld [vmem:[%s1 + $0x468] sm:$0xff]
  %v166 = vld [vmem:[%s1 + $0x470] sm:$0xff]
  %v167 = vld [vmem:[%s1 + $0x478] sm:$0xff]
  %v168 = vld [vmem:[%s1 + $0x480] sm:$0xff]
  %v169 = vld [vmem:[%s1 + $0x488] sm:$0xff]
  %v170 = vld [vmem:[%s1 + $0x490] sm:$0xff]
  %v171 = vld [vmem:[%s1 + $0x498] sm:$0xff]
  %v172 = vld [vmem:[%s1 + $0x4a0] sm:$0xff]
  %v173 = vld [vmem:[%s1 + $0x4a8] sm:$0xff]
  %v174 = vld [vmem:[%s1 + $0x4b0] sm:$0xff]
  %v175 = vld [vmem:[%s1 + $0x4b8] sm:$0xff]
  %v176 = vld [vmem:[%s1 + $0x4c0] sm:$0xff]
  %v177 = vld [vmem:[%s1 + $0x4c8] sm:$0xff]
  %v178 = vld [vmem:[%s1 + $0x4d0] sm:$0xff]
  %v179 = vld [vmem:[%s1 + $0x4d8] sm:$0xff]
  %v180 = vld [vmem:[%s1 + $0x4e0] sm:$0xff]
  %v181 = vld [vmem:[%s1 + $0x4e8] sm:$0xff]
  %v182 = vld [vmem:[%s1 + $0x4f0] sm:$0xff]
  %v183 = vld [vmem:[%s1 + $0x4f8] sm:$0xff]
  %v184 = vld [vmem:[%s1 + $0x500] sm:$0xff]
  %v185 = vld [vmem:[%s1 + $0x508] sm:$0xff]
  %v186 = vld [vmem:[%s1 + $0x510] sm:$0xff]
  %v187 = vld [vmem:[%s1 + $0x518] sm:$0xff]
  %v188 = vld [vmem:[%s1 + $0x520] sm:$0xff]
  %v189 = vld [vmem:[%s1 + $0x528] sm:$0xff]
  %v190 = vld [vmem:[%s1 + $0x530] sm:$0xff]
  %v191 = vld [vmem:[%s1 + $0x538] sm:$0xff]
  %v192 = vld [vmem:[%s1 + $0x540] sm:$0xff]
  %v193 = vld [vmem:[%s1 + $0x548] sm:$0xff]
  %v194 = vld [vmem:[%s1 + $0x550] sm:$0xff]
  %v195 = vld [vmem:[%s1 + $0x558] sm:$0xff]
  %v196 = vld [vmem:[%s1 + $0x560] sm:$0xff]
  %v197 = vld [vmem:[%s1 + $0x568] sm:$0xff]
  %v198 = vld [vmem:[%s1 + $0x570] sm:$0xff]
  %v199 = vld [vmem:[%s1 + $0x578] sm:$0xff]
  %v200 = vld [vmem:[%s1 + $0x580] sm:$0xff]
  %v201 = vld [vmem:[%s1 + $0x588] sm:$0xff]
  %v202 = vld [vmem:[%s1 + $0x590] sm:$0xff]
  %v203 = vld [vmem:[%s1 + $0x598] sm:$0xff]
  %v204 = vld [vmem:[%s2] sm:$0xf]
  %v206 = vlaneseq
  %v207 = vshrl.u32 %v206, 7
  %v208 = vsub.s32 0, %v207
  %v209 = vrot.slane %v204, %v208
  %v210 = vlaneseq
  %v211 = vshrl.u32 %v210, 7
  %v212 = vsub.s32 1, %v211
  %v213 = vrot.slane %v204, %v212
  %v214 = vlaneseq
  %v215 = vshrl.u32 %v214, 7
  %v216 = vsub.s32 2, %v215
  %v217 = vrot.slane %v204, %v216
  %v218 = vlaneseq
  %v219 = vshrl.u32 %v218, 7
  %v220 = vsub.s32 3, %v219
  %v221 = vrot.slane %v204, %v220
  %v227 = vcombine.high %v23, %v23
  %v229 = vunpack.c.l.s4 1966171168
  %v230 = vunpack.c.0.s8 %v229
  %v231 = vlaneseq
  %v232 = vshrl.u32 %v231, 7
  %v233 = vsub.s32 %v230, %v232
  %v234 = vrot.slane %v23, %v233
  %v236 = vunpack.c.l.s4 1966171168
  %v237 = vunpack.c.0.s8 %v236
  %v238 = vlaneseq
  %v239 = vshrl.u32 %v238, 7
  %v240 = vsub.s32 %v237, %v239
  %v241 = vrot.slane %v227, %v240
  %v242 = vcombine.high %v234, %v234
  %v243 = vcombine.high %v241, %v241
  %v245 = vunpack.c.l.s4 1966171168
  %v246 = vunpack.c.0.s8 %v245
  %v247 = vlaneseq
  %v248 = vshrl.u32 %v247, 7
  %v249 = vsub.s32 %v246, %v248
  %v250 = vrot.slane %v234, %v249
  %v252 = vunpack.c.l.s4 1966171168
  %v253 = vunpack.c.0.s8 %v252
  %v254 = vlaneseq
  %v255 = vshrl.u32 %v254, 7
  %v256 = vsub.s32 %v253, %v255
  %v257 = vrot.slane %v241, %v256
  %v259 = vunpack.c.l.s4 1966171168
  %v260 = vunpack.c.0.s8 %v259
  %v261 = vlaneseq
  %v262 = vshrl.u32 %v261, 7
  %v263 = vsub.s32 %v260, %v262
  %v264 = vrot.slane %v242, %v263
  %v266 = vunpack.c.l.s4 1966171168
  %v267 = vunpack.c.0.s8 %v266
  %v268 = vlaneseq
  %v269 = vshrl.u32 %v268, 7
  %v270 = vsub.s32 %v267, %v269
  %v271 = vrot.slane %v243, %v270
  %v272 = vcombine.high %v250, %v250
  %v273 = vcombine.high %v264, %v264
  %v459 = vunpack.c.l.b16 %v24
  %v460 = vunpack.c.h.b16 %v24
  %v461 = vunpack.c.l.b16 %v25
  %v462 = vunpack.c.h.b16 %v25
  %v463 = vunpack.c.l.b16 %v26
  %v464 = vunpack.c.h.b16 %v26
  %v465 = vunpack.c.l.b16 %v27
  %v466 = vunpack.c.h.b16 %v27
  %v467 = vunpack.c.l.b16 %v28
  %v468 = vunpack.c.h.b16 %v28
  %v469 = vunpack.c.l.b16 %v29
  %v470 = vunpack.c.h.b16 %v29
  %v471 = vunpack.c.l.b16 %v30
  %v472 = vunpack.c.h.b16 %v30
  %v473 = vunpack.c.l.b16 %v31
  %v474 = vunpack.c.h.b16 %v31
  %v475 = vunpack.c.l.b16 %v32
  %v476 = vunpack.c.h.b16 %v32
  %v477 = vunpack.c.l.b16 %v33
  %v478 = vunpack.c.h.b16 %v33
  %v479 = vunpack.c.l.b16 %v34
  %v480 = vunpack.c.h.b16 %v34
  %v481 = vunpack.c.l.b16 %v35
  %v482 = vunpack.c.h.b16 %v35
  %v483 = vunpack.c.l.b16 %v36
  %v484 = vunpack.c.h.b16 %v36
  %v485 = vunpack.c.l.b16 %v37
  %v486 = vunpack.c.h.b16 %v37
  %v487 = vunpack.c.l.b16 %v38
  %v488 = vunpack.c.h.b16 %v38
  %v489 = vunpack.c.l.b16 %v39
  %v490 = vunpack.c.h.b16 %v39
  %v491 = vunpack.c.l.b16 %v40
  %v492 = vunpack.c.h.b16 %v40
  %v493 = vunpack.c.l.b16 %v41
  %v494 = vunpack.c.h.b16 %v41
  %v495 = vunpack.c.l.b16 %v42
  %v496 = vunpack.c.h.b16 %v42
  %v497 = vunpack.c.l.b16 %v43
  %v498 = vunpack.c.h.b16 %v43
  %v499 = vunpack.c.l.b16 %v44
  %v500 = vunpack.c.h.b16 %v44
  %v501 = vunpack.c.l.b16 %v45
  %v502 = vunpack.c.h.b16 %v45
  %v503 = vunpack.c.l.b16 %v46
  %v504 = vunpack.c.h.b16 %v46
  %v505 = vunpack.c.l.b16 %v47
  %v506 = vunpack.c.h.b16 %v47
  %v507 = vunpack.c.l.b16 %v48
  %v508 = vunpack.c.h.b16 %v48
  %v509 = vunpack.c.l.b16 %v49
  %v510 = vunpack.c.h.b16 %v49
  %v511 = vunpack.c.l.b16 %v50
  %v512 = vunpack.c.h.b16 %v50
  %v513 = vunpack.c.l.b16 %v51
  %v514 = vunpack.c.h.b16 %v51
  %v515 = vunpack.c.l.b16 %v52
  %v516 = vunpack.c.h.b16 %v52
  %v517 = vunpack.c.l.b16 %v53
  %v518 = vunpack.c.h.b16 %v53
  %v519 = vunpack.c.l.b16 %v54
  %v520 = vunpack.c.h.b16 %v54
  %v521 = vunpack.c.l.b16 %v55
  %v522 = vunpack.c.h.b16 %v55
  %v523 = vunpack.c.l.b16 %v56
  %v524 = vunpack.c.h.b16 %v56
  %v525 = vunpack.c.l.b16 %v57
  %v526 = vunpack.c.h.b16 %v57
  %v527 = vunpack.c.l.b16 %v58
  %v528 = vunpack.c.h.b16 %v58
  %v529 = vunpack.c.l.b16 %v59
  %v530 = vunpack.c.h.b16 %v59
  %v531 = vunpack.c.l.b16 %v60
  %v532 = vunpack.c.h.b16 %v60
  %v533 = vunpack.c.l.b16 %v61
  %v534 = vunpack.c.h.b16 %v61
  %v535 = vunpack.c.l.b16 %v62
  %v536 = vunpack.c.h.b16 %v62
  %v537 = vunpack.c.l.b16 %v63
  %v538 = vunpack.c.h.b16 %v63
  %v539 = vunpack.c.l.b16 %v64
  %v540 = vunpack.c.h.b16 %v64
  %v541 = vunpack.c.l.b16 %v65
  %v542 = vunpack.c.h.b16 %v65
  %v543 = vunpack.c.l.b16 %v66
  %v544 = vunpack.c.h.b16 %v66
  %v545 = vunpack.c.l.b16 %v67
  %v546 = vunpack.c.h.b16 %v67
  %v547 = vunpack.c.l.b16 %v68
  %v548 = vunpack.c.h.b16 %v68
  %v549 = vunpack.c.l.b16 %v69
  %v550 = vunpack.c.h.b16 %v69
  %v551 = vunpack.c.l.b16 %v70
  %v552 = vunpack.c.h.b16 %v70
  %v553 = vunpack.c.l.b16 %v71
  %v554 = vunpack.c.h.b16 %v71
  %v555 = vunpack.c.l.b16 %v72
  %v556 = vunpack.c.h.b16 %v72
  %v557 = vunpack.c.l.b16 %v73
  %v558 = vunpack.c.h.b16 %v73
  %v559 = vunpack.c.l.b16 %v74
  %v560 = vunpack.c.h.b16 %v74
  %v561 = vunpack.c.l.b16 %v75
  %v562 = vunpack.c.h.b16 %v75
  %v563 = vunpack.c.l.b16 %v76
  %v564 = vunpack.c.h.b16 %v76
  %v565 = vunpack.c.l.b16 %v77
  %v566 = vunpack.c.h.b16 %v77
  %v567 = vunpack.c.l.b16 %v78
  %v568 = vunpack.c.h.b16 %v78
  %v569 = vunpack.c.l.b16 %v79
  %v570 = vunpack.c.h.b16 %v79
  %v571 = vunpack.c.l.b16 %v80
  %v572 = vunpack.c.h.b16 %v80
  %v573 = vunpack.c.l.b16 %v81
  %v574 = vunpack.c.h.b16 %v81
  %v575 = vunpack.c.l.b16 %v82
  %v576 = vunpack.c.h.b16 %v82
  %v577 = vunpack.c.l.b16 %v83
  %v578 = vunpack.c.h.b16 %v83
  %v579 = vunpack.c.l.b16 %v84
  %v580 = vunpack.c.h.b16 %v84
  %v581 = vunpack.c.l.b16 %v85
  %v582 = vunpack.c.h.b16 %v85
  %v583 = vunpack.c.l.b16 %v86
  %v584 = vunpack.c.h.b16 %v86
  %v585 = vunpack.c.l.b16 %v87
  %v586 = vunpack.c.h.b16 %v87
  %v587 = vunpack.c.l.b16 %v88
  %v588 = vunpack.c.h.b16 %v88
  %v589 = vunpack.c.l.b16 %v89
  %v590 = vunpack.c.h.b16 %v89
  %v591 = vunpack.c.l.b16 %v90
  %v592 = vunpack.c.h.b16 %v90
  %v593 = vunpack.c.l.b16 %v91
  %v594 = vunpack.c.h.b16 %v91
  %v595 = vunpack.c.l.b16 %v92
  %v596 = vunpack.c.h.b16 %v92
  %v597 = vunpack.c.l.b16 %v93
  %v598 = vunpack.c.h.b16 %v93
  %v599 = vunpack.c.l.b16 %v94
  %v600 = vunpack.c.h.b16 %v94
  %v601 = vunpack.c.l.b16 %v95
  %v602 = vunpack.c.h.b16 %v95
  %v603 = vunpack.c.l.b16 %v96
  %v604 = vunpack.c.h.b16 %v96
  %v605 = vunpack.c.l.b16 %v97
  %v606 = vunpack.c.h.b16 %v97
  %v607 = vunpack.c.l.b16 %v98
  %v608 = vunpack.c.h.b16 %v98
  %v609 = vunpack.c.l.b16 %v99
  %v610 = vunpack.c.h.b16 %v99
  %v611 = vunpack.c.l.b16 %v100
  %v612 = vunpack.c.h.b16 %v100
  %v613 = vunpack.c.l.b16 %v101
  %v614 = vunpack.c.h.b16 %v101
  %v615 = vunpack.c.l.b16 %v102
  %v616 = vunpack.c.h.b16 %v102
  %v617 = vunpack.c.l.b16 %v103
  %v618 = vunpack.c.h.b16 %v103
  %v619 = vunpack.c.l.b16 %v104
  %v620 = vunpack.c.h.b16 %v104
  %v621 = vunpack.c.l.b16 %v105
  %v622 = vunpack.c.h.b16 %v105
  %v623 = vunpack.c.l.b16 %v106
  %v624 = vunpack.c.h.b16 %v106
  %v625 = vunpack.c.l.b16 %v107
  %v626 = vunpack.c.h.b16 %v107
  %v627 = vunpack.c.l.b16 %v108
  %v628 = vunpack.c.h.b16 %v108
  %v629 = vunpack.c.l.b16 %v109
  %v630 = vunpack.c.h.b16 %v109
  %v631 = vunpack.c.l.b16 %v110
  %v632 = vunpack.c.h.b16 %v110
  %v633 = vunpack.c.l.b16 %v111
  %v634 = vunpack.c.h.b16 %v111
  %v635 = vunpack.c.l.b16 %v112
  %v636 = vunpack.c.h.b16 %v112
  %v637 = vunpack.c.l.b16 %v113
  %v638 = vunpack.c.h.b16 %v113
  %v639 = vunpack.c.l.b16 %v114
  %v640 = vunpack.c.h.b16 %v114
  %v641 = vunpack.c.l.b16 %v115
  %v642 = vunpack.c.h.b16 %v115
  %v643 = vunpack.c.l.b16 %v116
  %v644 = vunpack.c.h.b16 %v116
  %v645 = vunpack.c.l.b16 %v117
  %v646 = vunpack.c.h.b16 %v117
  %v647 = vunpack.c.l.b16 %v118
  %v648 = vunpack.c.h.b16 %v118
  %v649 = vunpack.c.l.b16 %v119
  %v650 = vunpack.c.h.b16 %v119
  %v651 = vunpack.c.l.b16 %v120
  %v652 = vunpack.c.h.b16 %v120
  %v653 = vunpack.c.l.b16 %v121
  %v654 = vunpack.c.h.b16 %v121
  %v655 = vunpack.c.l.b16 %v122
  %v656 = vunpack.c.h.b16 %v122
  %v657 = vunpack.c.l.b16 %v123
  %v658 = vunpack.c.h.b16 %v123
  %v659 = vunpack.c.l.b16 %v124
  %v660 = vunpack.c.h.b16 %v124
  %v661 = vunpack.c.l.b16 %v125
  %v662 = vunpack.c.h.b16 %v125
  %v663 = vunpack.c.l.b16 %v126
  %v664 = vunpack.c.h.b16 %v126
  %v665 = vunpack.c.l.b16 %v127
  %v666 = vunpack.c.h.b16 %v127
  %v667 = vunpack.c.l.b16 %v128
  %v668 = vunpack.c.h.b16 %v128
  %v669 = vunpack.c.l.b16 %v129
  %v670 = vunpack.c.h.b16 %v129
  %v671 = vunpack.c.l.b16 %v130
  %v672 = vunpack.c.h.b16 %v130
  %v673 = vunpack.c.l.b16 %v131
  %v674 = vunpack.c.h.b16 %v131
  %v675 = vunpack.c.l.b16 %v132
  %v676 = vunpack.c.h.b16 %v132
  %v677 = vunpack.c.l.b16 %v133
  %v678 = vunpack.c.h.b16 %v133
  %v679 = vunpack.c.l.b16 %v134
  %v680 = vunpack.c.h.b16 %v134
  %v681 = vunpack.c.l.b16 %v135
  %v682 = vunpack.c.h.b16 %v135
  %v683 = vunpack.c.l.b16 %v136
  %v684 = vunpack.c.h.b16 %v136
  %v685 = vunpack.c.l.b16 %v137
  %v686 = vunpack.c.h.b16 %v137
  %v687 = vunpack.c.l.b16 %v138
  %v688 = vunpack.c.h.b16 %v138
  %v689 = vunpack.c.l.b16 %v139
  %v690 = vunpack.c.h.b16 %v139
  %v691 = vunpack.c.l.b16 %v140
  %v692 = vunpack.c.h.b16 %v140
  %v693 = vunpack.c.l.b16 %v141
  %v694 = vunpack.c.h.b16 %v141
  %v695 = vunpack.c.l.b16 %v142
  %v696 = vunpack.c.h.b16 %v142
  %v697 = vunpack.c.l.b16 %v143
  %v698 = vunpack.c.h.b16 %v143
  %v699 = vunpack.c.l.b16 %v144
  %v700 = vunpack.c.h.b16 %v144
  %v701 = vunpack.c.l.b16 %v145
  %v702 = vunpack.c.h.b16 %v145
  %v703 = vunpack.c.l.b16 %v146
  %v704 = vunpack.c.h.b16 %v146
  %v705 = vunpack.c.l.b16 %v147
  %v706 = vunpack.c.h.b16 %v147
  %v707 = vunpack.c.l.b16 %v148
  %v708 = vunpack.c.h.b16 %v148
  %v709 = vunpack.c.l.b16 %v149
  %v710 = vunpack.c.h.b16 %v149
  %v711 = vunpack.c.l.b16 %v150
  %v712 = vunpack.c.h.b16 %v150
  %v713 = vunpack.c.l.b16 %v151
  %v714 = vunpack.c.h.b16 %v151
  %v715 = vunpack.c.l.b16 %v152
  %v716 = vunpack.c.h.b16 %v152
  %v717 = vunpack.c.l.b16 %v153
  %v718 = vunpack.c.h.b16 %v153
  %v719 = vunpack.c.l.b16 %v154
  %v720 = vunpack.c.h.b16 %v154
  %v721 = vunpack.c.l.b16 %v155
  %v722 = vunpack.c.h.b16 %v155
  %v723 = vunpack.c.l.b16 %v156
  %v724 = vunpack.c.h.b16 %v156
  %v725 = vunpack.c.l.b16 %v157
  %v726 = vunpack.c.h.b16 %v157
  %v727 = vunpack.c.l.b16 %v158
  %v728 = vunpack.c.h.b16 %v158
  %v729 = vunpack.c.l.b16 %v159
  %v730 = vunpack.c.h.b16 %v159
  %v731 = vunpack.c.l.b16 %v160
  %v732 = vunpack.c.h.b16 %v160
  %v733 = vunpack.c.l.b16 %v161
  %v734 = vunpack.c.h.b16 %v161
  %v735 = vunpack.c.l.b16 %v162
  %v736 = vunpack.c.h.b16 %v162
  %v737 = vunpack.c.l.b16 %v163
  %v738 = vunpack.c.h.b16 %v163
  %v739 = vunpack.c.l.b16 %v164
  %v740 = vunpack.c.h.b16 %v164
  %v741 = vunpack.c.l.b16 %v165
  %v742 = vunpack.c.h.b16 %v165
  %v743 = vunpack.c.l.b16 %v166
  %v744 = vunpack.c.h.b16 %v166
  %v745 = vunpack.c.l.b16 %v167
  %v746 = vunpack.c.h.b16 %v167
  %v747 = vunpack.c.l.b16 %v168
  %v748 = vunpack.c.h.b16 %v168
  %v749 = vunpack.c.l.b16 %v169
  %v750 = vunpack.c.h.b16 %v169
  %v751 = vunpack.c.l.b16 %v170
  %v752 = vunpack.c.h.b16 %v170
  %v753 = vunpack.c.l.b16 %v171
  %v754 = vunpack.c.h.b16 %v171
  %v755 = vunpack.c.l.b16 %v172
  %v756 = vunpack.c.h.b16 %v172
  %v757 = vunpack.c.l.b16 %v173
  %v758 = vunpack.c.h.b16 %v173
  %v759 = vunpack.c.l.b16 %v174
  %v760 = vunpack.c.h.b16 %v174
  %v761 = vunpack.c.l.b16 %v175
  %v762 = vunpack.c.h.b16 %v175
  %v763 = vunpack.c.l.b16 %v176
  %v764 = vunpack.c.h.b16 %v176
  %v765 = vunpack.c.l.b16 %v177
  %v766 = vunpack.c.h.b16 %v177
  %v767 = vunpack.c.l.b16 %v178
  %v768 = vunpack.c.h.b16 %v178
  %v769 = vunpack.c.l.b16 %v179
  %v770 = vunpack.c.h.b16 %v179
  %v771 = vunpack.c.l.b16 %v180
  %v772 = vunpack.c.h.b16 %v180
  %v773 = vunpack.c.l.b16 %v181
  %v774 = vunpack.c.h.b16 %v181
  %v775 = vunpack.c.l.b16 %v182
  %v776 = vunpack.c.h.b16 %v182
  %v777 = vunpack.c.l.b16 %v183
  %v778 = vunpack.c.h.b16 %v183
  %v779 = vunpack.c.l.b16 %v184
  %v780 = vunpack.c.h.b16 %v184
  %v781 = vunpack.c.l.b16 %v185
  %v782 = vunpack.c.h.b16 %v185
  %v783 = vunpack.c.l.b16 %v186
  %v784 = vunpack.c.h.b16 %v186
  %v785 = vunpack.c.l.b16 %v187
  %v786 = vunpack.c.h.b16 %v187
  %v787 = vunpack.c.l.b16 %v188
  %v788 = vunpack.c.h.b16 %v188
  %v789 = vunpack.c.l.b16 %v189
  %v790 = vunpack.c.h.b16 %v189
  %v791 = vunpack.c.l.b16 %v190
  %v792 = vunpack.c.h.b16 %v190
  %v793 = vunpack.c.l.b16 %v191
  %v794 = vunpack.c.h.b16 %v191
  %v795 = vunpack.c.l.b16 %v192
  %v796 = vunpack.c.h.b16 %v192
  %v797 = vunpack.c.l.b16 %v193
  %v798 = vunpack.c.h.b16 %v193
  %v799 = vunpack.c.l.b16 %v194
  %v800 = vunpack.c.h.b16 %v194
  %v801 = vunpack.c.l.b16 %v195
  %v802 = vunpack.c.h.b16 %v195
  %v803 = vunpack.c.l.b16 %v196
  %v804 = vunpack.c.h.b16 %v196
  %v805 = vunpack.c.l.b16 %v197
  %v806 = vunpack.c.h.b16 %v197
  %v807 = vunpack.c.l.b16 %v198
  %v808 = vunpack.c.h.b16 %v198
  %v809 = vunpack.c.l.b16 %v199
  %v810 = vunpack.c.h.b16 %v199
  %v811 = vunpack.c.l.b16 %v200
  %v812 = vunpack.c.h.b16 %v200
  %v813 = vunpack.c.l.b16 %v201
  %v814 = vunpack.c.h.b16 %v201
  %v815 = vunpack.c.l.b16 %v202
  %v816 = vunpack.c.h.b16 %v202
  %v817 = vunpack.c.l.b16 %v203
  %v818 = vunpack.c.h.b16 %v203
  %v819 = vpack.c.b16 %v463, %v459
  %v820 = vpack.c.b16 %v464, %v460
  %v821 = vpack.c.b16 %v465, %v461
  %v822 = vpack.c.b16 %v466, %v462
  %v823 = vpack.c.b16 %v471, %v467
  %v824 = vpack.c.b16 %v472, %v468
  %v825 = vpack.c.b16 %v473, %v469
  %v826 = vpack.c.b16 %v474, %v470
  %v827 = vpack.c.b16 %v479, %v475
  %v828 = vpack.c.b16 %v480, %v476
  %v829 = vpack.c.b16 %v481, %v477
  %v830 = vpack.c.b16 %v482, %v478
  %v831 = vpack.c.b16 %v487, %v483
  %v832 = vpack.c.b16 %v488, %v484
  %v833 = vpack.c.b16 %v489, %v485
  %v834 = vpack.c.b16 %v490, %v486
  %v835 = vpack.c.b16 %v495, %v491
  %v836 = vpack.c.b16 %v496, %v492
  %v837 = vpack.c.b16 %v497, %v493
  %v838 = vpack.c.b16 %v498, %v494
  %v839 = vpack.c.b16 %v503, %v499
  %v840 = vpack.c.b16 %v504, %v500
  %v841 = vpack.c.b16 %v505, %v501
  %v842 = vpack.c.b16 %v506, %v502
  %v843 = vpack.c.b16 %v511, %v507
  %v844 = vpack.c.b16 %v512, %v508
  %v845 = vpack.c.b16 %v513, %v509
  %v846 = vpack.c.b16 %v514, %v510
  %v847 = vpack.c.b16 %v519, %v515
  %v848 = vpack.c.b16 %v520, %v516
  %v849 = vpack.c.b16 %v521, %v517
  %v850 = vpack.c.b16 %v522, %v518
  %v851 = vpack.c.b16 %v527, %v523
  %v852 = vpack.c.b16 %v528, %v524
  %v853 = vpack.c.b16 %v529, %v525
  %v854 = vpack.c.b16 %v530, %v526
  %v855 = vpack.c.b16 %v535, %v531
  %v856 = vpack.c.b16 %v536, %v532
  %v857 = vpack.c.b16 %v537, %v533
  %v858 = vpack.c.b16 %v538, %v534
  %v859 = vpack.c.b16 %v543, %v539
  %v860 = vpack.c.b16 %v544, %v540
  %v861 = vpack.c.b16 %v545, %v541
  %v862 = vpack.c.b16 %v546, %v542
  %v863 = vpack.c.b16 %v551, %v547
  %v864 = vpack.c.b16 %v552, %v548
  %v865 = vpack.c.b16 %v553, %v549
  %v866 = vpack.c.b16 %v554, %v550
  %v867 = vpack.c.b16 %v559, %v555
  %v868 = vpack.c.b16 %v560, %v556
  %v869 = vpack.c.b16 %v561, %v557
  %v870 = vpack.c.b16 %v562, %v558
  %v871 = vpack.c.b16 %v567, %v563
  %v872 = vpack.c.b16 %v568, %v564
  %v873 = vpack.c.b16 %v569, %v565
  %v874 = vpack.c.b16 %v570, %v566
  %v875 = vpack.c.b16 %v575, %v571
  %v876 = vpack.c.b16 %v576, %v572
  %v877 = vpack.c.b16 %v577, %v573
  %v878 = vpack.c.b16 %v578, %v574
  %v879 = vpack.c.b16 %v583, %v579
  %v880 = vpack.c.b16 %v584, %v580
  %v881 = vpack.c.b16 %v585, %v581
  %v882 = vpack.c.b16 %v586, %v582
  %v883 = vpack.c.b16 %v591, %v587
  %v884 = vpack.c.b16 %v592, %v588
  %v885 = vpack.c.b16 %v593, %v589
  %v886 = vpack.c.b16 %v594, %v590
  %v887 = vpack.c.b16 %v599, %v595
  %v888 = vpack.c.b16 %v600, %v596
  %v889 = vpack.c.b16 %v601, %v597
  %v890 = vpack.c.b16 %v602, %v598
  %v891 = vpack.c.b16 %v607, %v603
  %v892 = vpack.c.b16 %v608, %v604
  %v893 = vpack.c.b16 %v609, %v605
  %v894 = vpack.c.b16 %v610, %v606
  %v895 = vpack.c.b16 %v615, %v611
  %v896 = vpack.c.b16 %v616, %v612
  %v897 = vpack.c.b16 %v617, %v613
  %v898 = vpack.c.b16 %v618, %v614
  %v899 = vpack.c.b16 %v623, %v619
  %v900 = vpack.c.b16 %v624, %v620
  %v901 = vpack.c.b16 %v625, %v621
  %v902 = vpack.c.b16 %v626, %v622
  %v903 = vpack.c.b16 %v631, %v627
  %v904 = vpack.c.b16 %v632, %v628
  %v905 = vpack.c.b16 %v633, %v629
  %v906 = vpack.c.b16 %v634, %v630
  %v907 = vpack.c.b16 %v639, %v635
  %v908 = vpack.c.b16 %v640, %v636
  %v909 = vpack.c.b16 %v641, %v637
  %v910 = vpack.c.b16 %v642, %v638
  %v911 = vpack.c.b16 %v647, %v643
  %v912 = vpack.c.b16 %v648, %v644
  %v913 = vpack.c.b16 %v649, %v645
  %v914 = vpack.c.b16 %v650, %v646
  %v915 = vpack.c.b16 %v655, %v651
  %v916 = vpack.c.b16 %v656, %v652
  %v917 = vpack.c.b16 %v657, %v653
  %v918 = vpack.c.b16 %v658, %v654
  %v919 = vpack.c.b16 %v663, %v659
  %v920 = vpack.c.b16 %v664, %v660
  %v921 = vpack.c.b16 %v665, %v661
  %v922 = vpack.c.b16 %v666, %v662
  %v923 = vpack.c.b16 %v671, %v667
  %v924 = vpack.c.b16 %v672, %v668
  %v925 = vpack.c.b16 %v673, %v669
  %v926 = vpack.c.b16 %v674, %v670
  %v927 = vpack.c.b16 %v679, %v675
  %v928 = vpack.c.b16 %v680, %v676
  %v929 = vpack.c.b16 %v681, %v677
  %v930 = vpack.c.b16 %v682, %v678
  %v931 = vpack.c.b16 %v687, %v683
  %v932 = vpack.c.b16 %v688, %v684
  %v933 = vpack.c.b16 %v689, %v685
  %v934 = vpack.c.b16 %v690, %v686
  %v935 = vpack.c.b16 %v695, %v691
  %v936 = vpack.c.b16 %v696, %v692
  %v937 = vpack.c.b16 %v697, %v693
  %v938 = vpack.c.b16 %v698, %v694
  %v939 = vpack.c.b16 %v703, %v699
  %v940 = vpack.c.b16 %v704, %v700
  %v941 = vpack.c.b16 %v705, %v701
  %v942 = vpack.c.b16 %v706, %v702
  %v943 = vpack.c.b16 %v711, %v707
  %v944 = vpack.c.b16 %v712, %v708
  %v945 = vpack.c.b16 %v713, %v709
  %v946 = vpack.c.b16 %v714, %v710
  %v947 = vpack.c.b16 %v719, %v715
  %v948 = vpack.c.b16 %v720, %v716
  %v949 = vpack.c.b16 %v721, %v717
  %v950 = vpack.c.b16 %v722, %v718
  %v951 = vpack.c.b16 %v727, %v723
  %v952 = vpack.c.b16 %v728, %v724
  %v953 = vpack.c.b16 %v729, %v725
  %v954 = vpack.c.b16 %v730, %v726
  %v955 = vpack.c.b16 %v735, %v731
  %v956 = vpack.c.b16 %v736, %v732
  %v957 = vpack.c.b16 %v737, %v733
  %v958 = vpack.c.b16 %v738, %v734
  %v959 = vpack.c.b16 %v743, %v739
  %v960 = vpack.c.b16 %v744, %v740
  %v961 = vpack.c.b16 %v745, %v741
  %v962 = vpack.c.b16 %v746, %v742
  %v963 = vpack.c.b16 %v751, %v747
  %v964 = vpack.c.b16 %v752, %v748
  %v965 = vpack.c.b16 %v753, %v749
  %v966 = vpack.c.b16 %v754, %v750
  %v967 = vpack.c.b16 %v759, %v755
  %v968 = vpack.c.b16 %v760, %v756
  %v969 = vpack.c.b16 %v761, %v757
  %v970 = vpack.c.b16 %v762, %v758
  %v971 = vpack.c.b16 %v767, %v763
  %v972 = vpack.c.b16 %v768, %v764
  %v973 = vpack.c.b16 %v769, %v765
  %v974 = vpack.c.b16 %v770, %v766
  %v975 = vpack.c.b16 %v775, %v771
  %v976 = vpack.c.b16 %v776, %v772
  %v977 = vpack.c.b16 %v777, %v773
  %v978 = vpack.c.b16 %v778, %v774
  %v979 = vpack.c.b16 %v783, %v779
  %v980 = vpack.c.b16 %v784, %v780
  %v981 = vpack.c.b16 %v785, %v781
  %v982 = vpack.c.b16 %v786, %v782
  %v983 = vpack.c.b16 %v791, %v787
  %v984 = vpack.c.b16 %v792, %v788
  %v985 = vpack.c.b16 %v793, %v789
  %v986 = vpack.c.b16 %v794, %v790
  %v987 = vpack.c.b16 %v799, %v795
  %v988 = vpack.c.b16 %v800, %v796
  %v989 = vpack.c.b16 %v801, %v797
  %v990 = vpack.c.b16 %v802, %v798
  %v991 = vpack.c.b16 %v807, %v803
  %v992 = vpack.c.b16 %v808, %v804
  %v993 = vpack.c.b16 %v809, %v805
  %v994 = vpack.c.b16 %v810, %v806
  %v995 = vpack.c.b16 %v815, %v811
  %v996 = vpack.c.b16 %v816, %v812
  %v997 = vpack.c.b16 %v817, %v813
  %v998 = vpack.c.b16 %v818, %v814
  %vm1179 = vcmask 654336
  %v1181 = vsel %vm1179, %v271, 0
  %1183 = vmatprep.subr.bf16.mxu0 %v820
  %1184 = vmatpush1.bf16.msra.mxu0 %v819
  %1185 = vmatprep.subr.bf16.mxu0 %v824
  %1186 = vmatpush1.bf16.msra.mxu0 %v823
  %1187 = vmatprep.subr.bf16.mxu0 %v828
  %1188 = vmatpush1.bf16.msra.mxu0 %v827
  %1189 = vmatprep.subr.bf16.mxu0 %v832
  %1190 = vmatpush1.bf16.msra.mxu0 %v831
  %1191 = vmatprep.subr.bf16.mxu0 %v836
  %1192 = vmatpush1.bf16.msra.mxu0 %v835
  %1193 = vmatprep.subr.bf16.mxu0 %v840
  %1194 = vmatpush1.bf16.msra.mxu0 %v839
  %1195 = vmatprep.subr.bf16.mxu0 %v844
  %1196 = vmatpush1.bf16.msra.mxu0 %v843
  %1197 = vmatprep.subr.bf16.mxu0 %v848
  %1198 = vmatpush1.bf16.msra.mxu0 %v847
  %1199 = vmatprep.subr.bf16.mxu0 %v852
  %1200 = vmatpush1.bf16.msra.mxu0 %v851
  %1201 = vmatprep.subr.bf16.mxu0 %v856
  %1202 = vmatpush1.bf16.msra.mxu0 %v855
  %1203 = vmatprep.subr.bf16.mxu0 %v860
  %1204 = vmatpush1.bf16.msra.mxu0 %v859
  %1205 = vmatprep.subr.bf16.mxu0 %v864
  %1206 = vmatpush1.bf16.msra.mxu0 %v863
  %1207 = vmatprep.subr.bf16.mxu0 %v868
  %1208 = vmatpush1.bf16.msra.mxu0 %v867
  %1209 = vmatprep.subr.bf16.mxu0 %v872
  %1210 = vmatpush1.bf16.msra.mxu0 %v871
  %1211 = vmatprep.subr.bf16.mxu0 %v876
  %1212 = vmatpush1.bf16.msra.mxu0 %v875
  %1213 = vmatprep.subr.bf16.mxu0 %v880
  %1214 = vmatpush1.bf16.msra.mxu0 %v879
  %1215 = vmatprep.mubr.bf16.mxu0 %v264
  %1216 = vmatmul.mubr.bf16.gmra.mrb[0].mxu0 %v250
  %v1217 = vpop.f32.mrb[0].mxu0
  %v1218 = vadd.f32 %v209, %v1217
  %v1219 = vpop.f32.mrb[0].mxu0
  %v1220 = vadd.f32 %v213, %v1219
  %v1221 = vpop.f32.mrb[0].mxu0
  %v1222 = vpop.f32.mrb[0].mxu0
  %1223 = vdwg.mxu0
  %1224 = vmatprep.subr.bf16.mxu0 %v884
  %1225 = vmatpush1.bf16.msra.mxu0 %v883
  %1226 = vmatprep.subr.bf16.mxu0 %v888
  %1227 = vmatpush1.bf16.msra.mxu0 %v887
  %1228 = vmatprep.subr.bf16.mxu0 %v892
  %1229 = vmatpush1.bf16.msra.mxu0 %v891
  %1230 = vmatprep.subr.bf16.mxu0 %v896
  %1231 = vmatpush1.bf16.msra.mxu0 %v895
  %1232 = vmatprep.subr.bf16.mxu0 %v900
  %1233 = vmatpush1.bf16.msra.mxu0 %v899
  %1234 = vmatprep.subr.bf16.mxu0 %v904
  %1235 = vmatpush1.bf16.msra.mxu0 %v903
  %1236 = vmatprep.subr.bf16.mxu0 %v908
  %1237 = vmatpush1.bf16.msra.mxu0 %v907
  %1238 = vmatprep.subr.bf16.mxu0 %v912
  %1239 = vmatpush1.bf16.msra.mxu0 %v911
  %1240 = vmatprep.subr.bf16.mxu0 %v916
  %1241 = vmatpush1.bf16.msra.mxu0 %v915
  %1242 = vmatprep.subr.bf16.mxu0 %v920
  %1243 = vmatpush1.bf16.msra.mxu0 %v919
  %1244 = vmatprep.subr.bf16.mxu0 %v924
  %1245 = vmatpush1.bf16.msra.mxu0 %v923
  %1246 = vmatprep.subr.bf16.mxu0 %v928
  %1247 = vmatpush1.bf16.msra.mxu0 %v927
  %1248 = vmatprep.subr.bf16.mxu0 %v932
  %1249 = vmatpush1.bf16.msra.mxu0 %v931
  %1250 = vmatprep.subr.bf16.mxu0 %v936
  %1251 = vmatpush1.bf16.msra.mxu0 %v935
  %1252 = vmatprep.subr.bf16.mxu0 %v940
  %1253 = vmatpush1.bf16.msra.mxu0 %v939
  %1254 = vmatprep.subr.bf16.mxu0 %v944
  %1255 = vmatpush1.bf16.msra.mxu0 %v943
  %1256 = vmatprep.mubr.bf16.mxu0 %v273
  %1257 = vmatmul.mubr.bf16.gmra.mrb[0].mxu0 %v272
  %v1258 = vpop.f32.mrb[0].mxu0
  %v1259 = vadd.f32 %v1218, %v1258
  %v1260 = vpop.f32.mrb[0].mxu0
  %v1261 = vadd.f32 %v1220, %v1260
  %v1262 = vpop.f32.mrb[0].mxu0
  %v1263 = vpop.f32.mrb[0].mxu0
  %1264 = vdwg.mxu0
  %1265 = vmatprep.subr.bf16.mxu0 %v948
  %1266 = vmatpush1.bf16.msra.mxu0 %v947
  %1267 = vmatprep.subr.bf16.mxu0 %v952
  %1268 = vmatpush1.bf16.msra.mxu0 %v951
  %1269 = vmatprep.subr.bf16.mxu0 %v956
  %1270 = vmatpush1.bf16.msra.mxu0 %v955
  %1271 = vmatprep.subr.bf16.mxu0 %v960
  %1272 = vmatpush1.bf16.msra.mxu0 %v959
  %1273 = vmatprep.subr.bf16.mxu0 %v964
  %1274 = vmatpush1.bf16.msra.mxu0 %v963
  %1275 = vmatprep.subr.bf16.mxu0 %v968
  %1276 = vmatpush1.bf16.msra.mxu0 %v967
  %1277 = vmatprep.subr.bf16.mxu0 %v972
  %1278 = vmatpush1.bf16.msra.mxu0 %v971
  %1279 = vmatprep.subr.bf16.mxu0 %v976
  %1280 = vmatpush1.bf16.msra.mxu0 %v975
  %1281 = vmatprep.subr.bf16.mxu0 %v980
  %1282 = vmatpush1.bf16.msra.mxu0 %v979
  %1283 = vmatprep.subr.bf16.mxu0 %v984
  %1284 = vmatpush1.bf16.msra.mxu0 %v983
  %1285 = vmatprep.subr.bf16.mxu0 %v988
  %1286 = vmatpush1.bf16.msra.mxu0 %v987
  %1287 = vmatprep.subr.bf16.mxu0 %v992
  %1288 = vmatpush1.bf16.msra.mxu0 %v991
  %1289 = vmatprep.subr.bf16.mxu0 %v996
  %1290 = vmatpush1.bf16.msra.mxu0 %v995
  %1291 = vmatprep.subr.bf16.mxu0 0
  %1292 = vmatpush1.bf16.msra.mxu0 0
  %1293 = vmatprep.subr.bf16.mxu0 0
  %1294 = vmatpush1.bf16.msra.mxu0 0
  %1295 = vmatprep.subr.bf16.mxu0 0
  %1296 = vmatpush1.bf16.msra.mxu0 0
  %1297 = vmatprep.mubr.bf16.mxu0 %v1181
  %1298 = vmatmul.mubr.bf16.gmra.mrb[0].mxu0 %v257
  %v1299 = vpop.f32.mrb[0].mxu0
  %v1300 = vadd.f32 %v1259, %v1299
  %v1301 = vpop.f32.mrb[0].mxu0
  %v1302 = vadd.f32 %v1261, %v1301
  %v1303 = vpop.f32.mrb[0].mxu0
  %v1304 = vpop.f32.mrb[0].mxu0
  %1305 = vdwg.mxu0
  %1306 = vmatprep.subr.bf16.mxu0 %v822
  %1307 = vmatpush1.bf16.msra.mxu0 %v821
  %1308 = vmatprep.subr.bf16.mxu0 %v826
  %1309 = vmatpush1.bf16.msra.mxu0 %v825
  %1310 = vmatprep.subr.bf16.mxu0 %v830
  %1311 = vmatpush1.bf16.msra.mxu0 %v829
  %1312 = vmatprep.subr.bf16.mxu0 %v834
  %1313 = vmatpush1.bf16.msra.mxu0 %v833
  %1314 = vmatprep.subr.bf16.mxu0 %v838
  %1315 = vmatpush1.bf16.msra.mxu0 %v837
  %1316 = vmatprep.subr.bf16.mxu0 %v842
  %1317 = vmatpush1.bf16.msra.mxu0 %v841
  %1318 = vmatprep.subr.bf16.mxu0 %v846
  %1319 = vmatpush1.bf16.msra.mxu0 %v845
  %1320 = vmatprep.subr.bf16.mxu0 %v850
  %1321 = vmatpush1.bf16.msra.mxu0 %v849
  %1322 = vmatprep.subr.bf16.mxu0 %v854
  %1323 = vmatpush1.bf16.msra.mxu0 %v853
  %1324 = vmatprep.subr.bf16.mxu0 %v858
  %1325 = vmatpush1.bf16.msra.mxu0 %v857
  %1326 = vmatprep.subr.bf16.mxu0 %v862
  %1327 = vmatpush1.bf16.msra.mxu0 %v861
  %1328 = vmatprep.subr.bf16.mxu0 %v866
  %1329 = vmatpush1.bf16.msra.mxu0 %v865
  %1330 = vmatprep.subr.bf16.mxu0 %v870
  %1331 = vmatpush1.bf16.msra.mxu0 %v869
  %1332 = vmatprep.subr.bf16.mxu0 %v874
  %1333 = vmatpush1.bf16.msra.mxu0 %v873
  %1334 = vmatprep.subr.bf16.mxu0 %v878
  %1335 = vmatpush1.bf16.msra.mxu0 %v877
  %1336 = vmatprep.subr.bf16.mxu0 %v882
  %1337 = vmatpush1.bf16.msra.mxu0 %v881
  %1338 = vmatprep.mubr.bf16.mxu0 %v264
  %1339 = vmatmul.mubr.bf16.gmra.mrb[0].mxu0 %v250
  %v1340 = vpop.f32.mrb[0].mxu0
  %v1341 = vadd.f32 %v217, %v1340
  %v1342 = vpop.f32.mrb[0].mxu0
  %v1343 = vadd.f32 %v221, %v1342
  %v1344 = vpop.f32.mrb[0].mxu0
  %v1345 = vpop.f32.mrb[0].mxu0
  %1346 = vdwg.mxu0
  %1347 = vmatprep.subr.bf16.mxu0 %v886
  %1348 = vmatpush1.bf16.msra.mxu0 %v885
  %1349 = vmatprep.subr.bf16.mxu0 %v890
  %1350 = vmatpush1.bf16.msra.mxu0 %v889
  %1351 = vmatprep.subr.bf16.mxu0 %v894
  %1352 = vmatpush1.bf16.msra.mxu0 %v893
  %1353 = vmatprep.subr.bf16.mxu0 %v898
  %1354 = vmatpush1.bf16.msra.mxu0 %v897
  %1355 = vmatprep.subr.bf16.mxu0 %v902
  %1356 = vmatpush1.bf16.msra.mxu0 %v901
  %1357 = vmatprep.subr.bf16.mxu0 %v906
  %1358 = vmatpush1.bf16.msra.mxu0 %v905
  %1359 = vmatprep.subr.bf16.mxu0 %v910
  %1360 = vmatpush1.bf16.msra.mxu0 %v909
  %1361 = vmatprep.subr.bf16.mxu0 %v914
  %1362 = vmatpush1.bf16.msra.mxu0 %v913
  %1363 = vmatprep.subr.bf16.mxu0 %v918
  %1364 = vmatpush1.bf16.msra.mxu0 %v917
  %1365 = vmatprep.subr.bf16.mxu0 %v922
  %1366 = vmatpush1.bf16.msra.mxu0 %v921
  %1367 = vmatprep.subr.bf16.mxu0 %v926
  %1368 = vmatpush1.bf16.msra.mxu0 %v925
  %1369 = vmatprep.subr.bf16.mxu0 %v930
  %1370 = vmatpush1.bf16.msra.mxu0 %v929
  %1371 = vmatprep.subr.bf16.mxu0 %v934
  %1372 = vmatpush1.bf16.msra.mxu0 %v933
  %1373 = vmatprep.subr.bf16.mxu0 %v938
  %1374 = vmatpush1.bf16.msra.mxu0 %v937
  %1375 = vmatprep.subr.bf16.mxu0 %v942
  %1376 = vmatpush1.bf16.msra.mxu0 %v941
  %1377 = vmatprep.subr.bf16.mxu0 %v946
  %1378 = vmatpush1.bf16.msra.mxu0 %v945
  %1379 = vmatprep.mubr.bf16.mxu0 %v273
  %1380 = vmatmul.mubr.bf16.gmra.mrb[0].mxu0 %v272
  %v1381 = vpop.f32.mrb[0].mxu0
  %v1382 = vadd.f32 %v1341, %v1381
  %v1383 = vpop.f32.mrb[0].mxu0
  %v1384 = vadd.f32 %v1343, %v1383
  %v1385 = vpop.f32.mrb[0].mxu0
  %v1386 = vpop.f32.mrb[0].mxu0
  %1387 = vdwg.mxu0
  %1388 = vmatprep.subr.bf16.mxu0 %v950
  %1389 = vmatpush1.bf16.msra.mxu0 %v949
  %1390 = vmatprep.subr.bf16.mxu0 %v954
  %1391 = vmatpush1.bf16.msra.mxu0 %v953
  %1392 = vmatprep.subr.bf16.mxu0 %v958
  %1393 = vmatpush1.bf16.msra.mxu0 %v957
  %1394 = vmatprep.subr.bf16.mxu0 %v962
  %1395 = vmatpush1.bf16.msra.mxu0 %v961
  %1396 = vmatprep.subr.bf16.mxu0 %v966
  %1397 = vmatpush1.bf16.msra.mxu0 %v965
  %1398 = vmatprep.subr.bf16.mxu0 %v970
  %1399 = vmatpush1.bf16.msra.mxu0 %v969
  %1400 = vmatprep.subr.bf16.mxu0 %v974
  %1401 = vmatpush1.bf16.msra.mxu0 %v973
  %1402 = vmatprep.subr.bf16.mxu0 %v978
  %1403 = vmatpush1.bf16.msra.mxu0 %v977
  %1404 = vmatprep.subr.bf16.mxu0 %v982
  %1405 = vmatpush1.bf16.msra.mxu0 %v981
  %1406 = vmatprep.subr.bf16.mxu0 %v986
  %1407 = vmatpush1.bf16.msra.mxu0 %v985
  %1408 = vmatprep.subr.bf16.mxu0 %v990
  %1409 = vmatpush1.bf16.msra.mxu0 %v989
  %1410 = vmatprep.subr.bf16.mxu0 %v994
  %1411 = vmatpush1.bf16.msra.mxu0 %v993
  %1412 = vmatprep.subr.bf16.mxu0 %v998
  %1413 = vmatpush1.bf16.msra.mxu0 %v997
  %1414 = vmatprep.subr.bf16.mxu0 0
  %1415 = vmatpush1.bf16.msra.mxu0 0
  %1416 = vmatprep.subr.bf16.mxu0 0
  %1417 = vmatpush1.bf16.msra.mxu0 0
  %1418 = vmatprep.subr.bf16.mxu0 0
  %1419 = vmatpush1.bf16.msra.mxu0 0
  %1420 = vmatprep.mubr.bf16.mxu0 %v1181
  %1421 = vmatmul.mubr.bf16.gmra.mrb[0].mxu0 %v257
  %v1422 = vpop.f32.mrb[0].mxu0
  %v1423 = vadd.f32 %v1382, %v1422
  %v1424 = vpop.f32.mrb[0].mxu0
  %v1425 = vadd.f32 %v1384, %v1424
  %v1426 = vpop.f32.mrb[0].mxu0
  %v1427 = vpop.f32.mrb[0].mxu0
  %1428 = vdwg.mxu0
  %v1429 = vmax.f32 %v1300, 0.0
  %v1430 = vmax.f32 %v1302, 0.0
  %v1431 = vmax.f32 %v1423, 0.0
  %v1432 = vmax.f32 %v1425, 0.0
  %v1433 = vld [vmem:[%s3] sm:$0xf]
  %v1435 = vlaneseq
  %v1436 = vshrl.u32 %v1435, 7
  %v1437 = vsub.s32 0, %v1436
  %v1438 = vrot.slane %v1433, %v1437
  %v1439 = vlaneseq
  %v1440 = vshrl.u32 %v1439, 7
  %v1441 = vsub.s32 1, %v1440
  %v1442 = vrot.slane %v1433, %v1441
  %v1443 = vlaneseq
  %v1444 = vshrl.u32 %v1443, 7
  %v1445 = vsub.s32 2, %v1444
  %v1446 = vrot.slane %v1433, %v1445
  %v1447 = vlaneseq
  %v1448 = vshrl.u32 %v1447, 7
  %v1449 = vsub.s32 3, %v1448
  %v1450 = vrot.slane %v1433, %v1449
  %v1455 = vmul.f32 %v1429, %v1438
  %v1456 = vmul.f32 %v1430, %v1442
  %v1457 = vmul.f32 %v1431, %v1446
  %v1458 = vmul.f32 %v1432, %v1450
  %vm1459 = vcmask 1041408
  %v1460 = vsel %vm1459, %v1455, 0.0
  %v1461 = vsel %vm1459, %v1456, 0.0
  %v1462 = vadd.f32 %v1460, %v1461
  %v1463 = vsel %vm1459, %v1457, 0.0
  %v1464 = vadd.f32 %v1462, %v1463
  %vm1465 = vcmask 123904
  %v1466 = vsel %vm1465, %v1458, 0.0
  %v1467 = vadd.f32 %v1464, %v1466
  %1468 = vadd.xlane.f32.xlu0 %v1467
  %v1469 = vpop.xlane.xlu0 %1468
  %v1470 = vld [vmem:[#allocation2] sm:$0x1]
  %v1472 = vlaneseq
  %v1473 = vshrl.u32 %v1472, 7
  %v1474 = vsub.s32 0, %v1473
  %v1475 = vrot.slane %v1470, %v1474
  %v1477 = vadd.f32 %v1469, %v1475
  %vm1478 = vcmask 1024
  %1479 = vst.msk [vmem:[%s5] sm:$0x3] %vm1478, %v1477
  // Predicated region
  $region22: #{net1_forward.17} parent=0 // pred_check
    _
  $region23: #{net1_forward.17} parent=0 // pred_check_branch
    %1481 = sbr.rel (0) target = $region25
  $region24: #{net1_forward.17} parent=0 // pred_region
    _
  $region25: #{net1_forward.17} parent=0 // pred_fallthru
    _
  // Predicated region
  $region26: #{net1_forward.17} parent=0 // pred_check
    _
  $region27: #{net1_forward.17} parent=0 // pred_check_branch
    %1483 = sbr.rel (0) target = $region29
  $region28: #{net1_forward.17} parent=0 // pred_region
    _
  $region29: #{net1_forward.17} parent=0 // pred_fallthru
    _

</llo_original>
